<compile_context>
chip_gen: v7x
topology: tpu7x:2x2x1
jax: 0.10.0
libtpu: 0.0.40
codegen_flags: <defaults>
</compile_context>

<pallas_src>
import functools
import math

import jax
import jax.numpy as jnp
from jax.experimental import pallas as pl
from jax.experimental.pallas import tpu as pltpu

LEAKY_SLOPE = 0.01  # nn.LeakyReLU default


def _leaky(v):
    return jnp.where(v > 0, v, LEAKY_SLOPE * v)


def _pool_bounds(size, out):
    # PyTorch AdaptiveMaxPool2d window bounds: floor start / ceil end.
    starts = tuple((i * size) // out for i in range(out))
    ends = tuple(math.ceil((i + 1) * size / out) for i in range(out))
    return starts, ends


# ------------------------------ fused kernel --------------------------------

def _custom_head_kernel(xpad_ref, w1_ref, w2_ref, wfc_ref, wout_ref, bout_ref,
                        out_ref, h1pad_ref, *,
                        H, W, C_in, C1, C2, n_hid, hs, he, ws, we):
    f32 = jnp.float32

    # ---------------- conv1: 3x3, C_in -> C1, LeakyReLU --------------------
    xp = xpad_ref[0]                                       # (H+2, W+2, C_in)
    acc1 = jnp.zeros((H * W, C1), f32)
    for k in range(9):
        ky, kx = divmod(k, 3)
        patch = xp[ky:ky + H, kx:kx + W, :].reshape(H * W, C_in)
        acc1 = acc1 + jnp.dot(patch, w1_ref[k], preferred_element_type=f32)
    h1 = _leaky(acc1)                                      # (H*W, C1)

    # conv1 output -> zero-padded VMEM scratch (halo for conv2).  Re-zeroed
    # every grid step (scratch is per-core, so no cross-step assumptions).
    h1pad_ref[...] = jnp.zeros_like(h1pad_ref)
    h1pad_ref[1:H + 1, 1:W + 1, :] = h1.reshape(H, W, C1)

    # ---------------- conv2: 3x3, C1 -> C2, LeakyReLU ----------------------
    acc2 = jnp.zeros((H * W, C2), f32)
    for k in range(9):
        ky, kx = divmod(k, 3)
        patch = h1pad_ref[ky:ky + H, kx:kx + W, :].reshape(H * W, C1)
        acc2 = acc2 + jnp.dot(patch, w2_ref[k], preferred_element_type=f32)
    h2 = _leaky(acc2).reshape(H, W, C2)                    # (H, W, C2)

    # ------- adaptive max-pool (3x3) fused with FC1 (36 -> n_hid) ----------
    # wfc_ref[i*3+j] is the (C2, n_hid) slice of the FC1 weight that pool
    # cell (i, j) multiplies (weight pre-permuted at trace time), so the
    # pooled tensor never needs to be materialized / flattened.
    facc = jnp.zeros((1, n_hid), f32)
    for i in range(3):
        for j in range(3):
            win = h2[hs[i]:he[i], ws[j]:we[j], :]          # (wh, ww, C2)
            m = jnp.max(jnp.max(win, axis=0), axis=0, keepdims=True)  # (1, C2)
            facc = facc + jnp.dot(m, wfc_ref[i * 3 + j],
                                  preferred_element_type=f32)
    f = _leaky(facc)                                       # (1, n_hid)

    # ---------------- FC2: n_hid -> n_out, + bias --------------------------
    y = jnp.dot(f, wout_ref[...], preferred_element_type=f32) + bout_ref[...]
    out_ref[0] = y                                         # (1, n_out)


# ------------------------------ forward wrapper ------------------------------

def custom_head_forward(x_nchw, params):
    N, C_in, H, W = x_nchw.shape
    C1 = params["w1"].shape[0]          # 64
    C2 = params["w2"].shape[0]          # 4
    n_hid = params["w_fc"].shape[0]     # 10
    n_out = params["w_out"].shape[0]    # 4

    # NCHW -> NHWC (channels on the lane axis) + spatial halo pad (trace-time,
    # single cheap XLA op on the tiny input).
    x = jnp.transpose(x_nchw, (0, 2, 3, 1)).astype(jnp.float32)
    xpad = jnp.pad(x, ((0, 0), (1, 1), (1, 1), (0, 0)))

    # Conv weights as 9 taps of (C_in, C_out): tap k = ky*3+kx -> w[:, :, ky, kx].T
    w1_r = jnp.transpose(params["w1"], (2, 3, 1, 0)).reshape(9, C_in, C1)
    w2_r = jnp.transpose(params["w2"], (2, 3, 1, 0)).reshape(9, C1, C2)
    # FC1 weight re-ordered so pool cell (i, j) owns a contiguous (C2, n_hid)
    # slice; this reproduces PyTorch's channel-major flatten of the NCHW
    # pooled map without any in-kernel transpose.
    wfc_r = jnp.transpose(params["w_fc"].reshape(n_hid, C2, 3, 3),
                          (2, 3, 1, 0)).reshape(9, C2, n_hid)
    wout_t = params["w_out"].T                              # (n_hid, n_out)
    bout = params["b_out"].reshape(1, n_out)                # (1, n_out)

    hs, he = _pool_bounds(H, 3)
    ws, we = _pool_bounds(W, 3)

    kern = functools.partial(_custom_head_kernel, H=H, W=W, C_in=C_in, C1=C1,
                             C2=C2, n_hid=n_hid, hs=hs, he=he, ws=ws, we=we)

    out = pl.pallas_call(
        kern,
        out_shape=jax.ShapeDtypeStruct((N, 1, n_out), jnp.float32),
        grid=(N,),
        in_specs=[
            # per-batch halo tile
            pl.BlockSpec((1, H + 2, W + 2, C_in), lambda b: (b, 0, 0, 0)),
            # resident weight blocks (constant index maps -> stay in VMEM)
            pl.BlockSpec((9, C_in, C1), lambda b: (0, 0, 0)),
            pl.BlockSpec((9, C1, C2), lambda b: (0, 0, 0)),
            pl.BlockSpec((9, C2, n_hid), lambda b: (0, 0, 0)),
            pl.BlockSpec((n_hid, n_out), lambda b: (0, 0)),
            pl.BlockSpec((1, n_out), lambda b: (0, 0)),
        ],
        out_specs=pl.BlockSpec((1, 1, n_out), lambda b: (b, 0, 0)),
        scratch_shapes=[pltpu.VMEM((H + 2, W + 2, C1), jnp.float32)],
        compiler_params=pltpu.CompilerParams(
            dimension_semantics=("parallel",)),
    )(xpad, w1_r, w2_r, wfc_r, wout_t, bout)
    return out.reshape(N, n_out)


# ------------------------------ pure-JAX reference ---------------------------

def ref_forward(x_nchw, params):
    dn = ("NCHW", "OIHW", "NCHW")
    y = _leaky(jax.lax.conv_general_dilated(x_nchw, params["w1"], (1, 1),
                                            ((1, 1), (1, 1)),
                                            dimension_numbers=dn))
    y = _leaky(jax.lax.conv_general_dilated(y, params["w2"], (1, 1),
                                            ((1, 1), (1, 1)),
                                            dimension_numbers=dn))
    N, C, H, W = y.shape
    hs, he = _pool_bounds(H, 3)
    ws, we = _pool_bounds(W, 3)
    pooled = jnp.stack(
        [jnp.stack([jnp.max(y[:, :, hs[i]:he[i], ws[j]:we[j]], axis=(2, 3))
                    for j in range(3)], axis=-1)
         for i in range(3)], axis=-2)                       # (N, C, 3, 3)
    flat = pooled.reshape(N, -1)
    f = _leaky(flat @ params["w_fc"].T)
    return f @ params["w_out"].T + params["b_out"]


# ----------------------------------- main ------------------------------------

if __name__ == "__main__":
    key = jax.random.PRNGKey(0)
    kx, k1, k2, k3, k4, k5 = jax.random.split(key, 6)

    N, C_in, H, W = 2, 4, 16, 16
    x = jax.random.normal(kx, (N, C_in, H, W), dtype=jnp.float32)

    params = {
        "w1": jax.random.normal(k1, (64, C_in, 3, 3), dtype=jnp.float32) * 0.1,
        "w2": jax.random.normal(k2, (4, 64, 3, 3), dtype=jnp.float32) * 0.1,
        "w_fc": jax.random.normal(k3, (10, 36), dtype=jnp.float32) * 0.1,
        "w_out": jax.random.normal(k4, (4, 10), dtype=jnp.float32) * 0.1,
        "b_out": jax.random.normal(k5, (4,), dtype=jnp.float32) * 0.1,
    }

    fwd = jax.jit(custom_head_forward)
    out = jax.block_until_ready(fwd(x, params))
    ref = jax.block_until_ready(ref_forward(x, params))

    assert out.shape == (N, 4), out.shape
    assert jnp.allclose(out, ref, rtol=1e-4, atol=1e-4), (
        f"max abs err {jnp.max(jnp.abs(out - ref))}")
    print("KERNEL_OK")
</pallas_src>

<mosaic_0001>
module attributes {stable_mosaic.version = 11 : i64} {
  func.func @_custom_head_kernel(%arg0: i32, %arg1: memref<1x18x18x4xf32, #tpu.memory_space<vmem>>, %arg2: memref<9x4x64xf32, #tpu.memory_space<vmem>>, %arg3: memref<9x64x4xf32, #tpu.memory_space<vmem>>, %arg4: memref<9x4x10xf32, #tpu.memory_space<vmem>>, %arg5: memref<10x4xf32, #tpu.memory_space<vmem>>, %arg6: memref<1x4xf32, #tpu.memory_space<vmem>>, %arg7: memref<1x1x4xf32, #tpu.memory_space<vmem>>, %arg8: memref<18x18x64xf32, #tpu.memory_space<vmem>>) attributes {dimension_semantics = [#tpu.dimension_semantics<parallel>], iteration_bounds = array<i64: 2>, scalar_prefetch = 0 : i64, scratch_operands = 1 : i64, tpu.core_type = #tpu.core_type<tc>, window_params = [{transform_indices = @transform_0, window_bounds = array<i64: 1, 18, 18, 4>}, {pipeline_mode = #tpu.pipeline_mode<synchronous>, transform_indices = @transform_1, window_bounds = array<i64: 9, 4, 64>}, {pipeline_mode = #tpu.pipeline_mode<synchronous>, transform_indices = @transform_2, window_bounds = array<i64: 9, 64, 4>}, {pipeline_mode = #tpu.pipeline_mode<synchronous>, transform_indices = @transform_3, window_bounds = array<i64: 9, 4, 10>}, {pipeline_mode = #tpu.pipeline_mode<synchronous>, transform_indices = @transform_4, window_bounds = array<i64: 10, 4>}, {pipeline_mode = #tpu.pipeline_mode<synchronous>, transform_indices = @transform_5, window_bounds = array<i64: 1, 4>}, {transform_indices = @transform_6, window_bounds = array<i64: 1, 1, 4>}]} {
    %c0 = arith.constant 0 : index
    %c0_0 = arith.constant 0 : index
    %c0_1 = arith.constant 0 : index
    %c0_2 = arith.constant 0 : index
    %0 = vector.load %arg1[%c0, %c0_0, %c0_1, %c0_2] : memref<1x18x18x4xf32, #tpu.memory_space<vmem>>, vector<1x18x18x4xf32>
    %1 = vector.shape_cast %0 : vector<1x18x18x4xf32> to vector<18x18x4xf32>
    %cst = arith.constant 0.000000e+00 : f32
    %2 = vector.broadcast %cst : f32 to vector<256x64xf32>
    %3 = vector.extract_strided_slice %1 {offsets = [0, 0, 0], sizes = [16, 16, 4], strides = [1, 1, 1]} : vector<18x18x4xf32> to vector<16x16x4xf32>
    %4 = vector.shape_cast %3 : vector<16x16x4xf32> to vector<256x4xf32>
    %c0_3 = arith.constant 0 : index
    %c0_4 = arith.constant 0 : index
    %c0_5 = arith.constant 0 : index
    %5 = vector.load %arg2[%c0_3, %c0_4, %c0_5] : memref<9x4x64xf32, #tpu.memory_space<vmem>>, vector<1x4x64xf32>
    %6 = vector.shape_cast %5 : vector<1x4x64xf32> to vector<4x64xf32>
    %cst_6 = arith.constant dense<0.000000e+00> : vector<256x64xf32>
    %7 = tpu.matmul %4, %6, %cst_6 {dimension_numbers = #tpu.dot_dimension_numbers<[1], [0], [0], [1], [0, 0, 1, 1], [], []>} : vector<256x4xf32>, vector<4x64xf32>, vector<256x64xf32> -> vector<256x64xf32>
    %8 = arith.addf %2, %7 : vector<256x64xf32>
    %9 = vector.extract_strided_slice %1 {offsets = [0, 1, 0], sizes = [16, 16, 4], strides = [1, 1, 1]} : vector<18x18x4xf32> to vector<16x16x4xf32>
    %10 = vector.shape_cast %9 : vector<16x16x4xf32> to vector<256x4xf32>
    %c1 = arith.constant 1 : index
    %c0_7 = arith.constant 0 : index
    %c0_8 = arith.constant 0 : index
    %11 = vector.load %arg2[%c1, %c0_7, %c0_8] : memref<9x4x64xf32, #tpu.memory_space<vmem>>, vector<1x4x64xf32>
    %12 = vector.shape_cast %11 : vector<1x4x64xf32> to vector<4x64xf32>
    %cst_9 = arith.constant dense<0.000000e+00> : vector<256x64xf32>
    %13 = tpu.matmul %10, %12, %cst_9 {dimension_numbers = #tpu.dot_dimension_numbers<[1], [0], [0], [1], [0, 0, 1, 1], [], []>} : vector<256x4xf32>, vector<4x64xf32>, vector<256x64xf32> -> vector<256x64xf32>
    %14 = arith.addf %8, %13 : vector<256x64xf32>
    %15 = vector.extract_strided_slice %1 {offsets = [0, 2, 0], sizes = [16, 16, 4], strides = [1, 1, 1]} : vector<18x18x4xf32> to vector<16x16x4xf32>
    %16 = vector.shape_cast %15 : vector<16x16x4xf32> to vector<256x4xf32>
    %c2 = arith.constant 2 : index
    %c0_10 = arith.constant 0 : index
    %c0_11 = arith.constant 0 : index
    %17 = vector.load %arg2[%c2, %c0_10, %c0_11] : memref<9x4x64xf32, #tpu.memory_space<vmem>>, vector<1x4x64xf32>
    %18 = vector.shape_cast %17 : vector<1x4x64xf32> to vector<4x64xf32>
    %cst_12 = arith.constant dense<0.000000e+00> : vector<256x64xf32>
    %19 = tpu.matmul %16, %18, %cst_12 {dimension_numbers = #tpu.dot_dimension_numbers<[1], [0], [0], [1], [0, 0, 1, 1], [], []>} : vector<256x4xf32>, vector<4x64xf32>, vector<256x64xf32> -> vector<256x64xf32>
    %20 = arith.addf %14, %19 : vector<256x64xf32>
    %21 = vector.extract_strided_slice %1 {offsets = [1, 0, 0], sizes = [16, 16, 4], strides = [1, 1, 1]} : vector<18x18x4xf32> to vector<16x16x4xf32>
    %22 = vector.shape_cast %21 : vector<16x16x4xf32> to vector<256x4xf32>
    %c3 = arith.constant 3 : index
    %c0_13 = arith.constant 0 : index
    %c0_14 = arith.constant 0 : index
    %23 = vector.load %arg2[%c3, %c0_13, %c0_14] : memref<9x4x64xf32, #tpu.memory_space<vmem>>, vector<1x4x64xf32>
    %24 = vector.shape_cast %23 : vector<1x4x64xf32> to vector<4x64xf32>
    %cst_15 = arith.constant dense<0.000000e+00> : vector<256x64xf32>
    %25 = tpu.matmul %22, %24, %cst_15 {dimension_numbers = #tpu.dot_dimension_numbers<[1], [0], [0], [1], [0, 0, 1, 1], [], []>} : vector<256x4xf32>, vector<4x64xf32>, vector<256x64xf32> -> vector<256x64xf32>
    %26 = arith.addf %20, %25 : vector<256x64xf32>
    %27 = vector.extract_strided_slice %1 {offsets = [1, 1, 0], sizes = [16, 16, 4], strides = [1, 1, 1]} : vector<18x18x4xf32> to vector<16x16x4xf32>
    %28 = vector.shape_cast %27 : vector<16x16x4xf32> to vector<256x4xf32>
    %c4 = arith.constant 4 : index
    %c0_16 = arith.constant 0 : index
    %c0_17 = arith.constant 0 : index
    %29 = vector.load %arg2[%c4, %c0_16, %c0_17] : memref<9x4x64xf32, #tpu.memory_space<vmem>>, vector<1x4x64xf32>
    %30 = vector.shape_cast %29 : vector<1x4x64xf32> to vector<4x64xf32>
    %cst_18 = arith.constant dense<0.000000e+00> : vector<256x64xf32>
    %31 = tpu.matmul %28, %30, %cst_18 {dimension_numbers = #tpu.dot_dimension_numbers<[1], [0], [0], [1], [0, 0, 1, 1], [], []>} : vector<256x4xf32>, vector<4x64xf32>, vector<256x64xf32> -> vector<256x64xf32>
    %32 = arith.addf %26, %31 : vector<256x64xf32>
    %33 = vector.extract_strided_slice %1 {offsets = [1, 2, 0], sizes = [16, 16, 4], strides = [1, 1, 1]} : vector<18x18x4xf32> to vector<16x16x4xf32>
    %34 = vector.shape_cast %33 : vector<16x16x4xf32> to vector<256x4xf32>
    %c5 = arith.constant 5 : index
    %c0_19 = arith.constant 0 : index
    %c0_20 = arith.constant 0 : index
    %35 = vector.load %arg2[%c5, %c0_19, %c0_20] : memref<9x4x64xf32, #tpu.memory_space<vmem>>, vector<1x4x64xf32>
    %36 = vector.shape_cast %35 : vector<1x4x64xf32> to vector<4x64xf32>
    %cst_21 = arith.constant dense<0.000000e+00> : vector<256x64xf32>
    %37 = tpu.matmul %34, %36, %cst_21 {dimension_numbers = #tpu.dot_dimension_numbers<[1], [0], [0], [1], [0, 0, 1, 1], [], []>} : vector<256x4xf32>, vector<4x64xf32>, vector<256x64xf32> -> vector<256x64xf32>
    %38 = arith.addf %32, %37 : vector<256x64xf32>
    %39 = vector.extract_strided_slice %1 {offsets = [2, 0, 0], sizes = [16, 16, 4], strides = [1, 1, 1]} : vector<18x18x4xf32> to vector<16x16x4xf32>
    %40 = vector.shape_cast %39 : vector<16x16x4xf32> to vector<256x4xf32>
    %c6 = arith.constant 6 : index
    %c0_22 = arith.constant 0 : index
    %c0_23 = arith.constant 0 : index
    %41 = vector.load %arg2[%c6, %c0_22, %c0_23] : memref<9x4x64xf32, #tpu.memory_space<vmem>>, vector<1x4x64xf32>
    %42 = vector.shape_cast %41 : vector<1x4x64xf32> to vector<4x64xf32>
    %cst_24 = arith.constant dense<0.000000e+00> : vector<256x64xf32>
    %43 = tpu.matmul %40, %42, %cst_24 {dimension_numbers = #tpu.dot_dimension_numbers<[1], [0], [0], [1], [0, 0, 1, 1], [], []>} : vector<256x4xf32>, vector<4x64xf32>, vector<256x64xf32> -> vector<256x64xf32>
    %44 = arith.addf %38, %43 : vector<256x64xf32>
    %45 = vector.extract_strided_slice %1 {offsets = [2, 1, 0], sizes = [16, 16, 4], strides = [1, 1, 1]} : vector<18x18x4xf32> to vector<16x16x4xf32>
    %46 = vector.shape_cast %45 : vector<16x16x4xf32> to vector<256x4xf32>
    %c7 = arith.constant 7 : index
    %c0_25 = arith.constant 0 : index
    %c0_26 = arith.constant 0 : index
    %47 = vector.load %arg2[%c7, %c0_25, %c0_26] : memref<9x4x64xf32, #tpu.memory_space<vmem>>, vector<1x4x64xf32>
    %48 = vector.shape_cast %47 : vector<1x4x64xf32> to vector<4x64xf32>
    %cst_27 = arith.constant dense<0.000000e+00> : vector<256x64xf32>
    %49 = tpu.matmul %46, %48, %cst_27 {dimension_numbers = #tpu.dot_dimension_numbers<[1], [0], [0], [1], [0, 0, 1, 1], [], []>} : vector<256x4xf32>, vector<4x64xf32>, vector<256x64xf32> -> vector<256x64xf32>
    %50 = arith.addf %44, %49 : vector<256x64xf32>
    %51 = vector.extract_strided_slice %1 {offsets = [2, 2, 0], sizes = [16, 16, 4], strides = [1, 1, 1]} : vector<18x18x4xf32> to vector<16x16x4xf32>
    %52 = vector.shape_cast %51 : vector<16x16x4xf32> to vector<256x4xf32>
    %c8 = arith.constant 8 : index
    %c0_28 = arith.constant 0 : index
    %c0_29 = arith.constant 0 : index
    %53 = vector.load %arg2[%c8, %c0_28, %c0_29] : memref<9x4x64xf32, #tpu.memory_space<vmem>>, vector<1x4x64xf32>
    %54 = vector.shape_cast %53 : vector<1x4x64xf32> to vector<4x64xf32>
    %cst_30 = arith.constant dense<0.000000e+00> : vector<256x64xf32>
    %55 = tpu.matmul %52, %54, %cst_30 {dimension_numbers = #tpu.dot_dimension_numbers<[1], [0], [0], [1], [0, 0, 1, 1], [], []>} : vector<256x4xf32>, vector<4x64xf32>, vector<256x64xf32> -> vector<256x64xf32>
    %56 = arith.addf %50, %55 : vector<256x64xf32>
    %cst_31 = arith.constant 0.000000e+00 : f32
    %57 = vector.broadcast %cst_31 : f32 to vector<256x64xf32>
    %58 = arith.cmpf ogt, %56, %57 : vector<256x64xf32>
    %cst_32 = arith.constant 0.00999999977 : f32
    %59 = vector.broadcast %cst_32 : f32 to vector<256x64xf32>
    %60 = arith.mulf %59, %56 : vector<256x64xf32>
    %61 = arith.select %58, %56, %60 : vector<256x64xi1>, vector<256x64xf32>
    %cst_33 = arith.constant 0.000000e+00 : f32
    %62 = vector.broadcast %cst_33 : f32 to vector<18x18x64xf32>
    %c0_34 = arith.constant 0 : index
    %c0_35 = arith.constant 0 : index
    %c0_36 = arith.constant 0 : index
    %63 = vector.load %arg8[%c0_34, %c0_35, %c0_36] : memref<18x18x64xf32, #tpu.memory_space<vmem>>, vector<18x18x64xf32>
    tpu.vector_store %arg8[%c0_34, %c0_35, %c0_36], %62 {strides = array<i32>} : memref<18x18x64xf32, #tpu.memory_space<vmem>>, vector<18x18x64xf32>,
    %64 = vector.shape_cast %61 : vector<256x64xf32> to vector<16x16x64xf32>
    %c1_37 = arith.constant 1 : index
    %c1_38 = arith.constant 1 : index
    %c0_39 = arith.constant 0 : index
    %65 = vector.load %arg8[%c1_37, %c1_38, %c0_39] : memref<18x18x64xf32, #tpu.memory_space<vmem>>, vector<16x16x64xf32>
    tpu.vector_store %arg8[%c1_37, %c1_38, %c0_39], %64 {strides = array<i32>} : memref<18x18x64xf32, #tpu.memory_space<vmem>>, vector<16x16x64xf32>,
    %cst_40 = arith.constant 0.000000e+00 : f32
    %66 = vector.broadcast %cst_40 : f32 to vector<256x4xf32>
    %c0_41 = arith.constant 0 : index
    %c0_42 = arith.constant 0 : index
    %c0_43 = arith.constant 0 : index
    %67 = vector.load %arg8[%c0_41, %c0_42, %c0_43] : memref<18x18x64xf32, #tpu.memory_space<vmem>>, vector<16x16x64xf32>
    %68 = vector.shape_cast %67 : vector<16x16x64xf32> to vector<256x64xf32>
    %c0_44 = arith.constant 0 : index
    %c0_45 = arith.constant 0 : index
    %c0_46 = arith.constant 0 : index
    %69 = vector.load %arg3[%c0_44, %c0_45, %c0_46] : memref<9x64x4xf32, #tpu.memory_space<vmem>>, vector<1x64x4xf32>
    %70 = vector.shape_cast %69 : vector<1x64x4xf32> to vector<64x4xf32>
    %cst_47 = arith.constant dense<0.000000e+00> : vector<256x4xf32>
    %71 = tpu.matmul %68, %70, %cst_47 {dimension_numbers = #tpu.dot_dimension_numbers<[1], [0], [0], [1], [0, 0, 1, 1], [], []>} : vector<256x64xf32>, vector<64x4xf32>, vector<256x4xf32> -> vector<256x4xf32>
    %72 = arith.addf %66, %71 : vector<256x4xf32>
    %c0_48 = arith.constant 0 : index
    %c1_49 = arith.constant 1 : index
    %c0_50 = arith.constant 0 : index
    %73 = vector.load %arg8[%c0_48, %c1_49, %c0_50] : memref<18x18x64xf32, #tpu.memory_space<vmem>>, vector<16x16x64xf32>
    %74 = vector.shape_cast %73 : vector<16x16x64xf32> to vector<256x64xf32>
    %c1_51 = arith.constant 1 : index
    %c0_52 = arith.constant 0 : index
    %c0_53 = arith.constant 0 : index
    %75 = vector.load %arg3[%c1_51, %c0_52, %c0_53] : memref<9x64x4xf32, #tpu.memory_space<vmem>>, vector<1x64x4xf32>
    %76 = vector.shape_cast %75 : vector<1x64x4xf32> to vector<64x4xf32>
    %cst_54 = arith.constant dense<0.000000e+00> : vector<256x4xf32>
    %77 = tpu.matmul %74, %76, %cst_54 {dimension_numbers = #tpu.dot_dimension_numbers<[1], [0], [0], [1], [0, 0, 1, 1], [], []>} : vector<256x64xf32>, vector<64x4xf32>, vector<256x4xf32> -> vector<256x4xf32>
    %78 = arith.addf %72, %77 : vector<256x4xf32>
    %c0_55 = arith.constant 0 : index
    %c2_56 = arith.constant 2 : index
    %c0_57 = arith.constant 0 : index
    %79 = vector.load %arg8[%c0_55, %c2_56, %c0_57] : memref<18x18x64xf32, #tpu.memory_space<vmem>>, vector<16x16x64xf32>
    %80 = vector.shape_cast %79 : vector<16x16x64xf32> to vector<256x64xf32>
    %c2_58 = arith.constant 2 : index
    %c0_59 = arith.constant 0 : index
    %c0_60 = arith.constant 0 : index
    %81 = vector.load %arg3[%c2_58, %c0_59, %c0_60] : memref<9x64x4xf32, #tpu.memory_space<vmem>>, vector<1x64x4xf32>
    %82 = vector.shape_cast %81 : vector<1x64x4xf32> to vector<64x4xf32>
    %cst_61 = arith.constant dense<0.000000e+00> : vector<256x4xf32>
    %83 = tpu.matmul %80, %82, %cst_61 {dimension_numbers = #tpu.dot_dimension_numbers<[1], [0], [0], [1], [0, 0, 1, 1], [], []>} : vector<256x64xf32>, vector<64x4xf32>, vector<256x4xf32> -> vector<256x4xf32>
    %84 = arith.addf %78, %83 : vector<256x4xf32>
    %c1_62 = arith.constant 1 : index
    %c0_63 = arith.constant 0 : index
    %c0_64 = arith.constant 0 : index
    %85 = vector.load %arg8[%c1_62, %c0_63, %c0_64] : memref<18x18x64xf32, #tpu.memory_space<vmem>>, vector<16x16x64xf32>
    %86 = vector.shape_cast %85 : vector<16x16x64xf32> to vector<256x64xf32>
    %c3_65 = arith.constant 3 : index
    %c0_66 = arith.constant 0 : index
    %c0_67 = arith.constant 0 : index
    %87 = vector.load %arg3[%c3_65, %c0_66, %c0_67] : memref<9x64x4xf32, #tpu.memory_space<vmem>>, vector<1x64x4xf32>
    %88 = vector.shape_cast %87 : vector<1x64x4xf32> to vector<64x4xf32>
    %cst_68 = arith.constant dense<0.000000e+00> : vector<256x4xf32>
    %89 = tpu.matmul %86, %88, %cst_68 {dimension_numbers = #tpu.dot_dimension_numbers<[1], [0], [0], [1], [0, 0, 1, 1], [], []>} : vector<256x64xf32>, vector<64x4xf32>, vector<256x4xf32> -> vector<256x4xf32>
    %90 = arith.addf %84, %89 : vector<256x4xf32>
    %c1_69 = arith.constant 1 : index
    %c1_70 = arith.constant 1 : index
    %c0_71 = arith.constant 0 : index
    %91 = vector.load %arg8[%c1_69, %c1_70, %c0_71] : memref<18x18x64xf32, #tpu.memory_space<vmem>>, vector<16x16x64xf32>
    %92 = vector.shape_cast %91 : vector<16x16x64xf32> to vector<256x64xf32>
    %c4_72 = arith.constant 4 : index
    %c0_73 = arith.constant 0 : index
    %c0_74 = arith.constant 0 : index
    %93 = vector.load %arg3[%c4_72, %c0_73, %c0_74] : memref<9x64x4xf32, #tpu.memory_space<vmem>>, vector<1x64x4xf32>
    %94 = vector.shape_cast %93 : vector<1x64x4xf32> to vector<64x4xf32>
    %cst_75 = arith.constant dense<0.000000e+00> : vector<256x4xf32>
    %95 = tpu.matmul %92, %94, %cst_75 {dimension_numbers = #tpu.dot_dimension_numbers<[1], [0], [0], [1], [0, 0, 1, 1], [], []>} : vector<256x64xf32>, vector<64x4xf32>, vector<256x4xf32> -> vector<256x4xf32>
    %96 = arith.addf %90, %95 : vector<256x4xf32>
    %c1_76 = arith.constant 1 : index
    %c2_77 = arith.constant 2 : index
    %c0_78 = arith.constant 0 : index
    %97 = vector.load %arg8[%c1_76, %c2_77, %c0_78] : memref<18x18x64xf32, #tpu.memory_space<vmem>>, vector<16x16x64xf32>
    %98 = vector.shape_cast %97 : vector<16x16x64xf32> to vector<256x64xf32>
    %c5_79 = arith.constant 5 : index
    %c0_80 = arith.constant 0 : index
    %c0_81 = arith.constant 0 : index
    %99 = vector.load %arg3[%c5_79, %c0_80, %c0_81] : memref<9x64x4xf32, #tpu.memory_space<vmem>>, vector<1x64x4xf32>
    %100 = vector.shape_cast %99 : vector<1x64x4xf32> to vector<64x4xf32>
    %cst_82 = arith.constant dense<0.000000e+00> : vector<256x4xf32>
    %101 = tpu.matmul %98, %100, %cst_82 {dimension_numbers = #tpu.dot_dimension_numbers<[1], [0], [0], [1], [0, 0, 1, 1], [], []>} : vector<256x64xf32>, vector<64x4xf32>, vector<256x4xf32> -> vector<256x4xf32>
    %102 = arith.addf %96, %101 : vector<256x4xf32>
    %c2_83 = arith.constant 2 : index
    %c0_84 = arith.constant 0 : index
    %c0_85 = arith.constant 0 : index
    %103 = vector.load %arg8[%c2_83, %c0_84, %c0_85] : memref<18x18x64xf32, #tpu.memory_space<vmem>>, vector<16x16x64xf32>
    %104 = vector.shape_cast %103 : vector<16x16x64xf32> to vector<256x64xf32>
    %c6_86 = arith.constant 6 : index
    %c0_87 = arith.constant 0 : index
    %c0_88 = arith.constant 0 : index
    %105 = vector.load %arg3[%c6_86, %c0_87, %c0_88] : memref<9x64x4xf32, #tpu.memory_space<vmem>>, vector<1x64x4xf32>
    %106 = vector.shape_cast %105 : vector<1x64x4xf32> to vector<64x4xf32>
    %cst_89 = arith.constant dense<0.000000e+00> : vector<256x4xf32>
    %107 = tpu.matmul %104, %106, %cst_89 {dimension_numbers = #tpu.dot_dimension_numbers<[1], [0], [0], [1], [0, 0, 1, 1], [], []>} : vector<256x64xf32>, vector<64x4xf32>, vector<256x4xf32> -> vector<256x4xf32>
    %108 = arith.addf %102, %107 : vector<256x4xf32>
    %c2_90 = arith.constant 2 : index
    %c1_91 = arith.constant 1 : index
    %c0_92 = arith.constant 0 : index
    %109 = vector.load %arg8[%c2_90, %c1_91, %c0_92] : memref<18x18x64xf32, #tpu.memory_space<vmem>>, vector<16x16x64xf32>
    %110 = vector.shape_cast %109 : vector<16x16x64xf32> to vector<256x64xf32>
    %c7_93 = arith.constant 7 : index
    %c0_94 = arith.constant 0 : index
    %c0_95 = arith.constant 0 : index
    %111 = vector.load %arg3[%c7_93, %c0_94, %c0_95] : memref<9x64x4xf32, #tpu.memory_space<vmem>>, vector<1x64x4xf32>
    %112 = vector.shape_cast %111 : vector<1x64x4xf32> to vector<64x4xf32>
    %cst_96 = arith.constant dense<0.000000e+00> : vector<256x4xf32>
    %113 = tpu.matmul %110, %112, %cst_96 {dimension_numbers = #tpu.dot_dimension_numbers<[1], [0], [0], [1], [0, 0, 1, 1], [], []>} : vector<256x64xf32>, vector<64x4xf32>, vector<256x4xf32> -> vector<256x4xf32>
    %114 = arith.addf %108, %113 : vector<256x4xf32>
    %c2_97 = arith.constant 2 : index
    %c2_98 = arith.constant 2 : index
    %c0_99 = arith.constant 0 : index
    %115 = vector.load %arg8[%c2_97, %c2_98, %c0_99] : memref<18x18x64xf32, #tpu.memory_space<vmem>>, vector<16x16x64xf32>
    %116 = vector.shape_cast %115 : vector<16x16x64xf32> to vector<256x64xf32>
    %c8_100 = arith.constant 8 : index
    %c0_101 = arith.constant 0 : index
    %c0_102 = arith.constant 0 : index
    %117 = vector.load %arg3[%c8_100, %c0_101, %c0_102] : memref<9x64x4xf32, #tpu.memory_space<vmem>>, vector<1x64x4xf32>
    %118 = vector.shape_cast %117 : vector<1x64x4xf32> to vector<64x4xf32>
    %cst_103 = arith.constant dense<0.000000e+00> : vector<256x4xf32>
    %119 = tpu.matmul %116, %118, %cst_103 {dimension_numbers = #tpu.dot_dimension_numbers<[1], [0], [0], [1], [0, 0, 1, 1], [], []>} : vector<256x64xf32>, vector<64x4xf32>, vector<256x4xf32> -> vector<256x4xf32>
    %120 = arith.addf %114, %119 : vector<256x4xf32>
    %cst_104 = arith.constant 0.000000e+00 : f32
    %121 = vector.broadcast %cst_104 : f32 to vector<256x4xf32>
    %122 = arith.cmpf ogt, %120, %121 : vector<256x4xf32>
    %cst_105 = arith.constant 0.00999999977 : f32
    %123 = vector.broadcast %cst_105 : f32 to vector<256x4xf32>
    %124 = arith.mulf %123, %120 : vector<256x4xf32>
    %125 = arith.select %122, %120, %124 : vector<256x4xi1>, vector<256x4xf32>
    %126 = vector.shape_cast %125 : vector<256x4xf32> to vector<16x16x4xf32>
    %cst_106 = arith.constant 0.000000e+00 : f32
    %127 = vector.broadcast %cst_106 : f32 to vector<1x10xf32>
    %128 = vector.extract_strided_slice %126 {offsets = [0, 0, 0], sizes = [6, 6, 4], strides = [1, 1, 1]} : vector<16x16x4xf32> to vector<6x6x4xf32>
    %cst_107 = arith.constant dense<0xFF800000> : vector<6x4xf32>
    %129 = vector.multi_reduction <maximumf>, %128, %cst_107 [0] : vector<6x6x4xf32> to vector<6x4xf32>
    %cst_108 = arith.constant dense<0xFF800000> : vector<4xf32>
    %130 = vector.multi_reduction <maximumf>, %129, %cst_108 [0] : vector<6x4xf32> to vector<4xf32>
    %131 = vector.shape_cast %130 : vector<4xf32> to vector<1x4xf32>
    %c0_109 = arith.constant 0 : index
    %c0_110 = arith.constant 0 : index
    %c0_111 = arith.constant 0 : index
    %132 = vector.load %arg4[%c0_109, %c0_110, %c0_111] : memref<9x4x10xf32, #tpu.memory_space<vmem>>, vector<1x4x10xf32>
    %133 = vector.shape_cast %132 : vector<1x4x10xf32> to vector<4x10xf32>
    %cst_112 = arith.constant dense<0.000000e+00> : vector<1x10xf32>
    %134 = tpu.matmul %131, %133, %cst_112 {dimension_numbers = #tpu.dot_dimension_numbers<[1], [0], [0], [1], [0, 0, 1, 1], [], []>} : vector<1x4xf32>, vector<4x10xf32>, vector<1x10xf32> -> vector<1x10xf32>
    %135 = arith.addf %127, %134 : vector<1x10xf32>
    %136 = vector.extract_strided_slice %126 {offsets = [0, 5, 0], sizes = [6, 6, 4], strides = [1, 1, 1]} : vector<16x16x4xf32> to vector<6x6x4xf32>
    %cst_113 = arith.constant dense<0xFF800000> : vector<6x4xf32>
    %137 = vector.multi_reduction <maximumf>, %136, %cst_113 [0] : vector<6x6x4xf32> to vector<6x4xf32>
    %cst_114 = arith.constant dense<0xFF800000> : vector<4xf32>
    %138 = vector.multi_reduction <maximumf>, %137, %cst_114 [0] : vector<6x4xf32> to vector<4xf32>
    %139 = vector.shape_cast %138 : vector<4xf32> to vector<1x4xf32>
    %c1_115 = arith.constant 1 : index
    %c0_116 = arith.constant 0 : index
    %c0_117 = arith.constant 0 : index
    %140 = vector.load %arg4[%c1_115, %c0_116, %c0_117] : memref<9x4x10xf32, #tpu.memory_space<vmem>>, vector<1x4x10xf32>
    %141 = vector.shape_cast %140 : vector<1x4x10xf32> to vector<4x10xf32>
    %cst_118 = arith.constant dense<0.000000e+00> : vector<1x10xf32>
    %142 = tpu.matmul %139, %141, %cst_118 {dimension_numbers = #tpu.dot_dimension_numbers<[1], [0], [0], [1], [0, 0, 1, 1], [], []>} : vector<1x4xf32>, vector<4x10xf32>, vector<1x10xf32> -> vector<1x10xf32>
    %143 = arith.addf %135, %142 : vector<1x10xf32>
    %144 = vector.extract_strided_slice %126 {offsets = [0, 10, 0], sizes = [6, 6, 4], strides = [1, 1, 1]} : vector<16x16x4xf32> to vector<6x6x4xf32>
    %cst_119 = arith.constant dense<0xFF800000> : vector<6x4xf32>
    %145 = vector.multi_reduction <maximumf>, %144, %cst_119 [0] : vector<6x6x4xf32> to vector<6x4xf32>
    %cst_120 = arith.constant dense<0xFF800000> : vector<4xf32>
    %146 = vector.multi_reduction <maximumf>, %145, %cst_120 [0] : vector<6x4xf32> to vector<4xf32>
    %147 = vector.shape_cast %146 : vector<4xf32> to vector<1x4xf32>
    %c2_121 = arith.constant 2 : index
    %c0_122 = arith.constant 0 : index
    %c0_123 = arith.constant 0 : index
    %148 = vector.load %arg4[%c2_121, %c0_122, %c0_123] : memref<9x4x10xf32, #tpu.memory_space<vmem>>, vector<1x4x10xf32>
    %149 = vector.shape_cast %148 : vector<1x4x10xf32> to vector<4x10xf32>
    %cst_124 = arith.constant dense<0.000000e+00> : vector<1x10xf32>
    %150 = tpu.matmul %147, %149, %cst_124 {dimension_numbers = #tpu.dot_dimension_numbers<[1], [0], [0], [1], [0, 0, 1, 1], [], []>} : vector<1x4xf32>, vector<4x10xf32>, vector<1x10xf32> -> vector<1x10xf32>
    %151 = arith.addf %143, %150 : vector<1x10xf32>
    %152 = vector.extract_strided_slice %126 {offsets = [5, 0, 0], sizes = [6, 6, 4], strides = [1, 1, 1]} : vector<16x16x4xf32> to vector<6x6x4xf32>
    %cst_125 = arith.constant dense<0xFF800000> : vector<6x4xf32>
    %153 = vector.multi_reduction <maximumf>, %152, %cst_125 [0] : vector<6x6x4xf32> to vector<6x4xf32>
    %cst_126 = arith.constant dense<0xFF800000> : vector<4xf32>
    %154 = vector.multi_reduction <maximumf>, %153, %cst_126 [0] : vector<6x4xf32> to vector<4xf32>
    %155 = vector.shape_cast %154 : vector<4xf32> to vector<1x4xf32>
    %c3_127 = arith.constant 3 : index
    %c0_128 = arith.constant 0 : index
    %c0_129 = arith.constant 0 : index
    %156 = vector.load %arg4[%c3_127, %c0_128, %c0_129] : memref<9x4x10xf32, #tpu.memory_space<vmem>>, vector<1x4x10xf32>
    %157 = vector.shape_cast %156 : vector<1x4x10xf32> to vector<4x10xf32>
    %cst_130 = arith.constant dense<0.000000e+00> : vector<1x10xf32>
    %158 = tpu.matmul %155, %157, %cst_130 {dimension_numbers = #tpu.dot_dimension_numbers<[1], [0], [0], [1], [0, 0, 1, 1], [], []>} : vector<1x4xf32>, vector<4x10xf32>, vector<1x10xf32> -> vector<1x10xf32>
    %159 = arith.addf %151, %158 : vector<1x10xf32>
    %160 = vector.extract_strided_slice %126 {offsets = [5, 5, 0], sizes = [6, 6, 4], strides = [1, 1, 1]} : vector<16x16x4xf32> to vector<6x6x4xf32>
    %cst_131 = arith.constant dense<0xFF800000> : vector<6x4xf32>
    %161 = vector.multi_reduction <maximumf>, %160, %cst_131 [0] : vector<6x6x4xf32> to vector<6x4xf32>
    %cst_132 = arith.constant dense<0xFF800000> : vector<4xf32>
    %162 = vector.multi_reduction <maximumf>, %161, %cst_132 [0] : vector<6x4xf32> to vector<4xf32>
    %163 = vector.shape_cast %162 : vector<4xf32> to vector<1x4xf32>
    %c4_133 = arith.constant 4 : index
    %c0_134 = arith.constant 0 : index
    %c0_135 = arith.constant 0 : index
    %164 = vector.load %arg4[%c4_133, %c0_134, %c0_135] : memref<9x4x10xf32, #tpu.memory_space<vmem>>, vector<1x4x10xf32>
    %165 = vector.shape_cast %164 : vector<1x4x10xf32> to vector<4x10xf32>
    %cst_136 = arith.constant dense<0.000000e+00> : vector<1x10xf32>
    %166 = tpu.matmul %163, %165, %cst_136 {dimension_numbers = #tpu.dot_dimension_numbers<[1], [0], [0], [1], [0, 0, 1, 1], [], []>} : vector<1x4xf32>, vector<4x10xf32>, vector<1x10xf32> -> vector<1x10xf32>
    %167 = arith.addf %159, %166 : vector<1x10xf32>
    %168 = vector.extract_strided_slice %126 {offsets = [5, 10, 0], sizes = [6, 6, 4], strides = [1, 1, 1]} : vector<16x16x4xf32> to vector<6x6x4xf32>
    %cst_137 = arith.constant dense<0xFF800000> : vector<6x4xf32>
    %169 = vector.multi_reduction <maximumf>, %168, %cst_137 [0] : vector<6x6x4xf32> to vector<6x4xf32>
    %cst_138 = arith.constant dense<0xFF800000> : vector<4xf32>
    %170 = vector.multi_reduction <maximumf>, %169, %cst_138 [0] : vector<6x4xf32> to vector<4xf32>
    %171 = vector.shape_cast %170 : vector<4xf32> to vector<1x4xf32>
    %c5_139 = arith.constant 5 : index
    %c0_140 = arith.constant 0 : index
    %c0_141 = arith.constant 0 : index
    %172 = vector.load %arg4[%c5_139, %c0_140, %c0_141] : memref<9x4x10xf32, #tpu.memory_space<vmem>>, vector<1x4x10xf32>
    %173 = vector.shape_cast %172 : vector<1x4x10xf32> to vector<4x10xf32>
    %cst_142 = arith.constant dense<0.000000e+00> : vector<1x10xf32>
    %174 = tpu.matmul %171, %173, %cst_142 {dimension_numbers = #tpu.dot_dimension_numbers<[1], [0], [0], [1], [0, 0, 1, 1], [], []>} : vector<1x4xf32>, vector<4x10xf32>, vector<1x10xf32> -> vector<1x10xf32>
    %175 = arith.addf %167, %174 : vector<1x10xf32>
    %176 = vector.extract_strided_slice %126 {offsets = [10, 0, 0], sizes = [6, 6, 4], strides = [1, 1, 1]} : vector<16x16x4xf32> to vector<6x6x4xf32>
    %cst_143 = arith.constant dense<0xFF800000> : vector<6x4xf32>
    %177 = vector.multi_reduction <maximumf>, %176, %cst_143 [0] : vector<6x6x4xf32> to vector<6x4xf32>
    %cst_144 = arith.constant dense<0xFF800000> : vector<4xf32>
    %178 = vector.multi_reduction <maximumf>, %177, %cst_144 [0] : vector<6x4xf32> to vector<4xf32>
    %179 = vector.shape_cast %178 : vector<4xf32> to vector<1x4xf32>
    %c6_145 = arith.constant 6 : index
    %c0_146 = arith.constant 0 : index
    %c0_147 = arith.constant 0 : index
    %180 = vector.load %arg4[%c6_145, %c0_146, %c0_147] : memref<9x4x10xf32, #tpu.memory_space<vmem>>, vector<1x4x10xf32>
    %181 = vector.shape_cast %180 : vector<1x4x10xf32> to vector<4x10xf32>
    %cst_148 = arith.constant dense<0.000000e+00> : vector<1x10xf32>
    %182 = tpu.matmul %179, %181, %cst_148 {dimension_numbers = #tpu.dot_dimension_numbers<[1], [0], [0], [1], [0, 0, 1, 1], [], []>} : vector<1x4xf32>, vector<4x10xf32>, vector<1x10xf32> -> vector<1x10xf32>
    %183 = arith.addf %175, %182 : vector<1x10xf32>
    %184 = vector.extract_strided_slice %126 {offsets = [10, 5, 0], sizes = [6, 6, 4], strides = [1, 1, 1]} : vector<16x16x4xf32> to vector<6x6x4xf32>
    %cst_149 = arith.constant dense<0xFF800000> : vector<6x4xf32>
    %185 = vector.multi_reduction <maximumf>, %184, %cst_149 [0] : vector<6x6x4xf32> to vector<6x4xf32>
    %cst_150 = arith.constant dense<0xFF800000> : vector<4xf32>
    %186 = vector.multi_reduction <maximumf>, %185, %cst_150 [0] : vector<6x4xf32> to vector<4xf32>
    %187 = vector.shape_cast %186 : vector<4xf32> to vector<1x4xf32>
    %c7_151 = arith.constant 7 : index
    %c0_152 = arith.constant 0 : index
    %c0_153 = arith.constant 0 : index
    %188 = vector.load %arg4[%c7_151, %c0_152, %c0_153] : memref<9x4x10xf32, #tpu.memory_space<vmem>>, vector<1x4x10xf32>
    %189 = vector.shape_cast %188 : vector<1x4x10xf32> to vector<4x10xf32>
    %cst_154 = arith.constant dense<0.000000e+00> : vector<1x10xf32>
    %190 = tpu.matmul %187, %189, %cst_154 {dimension_numbers = #tpu.dot_dimension_numbers<[1], [0], [0], [1], [0, 0, 1, 1], [], []>} : vector<1x4xf32>, vector<4x10xf32>, vector<1x10xf32> -> vector<1x10xf32>
    %191 = arith.addf %183, %190 : vector<1x10xf32>
    %192 = vector.extract_strided_slice %126 {offsets = [10, 10, 0], sizes = [6, 6, 4], strides = [1, 1, 1]} : vector<16x16x4xf32> to vector<6x6x4xf32>
    %cst_155 = arith.constant dense<0xFF800000> : vector<6x4xf32>
    %193 = vector.multi_reduction <maximumf>, %192, %cst_155 [0] : vector<6x6x4xf32> to vector<6x4xf32>
    %cst_156 = arith.constant dense<0xFF800000> : vector<4xf32>
    %194 = vector.multi_reduction <maximumf>, %193, %cst_156 [0] : vector<6x4xf32> to vector<4xf32>
    %195 = vector.shape_cast %194 : vector<4xf32> to vector<1x4xf32>
    %c8_157 = arith.constant 8 : index
    %c0_158 = arith.constant 0 : index
    %c0_159 = arith.constant 0 : index
    %196 = vector.load %arg4[%c8_157, %c0_158, %c0_159] : memref<9x4x10xf32, #tpu.memory_space<vmem>>, vector<1x4x10xf32>
    %197 = vector.shape_cast %196 : vector<1x4x10xf32> to vector<4x10xf32>
    %cst_160 = arith.constant dense<0.000000e+00> : vector<1x10xf32>
    %198 = tpu.matmul %195, %197, %cst_160 {dimension_numbers = #tpu.dot_dimension_numbers<[1], [0], [0], [1], [0, 0, 1, 1], [], []>} : vector<1x4xf32>, vector<4x10xf32>, vector<1x10xf32> -> vector<1x10xf32>
    %199 = arith.addf %191, %198 : vector<1x10xf32>
    %cst_161 = arith.constant 0.000000e+00 : f32
    %200 = vector.broadcast %cst_161 : f32 to vector<1x10xf32>
    %201 = arith.cmpf ogt, %199, %200 : vector<1x10xf32>
    %cst_162 = arith.constant 0.00999999977 : f32
    %202 = vector.broadcast %cst_162 : f32 to vector<1x10xf32>
    %203 = arith.mulf %202, %199 : vector<1x10xf32>
    %204 = arith.select %201, %199, %203 : vector<1x10xi1>, vector<1x10xf32>
    %c0_163 = arith.constant 0 : index
    %c0_164 = arith.constant 0 : index
    %205 = vector.load %arg5[%c0_163, %c0_164] : memref<10x4xf32, #tpu.memory_space<vmem>>, vector<10x4xf32>
    %cst_165 = arith.constant dense<0.000000e+00> : vector<1x4xf32>
    %206 = tpu.matmul %204, %205, %cst_165 {dimension_numbers = #tpu.dot_dimension_numbers<[1], [0], [0], [1], [0, 0, 1, 1], [], []>} : vector<1x10xf32>, vector<10x4xf32>, vector<1x4xf32> -> vector<1x4xf32>
    %c0_166 = arith.constant 0 : index
    %c0_167 = arith.constant 0 : index
    %207 = vector.load %arg6[%c0_166, %c0_167] : memref<1x4xf32, #tpu.memory_space<vmem>>, vector<1x4xf32>
    %208 = arith.addf %206, %207 : vector<1x4xf32>
    %c0_168 = arith.constant 0 : index
    %c0_169 = arith.constant 0 : index
    %c0_170 = arith.constant 0 : index
    %209 = vector.load %arg7[%c0_168, %c0_169, %c0_170] : memref<1x1x4xf32, #tpu.memory_space<vmem>>, vector<1x1x4xf32>
    %210 = vector.shape_cast %209 : vector<1x1x4xf32> to vector<1x4xf32>
    %211 = vector.shape_cast %208 : vector<1x4xf32> to vector<1x1x4xf32>
    tpu.vector_store %arg7[%c0_168, %c0_169, %c0_170], %211 {strides = array<i32>} : memref<1x1x4xf32, #tpu.memory_space<vmem>>, vector<1x1x4xf32>,
    return
  }
  func.func @transform_0(%arg0: i32) -> (i32, i32, i32, i32) {
    %c0_i32 = arith.constant 0 : i32
    %c0_i32_0 = arith.constant 0 : i32
    %c0_i32_1 = arith.constant 0 : i32
    %c0_i32_2 = arith.constant 0 : i32
    return %arg0, %c0_i32, %c0_i32_0, %c0_i32_1 : i32, i32, i32, i32
  }
  func.func @transform_1(%arg0: i32) -> (i32, i32, i32) {
    %c0_i32 = arith.constant 0 : i32
    %c0_i32_0 = arith.constant 0 : i32
    %c0_i32_1 = arith.constant 0 : i32
    %c0_i32_2 = arith.constant 0 : i32
    return %c0_i32, %c0_i32_0, %c0_i32_1 : i32, i32, i32
  }
  func.func @transform_2(%arg0: i32) -> (i32, i32, i32) {
    %c0_i32 = arith.constant 0 : i32
    %c0_i32_0 = arith.constant 0 : i32
    %c0_i32_1 = arith.constant 0 : i32
    %c0_i32_2 = arith.constant 0 : i32
    return %c0_i32, %c0_i32_0, %c0_i32_1 : i32, i32, i32
  }
  func.func @transform_3(%arg0: i32) -> (i32, i32, i32) {
    %c0_i32 = arith.constant 0 : i32
    %c0_i32_0 = arith.constant 0 : i32
    %c0_i32_1 = arith.constant 0 : i32
    %c0_i32_2 = arith.constant 0 : i32
    return %c0_i32, %c0_i32_0, %c0_i32_1 : i32, i32, i32
  }
  func.func @transform_4(%arg0: i32) -> (i32, i32) {
    %c0_i32 = arith.constant 0 : i32
    %c0_i32_0 = arith.constant 0 : i32
    %c0_i32_1 = arith.constant 0 : i32
    return %c0_i32, %c0_i32_0 : i32, i32
  }
  func.func @transform_5(%arg0: i32) -> (i32, i32) {
    %c0_i32 = arith.constant 0 : i32
    %c0_i32_0 = arith.constant 0 : i32
    %c0_i32_1 = arith.constant 0 : i32
    return %c0_i32, %c0_i32_0 : i32, i32
  }
  func.func @transform_6(%arg0: i32) -> (i32, i32, i32) {
    %c0_i32 = arith.constant 0 : i32
    %c0_i32_0 = arith.constant 0 : i32
    %c0_i32_1 = arith.constant 0 : i32
    return %arg0, %c0_i32, %c0_i32_0 : i32, i32, i32
  }
}

</mosaic_0001>

<llo_original>
// kernel: custom_head_forward.1
$region0: #{custom_head_forward.1}
  #allocation0 [shape = 'u32[]', space=smem, size = 0x4, offset = 0x4, fixed_abs, tag = 'smem constant byte address 0x4 - core index']
  #allocation1 [shape = 'u32[144,128]{1,0:T(1,128)}', space=vmem, size = 0x12000, scoped, tag = 'internal scratch']
  #allocation2 [shape = 'f32[18,18,64]{2,1,0:T(8,128)}', space=vmem, size = 0x36000, scoped, tag = 'scratch operand']
  %s0 = inlined_call_operand.vmem [shape: f32[2,18,18,4], index: 0, kind: input, shape index: {}]
  %s1 = inlined_call_operand.vmem [shape: f32[9,4,64], index: 1, kind: input, shape index: {}]
  %s2 = inlined_call_operand.vmem [shape: f32[9,64,4], index: 2, kind: input, shape index: {}]
  %s3 = inlined_call_operand.vmem [shape: f32[9,4,10], index: 3, kind: input, shape index: {}]
  %s4 = inlined_call_operand.vmem [shape: f32[10,4], index: 4, kind: input, shape index: {}]
  %s5 = inlined_call_operand.vmem [shape: f32[1,4], index: 5, kind: input, shape index: {}]
  %s6 = inlined_call_operand.hbm [shape: f32[2,1,4], index: 6, kind: output, shape index: {}]
  %s7 = sld [smem:[#allocation0]]
  $region57: #{custom_head_forward.1} parent=0
    _
  %s9 = ssub.s32 1, %s7
  %s10 = scalar_select 0, %s9, %s7
  $region1: #{custom_head_forward.1} parent=0
    #allocation3 [shape = 'u8[1024]{0}', space=vmem, size = 0x400, scoped, tag = 'output window, operand 0']
    #allocation4 [shape = 's32[2]{0}', space=sflag, size = 0x8, scoped, tag = 'scoped memory for custom_head_forward.1']
    %11 = vsyncpa [#allocation4], 0
    %s12 = scalar_lea.sflag [#allocation4], 1
    %13 = vsyncpa %s12, 0
    loop: start=0, step=1, limit=4
    $region2: #{custom_head_forward.1} parent=1 // loop_pre_header
      _
    $region3: #{custom_head_forward.1} parent=1 // loop_header
      %s15 = sphi 0, %s19
      %p16 = scmp.ge.s32.totalorder %s15, 4
      %s25 = sphi 0, %s27
      %s28 = sphi 0, %s25
      %s29 = sphi 0, %s28
      %s45 = sphi 0, %s29
      %s49 = sphi 0, %s49
      %s51 = sphi 0, %s49
      %s52 = sphi 0, %s51
      %s66 = sphi 0, %s52
      %s70 = sphi 0, %s70
      %s72 = sphi 0, %s70
      %s73 = sphi 0, %s72
      %s87 = sphi 0, %s73
      %s91 = sphi 0, %s91
      %s93 = sphi 0, %s91
      %s94 = sphi 0, %s93
      %s108 = sphi 0, %s94
      %s112 = sphi 0, %s112
      %s114 = sphi 0, %s112
      %s115 = sphi 0, %s114
      %s129 = sphi 0, %s115
      %s133 = sphi 0, %s133
      %s135 = sphi 0, %s133
      %s136 = sphi 0, %s135
      %s150 = sphi 0, %s136
      %s156 = sphi 0, %s158
      %s159 = sphi 0, %s156
      %s160 = sphi 0, %s159
      %s176 = sphi 0, %s160
    $region4: #{custom_head_forward.1} parent=1 // loop_header_branch
      %18 = sbr.rel (%p16) target = $region8
    $region5: #{custom_head_forward.1} parent=1 // loop_body
      %s20 = ssub.s32 %s15, 1
      %s21 = ssub.s32 %s15, 2
      %s22 = sadd.s32 %s15, 1
      %s23 = ssub.s32 %s15, %s22
      %p24 = scmp.eq.s32.totalorder %s23, 0
      %s26 = sadd.s32 %s25, 1
      %s27 = scalar_select %p24, %s25, %s26
      %p30 = pneg %p24
      %p31 = scmp.eq.s32.totalorder %s15, 1
      %p32 = por %p30, %p31
      %p33 = scmp.ne.s32.totalorder %s25, %s28
      %p34 = scmp.eq.s32.totalorder %s15, 0
      %p35 = por %p33, %p34
      %p36 = scmp.ne.s32.totalorder %s25, %s28
      %p37 = scmp.eq.s32.totalorder %s20, 1
      %p38 = por %p36, %p37
      %p39 = scmp.ne.s32.totalorder %s28, %s29
      %p40 = scmp.eq.s32.totalorder %s20, 0
      %p41 = por %p39, %p40
      %p42 = scmp.ne.s32.totalorder %s28, %s29
      %p43 = scmp.eq.s32.totalorder %s21, 1
      %p44 = por %p42, %p43
      %p46 = scmp.ne.s32.totalorder %s29, %s45
      %p47 = scmp.eq.s32.totalorder %s21, 0
      %p48 = por %p46, %p47
      %s50 = sadd.s32 %s49, 1
      %p53 = scmp.eq.s32.totalorder %s15, 1
      %p54 = scmp.ne.s32.totalorder %s49, %s51
      %p55 = scmp.eq.s32.totalorder %s15, 0
      %p56 = por %p54, %p55
      %p57 = scmp.ne.s32.totalorder %s49, %s51
      %p58 = scmp.eq.s32.totalorder %s20, 1
      %p59 = por %p57, %p58
      %p60 = scmp.ne.s32.totalorder %s51, %s52
      %p61 = scmp.eq.s32.totalorder %s20, 0
      %p62 = por %p60, %p61
      %p63 = scmp.ne.s32.totalorder %s51, %s52
      %p64 = scmp.eq.s32.totalorder %s21, 1
      %p65 = por %p63, %p64
      %p67 = scmp.ne.s32.totalorder %s52, %s66
      %p68 = scmp.eq.s32.totalorder %s21, 0
      %p69 = por %p67, %p68
      %s71 = sadd.s32 %s70, 1
      %p74 = scmp.eq.s32.totalorder %s15, 1
      %p75 = scmp.ne.s32.totalorder %s70, %s72
      %p76 = scmp.eq.s32.totalorder %s15, 0
      %p77 = por %p75, %p76
      %p78 = scmp.ne.s32.totalorder %s70, %s72
      %p79 = scmp.eq.s32.totalorder %s20, 1
      %p80 = por %p78, %p79
      %p81 = scmp.ne.s32.totalorder %s72, %s73
      %p82 = scmp.eq.s32.totalorder %s20, 0
      %p83 = por %p81, %p82
      %p84 = scmp.ne.s32.totalorder %s72, %s73
      %p85 = scmp.eq.s32.totalorder %s21, 1
      %p86 = por %p84, %p85
      %p88 = scmp.ne.s32.totalorder %s73, %s87
      %p89 = scmp.eq.s32.totalorder %s21, 0
      %p90 = por %p88, %p89
      %s92 = sadd.s32 %s91, 1
      %p95 = scmp.eq.s32.totalorder %s15, 1
      %p96 = scmp.ne.s32.totalorder %s91, %s93
      %p97 = scmp.eq.s32.totalorder %s15, 0
      %p98 = por %p96, %p97
      %p99 = scmp.ne.s32.totalorder %s91, %s93
      %p100 = scmp.eq.s32.totalorder %s20, 1
      %p101 = por %p99, %p100
      %p102 = scmp.ne.s32.totalorder %s93, %s94
      %p103 = scmp.eq.s32.totalorder %s20, 0
      %p104 = por %p102, %p103
      %p105 = scmp.ne.s32.totalorder %s93, %s94
      %p106 = scmp.eq.s32.totalorder %s21, 1
      %p107 = por %p105, %p106
      %p109 = scmp.ne.s32.totalorder %s94, %s108
      %p110 = scmp.eq.s32.totalorder %s21, 0
      %p111 = por %p109, %p110
      %s113 = sadd.s32 %s112, 1
      %p116 = scmp.eq.s32.totalorder %s15, 1
      %p117 = scmp.ne.s32.totalorder %s112, %s114
      %p118 = scmp.eq.s32.totalorder %s15, 0
      %p119 = por %p117, %p118
      %p120 = scmp.ne.s32.totalorder %s112, %s114
      %p121 = scmp.eq.s32.totalorder %s20, 1
      %p122 = por %p120, %p121
      %p123 = scmp.ne.s32.totalorder %s114, %s115
      %p124 = scmp.eq.s32.totalorder %s20, 0
      %p125 = por %p123, %p124
      %p126 = scmp.ne.s32.totalorder %s114, %s115
      %p127 = scmp.eq.s32.totalorder %s21, 1
      %p128 = por %p126, %p127
      %p130 = scmp.ne.s32.totalorder %s115, %s129
      %p131 = scmp.eq.s32.totalorder %s21, 0
      %p132 = por %p130, %p131
      %s134 = sadd.s32 %s133, 1
      %p137 = scmp.eq.s32.totalorder %s15, 1
      %p138 = scmp.ne.s32.totalorder %s133, %s135
      %p139 = scmp.eq.s32.totalorder %s15, 0
      %p140 = por %p138, %p139
      %p141 = scmp.ne.s32.totalorder %s133, %s135
      %p142 = scmp.eq.s32.totalorder %s20, 1
      %p143 = por %p141, %p142
      %p144 = scmp.ne.s32.totalorder %s135, %s136
      %p145 = scmp.eq.s32.totalorder %s20, 0
      %p146 = por %p144, %p145
      %p147 = scmp.ne.s32.totalorder %s135, %s136
      %p148 = scmp.eq.s32.totalorder %s21, 1
      %p149 = por %p147, %p148
      %p151 = scmp.ne.s32.totalorder %s136, %s150
      %p152 = scmp.eq.s32.totalorder %s21, 0
      %p153 = por %p151, %p152
      %s154 = ssub.s32 %s15, %s22
      %p155 = scmp.eq.s32.totalorder %s154, 0
      %s157 = sadd.s32 %s156, 1
      %s158 = scalar_select %p155, %s156, %s157
      %p161 = pneg %p155
      %p162 = scmp.eq.s32.totalorder %s15, 1
      %p163 = por %p161, %p162
      %p164 = scmp.ne.s32.totalorder %s156, %s159
      %p165 = scmp.eq.s32.totalorder %s15, 0
      %p166 = por %p164, %p165
      %p167 = scmp.ne.s32.totalorder %s156, %s159
      %p168 = scmp.eq.s32.totalorder %s20, 1
      %p169 = por %p167, %p168
      %p170 = scmp.ne.s32.totalorder %s159, %s160
      %p171 = scmp.eq.s32.totalorder %s20, 0
      %p172 = por %p170, %p171
      %p173 = scmp.ne.s32.totalorder %s159, %s160
      %p174 = scmp.eq.s32.totalorder %s21, 1
      %p175 = por %p173, %p174
      %p177 = scmp.ne.s32.totalorder %s160, %s176
      %p178 = scmp.eq.s32.totalorder %s21, 0
      %p179 = por %p177, %p178
      %p180 = scmp.le.s32.totalorder 1, %s15
      %p181 = scmp.lt.s32.totalorder %s15, 3
      %p182 = pnand %p180, %p181
      %p183 = pneg %p182
      // Predicated region
      $region9: #{custom_head_forward.1} parent=5 // pred_check
        _
      $region10: #{custom_head_forward.1} parent=5 // pred_check_branch
        %185 = sbr.rel (%p182) target = $region12
      $region11: #{custom_head_forward.1} parent=5 // pred_region
        %s186 = ssub.s32 %s15, 1
        // Predicated region
        $region13: #{custom_head_forward.1} parent=11 // pred_check
          %p187 = pneg %p62
        $region14: #{custom_head_forward.1} parent=11 // pred_check_branch
          %189 = sbr.rel (%p187) target = $region16
        $region15: #{custom_head_forward.1} parent=11 // pred_region
          _
        $region16: #{custom_head_forward.1} parent=11 // pred_fallthru
          _
        // Predicated region
        $region17: #{custom_head_forward.1} parent=11 // pred_check
          %p190 = pneg %p83
        $region18: #{custom_head_forward.1} parent=11 // pred_check_branch
          %192 = sbr.rel (%p190) target = $region20
        $region19: #{custom_head_forward.1} parent=11 // pred_region
          _
        $region20: #{custom_head_forward.1} parent=11 // pred_fallthru
          _
        // Predicated region
        $region21: #{custom_head_forward.1} parent=11 // pred_check
          %p193 = pneg %p104
        $region22: #{custom_head_forward.1} parent=11 // pred_check_branch
          %195 = sbr.rel (%p193) target = $region24
        $region23: #{custom_head_forward.1} parent=11 // pred_region
          _
        $region24: #{custom_head_forward.1} parent=11 // pred_fallthru
          _
        // Predicated region
        $region25: #{custom_head_forward.1} parent=11 // pred_check
          %p196 = pneg %p125
        $region26: #{custom_head_forward.1} parent=11 // pred_check_branch
          %198 = sbr.rel (%p196) target = $region28
        $region27: #{custom_head_forward.1} parent=11 // pred_region
          _
        $region28: #{custom_head_forward.1} parent=11 // pred_fallthru
          _
        // Predicated region
        $region29: #{custom_head_forward.1} parent=11 // pred_check
          %p199 = pneg %p146
        $region30: #{custom_head_forward.1} parent=11 // pred_check_branch
          %201 = sbr.rel (%p199) target = $region32
        $region31: #{custom_head_forward.1} parent=11 // pred_region
          _
        $region32: #{custom_head_forward.1} parent=11 // pred_fallthru
          _
      $region12: #{custom_head_forward.1} parent=5 // pred_fallthru
        _
      %p202 = scmp.lt.s32.totalorder %s15, 2
      // Predicated region
      $region33: #{custom_head_forward.1} parent=5 // pred_check
        %p203 = pneg %p202
      $region34: #{custom_head_forward.1} parent=5 // pred_check_branch
        %205 = sbr.rel (%p203) target = $region36
      $region35: #{custom_head_forward.1} parent=5 // pred_region
        // Predicated region
        $region37: #{custom_head_forward.1} parent=35 // pred_check
          %p206 = pneg %p35
        $region38: #{custom_head_forward.1} parent=35 // pred_check_branch
          %208 = sbr.rel (%p206) target = $region40
        $region39: #{custom_head_forward.1} parent=35 // pred_region
          %p209 = scmp.lt.s32.totalorder %s15, 1
          %s210 = scalar_select %p209, %s15, 1
          %s211 = smul.addr %s210, 54
          %s212 = smul.addr %s211, 8
          %s213 = scalar_lea.vmem %s0, %s212
        $region40: #{custom_head_forward.1} parent=35 // pred_fallthru
          _
      $region36: #{custom_head_forward.1} parent=5 // pred_fallthru
        _
      %p214 = scmp.le.s32.totalorder 1, %s15
      %p215 = scmp.lt.s32.totalorder %s15, 3
      %p216 = pnand %p214, %p215
      %p217 = pneg %p216
      // Predicated region
      $region41: #{custom_head_forward.1} parent=5 // pred_check
        _
      $region42: #{custom_head_forward.1} parent=5 // pred_check_branch
        %219 = sbr.rel (%p216) target = $region44
      $region43: #{custom_head_forward.1} parent=5 // pred_region
        %s220 = ssub.s32 %s15, 1
        %p221 = scmp.lt.s32.totalorder %s20, 1
        %s222 = scalar_select %p221, %s20, 1
        %s223 = smul.addr %s222, 54
        %s224 = smul.addr %s223, 8
        %s225 = scalar_lea.vmem %s0, %s224
        %p226 = pneg %p41
        %p227 = pneg %p38
        %p228 = pneg %p62
        %p229 = pneg %p59
        %p230 = pneg %p83
        %p231 = pneg %p80
        %p232 = pneg %p104
        %p233 = pneg %p101
        %p234 = pneg %p125
        %p235 = pneg %p122
        %p236 = pneg %p146
        %p237 = pneg %p143
        %p238 = pneg %p172
        %p239 = pneg %p169
        %s240 = sand.u32 %s159, 1
        %s241 = scalar_lea.sflag [#allocation4], %s240
        %s242 = sand.u32 %s159, 1
        %s243 = scalar_lea.vmem [#allocation3], %s242
        %p244 = scmp.lt.s32.totalorder %s20, 1
        %s245 = scalar_select %p244, %s20, 1
        %s246 = smul.addr %s245, 54
        %s247 = smul.addr %s246, 8
        %s248 = scalar_lea.vmem %s0, %s247
        %v249 = vld [vmem:[%s248] sm:$0xff]
        %v250 = vld [vmem:[%s248 + $0x8] sm:$0xff]
        %v251 = vld [vmem:[%s248 + $0x10] sm:$0x3]
        %v252 = vld [vmem:[%s248 + $0x18] sm:$0xff]
        %v253 = vld [vmem:[%s248 + $0x20] sm:$0xff]
        %v254 = vld [vmem:[%s248 + $0x28] sm:$0x3]
        %v255 = vld [vmem:[%s248 + $0x30] sm:$0xff]
        %v256 = vld [vmem:[%s248 + $0x38] sm:$0xff]
        %v257 = vld [vmem:[%s248 + $0x40] sm:$0x3]
        %v258 = vld [vmem:[%s248 + $0x48] sm:$0xff]
        %v259 = vld [vmem:[%s248 + $0x50] sm:$0xff]
        %v260 = vld [vmem:[%s248 + $0x58] sm:$0x3]
        %v261 = vld [vmem:[%s248 + $0x60] sm:$0xff]
        %v262 = vld [vmem:[%s248 + $0x68] sm:$0xff]
        %v263 = vld [vmem:[%s248 + $0x70] sm:$0x3]
        %v264 = vld [vmem:[%s248 + $0x78] sm:$0xff]
        %v265 = vld [vmem:[%s248 + $0x80] sm:$0xff]
        %v266 = vld [vmem:[%s248 + $0x88] sm:$0x3]
        %v267 = vld [vmem:[%s248 + $0x90] sm:$0xff]
        %v268 = vld [vmem:[%s248 + $0x98] sm:$0xff]
        %v269 = vld [vmem:[%s248 + $0xa0] sm:$0x3]
        %v270 = vld [vmem:[%s248 + $0xa8] sm:$0xff]
        %v271 = vld [vmem:[%s248 + $0xb0] sm:$0xff]
        %v272 = vld [vmem:[%s248 + $0xb8] sm:$0x3]
        %v273 = vld [vmem:[%s248 + $0xc0] sm:$0xff]
        %v274 = vld [vmem:[%s248 + $0xc8] sm:$0xff]
        %v275 = vld [vmem:[%s248 + $0xd0] sm:$0x3]
        %v276 = vld [vmem:[%s248 + $0xd8] sm:$0xff]
        %v277 = vld [vmem:[%s248 + $0xe0] sm:$0xff]
        %v278 = vld [vmem:[%s248 + $0xe8] sm:$0x3]
        %v279 = vld [vmem:[%s248 + $0xf0] sm:$0xff]
        %v280 = vld [vmem:[%s248 + $0xf8] sm:$0xff]
        %v281 = vld [vmem:[%s248 + $0x100] sm:$0x3]
        %v282 = vld [vmem:[%s248 + $0x108] sm:$0xff]
        %v283 = vld [vmem:[%s248 + $0x110] sm:$0xff]
        %v284 = vld [vmem:[%s248 + $0x118] sm:$0x3]
        %v285 = vld [vmem:[%s248 + $0x120] sm:$0xff]
        %v286 = vld [vmem:[%s248 + $0x128] sm:$0xff]
        %v287 = vld [vmem:[%s248 + $0x130] sm:$0x3]
        %v288 = vld [vmem:[%s248 + $0x138] sm:$0xff]
        %v289 = vld [vmem:[%s248 + $0x140] sm:$0xff]
        %v290 = vld [vmem:[%s248 + $0x148] sm:$0x3]
        %v291 = vld [vmem:[%s248 + $0x150] sm:$0xff]
        %v292 = vld [vmem:[%s248 + $0x158] sm:$0xff]
        %v293 = vld [vmem:[%s248 + $0x160] sm:$0x3]
        %v294 = vld [vmem:[%s248 + $0x168] sm:$0xff]
        %v295 = vld [vmem:[%s248 + $0x170] sm:$0xff]
        %v296 = vld [vmem:[%s248 + $0x178] sm:$0x3]
        %v297 = vld [vmem:[%s248 + $0x180] sm:$0xff]
        %v298 = vld [vmem:[%s248 + $0x188] sm:$0xff]
        %v299 = vld [vmem:[%s248 + $0x190] sm:$0x3]
        %v300 = vld [vmem:[%s248 + $0x198] sm:$0xff]
        %v301 = vld [vmem:[%s248 + $0x1a0] sm:$0xff]
        %v302 = vld [vmem:[%s248 + $0x1a8] sm:$0x3]
        %v303 = vld [vmem:[%s1] sm:$0xf]
        %vm352 = vcmask 1046528
        %v353 = vrot.slane %v249, 1
        %v354 = vrot.slane %v250, 1
        %v355 = vsel %vm352, %v353, %v354
        %v356 = vrot.slane %v251, 1
        %v357 = vsel %vm352, %v354, %v356
        %v358 = vrot.slane %v252, 1
        %v359 = vrot.slane %v253, 1
        %v360 = vsel %vm352, %v358, %v359
        %v361 = vrot.slane %v254, 1
        %v362 = vsel %vm352, %v359, %v361
        %v363 = vrot.slane %v255, 1
        %v364 = vrot.slane %v256, 1
        %v365 = vsel %vm352, %v363, %v364
        %v366 = vrot.slane %v257, 1
        %v367 = vsel %vm352, %v364, %v366
        %v368 = vrot.slane %v258, 1
        %v369 = vrot.slane %v259, 1
        %v370 = vsel %vm352, %v368, %v369
        %v371 = vrot.slane %v260, 1
        %v372 = vsel %vm352, %v369, %v371
        %v373 = vrot.slane %v261, 1
        %v374 = vrot.slane %v262, 1
        %v375 = vsel %vm352, %v373, %v374
        %v376 = vrot.slane %v263, 1
        %v377 = vsel %vm352, %v374, %v376
        %v378 = vrot.slane %v264, 1
        %v379 = vrot.slane %v265, 1
        %v380 = vsel %vm352, %v378, %v379
        %v381 = vrot.slane %v266, 1
        %v382 = vsel %vm352, %v379, %v381
        %v383 = vrot.slane %v267, 1
        %v384 = vrot.slane %v268, 1
        %v385 = vsel %vm352, %v383, %v384
        %v386 = vrot.slane %v269, 1
        %v387 = vsel %vm352, %v384, %v386
        %v388 = vrot.slane %v270, 1
        %v389 = vrot.slane %v271, 1
        %v390 = vsel %vm352, %v388, %v389
        %v391 = vrot.slane %v272, 1
        %v392 = vsel %vm352, %v389, %v391
        %v393 = vrot.slane %v273, 1
        %v394 = vrot.slane %v274, 1
        %v395 = vsel %vm352, %v393, %v394
        %v396 = vrot.slane %v275, 1
        %v397 = vsel %vm352, %v394, %v396
        %v398 = vrot.slane %v276, 1
        %v399 = vrot.slane %v277, 1
        %v400 = vsel %vm352, %v398, %v399
        %v401 = vrot.slane %v278, 1
        %v402 = vsel %vm352, %v399, %v401
        %v403 = vrot.slane %v279, 1
        %v404 = vrot.slane %v280, 1
        %v405 = vsel %vm352, %v403, %v404
        %v406 = vrot.slane %v281, 1
        %v407 = vsel %vm352, %v404, %v406
        %v408 = vrot.slane %v282, 1
        %v409 = vrot.slane %v283, 1
        %v410 = vsel %vm352, %v408, %v409
        %v411 = vrot.slane %v284, 1
        %v412 = vsel %vm352, %v409, %v411
        %v413 = vrot.slane %v285, 1
        %v414 = vrot.slane %v286, 1
        %v415 = vsel %vm352, %v413, %v414
        %v416 = vrot.slane %v287, 1
        %v417 = vsel %vm352, %v414, %v416
        %v418 = vrot.slane %v288, 1
        %v419 = vrot.slane %v289, 1
        %v420 = vsel %vm352, %v418, %v419
        %v421 = vrot.slane %v290, 1
        %v422 = vsel %vm352, %v419, %v421
        %v423 = vrot.slane %v291, 1
        %v424 = vrot.slane %v292, 1
        %v425 = vsel %vm352, %v423, %v424
        %v426 = vrot.slane %v293, 1
        %v427 = vsel %vm352, %v424, %v426
        %v428 = vrot.slane %v294, 1
        %v429 = vrot.slane %v295, 1
        %v430 = vsel %vm352, %v428, %v429
        %v431 = vrot.slane %v296, 1
        %v432 = vsel %vm352, %v429, %v431
        %s433 = scalar_lea.vmem %s1, 4
        %v434 = vld [vmem:[%s433] sm:$0xf]
        %vm435 = vcmask 31744
        %v436 = vsel %vm435, %v355, 0
        %v438 = vsel %vm435, %v357, 0
        %v440 = vsel %vm435, %v360, 0
        %v442 = vsel %vm435, %v362, 0
        %v444 = vsel %vm435, %v365, 0
        %v446 = vsel %vm435, %v367, 0
        %v448 = vsel %vm435, %v370, 0
        %v450 = vsel %vm435, %v372, 0
        %v452 = vsel %vm435, %v375, 0
        %v454 = vsel %vm435, %v377, 0
        %v456 = vsel %vm435, %v380, 0
        %v458 = vsel %vm435, %v382, 0
        %v460 = vsel %vm435, %v385, 0
        %v462 = vsel %vm435, %v387, 0
        %v464 = vsel %vm435, %v390, 0
        %v466 = vsel %vm435, %v392, 0
        %v468 = vsel %vm435, %v395, 0
        %v470 = vsel %vm435, %v397, 0
        %v472 = vsel %vm435, %v400, 0
        %v474 = vsel %vm435, %v402, 0
        %v476 = vsel %vm435, %v405, 0
        %v478 = vsel %vm435, %v407, 0
        %v480 = vsel %vm435, %v410, 0
        %v482 = vsel %vm435, %v412, 0
        %v484 = vsel %vm435, %v415, 0
        %v486 = vsel %vm435, %v417, 0
        %v488 = vsel %vm435, %v420, 0
        %v490 = vsel %vm435, %v422, 0
        %v492 = vsel %vm435, %v425, 0
        %v494 = vsel %vm435, %v427, 0
        %v496 = vsel %vm435, %v430, 0
        %v498 = vsel %vm435, %v432, 0
        %vm500 = vcmask 1043456
        %v502 = vsel %vm500, %v434, 0
        %504 = vmatprep.subr.mxu0 0.0
        %505 = vmatpush1.msra.mxu0 %v502
        %506 = vmatprep.subr.mxu0 0.0
        %507 = vmatpush1.msra.mxu0 0.0
        %508 = vmatprep.subr.mxu0 0.0
        %509 = vmatpush1.msra.mxu0 0.0
        %510 = vmatprep.subr.mxu0 0.0
        %511 = vmatpush1.msra.mxu0 0.0
        %512 = vmatprep.subr.mxu0 0.0
        %513 = vmatpush1.msra.mxu0 0.0
        %514 = vmatprep.subr.mxu0 0.0
        %515 = vmatpush1.msra.mxu0 0.0
        %516 = vmatprep.subr.mxu0 0.0
        %517 = vmatpush1.msra.mxu0 0.0
        %518 = vmatprep.subr.mxu0 0.0
        %519 = vmatpush1.msra.mxu0 0.0
        %520 = vmatprep.subr.mxu0 0.0
        %521 = vmatpush1.msra.mxu0 0.0
        %522 = vmatprep.subr.mxu0 0.0
        %523 = vmatpush1.msra.mxu0 0.0
        %524 = vmatprep.subr.mxu0 0.0
        %525 = vmatpush1.msra.mxu0 0.0
        %526 = vmatprep.subr.mxu0 0.0
        %527 = vmatpush1.msra.mxu0 0.0
        %528 = vmatprep.subr.mxu0 0.0
        %529 = vmatpush1.msra.mxu0 0.0
        %530 = vmatprep.subr.mxu0 0.0
        %531 = vmatpush1.msra.mxu0 0.0
        %532 = vmatprep.subr.mxu0 0.0
        %533 = vmatpush1.msra.mxu0 0.0
        %534 = vmatprep.subr.mxu0 0.0
        %535 = vmatpush1.msra.mxu0 0.0
        %536 = vmatprep.subr.mxu0 0.0
        %537 = vmatpush1.msra.mxu0 0.0
        %538 = vmatprep.subr.mxu0 0.0
        %539 = vmatpush1.msra.mxu0 0.0
        %540 = vmatprep.subr.mxu0 0.0
        %541 = vmatpush1.msra.mxu0 0.0
        %542 = vmatprep.subr.mxu0 0.0
        %543 = vmatpush1.msra.mxu0 0.0
        %544 = vmatprep.subr.mxu0 0.0
        %545 = vmatpush1.msra.mxu0 0.0
        %546 = vmatprep.subr.mxu0 0.0
        %547 = vmatpush1.msra.mxu0 0.0
        %548 = vmatprep.subr.mxu0 0.0
        %549 = vmatpush1.msra.mxu0 0.0
        %550 = vmatprep.subr.mxu0 0.0
        %551 = vmatpush1.msra.mxu0 0.0
        %552 = vmatprep.subr.mxu0 0.0
        %553 = vmatpush1.msra.mxu0 0.0
        %554 = vmatprep.subr.mxu0 0.0
        %555 = vmatpush1.msra.mxu0 0.0
        %556 = vmatprep.subr.mxu0 0.0
        %557 = vmatpush1.msra.mxu0 0.0
        %558 = vmatprep.subr.mxu0 0.0
        %559 = vmatpush1.msra.mxu0 0.0
        %560 = vmatprep.subr.mxu0 0.0
        %561 = vmatpush1.msra.mxu0 0.0
        %562 = vmatprep.subr.mxu0 0.0
        %563 = vmatpush1.msra.mxu0 0.0
        %564 = vmatprep.subr.mxu0 0.0
        %565 = vmatpush1.msra.mxu0 0.0
        %566 = vmatprep.subr.mxu0 0.0
        %567 = vmatpush1.msra.mxu0 0.0
        %568 = vmatprep.mubr.f32.mxu0 0.0
        %569 = vmatmul.mubr.f32.gmra.mrb[0].mxu0 %v436
        %v570 = vpop.f32.mrb[0].mxu0
        %v571 = vadd.f32 0.0, %v570
        %v572 = vpop.f32.mrb[0].mxu0
        %573 = vmatprep.mubr.f32.mxu0 0.0
        %574 = vmatmul.mubr.f32.gmra.mrb[0].mxu0 %v438
        %v575 = vpop.f32.mrb[0].mxu0
        %v576 = vadd.f32 0.0, %v575
        %v577 = vpop.f32.mrb[0].mxu0
        %578 = vmatprep.mubr.f32.mxu0 0.0
        %579 = vmatmul.mubr.f32.gmra.mrb[0].mxu0 %v440
        %v580 = vpop.f32.mrb[0].mxu0
        %v581 = vadd.f32 0.0, %v580
        %v582 = vpop.f32.mrb[0].mxu0
        %583 = vmatprep.mubr.f32.mxu0 0.0
        %584 = vmatmul.mubr.f32.gmra.mrb[0].mxu0 %v442
        %v585 = vpop.f32.mrb[0].mxu0
        %v586 = vadd.f32 0.0, %v585
        %v587 = vpop.f32.mrb[0].mxu0
        %588 = vmatprep.mubr.f32.mxu0 0.0
        %589 = vmatmul.mubr.f32.gmra.mrb[0].mxu0 %v444
        %v590 = vpop.f32.mrb[0].mxu0
        %v591 = vadd.f32 0.0, %v590
        %v592 = vpop.f32.mrb[0].mxu0
        %593 = vmatprep.mubr.f32.mxu0 0.0
        %594 = vmatmul.mubr.f32.gmra.mrb[0].mxu0 %v446
        %v595 = vpop.f32.mrb[0].mxu0
        %v596 = vadd.f32 0.0, %v595
        %v597 = vpop.f32.mrb[0].mxu0
        %598 = vmatprep.mubr.f32.mxu0 0.0
        %599 = vmatmul.mubr.f32.gmra.mrb[0].mxu0 %v448
        %v600 = vpop.f32.mrb[0].mxu0
        %v601 = vadd.f32 0.0, %v600
        %v602 = vpop.f32.mrb[0].mxu0
        %603 = vmatprep.mubr.f32.mxu0 0.0
        %604 = vmatmul.mubr.f32.gmra.mrb[0].mxu0 %v450
        %v605 = vpop.f32.mrb[0].mxu0
        %v606 = vadd.f32 0.0, %v605
        %v607 = vpop.f32.mrb[0].mxu0
        %608 = vmatprep.mubr.f32.mxu0 0.0
        %609 = vmatmul.mubr.f32.gmra.mrb[0].mxu0 %v452
        %v610 = vpop.f32.mrb[0].mxu0
        %v611 = vadd.f32 0.0, %v610
        %v612 = vpop.f32.mrb[0].mxu0
        %613 = vmatprep.mubr.f32.mxu0 0.0
        %614 = vmatmul.mubr.f32.gmra.mrb[0].mxu0 %v454
        %v615 = vpop.f32.mrb[0].mxu0
        %v616 = vadd.f32 0.0, %v615
        %v617 = vpop.f32.mrb[0].mxu0
        %618 = vmatprep.mubr.f32.mxu0 0.0
        %619 = vmatmul.mubr.f32.gmra.mrb[0].mxu0 %v456
        %v620 = vpop.f32.mrb[0].mxu0
        %v621 = vadd.f32 0.0, %v620
        %v622 = vpop.f32.mrb[0].mxu0
        %623 = vmatprep.mubr.f32.mxu0 0.0
        %624 = vmatmul.mubr.f32.gmra.mrb[0].mxu0 %v458
        %v625 = vpop.f32.mrb[0].mxu0
        %v626 = vadd.f32 0.0, %v625
        %v627 = vpop.f32.mrb[0].mxu0
        %628 = vmatprep.mubr.f32.mxu0 0.0
        %629 = vmatmul.mubr.f32.gmra.mrb[0].mxu0 %v460
        %v630 = vpop.f32.mrb[0].mxu0
        %v631 = vadd.f32 0.0, %v630
        %v632 = vpop.f32.mrb[0].mxu0
        %633 = vmatprep.mubr.f32.mxu0 0.0
        %634 = vmatmul.mubr.f32.gmra.mrb[0].mxu0 %v462
        %v635 = vpop.f32.mrb[0].mxu0
        %v636 = vadd.f32 0.0, %v635
        %v637 = vpop.f32.mrb[0].mxu0
        %638 = vmatprep.mubr.f32.mxu0 0.0
        %639 = vmatmul.mubr.f32.gmra.mrb[0].mxu0 %v464
        %v640 = vpop.f32.mrb[0].mxu0
        %v641 = vadd.f32 0.0, %v640
        %v642 = vpop.f32.mrb[0].mxu0
        %643 = vmatprep.mubr.f32.mxu0 0.0
        %644 = vmatmul.mubr.f32.gmra.mrb[0].mxu0 %v466
        %v645 = vpop.f32.mrb[0].mxu0
        %v646 = vadd.f32 0.0, %v645
        %v647 = vpop.f32.mrb[0].mxu0
        %648 = vmatprep.mubr.f32.mxu0 0.0
        %649 = vmatmul.mubr.f32.gmra.mrb[0].mxu0 %v468
        %v650 = vpop.f32.mrb[0].mxu0
        %v651 = vadd.f32 0.0, %v650
        %v652 = vpop.f32.mrb[0].mxu0
        %653 = vmatprep.mubr.f32.mxu0 0.0
        %654 = vmatmul.mubr.f32.gmra.mrb[0].mxu0 %v470
        %v655 = vpop.f32.mrb[0].mxu0
        %v656 = vadd.f32 0.0, %v655
        %v657 = vpop.f32.mrb[0].mxu0
        %658 = vmatprep.mubr.f32.mxu0 0.0
        %659 = vmatmul.mubr.f32.gmra.mrb[0].mxu0 %v472
        %v660 = vpop.f32.mrb[0].mxu0
        %v661 = vadd.f32 0.0, %v660
        %v662 = vpop.f32.mrb[0].mxu0
        %663 = vmatprep.mubr.f32.mxu0 0.0
        %664 = vmatmul.mubr.f32.gmra.mrb[0].mxu0 %v474
        %v665 = vpop.f32.mrb[0].mxu0
        %v666 = vadd.f32 0.0, %v665
        %v667 = vpop.f32.mrb[0].mxu0
        %668 = vmatprep.mubr.f32.mxu0 0.0
        %669 = vmatmul.mubr.f32.gmra.mrb[0].mxu0 %v476
        %v670 = vpop.f32.mrb[0].mxu0
        %v671 = vadd.f32 0.0, %v670
        %v672 = vpop.f32.mrb[0].mxu0
        %673 = vmatprep.mubr.f32.mxu0 0.0
        %674 = vmatmul.mubr.f32.gmra.mrb[0].mxu0 %v478
        %v675 = vpop.f32.mrb[0].mxu0
        %v676 = vadd.f32 0.0, %v675
        %v677 = vpop.f32.mrb[0].mxu0
        %678 = vmatprep.mubr.f32.mxu0 0.0
        %679 = vmatmul.mubr.f32.gmra.mrb[0].mxu0 %v480
        %v680 = vpop.f32.mrb[0].mxu0
        %v681 = vadd.f32 0.0, %v680
        %v682 = vpop.f32.mrb[0].mxu0
        %683 = vmatprep.mubr.f32.mxu0 0.0
        %684 = vmatmul.mubr.f32.gmra.mrb[0].mxu0 %v482
        %v685 = vpop.f32.mrb[0].mxu0
        %v686 = vadd.f32 0.0, %v685
        %v687 = vpop.f32.mrb[0].mxu0
        %688 = vmatprep.mubr.f32.mxu0 0.0
        %689 = vmatmul.mubr.f32.gmra.mrb[0].mxu0 %v484
        %v690 = vpop.f32.mrb[0].mxu0
        %v691 = vadd.f32 0.0, %v690
        %v692 = vpop.f32.mrb[0].mxu0
        %693 = vmatprep.mubr.f32.mxu0 0.0
        %694 = vmatmul.mubr.f32.gmra.mrb[0].mxu0 %v486
        %v695 = vpop.f32.mrb[0].mxu0
        %v696 = vadd.f32 0.0, %v695
        %v697 = vpop.f32.mrb[0].mxu0
        %698 = vmatprep.mubr.f32.mxu0 0.0
        %699 = vmatmul.mubr.f32.gmra.mrb[0].mxu0 %v488
        %v700 = vpop.f32.mrb[0].mxu0
        %v701 = vadd.f32 0.0, %v700
        %v702 = vpop.f32.mrb[0].mxu0
        %703 = vmatprep.mubr.f32.mxu0 0.0
        %704 = vmatmul.mubr.f32.gmra.mrb[0].mxu0 %v490
        %v705 = vpop.f32.mrb[0].mxu0
        %v706 = vadd.f32 0.0, %v705
        %v707 = vpop.f32.mrb[0].mxu0
        %708 = vmatprep.mubr.f32.mxu0 0.0
        %709 = vmatmul.mubr.f32.gmra.mrb[0].mxu0 %v492
        %v710 = vpop.f32.mrb[0].mxu0
        %v711 = vadd.f32 0.0, %v710
        %v712 = vpop.f32.mrb[0].mxu0
        %713 = vmatprep.mubr.f32.mxu0 0.0
        %714 = vmatmul.mubr.f32.gmra.mrb[0].mxu0 %v494
        %v715 = vpop.f32.mrb[0].mxu0
        %v716 = vadd.f32 0.0, %v715
        %v717 = vpop.f32.mrb[0].mxu0
        %718 = vmatprep.mubr.f32.mxu0 0.0
        %719 = vmatmul.mubr.f32.gmra.mrb[0].mxu0 %v496
        %v720 = vpop.f32.mrb[0].mxu0
        %v721 = vadd.f32 0.0, %v720
        %v722 = vpop.f32.mrb[0].mxu0
        %723 = vmatprep.mubr.f32.mxu0 0.0
        %724 = vmatmul.mubr.f32.gmra.mrb[0].mxu0 %v498
        %v725 = vpop.f32.mrb[0].mxu0
        %v726 = vadd.f32 0.0, %v725
        %v727 = vpop.f32.mrb[0].mxu0
        %728 = vdwg.mxu0
        %v729 = vsel %vm435, %v249, 0
        %v731 = vsel %vm435, %v250, 0
        %v733 = vsel %vm435, %v252, 0
        %v735 = vsel %vm435, %v253, 0
        %v737 = vsel %vm435, %v255, 0
        %v739 = vsel %vm435, %v256, 0
        %v741 = vsel %vm435, %v258, 0
        %v743 = vsel %vm435, %v259, 0
        %v745 = vsel %vm435, %v261, 0
        %v747 = vsel %vm435, %v262, 0
        %v749 = vsel %vm435, %v264, 0
        %v751 = vsel %vm435, %v265, 0
        %v753 = vsel %vm435, %v267, 0
        %v755 = vsel %vm435, %v268, 0
        %v757 = vsel %vm435, %v270, 0
        %v759 = vsel %vm435, %v271, 0
        %v761 = vsel %vm435, %v273, 0
        %v763 = vsel %vm435, %v274, 0
        %v765 = vsel %vm435, %v276, 0
        %v767 = vsel %vm435, %v277, 0
        %v769 = vsel %vm435, %v279, 0
        %v771 = vsel %vm435, %v280, 0
        %v773 = vsel %vm435, %v282, 0
        %v775 = vsel %vm435, %v283, 0
        %v777 = vsel %vm435, %v285, 0
        %v779 = vsel %vm435, %v286, 0
        %v781 = vsel %vm435, %v288, 0
        %v783 = vsel %vm435, %v289, 0
        %v785 = vsel %vm435, %v291, 0
        %v787 = vsel %vm435, %v292, 0
        %v789 = vsel %vm435, %v294, 0
        %v791 = vsel %vm435, %v295, 0
        %v794 = vsel %vm500, %v303, 0
        %796 = vmatprep.subr.mxu0 0.0
        %797 = vmatpush1.msra.mxu0 %v794
        %798 = vmatprep.subr.mxu0 0.0
        %799 = vmatpush1.msra.mxu0 0.0
        %800 = vmatprep.subr.mxu0 0.0
        %801 = vmatpush1.msra.mxu0 0.0
        %802 = vmatprep.subr.mxu0 0.0
        %803 = vmatpush1.msra.mxu0 0.0
        %804 = vmatprep.subr.mxu0 0.0
        %805 = vmatpush1.msra.mxu0 0.0
        %806 = vmatprep.subr.mxu0 0.0
        %807 = vmatpush1.msra.mxu0 0.0
        %808 = vmatprep.subr.mxu0 0.0
        %809 = vmatpush1.msra.mxu0 0.0
        %810 = vmatprep.subr.mxu0 0.0
        %811 = vmatpush1.msra.mxu0 0.0
        %812 = vmatprep.subr.mxu0 0.0
        %813 = vmatpush1.msra.mxu0 0.0
        %814 = vmatprep.subr.mxu0 0.0
        %815 = vmatpush1.msra.mxu0 0.0
        %816 = vmatprep.subr.mxu0 0.0
        %817 = vmatpush1.msra.mxu0 0.0
        %818 = vmatprep.subr.mxu0 0.0
        %819 = vmatpush1.msra.mxu0 0.0
        %820 = vmatprep.subr.mxu0 0.0
        %821 = vmatpush1.msra.mxu0 0.0
        %822 = vmatprep.subr.mxu0 0.0
        %823 = vmatpush1.msra.mxu0 0.0
        %824 = vmatprep.subr.mxu0 0.0
        %825 = vmatpush1.msra.mxu0 0.0
        %826 = vmatprep.subr.mxu0 0.0
        %827 = vmatpush1.msra.mxu0 0.0
        %828 = vmatprep.subr.mxu0 0.0
        %829 = vmatpush1.msra.mxu0 0.0
        %830 = vmatprep.subr.mxu0 0.0
        %831 = vmatpush1.msra.mxu0 0.0
        %832 = vmatprep.subr.mxu0 0.0
        %833 = vmatpush1.msra.mxu0 0.0
        %834 = vmatprep.subr.mxu0 0.0
        %835 = vmatpush1.msra.mxu0 0.0
        %836 = vmatprep.subr.mxu0 0.0
        %837 = vmatpush1.msra.mxu0 0.0
        %838 = vmatprep.subr.mxu0 0.0
        %839 = vmatpush1.msra.mxu0 0.0
        %840 = vmatprep.subr.mxu0 0.0
        %841 = vmatpush1.msra.mxu0 0.0
        %842 = vmatprep.subr.mxu0 0.0
        %843 = vmatpush1.msra.mxu0 0.0
        %844 = vmatprep.subr.mxu0 0.0
        %845 = vmatpush1.msra.mxu0 0.0
        %846 = vmatprep.subr.mxu0 0.0
        %847 = vmatpush1.msra.mxu0 0.0
        %848 = vmatprep.subr.mxu0 0.0
        %849 = vmatpush1.msra.mxu0 0.0
        %850 = vmatprep.subr.mxu0 0.0
        %851 = vmatpush1.msra.mxu0 0.0
        %852 = vmatprep.subr.mxu0 0.0
        %853 = vmatpush1.msra.mxu0 0.0
        %854 = vmatprep.subr.mxu0 0.0
        %855 = vmatpush1.msra.mxu0 0.0
        %856 = vmatprep.subr.mxu0 0.0
        %857 = vmatpush1.msra.mxu0 0.0
        %858 = vmatprep.subr.mxu0 0.0
        %859 = vmatpush1.msra.mxu0 0.0
        %860 = vmatprep.mubr.f32.mxu0 0.0
        %861 = vmatmul.mubr.f32.gmra.mrb[0].mxu0 %v729
        %v862 = vpop.f32.mrb[0].mxu0
        %v863 = vadd.f32 %v571, %v862
        %v864 = vpop.f32.mrb[0].mxu0
        %865 = vmatprep.mubr.f32.mxu0 0.0
        %866 = vmatmul.mubr.f32.gmra.mrb[0].mxu0 %v731
        %v867 = vpop.f32.mrb[0].mxu0
        %v868 = vadd.f32 %v576, %v867
        %v869 = vpop.f32.mrb[0].mxu0
        %870 = vmatprep.mubr.f32.mxu0 0.0
        %871 = vmatmul.mubr.f32.gmra.mrb[0].mxu0 %v733
        %v872 = vpop.f32.mrb[0].mxu0
        %v873 = vadd.f32 %v581, %v872
        %v874 = vpop.f32.mrb[0].mxu0
        %875 = vmatprep.mubr.f32.mxu0 0.0
        %876 = vmatmul.mubr.f32.gmra.mrb[0].mxu0 %v735
        %v877 = vpop.f32.mrb[0].mxu0
        %v878 = vadd.f32 %v586, %v877
        %v879 = vpop.f32.mrb[0].mxu0
        %880 = vmatprep.mubr.f32.mxu0 0.0
        %881 = vmatmul.mubr.f32.gmra.mrb[0].mxu0 %v737
        %v882 = vpop.f32.mrb[0].mxu0
        %v883 = vadd.f32 %v591, %v882
        %v884 = vpop.f32.mrb[0].mxu0
        %885 = vmatprep.mubr.f32.mxu0 0.0
        %886 = vmatmul.mubr.f32.gmra.mrb[0].mxu0 %v739
        %v887 = vpop.f32.mrb[0].mxu0
        %v888 = vadd.f32 %v596, %v887
        %v889 = vpop.f32.mrb[0].mxu0
        %890 = vmatprep.mubr.f32.mxu0 0.0
        %891 = vmatmul.mubr.f32.gmra.mrb[0].mxu0 %v741
        %v892 = vpop.f32.mrb[0].mxu0
        %v893 = vadd.f32 %v601, %v892
        %v894 = vpop.f32.mrb[0].mxu0
        %895 = vmatprep.mubr.f32.mxu0 0.0
        %896 = vmatmul.mubr.f32.gmra.mrb[0].mxu0 %v743
        %v897 = vpop.f32.mrb[0].mxu0
        %v898 = vadd.f32 %v606, %v897
        %v899 = vpop.f32.mrb[0].mxu0
        %900 = vmatprep.mubr.f32.mxu0 0.0
        %901 = vmatmul.mubr.f32.gmra.mrb[0].mxu0 %v745
        %v902 = vpop.f32.mrb[0].mxu0
        %v903 = vadd.f32 %v611, %v902
        %v904 = vpop.f32.mrb[0].mxu0
        %905 = vmatprep.mubr.f32.mxu0 0.0
        %906 = vmatmul.mubr.f32.gmra.mrb[0].mxu0 %v747
        %v907 = vpop.f32.mrb[0].mxu0
        %v908 = vadd.f32 %v616, %v907
        %v909 = vpop.f32.mrb[0].mxu0
        %910 = vmatprep.mubr.f32.mxu0 0.0
        %911 = vmatmul.mubr.f32.gmra.mrb[0].mxu0 %v749
        %v912 = vpop.f32.mrb[0].mxu0
        %v913 = vadd.f32 %v621, %v912
        %v914 = vpop.f32.mrb[0].mxu0
        %915 = vmatprep.mubr.f32.mxu0 0.0
        %916 = vmatmul.mubr.f32.gmra.mrb[0].mxu0 %v751
        %v917 = vpop.f32.mrb[0].mxu0
        %v918 = vadd.f32 %v626, %v917
        %v919 = vpop.f32.mrb[0].mxu0
        %920 = vmatprep.mubr.f32.mxu0 0.0
        %921 = vmatmul.mubr.f32.gmra.mrb[0].mxu0 %v753
        %v922 = vpop.f32.mrb[0].mxu0
        %v923 = vadd.f32 %v631, %v922
        %v924 = vpop.f32.mrb[0].mxu0
        %925 = vmatprep.mubr.f32.mxu0 0.0
        %926 = vmatmul.mubr.f32.gmra.mrb[0].mxu0 %v755
        %v927 = vpop.f32.mrb[0].mxu0
        %v928 = vadd.f32 %v636, %v927
        %v929 = vpop.f32.mrb[0].mxu0
        %930 = vmatprep.mubr.f32.mxu0 0.0
        %931 = vmatmul.mubr.f32.gmra.mrb[0].mxu0 %v757
        %v932 = vpop.f32.mrb[0].mxu0
        %v933 = vadd.f32 %v641, %v932
        %v934 = vpop.f32.mrb[0].mxu0
        %935 = vmatprep.mubr.f32.mxu0 0.0
        %936 = vmatmul.mubr.f32.gmra.mrb[0].mxu0 %v759
        %v937 = vpop.f32.mrb[0].mxu0
        %v938 = vadd.f32 %v646, %v937
        %v939 = vpop.f32.mrb[0].mxu0
        %940 = vmatprep.mubr.f32.mxu0 0.0
        %941 = vmatmul.mubr.f32.gmra.mrb[0].mxu0 %v761
        %v942 = vpop.f32.mrb[0].mxu0
        %v943 = vadd.f32 %v651, %v942
        %v944 = vpop.f32.mrb[0].mxu0
        %945 = vmatprep.mubr.f32.mxu0 0.0
        %946 = vmatmul.mubr.f32.gmra.mrb[0].mxu0 %v763
        %v947 = vpop.f32.mrb[0].mxu0
        %v948 = vadd.f32 %v656, %v947
        %v949 = vpop.f32.mrb[0].mxu0
        %950 = vmatprep.mubr.f32.mxu0 0.0
        %951 = vmatmul.mubr.f32.gmra.mrb[0].mxu0 %v765
        %v952 = vpop.f32.mrb[0].mxu0
        %v953 = vadd.f32 %v661, %v952
        %v954 = vpop.f32.mrb[0].mxu0
        %955 = vmatprep.mubr.f32.mxu0 0.0
        %956 = vmatmul.mubr.f32.gmra.mrb[0].mxu0 %v767
        %v957 = vpop.f32.mrb[0].mxu0
        %v958 = vadd.f32 %v666, %v957
        %v959 = vpop.f32.mrb[0].mxu0
        %960 = vmatprep.mubr.f32.mxu0 0.0
        %961 = vmatmul.mubr.f32.gmra.mrb[0].mxu0 %v769
        %v962 = vpop.f32.mrb[0].mxu0
        %v963 = vadd.f32 %v671, %v962
        %v964 = vpop.f32.mrb[0].mxu0
        %965 = vmatprep.mubr.f32.mxu0 0.0
        %966 = vmatmul.mubr.f32.gmra.mrb[0].mxu0 %v771
        %v967 = vpop.f32.mrb[0].mxu0
        %v968 = vadd.f32 %v676, %v967
        %v969 = vpop.f32.mrb[0].mxu0
        %970 = vmatprep.mubr.f32.mxu0 0.0
        %971 = vmatmul.mubr.f32.gmra.mrb[0].mxu0 %v773
        %v972 = vpop.f32.mrb[0].mxu0
        %v973 = vadd.f32 %v681, %v972
        %v974 = vpop.f32.mrb[0].mxu0
        %975 = vmatprep.mubr.f32.mxu0 0.0
        %976 = vmatmul.mubr.f32.gmra.mrb[0].mxu0 %v775
        %v977 = vpop.f32.mrb[0].mxu0
        %v978 = vadd.f32 %v686, %v977
        %v979 = vpop.f32.mrb[0].mxu0
        %980 = vmatprep.mubr.f32.mxu0 0.0
        %981 = vmatmul.mubr.f32.gmra.mrb[0].mxu0 %v777
        %v982 = vpop.f32.mrb[0].mxu0
        %v983 = vadd.f32 %v691, %v982
        %v984 = vpop.f32.mrb[0].mxu0
        %985 = vmatprep.mubr.f32.mxu0 0.0
        %986 = vmatmul.mubr.f32.gmra.mrb[0].mxu0 %v779
        %v987 = vpop.f32.mrb[0].mxu0
        %v988 = vadd.f32 %v696, %v987
        %v989 = vpop.f32.mrb[0].mxu0
        %990 = vmatprep.mubr.f32.mxu0 0.0
        %991 = vmatmul.mubr.f32.gmra.mrb[0].mxu0 %v781
        %v992 = vpop.f32.mrb[0].mxu0
        %v993 = vadd.f32 %v701, %v992
        %v994 = vpop.f32.mrb[0].mxu0
        %995 = vmatprep.mubr.f32.mxu0 0.0
        %996 = vmatmul.mubr.f32.gmra.mrb[0].mxu0 %v783
        %v997 = vpop.f32.mrb[0].mxu0
        %v998 = vadd.f32 %v706, %v997
        %v999 = vpop.f32.mrb[0].mxu0
        %1000 = vmatprep.mubr.f32.mxu0 0.0
        %1001 = vmatmul.mubr.f32.gmra.mrb[0].mxu0 %v785
        %v1002 = vpop.f32.mrb[0].mxu0
        %v1003 = vadd.f32 %v711, %v1002
        %v1004 = vpop.f32.mrb[0].mxu0
        %1005 = vmatprep.mubr.f32.mxu0 0.0
        %1006 = vmatmul.mubr.f32.gmra.mrb[0].mxu0 %v787
        %v1007 = vpop.f32.mrb[0].mxu0
        %v1008 = vadd.f32 %v716, %v1007
        %v1009 = vpop.f32.mrb[0].mxu0
        %1010 = vmatprep.mubr.f32.mxu0 0.0
        %1011 = vmatmul.mubr.f32.gmra.mrb[0].mxu0 %v789
        %v1012 = vpop.f32.mrb[0].mxu0
        %v1013 = vadd.f32 %v721, %v1012
        %v1014 = vpop.f32.mrb[0].mxu0
        %1015 = vmatprep.mubr.f32.mxu0 0.0
        %1016 = vmatmul.mubr.f32.gmra.mrb[0].mxu0 %v791
        %v1017 = vpop.f32.mrb[0].mxu0
        %v1018 = vadd.f32 %v726, %v1017
        %v1019 = vpop.f32.mrb[0].mxu0
        %1020 = vdwg.mxu0
        %vm1021 = vcmask 1045504
        %v1022 = vrot.slane %v249, 2
        %v1023 = vrot.slane %v250, 2
        %v1024 = vsel %vm1021, %v1022, %v1023
        %v1025 = vrot.slane %v251, 2
        %v1026 = vsel %vm1021, %v1023, %v1025
        %v1027 = vrot.slane %v252, 2
        %v1028 = vrot.slane %v253, 2
        %v1029 = vsel %vm1021, %v1027, %v1028
        %v1030 = vrot.slane %v254, 2
        %v1031 = vsel %vm1021, %v1028, %v1030
        %v1032 = vrot.slane %v255, 2
        %v1033 = vrot.slane %v256, 2
        %v1034 = vsel %vm1021, %v1032, %v1033
        %v1035 = vrot.slane %v257, 2
        %v1036 = vsel %vm1021, %v1033, %v1035
        %v1037 = vrot.slane %v258, 2
        %v1038 = vrot.slane %v259, 2
        %v1039 = vsel %vm1021, %v1037, %v1038
        %v1040 = vrot.slane %v260, 2
        %v1041 = vsel %vm1021, %v1038, %v1040
        %v1042 = vrot.slane %v261, 2
        %v1043 = vrot.slane %v262, 2
        %v1044 = vsel %vm1021, %v1042, %v1043
        %v1045 = vrot.slane %v263, 2
        %v1046 = vsel %vm1021, %v1043, %v1045
        %v1047 = vrot.slane %v264, 2
        %v1048 = vrot.slane %v265, 2
        %v1049 = vsel %vm1021, %v1047, %v1048
        %v1050 = vrot.slane %v266, 2
        %v1051 = vsel %vm1021, %v1048, %v1050
        %v1052 = vrot.slane %v267, 2
        %v1053 = vrot.slane %v268, 2
        %v1054 = vsel %vm1021, %v1052, %v1053
        %v1055 = vrot.slane %v269, 2
        %v1056 = vsel %vm1021, %v1053, %v1055
        %v1057 = vrot.slane %v270, 2
        %v1058 = vrot.slane %v271, 2
        %v1059 = vsel %vm1021, %v1057, %v1058
        %v1060 = vrot.slane %v272, 2
        %v1061 = vsel %vm1021, %v1058, %v1060
        %v1062 = vrot.slane %v273, 2
        %v1063 = vrot.slane %v274, 2
        %v1064 = vsel %vm1021, %v1062, %v1063
        %v1065 = vrot.slane %v275, 2
        %v1066 = vsel %vm1021, %v1063, %v1065
        %v1067 = vrot.slane %v276, 2
        %v1068 = vrot.slane %v277, 2
        %v1069 = vsel %vm1021, %v1067, %v1068
        %v1070 = vrot.slane %v278, 2
        %v1071 = vsel %vm1021, %v1068, %v1070
        %v1072 = vrot.slane %v279, 2
        %v1073 = vrot.slane %v280, 2
        %v1074 = vsel %vm1021, %v1072, %v1073
        %v1075 = vrot.slane %v281, 2
        %v1076 = vsel %vm1021, %v1073, %v1075
        %v1077 = vrot.slane %v282, 2
        %v1078 = vrot.slane %v283, 2
        %v1079 = vsel %vm1021, %v1077, %v1078
        %v1080 = vrot.slane %v284, 2
        %v1081 = vsel %vm1021, %v1078, %v1080
        %v1082 = vrot.slane %v285, 2
        %v1083 = vrot.slane %v286, 2
        %v1084 = vsel %vm1021, %v1082, %v1083
        %v1085 = vrot.slane %v287, 2
        %v1086 = vsel %vm1021, %v1083, %v1085
        %v1087 = vrot.slane %v288, 2
        %v1088 = vrot.slane %v289, 2
        %v1089 = vsel %vm1021, %v1087, %v1088
        %v1090 = vrot.slane %v290, 2
        %v1091 = vsel %vm1021, %v1088, %v1090
        %v1092 = vrot.slane %v291, 2
        %v1093 = vrot.slane %v292, 2
        %v1094 = vsel %vm1021, %v1092, %v1093
        %v1095 = vrot.slane %v293, 2
        %v1096 = vsel %vm1021, %v1093, %v1095
        %v1097 = vrot.slane %v294, 2
        %v1098 = vrot.slane %v295, 2
        %v1099 = vsel %vm1021, %v1097, %v1098
        %v1100 = vrot.slane %v296, 2
        %v1101 = vsel %vm1021, %v1098, %v1100
        %s1102 = scalar_lea.vmem %s1, 8
        %v1103 = vld [vmem:[%s1102] sm:$0xf]
        %v1104 = vsel %vm435, %v1024, 0
        %v1106 = vsel %vm435, %v1026, 0
        %v1108 = vsel %vm435, %v1029, 0
        %v1110 = vsel %vm435, %v1031, 0
        %v1112 = vsel %vm435, %v1034, 0
        %v1114 = vsel %vm435, %v1036, 0
        %v1116 = vsel %vm435, %v1039, 0
        %v1118 = vsel %vm435, %v1041, 0
        %v1120 = vsel %vm435, %v1044, 0
        %v1122 = vsel %vm435, %v1046, 0
        %v1124 = vsel %vm435, %v1049, 0
        %v1126 = vsel %vm435, %v1051, 0
        %v1128 = vsel %vm435, %v1054, 0
        %v1130 = vsel %vm435, %v1056, 0
        %v1132 = vsel %vm435, %v1059, 0
        %v1134 = vsel %vm435, %v1061, 0
        %v1136 = vsel %vm435, %v1064, 0
        %v1138 = vsel %vm435, %v1066, 0
        %v1140 = vsel %vm435, %v1069, 0
        %v1142 = vsel %vm435, %v1071, 0
        %v1144 = vsel %vm435, %v1074, 0
        %v1146 = vsel %vm435, %v1076, 0
        %v1148 = vsel %vm435, %v1079, 0
        %v1150 = vsel %vm435, %v1081, 0
        %v1152 = vsel %vm435, %v1084, 0
        %v1154 = vsel %vm435, %v1086, 0
        %v1156 = vsel %vm435, %v1089, 0
        %v1158 = vsel %vm435, %v1091, 0
        %v1160 = vsel %vm435, %v1094, 0
        %v1162 = vsel %vm435, %v1096, 0
        %v1164 = vsel %vm435, %v1099, 0
        %v1166 = vsel %vm435, %v1101, 0
        %v1169 = vsel %vm500, %v1103, 0
        %1171 = vmatprep.subr.mxu0 0.0
        %1172 = vmatpush1.msra.mxu0 %v1169
        %1173 = vmatprep.subr.mxu0 0.0
        %1174 = vmatpush1.msra.mxu0 0.0
        %1175 = vmatprep.subr.mxu0 0.0
        %1176 = vmatpush1.msra.mxu0 0.0
        %1177 = vmatprep.subr.mxu0 0.0
        %1178 = vmatpush1.msra.mxu0 0.0
        %1179 = vmatprep.subr.mxu0 0.0
        %1180 = vmatpush1.msra.mxu0 0.0
        %1181 = vmatprep.subr.mxu0 0.0
        %1182 = vmatpush1.msra.mxu0 0.0
        %1183 = vmatprep.subr.mxu0 0.0
        %1184 = vmatpush1.msra.mxu0 0.0
        %1185 = vmatprep.subr.mxu0 0.0
        %1186 = vmatpush1.msra.mxu0 0.0
        %1187 = vmatprep.subr.mxu0 0.0
        %1188 = vmatpush1.msra.mxu0 0.0
        %1189 = vmatprep.subr.mxu0 0.0
        %1190 = vmatpush1.msra.mxu0 0.0
        %1191 = vmatprep.subr.mxu0 0.0
        %1192 = vmatpush1.msra.mxu0 0.0
        %1193 = vmatprep.subr.mxu0 0.0
        %1194 = vmatpush1.msra.mxu0 0.0
        %1195 = vmatprep.subr.mxu0 0.0
        %1196 = vmatpush1.msra.mxu0 0.0
        %1197 = vmatprep.subr.mxu0 0.0
        %1198 = vmatpush1.msra.mxu0 0.0
        %1199 = vmatprep.subr.mxu0 0.0
        %1200 = vmatpush1.msra.mxu0 0.0
        %1201 = vmatprep.subr.mxu0 0.0
        %1202 = vmatpush1.msra.mxu0 0.0
        %1203 = vmatprep.subr.mxu0 0.0
        %1204 = vmatpush1.msra.mxu0 0.0
        %1205 = vmatprep.subr.mxu0 0.0
        %1206 = vmatpush1.msra.mxu0 0.0
        %1207 = vmatprep.subr.mxu0 0.0
        %1208 = vmatpush1.msra.mxu0 0.0
        %1209 = vmatprep.subr.mxu0 0.0
        %1210 = vmatpush1.msra.mxu0 0.0
        %1211 = vmatprep.subr.mxu0 0.0
        %1212 = vmatpush1.msra.mxu0 0.0
        %1213 = vmatprep.subr.mxu0 0.0
        %1214 = vmatpush1.msra.mxu0 0.0
        %1215 = vmatprep.subr.mxu0 0.0
        %1216 = vmatpush1.msra.mxu0 0.0
        %1217 = vmatprep.subr.mxu0 0.0
        %1218 = vmatpush1.msra.mxu0 0.0
        %1219 = vmatprep.subr.mxu0 0.0
        %1220 = vmatpush1.msra.mxu0 0.0
        %1221 = vmatprep.subr.mxu0 0.0
        %1222 = vmatpush1.msra.mxu0 0.0
        %1223 = vmatprep.subr.mxu0 0.0
        %1224 = vmatpush1.msra.mxu0 0.0
        %1225 = vmatprep.subr.mxu0 0.0
        %1226 = vmatpush1.msra.mxu0 0.0
        %1227 = vmatprep.subr.mxu0 0.0
        %1228 = vmatpush1.msra.mxu0 0.0
        %1229 = vmatprep.subr.mxu0 0.0
        %1230 = vmatpush1.msra.mxu0 0.0
        %1231 = vmatprep.subr.mxu0 0.0
        %1232 = vmatpush1.msra.mxu0 0.0
        %1233 = vmatprep.subr.mxu0 0.0
        %1234 = vmatpush1.msra.mxu0 0.0
        %1235 = vmatprep.mubr.f32.mxu0 0.0
        %1236 = vmatmul.mubr.f32.gmra.mrb[0].mxu0 %v1104
        %v1237 = vpop.f32.mrb[0].mxu0
        %v1238 = vadd.f32 0.0, %v1237
        %v1239 = vpop.f32.mrb[0].mxu0
        %1240 = vmatprep.mubr.f32.mxu0 0.0
        %1241 = vmatmul.mubr.f32.gmra.mrb[0].mxu0 %v1106
        %v1242 = vpop.f32.mrb[0].mxu0
        %v1243 = vadd.f32 0.0, %v1242
        %v1244 = vpop.f32.mrb[0].mxu0
        %1245 = vmatprep.mubr.f32.mxu0 0.0
        %1246 = vmatmul.mubr.f32.gmra.mrb[0].mxu0 %v1108
        %v1247 = vpop.f32.mrb[0].mxu0
        %v1248 = vadd.f32 0.0, %v1247
        %v1249 = vpop.f32.mrb[0].mxu0
        %1250 = vmatprep.mubr.f32.mxu0 0.0
        %1251 = vmatmul.mubr.f32.gmra.mrb[0].mxu0 %v1110
        %v1252 = vpop.f32.mrb[0].mxu0
        %v1253 = vadd.f32 0.0, %v1252
        %v1254 = vpop.f32.mrb[0].mxu0
        %1255 = vmatprep.mubr.f32.mxu0 0.0
        %1256 = vmatmul.mubr.f32.gmra.mrb[0].mxu0 %v1112
        %v1257 = vpop.f32.mrb[0].mxu0
        %v1258 = vadd.f32 0.0, %v1257
        %v1259 = vpop.f32.mrb[0].mxu0
        %1260 = vmatprep.mubr.f32.mxu0 0.0
        %1261 = vmatmul.mubr.f32.gmra.mrb[0].mxu0 %v1114
        %v1262 = vpop.f32.mrb[0].mxu0
        %v1263 = vadd.f32 0.0, %v1262
        %v1264 = vpop.f32.mrb[0].mxu0
        %1265 = vmatprep.mubr.f32.mxu0 0.0
        %1266 = vmatmul.mubr.f32.gmra.mrb[0].mxu0 %v1116
        %v1267 = vpop.f32.mrb[0].mxu0
        %v1268 = vadd.f32 0.0, %v1267
        %v1269 = vpop.f32.mrb[0].mxu0
        %1270 = vmatprep.mubr.f32.mxu0 0.0
        %1271 = vmatmul.mubr.f32.gmra.mrb[0].mxu0 %v1118
        %v1272 = vpop.f32.mrb[0].mxu0
        %v1273 = vadd.f32 0.0, %v1272
        %v1274 = vpop.f32.mrb[0].mxu0
        %1275 = vmatprep.mubr.f32.mxu0 0.0
        %1276 = vmatmul.mubr.f32.gmra.mrb[0].mxu0 %v1120
        %v1277 = vpop.f32.mrb[0].mxu0
        %v1278 = vadd.f32 0.0, %v1277
        %v1279 = vpop.f32.mrb[0].mxu0
        %1280 = vmatprep.mubr.f32.mxu0 0.0
        %1281 = vmatmul.mubr.f32.gmra.mrb[0].mxu0 %v1122
        %v1282 = vpop.f32.mrb[0].mxu0
        %v1283 = vadd.f32 0.0, %v1282
        %v1284 = vpop.f32.mrb[0].mxu0
        %1285 = vmatprep.mubr.f32.mxu0 0.0
        %1286 = vmatmul.mubr.f32.gmra.mrb[0].mxu0 %v1124
        %v1287 = vpop.f32.mrb[0].mxu0
        %v1288 = vadd.f32 0.0, %v1287
        %v1289 = vpop.f32.mrb[0].mxu0
        %1290 = vmatprep.mubr.f32.mxu0 0.0
        %1291 = vmatmul.mubr.f32.gmra.mrb[0].mxu0 %v1126
        %v1292 = vpop.f32.mrb[0].mxu0
        %v1293 = vadd.f32 0.0, %v1292
        %v1294 = vpop.f32.mrb[0].mxu0
        %1295 = vmatprep.mubr.f32.mxu0 0.0
        %1296 = vmatmul.mubr.f32.gmra.mrb[0].mxu0 %v1128
        %v1297 = vpop.f32.mrb[0].mxu0
        %v1298 = vadd.f32 0.0, %v1297
        %v1299 = vpop.f32.mrb[0].mxu0
        %1300 = vmatprep.mubr.f32.mxu0 0.0
        %1301 = vmatmul.mubr.f32.gmra.mrb[0].mxu0 %v1130
        %v1302 = vpop.f32.mrb[0].mxu0
        %v1303 = vadd.f32 0.0, %v1302
        %v1304 = vpop.f32.mrb[0].mxu0
        %1305 = vmatprep.mubr.f32.mxu0 0.0
        %1306 = vmatmul.mubr.f32.gmra.mrb[0].mxu0 %v1132
        %v1307 = vpop.f32.mrb[0].mxu0
        %v1308 = vadd.f32 0.0, %v1307
        %v1309 = vpop.f32.mrb[0].mxu0
        %1310 = vmatprep.mubr.f32.mxu0 0.0
        %1311 = vmatmul.mubr.f32.gmra.mrb[0].mxu0 %v1134
        %v1312 = vpop.f32.mrb[0].mxu0
        %v1313 = vadd.f32 0.0, %v1312
        %v1314 = vpop.f32.mrb[0].mxu0
        %1315 = vmatprep.mubr.f32.mxu0 0.0
        %1316 = vmatmul.mubr.f32.gmra.mrb[0].mxu0 %v1136
        %v1317 = vpop.f32.mrb[0].mxu0
        %v1318 = vadd.f32 0.0, %v1317
        %v1319 = vpop.f32.mrb[0].mxu0
        %1320 = vmatprep.mubr.f32.mxu0 0.0
        %1321 = vmatmul.mubr.f32.gmra.mrb[0].mxu0 %v1138
        %v1322 = vpop.f32.mrb[0].mxu0
        %v1323 = vadd.f32 0.0, %v1322
        %v1324 = vpop.f32.mrb[0].mxu0
        %1325 = vmatprep.mubr.f32.mxu0 0.0
        %1326 = vmatmul.mubr.f32.gmra.mrb[0].mxu0 %v1140
        %v1327 = vpop.f32.mrb[0].mxu0
        %v1328 = vadd.f32 0.0, %v1327
        %v1329 = vpop.f32.mrb[0].mxu0
        %1330 = vmatprep.mubr.f32.mxu0 0.0
        %1331 = vmatmul.mubr.f32.gmra.mrb[0].mxu0 %v1142
        %v1332 = vpop.f32.mrb[0].mxu0
        %v1333 = vadd.f32 0.0, %v1332
        %v1334 = vpop.f32.mrb[0].mxu0
        %1335 = vmatprep.mubr.f32.mxu0 0.0
        %1336 = vmatmul.mubr.f32.gmra.mrb[0].mxu0 %v1144
        %v1337 = vpop.f32.mrb[0].mxu0
        %v1338 = vadd.f32 0.0, %v1337
        %v1339 = vpop.f32.mrb[0].mxu0
        %1340 = vmatprep.mubr.f32.mxu0 0.0
        %1341 = vmatmul.mubr.f32.gmra.mrb[0].mxu0 %v1146
        %v1342 = vpop.f32.mrb[0].mxu0
        %v1343 = vadd.f32 0.0, %v1342
        %v1344 = vpop.f32.mrb[0].mxu0
        %1345 = vmatprep.mubr.f32.mxu0 0.0
        %1346 = vmatmul.mubr.f32.gmra.mrb[0].mxu0 %v1148
        %v1347 = vpop.f32.mrb[0].mxu0
        %v1348 = vadd.f32 0.0, %v1347
        %v1349 = vpop.f32.mrb[0].mxu0
        %1350 = vmatprep.mubr.f32.mxu0 0.0
        %1351 = vmatmul.mubr.f32.gmra.mrb[0].mxu0 %v1150
        %v1352 = vpop.f32.mrb[0].mxu0
        %v1353 = vadd.f32 0.0, %v1352
        %v1354 = vpop.f32.mrb[0].mxu0
        %1355 = vmatprep.mubr.f32.mxu0 0.0
        %1356 = vmatmul.mubr.f32.gmra.mrb[0].mxu0 %v1152
        %v1357 = vpop.f32.mrb[0].mxu0
        %v1358 = vadd.f32 0.0, %v1357
        %v1359 = vpop.f32.mrb[0].mxu0
        %1360 = vmatprep.mubr.f32.mxu0 0.0
        %1361 = vmatmul.mubr.f32.gmra.mrb[0].mxu0 %v1154
        %v1362 = vpop.f32.mrb[0].mxu0
        %v1363 = vadd.f32 0.0, %v1362
        %v1364 = vpop.f32.mrb[0].mxu0
        %1365 = vmatprep.mubr.f32.mxu0 0.0
        %1366 = vmatmul.mubr.f32.gmra.mrb[0].mxu0 %v1156
        %v1367 = vpop.f32.mrb[0].mxu0
        %v1368 = vadd.f32 0.0, %v1367
        %v1369 = vpop.f32.mrb[0].mxu0
        %1370 = vmatprep.mubr.f32.mxu0 0.0
        %1371 = vmatmul.mubr.f32.gmra.mrb[0].mxu0 %v1158
        %v1372 = vpop.f32.mrb[0].mxu0
        %v1373 = vadd.f32 0.0, %v1372
        %v1374 = vpop.f32.mrb[0].mxu0
        %1375 = vmatprep.mubr.f32.mxu0 0.0
        %1376 = vmatmul.mubr.f32.gmra.mrb[0].mxu0 %v1160
        %v1377 = vpop.f32.mrb[0].mxu0
        %v1378 = vadd.f32 0.0, %v1377
        %v1379 = vpop.f32.mrb[0].mxu0
        %1380 = vmatprep.mubr.f32.mxu0 0.0
        %1381 = vmatmul.mubr.f32.gmra.mrb[0].mxu0 %v1162
        %v1382 = vpop.f32.mrb[0].mxu0
        %v1383 = vadd.f32 0.0, %v1382
        %v1384 = vpop.f32.mrb[0].mxu0
        %1385 = vmatprep.mubr.f32.mxu0 0.0
        %1386 = vmatmul.mubr.f32.gmra.mrb[0].mxu0 %v1164
        %v1387 = vpop.f32.mrb[0].mxu0
        %v1388 = vadd.f32 0.0, %v1387
        %v1389 = vpop.f32.mrb[0].mxu0
        %1390 = vmatprep.mubr.f32.mxu0 0.0
        %1391 = vmatmul.mubr.f32.gmra.mrb[0].mxu0 %v1166
        %v1392 = vpop.f32.mrb[0].mxu0
        %v1393 = vadd.f32 0.0, %v1392
        %v1394 = vpop.f32.mrb[0].mxu0
        %1395 = vdwg.mxu0
        %v1396 = vadd.f32 %v863, %v1238
        %v1397 = vadd.f32 %v868, %v1243
        %v1398 = vadd.f32 %v873, %v1248
        %v1399 = vadd.f32 %v878, %v1253
        %v1400 = vadd.f32 %v883, %v1258
        %v1401 = vadd.f32 %v888, %v1263
        %v1402 = vadd.f32 %v893, %v1268
        %v1403 = vadd.f32 %v898, %v1273
        %v1404 = vadd.f32 %v903, %v1278
        %v1405 = vadd.f32 %v908, %v1283
        %v1406 = vadd.f32 %v913, %v1288
        %v1407 = vadd.f32 %v918, %v1293
        %v1408 = vadd.f32 %v923, %v1298
        %v1409 = vadd.f32 %v928, %v1303
        %v1410 = vadd.f32 %v933, %v1308
        %v1411 = vadd.f32 %v938, %v1313
        %v1412 = vadd.f32 %v943, %v1318
        %v1413 = vadd.f32 %v948, %v1323
        %v1414 = vadd.f32 %v953, %v1328
        %v1415 = vadd.f32 %v958, %v1333
        %v1416 = vadd.f32 %v963, %v1338
        %v1417 = vadd.f32 %v968, %v1343
        %v1418 = vadd.f32 %v973, %v1348
        %v1419 = vadd.f32 %v978, %v1353
        %v1420 = vadd.f32 %v983, %v1358
        %v1421 = vadd.f32 %v988, %v1363
        %v1422 = vadd.f32 %v993, %v1368
        %v1423 = vadd.f32 %v998, %v1373
        %v1424 = vadd.f32 %v1003, %v1378
        %v1425 = vadd.f32 %v1008, %v1383
        %v1426 = vadd.f32 %v1013, %v1388
        %v1427 = vadd.f32 %v1018, %v1393
        %s1428 = scalar_lea.vmem %s1, 12
        %v1429 = vld [vmem:[%s1428] sm:$0xf]
        %v1431 = vsel %vm435, %v297, 0
        %v1434 = vsel %vm435, %v298, 0
        %v1437 = vsel %vm500, %v1429, 0
        %1439 = vmatprep.subr.mxu0 0.0
        %1440 = vmatpush1.msra.mxu0 %v1437
        %1441 = vmatprep.subr.mxu0 0.0
        %1442 = vmatpush1.msra.mxu0 0.0
        %1443 = vmatprep.subr.mxu0 0.0
        %1444 = vmatpush1.msra.mxu0 0.0
        %1445 = vmatprep.subr.mxu0 0.0
        %1446 = vmatpush1.msra.mxu0 0.0
        %1447 = vmatprep.subr.mxu0 0.0
        %1448 = vmatpush1.msra.mxu0 0.0
        %1449 = vmatprep.subr.mxu0 0.0
        %1450 = vmatpush1.msra.mxu0 0.0
        %1451 = vmatprep.subr.mxu0 0.0
        %1452 = vmatpush1.msra.mxu0 0.0
        %1453 = vmatprep.subr.mxu0 0.0
        %1454 = vmatpush1.msra.mxu0 0.0
        %1455 = vmatprep.subr.mxu0 0.0
        %1456 = vmatpush1.msra.mxu0 0.0
        %1457 = vmatprep.subr.mxu0 0.0
        %1458 = vmatpush1.msra.mxu0 0.0
        %1459 = vmatprep.subr.mxu0 0.0
        %1460 = vmatpush1.msra.mxu0 0.0
        %1461 = vmatprep.subr.mxu0 0.0
        %1462 = vmatpush1.msra.mxu0 0.0
        %1463 = vmatprep.subr.mxu0 0.0
        %1464 = vmatpush1.msra.mxu0 0.0
        %1465 = vmatprep.subr.mxu0 0.0
        %1466 = vmatpush1.msra.mxu0 0.0
        %1467 = vmatprep.subr.mxu0 0.0
        %1468 = vmatpush1.msra.mxu0 0.0
        %1469 = vmatprep.subr.mxu0 0.0
        %1470 = vmatpush1.msra.mxu0 0.0
        %1471 = vmatprep.subr.mxu0 0.0
        %1472 = vmatpush1.msra.mxu0 0.0
        %1473 = vmatprep.subr.mxu0 0.0
        %1474 = vmatpush1.msra.mxu0 0.0
        %1475 = vmatprep.subr.mxu0 0.0
        %1476 = vmatpush1.msra.mxu0 0.0
        %1477 = vmatprep.subr.mxu0 0.0
        %1478 = vmatpush1.msra.mxu0 0.0
        %1479 = vmatprep.subr.mxu0 0.0
        %1480 = vmatpush1.msra.mxu0 0.0
        %1481 = vmatprep.subr.mxu0 0.0
        %1482 = vmatpush1.msra.mxu0 0.0
        %1483 = vmatprep.subr.mxu0 0.0
        %1484 = vmatpush1.msra.mxu0 0.0
        %1485 = vmatprep.subr.mxu0 0.0
        %1486 = vmatpush1.msra.mxu0 0.0
        %1487 = vmatprep.subr.mxu0 0.0
        %1488 = vmatpush1.msra.mxu0 0.0
        %1489 = vmatprep.subr.mxu0 0.0
        %1490 = vmatpush1.msra.mxu0 0.0
        %1491 = vmatprep.subr.mxu0 0.0
        %1492 = vmatpush1.msra.mxu0 0.0
        %1493 = vmatprep.subr.mxu0 0.0
        %1494 = vmatpush1.msra.mxu0 0.0
        %1495 = vmatprep.subr.mxu0 0.0
        %1496 = vmatpush1.msra.mxu0 0.0
        %1497 = vmatprep.subr.mxu0 0.0
        %1498 = vmatpush1.msra.mxu0 0.0
        %1499 = vmatprep.subr.mxu0 0.0
        %1500 = vmatpush1.msra.mxu0 0.0
        %1501 = vmatprep.subr.mxu0 0.0
        %1502 = vmatpush1.msra.mxu0 0.0
        %1503 = vmatprep.mubr.f32.mxu0 0.0
        %1504 = vmatmul.mubr.f32.gmra.mrb[0].mxu0 %v733
        %v1505 = vpop.f32.mrb[0].mxu0
        %v1506 = vadd.f32 0.0, %v1505
        %v1507 = vpop.f32.mrb[0].mxu0
        %1508 = vmatprep.mubr.f32.mxu0 0.0
        %1509 = vmatmul.mubr.f32.gmra.mrb[0].mxu0 %v735
        %v1510 = vpop.f32.mrb[0].mxu0
        %v1511 = vadd.f32 0.0, %v1510
        %v1512 = vpop.f32.mrb[0].mxu0
        %1513 = vmatprep.mubr.f32.mxu0 0.0
        %1514 = vmatmul.mubr.f32.gmra.mrb[0].mxu0 %v737
        %v1515 = vpop.f32.mrb[0].mxu0
        %v1516 = vadd.f32 0.0, %v1515
        %v1517 = vpop.f32.mrb[0].mxu0
        %1518 = vmatprep.mubr.f32.mxu0 0.0
        %1519 = vmatmul.mubr.f32.gmra.mrb[0].mxu0 %v739
        %v1520 = vpop.f32.mrb[0].mxu0
        %v1521 = vadd.f32 0.0, %v1520
        %v1522 = vpop.f32.mrb[0].mxu0
        %1523 = vmatprep.mubr.f32.mxu0 0.0
        %1524 = vmatmul.mubr.f32.gmra.mrb[0].mxu0 %v741
        %v1525 = vpop.f32.mrb[0].mxu0
        %v1526 = vadd.f32 0.0, %v1525
        %v1527 = vpop.f32.mrb[0].mxu0
        %1528 = vmatprep.mubr.f32.mxu0 0.0
        %1529 = vmatmul.mubr.f32.gmra.mrb[0].mxu0 %v743
        %v1530 = vpop.f32.mrb[0].mxu0
        %v1531 = vadd.f32 0.0, %v1530
        %v1532 = vpop.f32.mrb[0].mxu0
        %1533 = vmatprep.mubr.f32.mxu0 0.0
        %1534 = vmatmul.mubr.f32.gmra.mrb[0].mxu0 %v745
        %v1535 = vpop.f32.mrb[0].mxu0
        %v1536 = vadd.f32 0.0, %v1535
        %v1537 = vpop.f32.mrb[0].mxu0
        %1538 = vmatprep.mubr.f32.mxu0 0.0
        %1539 = vmatmul.mubr.f32.gmra.mrb[0].mxu0 %v747
        %v1540 = vpop.f32.mrb[0].mxu0
        %v1541 = vadd.f32 0.0, %v1540
        %v1542 = vpop.f32.mrb[0].mxu0
        %1543 = vmatprep.mubr.f32.mxu0 0.0
        %1544 = vmatmul.mubr.f32.gmra.mrb[0].mxu0 %v749
        %v1545 = vpop.f32.mrb[0].mxu0
        %v1546 = vadd.f32 0.0, %v1545
        %v1547 = vpop.f32.mrb[0].mxu0
        %1548 = vmatprep.mubr.f32.mxu0 0.0
        %1549 = vmatmul.mubr.f32.gmra.mrb[0].mxu0 %v751
        %v1550 = vpop.f32.mrb[0].mxu0
        %v1551 = vadd.f32 0.0, %v1550
        %v1552 = vpop.f32.mrb[0].mxu0
        %1553 = vmatprep.mubr.f32.mxu0 0.0
        %1554 = vmatmul.mubr.f32.gmra.mrb[0].mxu0 %v753
        %v1555 = vpop.f32.mrb[0].mxu0
        %v1556 = vadd.f32 0.0, %v1555
        %v1557 = vpop.f32.mrb[0].mxu0
        %1558 = vmatprep.mubr.f32.mxu0 0.0
        %1559 = vmatmul.mubr.f32.gmra.mrb[0].mxu0 %v755
        %v1560 = vpop.f32.mrb[0].mxu0
        %v1561 = vadd.f32 0.0, %v1560
        %v1562 = vpop.f32.mrb[0].mxu0
        %1563 = vmatprep.mubr.f32.mxu0 0.0
        %1564 = vmatmul.mubr.f32.gmra.mrb[0].mxu0 %v757
        %v1565 = vpop.f32.mrb[0].mxu0
        %v1566 = vadd.f32 0.0, %v1565
        %v1567 = vpop.f32.mrb[0].mxu0
        %1568 = vmatprep.mubr.f32.mxu0 0.0
        %1569 = vmatmul.mubr.f32.gmra.mrb[0].mxu0 %v759
        %v1570 = vpop.f32.mrb[0].mxu0
        %v1571 = vadd.f32 0.0, %v1570
        %v1572 = vpop.f32.mrb[0].mxu0
        %1573 = vmatprep.mubr.f32.mxu0 0.0
        %1574 = vmatmul.mubr.f32.gmra.mrb[0].mxu0 %v761
        %v1575 = vpop.f32.mrb[0].mxu0
        %v1576 = vadd.f32 0.0, %v1575
        %v1577 = vpop.f32.mrb[0].mxu0
        %1578 = vmatprep.mubr.f32.mxu0 0.0
        %1579 = vmatmul.mubr.f32.gmra.mrb[0].mxu0 %v763
        %v1580 = vpop.f32.mrb[0].mxu0
        %v1581 = vadd.f32 0.0, %v1580
        %v1582 = vpop.f32.mrb[0].mxu0
        %1583 = vmatprep.mubr.f32.mxu0 0.0
        %1584 = vmatmul.mubr.f32.gmra.mrb[0].mxu0 %v765
        %v1585 = vpop.f32.mrb[0].mxu0
        %v1586 = vadd.f32 0.0, %v1585
        %v1587 = vpop.f32.mrb[0].mxu0
        %1588 = vmatprep.mubr.f32.mxu0 0.0
        %1589 = vmatmul.mubr.f32.gmra.mrb[0].mxu0 %v767
        %v1590 = vpop.f32.mrb[0].mxu0
        %v1591 = vadd.f32 0.0, %v1590
        %v1592 = vpop.f32.mrb[0].mxu0
        %1593 = vmatprep.mubr.f32.mxu0 0.0
        %1594 = vmatmul.mubr.f32.gmra.mrb[0].mxu0 %v769
        %v1595 = vpop.f32.mrb[0].mxu0
        %v1596 = vadd.f32 0.0, %v1595
        %v1597 = vpop.f32.mrb[0].mxu0
        %1598 = vmatprep.mubr.f32.mxu0 0.0
        %1599 = vmatmul.mubr.f32.gmra.mrb[0].mxu0 %v771
        %v1600 = vpop.f32.mrb[0].mxu0
        %v1601 = vadd.f32 0.0, %v1600
        %v1602 = vpop.f32.mrb[0].mxu0
        %1603 = vmatprep.mubr.f32.mxu0 0.0
        %1604 = vmatmul.mubr.f32.gmra.mrb[0].mxu0 %v773
        %v1605 = vpop.f32.mrb[0].mxu0
        %v1606 = vadd.f32 0.0, %v1605
        %v1607 = vpop.f32.mrb[0].mxu0
        %1608 = vmatprep.mubr.f32.mxu0 0.0
        %1609 = vmatmul.mubr.f32.gmra.mrb[0].mxu0 %v775
        %v1610 = vpop.f32.mrb[0].mxu0
        %v1611 = vadd.f32 0.0, %v1610
        %v1612 = vpop.f32.mrb[0].mxu0
        %1613 = vmatprep.mubr.f32.mxu0 0.0
        %1614 = vmatmul.mubr.f32.gmra.mrb[0].mxu0 %v777
        %v1615 = vpop.f32.mrb[0].mxu0
        %v1616 = vadd.f32 0.0, %v1615
        %v1617 = vpop.f32.mrb[0].mxu0
        %1618 = vmatprep.mubr.f32.mxu0 0.0
        %1619 = vmatmul.mubr.f32.gmra.mrb[0].mxu0 %v779
        %v1620 = vpop.f32.mrb[0].mxu0
        %v1621 = vadd.f32 0.0, %v1620
        %v1622 = vpop.f32.mrb[0].mxu0
        %1623 = vmatprep.mubr.f32.mxu0 0.0
        %1624 = vmatmul.mubr.f32.gmra.mrb[0].mxu0 %v781
        %v1625 = vpop.f32.mrb[0].mxu0
        %v1626 = vadd.f32 0.0, %v1625
        %v1627 = vpop.f32.mrb[0].mxu0
        %1628 = vmatprep.mubr.f32.mxu0 0.0
        %1629 = vmatmul.mubr.f32.gmra.mrb[0].mxu0 %v783
        %v1630 = vpop.f32.mrb[0].mxu0
        %v1631 = vadd.f32 0.0, %v1630
        %v1632 = vpop.f32.mrb[0].mxu0
        %1633 = vmatprep.mubr.f32.mxu0 0.0
        %1634 = vmatmul.mubr.f32.gmra.mrb[0].mxu0 %v785
        %v1635 = vpop.f32.mrb[0].mxu0
        %v1636 = vadd.f32 0.0, %v1635
        %v1637 = vpop.f32.mrb[0].mxu0
        %1638 = vmatprep.mubr.f32.mxu0 0.0
        %1639 = vmatmul.mubr.f32.gmra.mrb[0].mxu0 %v787
        %v1640 = vpop.f32.mrb[0].mxu0
        %v1641 = vadd.f32 0.0, %v1640
        %v1642 = vpop.f32.mrb[0].mxu0
        %1643 = vmatprep.mubr.f32.mxu0 0.0
        %1644 = vmatmul.mubr.f32.gmra.mrb[0].mxu0 %v789
        %v1645 = vpop.f32.mrb[0].mxu0
        %v1646 = vadd.f32 0.0, %v1645
        %v1647 = vpop.f32.mrb[0].mxu0
        %1648 = vmatprep.mubr.f32.mxu0 0.0
        %1649 = vmatmul.mubr.f32.gmra.mrb[0].mxu0 %v791
        %v1650 = vpop.f32.mrb[0].mxu0
        %v1651 = vadd.f32 0.0, %v1650
        %v1652 = vpop.f32.mrb[0].mxu0
        %1653 = vmatprep.mubr.f32.mxu0 0.0
        %1654 = vmatmul.mubr.f32.gmra.mrb[0].mxu0 %v1431
        %v1655 = vpop.f32.mrb[0].mxu0
        %v1656 = vadd.f32 0.0, %v1655
        %v1657 = vpop.f32.mrb[0].mxu0
        %1658 = vmatprep.mubr.f32.mxu0 0.0
        %1659 = vmatmul.mubr.f32.gmra.mrb[0].mxu0 %v1434
        %v1660 = vpop.f32.mrb[0].mxu0
        %v1661 = vadd.f32 0.0, %v1660
        %v1662 = vpop.f32.mrb[0].mxu0
        %1663 = vdwg.mxu0
        %v1664 = vadd.f32 %v1396, %v1506
        %v1665 = vadd.f32 %v1397, %v1511
        %v1666 = vadd.f32 %v1398, %v1516
        %v1667 = vadd.f32 %v1399, %v1521
        %v1668 = vadd.f32 %v1400, %v1526
        %v1669 = vadd.f32 %v1401, %v1531
        %v1670 = vadd.f32 %v1402, %v1536
        %v1671 = vadd.f32 %v1403, %v1541
        %v1672 = vadd.f32 %v1404, %v1546
        %v1673 = vadd.f32 %v1405, %v1551
        %v1674 = vadd.f32 %v1406, %v1556
        %v1675 = vadd.f32 %v1407, %v1561
        %v1676 = vadd.f32 %v1408, %v1566
        %v1677 = vadd.f32 %v1409, %v1571
        %v1678 = vadd.f32 %v1410, %v1576
        %v1679 = vadd.f32 %v1411, %v1581
        %v1680 = vadd.f32 %v1412, %v1586
        %v1681 = vadd.f32 %v1413, %v1591
        %v1682 = vadd.f32 %v1414, %v1596
        %v1683 = vadd.f32 %v1415, %v1601
        %v1684 = vadd.f32 %v1416, %v1606
        %v1685 = vadd.f32 %v1417, %v1611
        %v1686 = vadd.f32 %v1418, %v1616
        %v1687 = vadd.f32 %v1419, %v1621
        %v1688 = vadd.f32 %v1420, %v1626
        %v1689 = vadd.f32 %v1421, %v1631
        %v1690 = vadd.f32 %v1422, %v1636
        %v1691 = vadd.f32 %v1423, %v1641
        %v1692 = vadd.f32 %v1424, %v1646
        %v1693 = vadd.f32 %v1425, %v1651
        %v1694 = vadd.f32 %v1426, %v1656
        %v1695 = vadd.f32 %v1427, %v1661
        %v1697 = vrot.slane %v297, 1
        %v1698 = vrot.slane %v298, 1
        %v1699 = vsel %vm352, %v1697, %v1698
        %v1700 = vrot.slane %v299, 1
        %v1701 = vsel %vm352, %v1698, %v1700
        %s1702 = scalar_lea.vmem %s1, 16
        %v1703 = vld [vmem:[%s1702] sm:$0xf]
        %v1704 = vsel %vm435, %v1699, 0
        %v1706 = vsel %vm435, %v1701, 0
        %v1709 = vsel %vm500, %v1703, 0
        %1711 = vmatprep.subr.mxu0 0.0
        %1712 = vmatpush1.msra.mxu0 %v1709
        %1713 = vmatprep.subr.mxu0 0.0
        %1714 = vmatpush1.msra.mxu0 0.0
        %1715 = vmatprep.subr.mxu0 0.0
        %1716 = vmatpush1.msra.mxu0 0.0
        %1717 = vmatprep.subr.mxu0 0.0
        %1718 = vmatpush1.msra.mxu0 0.0
        %1719 = vmatprep.subr.mxu0 0.0
        %1720 = vmatpush1.msra.mxu0 0.0
        %1721 = vmatprep.subr.mxu0 0.0
        %1722 = vmatpush1.msra.mxu0 0.0
        %1723 = vmatprep.subr.mxu0 0.0
        %1724 = vmatpush1.msra.mxu0 0.0
        %1725 = vmatprep.subr.mxu0 0.0
        %1726 = vmatpush1.msra.mxu0 0.0
        %1727 = vmatprep.subr.mxu0 0.0
        %1728 = vmatpush1.msra.mxu0 0.0
        %1729 = vmatprep.subr.mxu0 0.0
        %1730 = vmatpush1.msra.mxu0 0.0
        %1731 = vmatprep.subr.mxu0 0.0
        %1732 = vmatpush1.msra.mxu0 0.0
        %1733 = vmatprep.subr.mxu0 0.0
        %1734 = vmatpush1.msra.mxu0 0.0
        %1735 = vmatprep.subr.mxu0 0.0
        %1736 = vmatpush1.msra.mxu0 0.0
        %1737 = vmatprep.subr.mxu0 0.0
        %1738 = vmatpush1.msra.mxu0 0.0
        %1739 = vmatprep.subr.mxu0 0.0
        %1740 = vmatpush1.msra.mxu0 0.0
        %1741 = vmatprep.subr.mxu0 0.0
        %1742 = vmatpush1.msra.mxu0 0.0
        %1743 = vmatprep.subr.mxu0 0.0
        %1744 = vmatpush1.msra.mxu0 0.0
        %1745 = vmatprep.subr.mxu0 0.0
        %1746 = vmatpush1.msra.mxu0 0.0
        %1747 = vmatprep.subr.mxu0 0.0
        %1748 = vmatpush1.msra.mxu0 0.0
        %1749 = vmatprep.subr.mxu0 0.0
        %1750 = vmatpush1.msra.mxu0 0.0
        %1751 = vmatprep.subr.mxu0 0.0
        %1752 = vmatpush1.msra.mxu0 0.0
        %1753 = vmatprep.subr.mxu0 0.0
        %1754 = vmatpush1.msra.mxu0 0.0
        %1755 = vmatprep.subr.mxu0 0.0
        %1756 = vmatpush1.msra.mxu0 0.0
        %1757 = vmatprep.subr.mxu0 0.0
        %1758 = vmatpush1.msra.mxu0 0.0
        %1759 = vmatprep.subr.mxu0 0.0
        %1760 = vmatpush1.msra.mxu0 0.0
        %1761 = vmatprep.subr.mxu0 0.0
        %1762 = vmatpush1.msra.mxu0 0.0
        %1763 = vmatprep.subr.mxu0 0.0
        %1764 = vmatpush1.msra.mxu0 0.0
        %1765 = vmatprep.subr.mxu0 0.0
        %1766 = vmatpush1.msra.mxu0 0.0
        %1767 = vmatprep.subr.mxu0 0.0
        %1768 = vmatpush1.msra.mxu0 0.0
        %1769 = vmatprep.subr.mxu0 0.0
        %1770 = vmatpush1.msra.mxu0 0.0
        %1771 = vmatprep.subr.mxu0 0.0
        %1772 = vmatpush1.msra.mxu0 0.0
        %1773 = vmatprep.subr.mxu0 0.0
        %1774 = vmatpush1.msra.mxu0 0.0
        %1775 = vmatprep.mubr.f32.mxu0 0.0
        %1776 = vmatmul.mubr.f32.gmra.mrb[0].mxu0 %v440
        %v1777 = vpop.f32.mrb[0].mxu0
        %v1778 = vadd.f32 0.0, %v1777
        %v1779 = vpop.f32.mrb[0].mxu0
        %1780 = vmatprep.mubr.f32.mxu0 0.0
        %1781 = vmatmul.mubr.f32.gmra.mrb[0].mxu0 %v442
        %v1782 = vpop.f32.mrb[0].mxu0
        %v1783 = vadd.f32 0.0, %v1782
        %v1784 = vpop.f32.mrb[0].mxu0
        %1785 = vmatprep.mubr.f32.mxu0 0.0
        %1786 = vmatmul.mubr.f32.gmra.mrb[0].mxu0 %v444
        %v1787 = vpop.f32.mrb[0].mxu0
        %v1788 = vadd.f32 0.0, %v1787
        %v1789 = vpop.f32.mrb[0].mxu0
        %1790 = vmatprep.mubr.f32.mxu0 0.0
        %1791 = vmatmul.mubr.f32.gmra.mrb[0].mxu0 %v446
        %v1792 = vpop.f32.mrb[0].mxu0
        %v1793 = vadd.f32 0.0, %v1792
        %v1794 = vpop.f32.mrb[0].mxu0
        %1795 = vmatprep.mubr.f32.mxu0 0.0
        %1796 = vmatmul.mubr.f32.gmra.mrb[0].mxu0 %v448
        %v1797 = vpop.f32.mrb[0].mxu0
        %v1798 = vadd.f32 0.0, %v1797
        %v1799 = vpop.f32.mrb[0].mxu0
        %1800 = vmatprep.mubr.f32.mxu0 0.0
        %1801 = vmatmul.mubr.f32.gmra.mrb[0].mxu0 %v450
        %v1802 = vpop.f32.mrb[0].mxu0
        %v1803 = vadd.f32 0.0, %v1802
        %v1804 = vpop.f32.mrb[0].mxu0
        %1805 = vmatprep.mubr.f32.mxu0 0.0
        %1806 = vmatmul.mubr.f32.gmra.mrb[0].mxu0 %v452
        %v1807 = vpop.f32.mrb[0].mxu0
        %v1808 = vadd.f32 0.0, %v1807
        %v1809 = vpop.f32.mrb[0].mxu0
        %1810 = vmatprep.mubr.f32.mxu0 0.0
        %1811 = vmatmul.mubr.f32.gmra.mrb[0].mxu0 %v454
        %v1812 = vpop.f32.mrb[0].mxu0
        %v1813 = vadd.f32 0.0, %v1812
        %v1814 = vpop.f32.mrb[0].mxu0
        %1815 = vmatprep.mubr.f32.mxu0 0.0
        %1816 = vmatmul.mubr.f32.gmra.mrb[0].mxu0 %v456
        %v1817 = vpop.f32.mrb[0].mxu0
        %v1818 = vadd.f32 0.0, %v1817
        %v1819 = vpop.f32.mrb[0].mxu0
        %1820 = vmatprep.mubr.f32.mxu0 0.0
        %1821 = vmatmul.mubr.f32.gmra.mrb[0].mxu0 %v458
        %v1822 = vpop.f32.mrb[0].mxu0
        %v1823 = vadd.f32 0.0, %v1822
        %v1824 = vpop.f32.mrb[0].mxu0
        %1825 = vmatprep.mubr.f32.mxu0 0.0
        %1826 = vmatmul.mubr.f32.gmra.mrb[0].mxu0 %v460
        %v1827 = vpop.f32.mrb[0].mxu0
        %v1828 = vadd.f32 0.0, %v1827
        %v1829 = vpop.f32.mrb[0].mxu0
        %1830 = vmatprep.mubr.f32.mxu0 0.0
        %1831 = vmatmul.mubr.f32.gmra.mrb[0].mxu0 %v462
        %v1832 = vpop.f32.mrb[0].mxu0
        %v1833 = vadd.f32 0.0, %v1832
        %v1834 = vpop.f32.mrb[0].mxu0
        %1835 = vmatprep.mubr.f32.mxu0 0.0
        %1836 = vmatmul.mubr.f32.gmra.mrb[0].mxu0 %v464
        %v1837 = vpop.f32.mrb[0].mxu0
        %v1838 = vadd.f32 0.0, %v1837
        %v1839 = vpop.f32.mrb[0].mxu0
        %1840 = vmatprep.mubr.f32.mxu0 0.0
        %1841 = vmatmul.mubr.f32.gmra.mrb[0].mxu0 %v466
        %v1842 = vpop.f32.mrb[0].mxu0
        %v1843 = vadd.f32 0.0, %v1842
        %v1844 = vpop.f32.mrb[0].mxu0
        %1845 = vmatprep.mubr.f32.mxu0 0.0
        %1846 = vmatmul.mubr.f32.gmra.mrb[0].mxu0 %v468
        %v1847 = vpop.f32.mrb[0].mxu0
        %v1848 = vadd.f32 0.0, %v1847
        %v1849 = vpop.f32.mrb[0].mxu0
        %1850 = vmatprep.mubr.f32.mxu0 0.0
        %1851 = vmatmul.mubr.f32.gmra.mrb[0].mxu0 %v470
        %v1852 = vpop.f32.mrb[0].mxu0
        %v1853 = vadd.f32 0.0, %v1852
        %v1854 = vpop.f32.mrb[0].mxu0
        %1855 = vmatprep.mubr.f32.mxu0 0.0
        %1856 = vmatmul.mubr.f32.gmra.mrb[0].mxu0 %v472
        %v1857 = vpop.f32.mrb[0].mxu0
        %v1858 = vadd.f32 0.0, %v1857
        %v1859 = vpop.f32.mrb[0].mxu0
        %1860 = vmatprep.mubr.f32.mxu0 0.0
        %1861 = vmatmul.mubr.f32.gmra.mrb[0].mxu0 %v474
        %v1862 = vpop.f32.mrb[0].mxu0
        %v1863 = vadd.f32 0.0, %v1862
        %v1864 = vpop.f32.mrb[0].mxu0
        %1865 = vmatprep.mubr.f32.mxu0 0.0
        %1866 = vmatmul.mubr.f32.gmra.mrb[0].mxu0 %v476
        %v1867 = vpop.f32.mrb[0].mxu0
        %v1868 = vadd.f32 0.0, %v1867
        %v1869 = vpop.f32.mrb[0].mxu0
        %1870 = vmatprep.mubr.f32.mxu0 0.0
        %1871 = vmatmul.mubr.f32.gmra.mrb[0].mxu0 %v478
        %v1872 = vpop.f32.mrb[0].mxu0
        %v1873 = vadd.f32 0.0, %v1872
        %v1874 = vpop.f32.mrb[0].mxu0
        %1875 = vmatprep.mubr.f32.mxu0 0.0
        %1876 = vmatmul.mubr.f32.gmra.mrb[0].mxu0 %v480
        %v1877 = vpop.f32.mrb[0].mxu0
        %v1878 = vadd.f32 0.0, %v1877
        %v1879 = vpop.f32.mrb[0].mxu0
        %1880 = vmatprep.mubr.f32.mxu0 0.0
        %1881 = vmatmul.mubr.f32.gmra.mrb[0].mxu0 %v482
        %v1882 = vpop.f32.mrb[0].mxu0
        %v1883 = vadd.f32 0.0, %v1882
        %v1884 = vpop.f32.mrb[0].mxu0
        %1885 = vmatprep.mubr.f32.mxu0 0.0
        %1886 = vmatmul.mubr.f32.gmra.mrb[0].mxu0 %v484
        %v1887 = vpop.f32.mrb[0].mxu0
        %v1888 = vadd.f32 0.0, %v1887
        %v1889 = vpop.f32.mrb[0].mxu0
        %1890 = vmatprep.mubr.f32.mxu0 0.0
        %1891 = vmatmul.mubr.f32.gmra.mrb[0].mxu0 %v486
        %v1892 = vpop.f32.mrb[0].mxu0
        %v1893 = vadd.f32 0.0, %v1892
        %v1894 = vpop.f32.mrb[0].mxu0
        %1895 = vmatprep.mubr.f32.mxu0 0.0
        %1896 = vmatmul.mubr.f32.gmra.mrb[0].mxu0 %v488
        %v1897 = vpop.f32.mrb[0].mxu0
        %v1898 = vadd.f32 0.0, %v1897
        %v1899 = vpop.f32.mrb[0].mxu0
        %1900 = vmatprep.mubr.f32.mxu0 0.0
        %1901 = vmatmul.mubr.f32.gmra.mrb[0].mxu0 %v490
        %v1902 = vpop.f32.mrb[0].mxu0
        %v1903 = vadd.f32 0.0, %v1902
        %v1904 = vpop.f32.mrb[0].mxu0
        %1905 = vmatprep.mubr.f32.mxu0 0.0
        %1906 = vmatmul.mubr.f32.gmra.mrb[0].mxu0 %v492
        %v1907 = vpop.f32.mrb[0].mxu0
        %v1908 = vadd.f32 0.0, %v1907
        %v1909 = vpop.f32.mrb[0].mxu0
        %1910 = vmatprep.mubr.f32.mxu0 0.0
        %1911 = vmatmul.mubr.f32.gmra.mrb[0].mxu0 %v494
        %v1912 = vpop.f32.mrb[0].mxu0
        %v1913 = vadd.f32 0.0, %v1912
        %v1914 = vpop.f32.mrb[0].mxu0
        %1915 = vmatprep.mubr.f32.mxu0 0.0
        %1916 = vmatmul.mubr.f32.gmra.mrb[0].mxu0 %v496
        %v1917 = vpop.f32.mrb[0].mxu0
        %v1918 = vadd.f32 0.0, %v1917
        %v1919 = vpop.f32.mrb[0].mxu0
        %1920 = vmatprep.mubr.f32.mxu0 0.0
        %1921 = vmatmul.mubr.f32.gmra.mrb[0].mxu0 %v498
        %v1922 = vpop.f32.mrb[0].mxu0
        %v1923 = vadd.f32 0.0, %v1922
        %v1924 = vpop.f32.mrb[0].mxu0
        %1925 = vmatprep.mubr.f32.mxu0 0.0
        %1926 = vmatmul.mubr.f32.gmra.mrb[0].mxu0 %v1704
        %v1927 = vpop.f32.mrb[0].mxu0
        %v1928 = vadd.f32 0.0, %v1927
        %v1929 = vpop.f32.mrb[0].mxu0
        %1930 = vmatprep.mubr.f32.mxu0 0.0
        %1931 = vmatmul.mubr.f32.gmra.mrb[0].mxu0 %v1706
        %v1932 = vpop.f32.mrb[0].mxu0
        %v1933 = vadd.f32 0.0, %v1932
        %v1934 = vpop.f32.mrb[0].mxu0
        %1935 = vdwg.mxu0
        %v1936 = vadd.f32 %v1664, %v1778
        %v1937 = vadd.f32 %v1665, %v1783
        %v1938 = vadd.f32 %v1666, %v1788
        %v1939 = vadd.f32 %v1667, %v1793
        %v1940 = vadd.f32 %v1668, %v1798
        %v1941 = vadd.f32 %v1669, %v1803
        %v1942 = vadd.f32 %v1670, %v1808
        %v1943 = vadd.f32 %v1671, %v1813
        %v1944 = vadd.f32 %v1672, %v1818
        %v1945 = vadd.f32 %v1673, %v1823
        %v1946 = vadd.f32 %v1674, %v1828
        %v1947 = vadd.f32 %v1675, %v1833
        %v1948 = vadd.f32 %v1676, %v1838
        %v1949 = vadd.f32 %v1677, %v1843
        %v1950 = vadd.f32 %v1678, %v1848
        %v1951 = vadd.f32 %v1679, %v1853
        %v1952 = vadd.f32 %v1680, %v1858
        %v1953 = vadd.f32 %v1681, %v1863
        %v1954 = vadd.f32 %v1682, %v1868
        %v1955 = vadd.f32 %v1683, %v1873
        %v1956 = vadd.f32 %v1684, %v1878
        %v1957 = vadd.f32 %v1685, %v1883
        %v1958 = vadd.f32 %v1686, %v1888
        %v1959 = vadd.f32 %v1687, %v1893
        %v1960 = vadd.f32 %v1688, %v1898
        %v1961 = vadd.f32 %v1689, %v1903
        %v1962 = vadd.f32 %v1690, %v1908
        %v1963 = vadd.f32 %v1691, %v1913
        %v1964 = vadd.f32 %v1692, %v1918
        %v1965 = vadd.f32 %v1693, %v1923
        %v1966 = vadd.f32 %v1694, %v1928
        %v1967 = vadd.f32 %v1695, %v1933
        %v1968 = vrot.slane %v297, 2
        %v1969 = vrot.slane %v298, 2
        %v1970 = vsel %vm1021, %v1968, %v1969
        %v1971 = vrot.slane %v299, 2
        %v1972 = vsel %vm1021, %v1969, %v1971
        %s1973 = scalar_lea.vmem %s1, 20
        %v1974 = vld [vmem:[%s1973] sm:$0xf]
        %v1975 = vsel %vm435, %v1970, 0
        %v1977 = vsel %vm435, %v1972, 0
        %v1980 = vsel %vm500, %v1974, 0
        %1982 = vmatprep.subr.mxu0 0.0
        %1983 = vmatpush1.msra.mxu0 %v1980
        %1984 = vmatprep.subr.mxu0 0.0
        %1985 = vmatpush1.msra.mxu0 0.0
        %1986 = vmatprep.subr.mxu0 0.0
        %1987 = vmatpush1.msra.mxu0 0.0
        %1988 = vmatprep.subr.mxu0 0.0
        %1989 = vmatpush1.msra.mxu0 0.0
        %1990 = vmatprep.subr.mxu0 0.0
        %1991 = vmatpush1.msra.mxu0 0.0
        %1992 = vmatprep.subr.mxu0 0.0
        %1993 = vmatpush1.msra.mxu0 0.0
        %1994 = vmatprep.subr.mxu0 0.0
        %1995 = vmatpush1.msra.mxu0 0.0
        %1996 = vmatprep.subr.mxu0 0.0
        %1997 = vmatpush1.msra.mxu0 0.0
        %1998 = vmatprep.subr.mxu0 0.0
        %1999 = vmatpush1.msra.mxu0 0.0
        %2000 = vmatprep.subr.mxu0 0.0
        %2001 = vmatpush1.msra.mxu0 0.0
        %2002 = vmatprep.subr.mxu0 0.0
        %2003 = vmatpush1.msra.mxu0 0.0
        %2004 = vmatprep.subr.mxu0 0.0
        %2005 = vmatpush1.msra.mxu0 0.0
        %2006 = vmatprep.subr.mxu0 0.0
        %2007 = vmatpush1.msra.mxu0 0.0
        %2008 = vmatprep.subr.mxu0 0.0
        %2009 = vmatpush1.msra.mxu0 0.0
        %2010 = vmatprep.subr.mxu0 0.0
        %2011 = vmatpush1.msra.mxu0 0.0
        %2012 = vmatprep.subr.mxu0 0.0
        %2013 = vmatpush1.msra.mxu0 0.0
        %2014 = vmatprep.subr.mxu0 0.0
        %2015 = vmatpush1.msra.mxu0 0.0
        %2016 = vmatprep.subr.mxu0 0.0
        %2017 = vmatpush1.msra.mxu0 0.0
        %2018 = vmatprep.subr.mxu0 0.0
        %2019 = vmatpush1.msra.mxu0 0.0
        %2020 = vmatprep.subr.mxu0 0.0
        %2021 = vmatpush1.msra.mxu0 0.0
        %2022 = vmatprep.subr.mxu0 0.0
        %2023 = vmatpush1.msra.mxu0 0.0
        %2024 = vmatprep.subr.mxu0 0.0
        %2025 = vmatpush1.msra.mxu0 0.0
        %2026 = vmatprep.subr.mxu0 0.0
        %2027 = vmatpush1.msra.mxu0 0.0
        %2028 = vmatprep.subr.mxu0 0.0
        %2029 = vmatpush1.msra.mxu0 0.0
        %2030 = vmatprep.subr.mxu0 0.0
        %2031 = vmatpush1.msra.mxu0 0.0
        %2032 = vmatprep.subr.mxu0 0.0
        %2033 = vmatpush1.msra.mxu0 0.0
        %2034 = vmatprep.subr.mxu0 0.0
        %2035 = vmatpush1.msra.mxu0 0.0
        %2036 = vmatprep.subr.mxu0 0.0
        %2037 = vmatpush1.msra.mxu0 0.0
        %2038 = vmatprep.subr.mxu0 0.0
        %2039 = vmatpush1.msra.mxu0 0.0
        %2040 = vmatprep.subr.mxu0 0.0
        %2041 = vmatpush1.msra.mxu0 0.0
        %2042 = vmatprep.subr.mxu0 0.0
        %2043 = vmatpush1.msra.mxu0 0.0
        %2044 = vmatprep.subr.mxu0 0.0
        %2045 = vmatpush1.msra.mxu0 0.0
        %2046 = vmatprep.mubr.f32.mxu0 0.0
        %2047 = vmatmul.mubr.f32.gmra.mrb[0].mxu0 %v1108
        %v2048 = vpop.f32.mrb[0].mxu0
        %v2049 = vadd.f32 0.0, %v2048
        %v2050 = vpop.f32.mrb[0].mxu0
        %2051 = vmatprep.mubr.f32.mxu0 0.0
        %2052 = vmatmul.mubr.f32.gmra.mrb[0].mxu0 %v1110
        %v2053 = vpop.f32.mrb[0].mxu0
        %v2054 = vadd.f32 0.0, %v2053
        %v2055 = vpop.f32.mrb[0].mxu0
        %2056 = vmatprep.mubr.f32.mxu0 0.0
        %2057 = vmatmul.mubr.f32.gmra.mrb[0].mxu0 %v1112
        %v2058 = vpop.f32.mrb[0].mxu0
        %v2059 = vadd.f32 0.0, %v2058
        %v2060 = vpop.f32.mrb[0].mxu0
        %2061 = vmatprep.mubr.f32.mxu0 0.0
        %2062 = vmatmul.mubr.f32.gmra.mrb[0].mxu0 %v1114
        %v2063 = vpop.f32.mrb[0].mxu0
        %v2064 = vadd.f32 0.0, %v2063
        %v2065 = vpop.f32.mrb[0].mxu0
        %2066 = vmatprep.mubr.f32.mxu0 0.0
        %2067 = vmatmul.mubr.f32.gmra.mrb[0].mxu0 %v1116
        %v2068 = vpop.f32.mrb[0].mxu0
        %v2069 = vadd.f32 0.0, %v2068
        %v2070 = vpop.f32.mrb[0].mxu0
        %2071 = vmatprep.mubr.f32.mxu0 0.0
        %2072 = vmatmul.mubr.f32.gmra.mrb[0].mxu0 %v1118
        %v2073 = vpop.f32.mrb[0].mxu0
        %v2074 = vadd.f32 0.0, %v2073
        %v2075 = vpop.f32.mrb[0].mxu0
        %2076 = vmatprep.mubr.f32.mxu0 0.0
        %2077 = vmatmul.mubr.f32.gmra.mrb[0].mxu0 %v1120
        %v2078 = vpop.f32.mrb[0].mxu0
        %v2079 = vadd.f32 0.0, %v2078
        %v2080 = vpop.f32.mrb[0].mxu0
        %2081 = vmatprep.mubr.f32.mxu0 0.0
        %2082 = vmatmul.mubr.f32.gmra.mrb[0].mxu0 %v1122
        %v2083 = vpop.f32.mrb[0].mxu0
        %v2084 = vadd.f32 0.0, %v2083
        %v2085 = vpop.f32.mrb[0].mxu0
        %2086 = vmatprep.mubr.f32.mxu0 0.0
        %2087 = vmatmul.mubr.f32.gmra.mrb[0].mxu0 %v1124
        %v2088 = vpop.f32.mrb[0].mxu0
        %v2089 = vadd.f32 0.0, %v2088
        %v2090 = vpop.f32.mrb[0].mxu0
        %2091 = vmatprep.mubr.f32.mxu0 0.0
        %2092 = vmatmul.mubr.f32.gmra.mrb[0].mxu0 %v1126
        %v2093 = vpop.f32.mrb[0].mxu0
        %v2094 = vadd.f32 0.0, %v2093
        %v2095 = vpop.f32.mrb[0].mxu0
        %2096 = vmatprep.mubr.f32.mxu0 0.0
        %2097 = vmatmul.mubr.f32.gmra.mrb[0].mxu0 %v1128
        %v2098 = vpop.f32.mrb[0].mxu0
        %v2099 = vadd.f32 0.0, %v2098
        %v2100 = vpop.f32.mrb[0].mxu0
        %2101 = vmatprep.mubr.f32.mxu0 0.0
        %2102 = vmatmul.mubr.f32.gmra.mrb[0].mxu0 %v1130
        %v2103 = vpop.f32.mrb[0].mxu0
        %v2104 = vadd.f32 0.0, %v2103
        %v2105 = vpop.f32.mrb[0].mxu0
        %2106 = vmatprep.mubr.f32.mxu0 0.0
        %2107 = vmatmul.mubr.f32.gmra.mrb[0].mxu0 %v1132
        %v2108 = vpop.f32.mrb[0].mxu0
        %v2109 = vadd.f32 0.0, %v2108
        %v2110 = vpop.f32.mrb[0].mxu0
        %2111 = vmatprep.mubr.f32.mxu0 0.0
        %2112 = vmatmul.mubr.f32.gmra.mrb[0].mxu0 %v1134
        %v2113 = vpop.f32.mrb[0].mxu0
        %v2114 = vadd.f32 0.0, %v2113
        %v2115 = vpop.f32.mrb[0].mxu0
        %2116 = vmatprep.mubr.f32.mxu0 0.0
        %2117 = vmatmul.mubr.f32.gmra.mrb[0].mxu0 %v1136
        %v2118 = vpop.f32.mrb[0].mxu0
        %v2119 = vadd.f32 0.0, %v2118
        %v2120 = vpop.f32.mrb[0].mxu0
        %2121 = vmatprep.mubr.f32.mxu0 0.0
        %2122 = vmatmul.mubr.f32.gmra.mrb[0].mxu0 %v1138
        %v2123 = vpop.f32.mrb[0].mxu0
        %v2124 = vadd.f32 0.0, %v2123
        %v2125 = vpop.f32.mrb[0].mxu0
        %2126 = vmatprep.mubr.f32.mxu0 0.0
        %2127 = vmatmul.mubr.f32.gmra.mrb[0].mxu0 %v1140
        %v2128 = vpop.f32.mrb[0].mxu0
        %v2129 = vadd.f32 0.0, %v2128
        %v2130 = vpop.f32.mrb[0].mxu0
        %2131 = vmatprep.mubr.f32.mxu0 0.0
        %2132 = vmatmul.mubr.f32.gmra.mrb[0].mxu0 %v1142
        %v2133 = vpop.f32.mrb[0].mxu0
        %v2134 = vadd.f32 0.0, %v2133
        %v2135 = vpop.f32.mrb[0].mxu0
        %2136 = vmatprep.mubr.f32.mxu0 0.0
        %2137 = vmatmul.mubr.f32.gmra.mrb[0].mxu0 %v1144
        %v2138 = vpop.f32.mrb[0].mxu0
        %v2139 = vadd.f32 0.0, %v2138
        %v2140 = vpop.f32.mrb[0].mxu0
        %2141 = vmatprep.mubr.f32.mxu0 0.0
        %2142 = vmatmul.mubr.f32.gmra.mrb[0].mxu0 %v1146
        %v2143 = vpop.f32.mrb[0].mxu0
        %v2144 = vadd.f32 0.0, %v2143
        %v2145 = vpop.f32.mrb[0].mxu0
        %2146 = vmatprep.mubr.f32.mxu0 0.0
        %2147 = vmatmul.mubr.f32.gmra.mrb[0].mxu0 %v1148
        %v2148 = vpop.f32.mrb[0].mxu0
        %v2149 = vadd.f32 0.0, %v2148
        %v2150 = vpop.f32.mrb[0].mxu0
        %2151 = vmatprep.mubr.f32.mxu0 0.0
        %2152 = vmatmul.mubr.f32.gmra.mrb[0].mxu0 %v1150
        %v2153 = vpop.f32.mrb[0].mxu0
        %v2154 = vadd.f32 0.0, %v2153
        %v2155 = vpop.f32.mrb[0].mxu0
        %2156 = vmatprep.mubr.f32.mxu0 0.0
        %2157 = vmatmul.mubr.f32.gmra.mrb[0].mxu0 %v1152
        %v2158 = vpop.f32.mrb[0].mxu0
        %v2159 = vadd.f32 0.0, %v2158
        %v2160 = vpop.f32.mrb[0].mxu0
        %2161 = vmatprep.mubr.f32.mxu0 0.0
        %2162 = vmatmul.mubr.f32.gmra.mrb[0].mxu0 %v1154
        %v2163 = vpop.f32.mrb[0].mxu0
        %v2164 = vadd.f32 0.0, %v2163
        %v2165 = vpop.f32.mrb[0].mxu0
        %2166 = vmatprep.mubr.f32.mxu0 0.0
        %2167 = vmatmul.mubr.f32.gmra.mrb[0].mxu0 %v1156
        %v2168 = vpop.f32.mrb[0].mxu0
        %v2169 = vadd.f32 0.0, %v2168
        %v2170 = vpop.f32.mrb[0].mxu0
        %2171 = vmatprep.mubr.f32.mxu0 0.0
        %2172 = vmatmul.mubr.f32.gmra.mrb[0].mxu0 %v1158
        %v2173 = vpop.f32.mrb[0].mxu0
        %v2174 = vadd.f32 0.0, %v2173
        %v2175 = vpop.f32.mrb[0].mxu0
        %2176 = vmatprep.mubr.f32.mxu0 0.0
        %2177 = vmatmul.mubr.f32.gmra.mrb[0].mxu0 %v1160
        %v2178 = vpop.f32.mrb[0].mxu0
        %v2179 = vadd.f32 0.0, %v2178
        %v2180 = vpop.f32.mrb[0].mxu0
        %2181 = vmatprep.mubr.f32.mxu0 0.0
        %2182 = vmatmul.mubr.f32.gmra.mrb[0].mxu0 %v1162
        %v2183 = vpop.f32.mrb[0].mxu0
        %v2184 = vadd.f32 0.0, %v2183
        %v2185 = vpop.f32.mrb[0].mxu0
        %2186 = vmatprep.mubr.f32.mxu0 0.0
        %2187 = vmatmul.mubr.f32.gmra.mrb[0].mxu0 %v1164
        %v2188 = vpop.f32.mrb[0].mxu0
        %v2189 = vadd.f32 0.0, %v2188
        %v2190 = vpop.f32.mrb[0].mxu0
        %2191 = vmatprep.mubr.f32.mxu0 0.0
        %2192 = vmatmul.mubr.f32.gmra.mrb[0].mxu0 %v1166
        %v2193 = vpop.f32.mrb[0].mxu0
        %v2194 = vadd.f32 0.0, %v2193
        %v2195 = vpop.f32.mrb[0].mxu0
        %2196 = vmatprep.mubr.f32.mxu0 0.0
        %2197 = vmatmul.mubr.f32.gmra.mrb[0].mxu0 %v1975
        %v2198 = vpop.f32.mrb[0].mxu0
        %v2199 = vadd.f32 0.0, %v2198
        %v2200 = vpop.f32.mrb[0].mxu0
        %2201 = vmatprep.mubr.f32.mxu0 0.0
        %2202 = vmatmul.mubr.f32.gmra.mrb[0].mxu0 %v1977
        %v2203 = vpop.f32.mrb[0].mxu0
        %v2204 = vadd.f32 0.0, %v2203
        %v2205 = vpop.f32.mrb[0].mxu0
        %2206 = vdwg.mxu0
        %v2207 = vadd.f32 %v1936, %v2049
        %v2208 = vadd.f32 %v1937, %v2054
        %v2209 = vadd.f32 %v1938, %v2059
        %v2210 = vadd.f32 %v1939, %v2064
        %v2211 = vadd.f32 %v1940, %v2069
        %v2212 = vadd.f32 %v1941, %v2074
        %v2213 = vadd.f32 %v1942, %v2079
        %v2214 = vadd.f32 %v1943, %v2084
        %v2215 = vadd.f32 %v1944, %v2089
        %v2216 = vadd.f32 %v1945, %v2094
        %v2217 = vadd.f32 %v1946, %v2099
        %v2218 = vadd.f32 %v1947, %v2104
        %v2219 = vadd.f32 %v1948, %v2109
        %v2220 = vadd.f32 %v1949, %v2114
        %v2221 = vadd.f32 %v1950, %v2119
        %v2222 = vadd.f32 %v1951, %v2124
        %v2223 = vadd.f32 %v1952, %v2129
        %v2224 = vadd.f32 %v1953, %v2134
        %v2225 = vadd.f32 %v1954, %v2139
        %v2226 = vadd.f32 %v1955, %v2144
        %v2227 = vadd.f32 %v1956, %v2149
        %v2228 = vadd.f32 %v1957, %v2154
        %v2229 = vadd.f32 %v1958, %v2159
        %v2230 = vadd.f32 %v1959, %v2164
        %v2231 = vadd.f32 %v1960, %v2169
        %v2232 = vadd.f32 %v1961, %v2174
        %v2233 = vadd.f32 %v1962, %v2179
        %v2234 = vadd.f32 %v1963, %v2184
        %v2235 = vadd.f32 %v1964, %v2189
        %v2236 = vadd.f32 %v1965, %v2194
        %v2237 = vadd.f32 %v1966, %v2199
        %v2238 = vadd.f32 %v1967, %v2204
        %s2239 = scalar_lea.vmem %s1, 24
        %v2240 = vld [vmem:[%s2239] sm:$0xf]
        %v2242 = vsel %vm435, %v300, 0
        %v2245 = vsel %vm435, %v301, 0
        %v2248 = vsel %vm500, %v2240, 0
        %2250 = vmatprep.subr.mxu0 0.0
        %2251 = vmatpush1.msra.mxu0 %v2248
        %2252 = vmatprep.subr.mxu0 0.0
        %2253 = vmatpush1.msra.mxu0 0.0
        %2254 = vmatprep.subr.mxu0 0.0
        %2255 = vmatpush1.msra.mxu0 0.0
        %2256 = vmatprep.subr.mxu0 0.0
        %2257 = vmatpush1.msra.mxu0 0.0
        %2258 = vmatprep.subr.mxu0 0.0
        %2259 = vmatpush1.msra.mxu0 0.0
        %2260 = vmatprep.subr.mxu0 0.0
        %2261 = vmatpush1.msra.mxu0 0.0
        %2262 = vmatprep.subr.mxu0 0.0
        %2263 = vmatpush1.msra.mxu0 0.0
        %2264 = vmatprep.subr.mxu0 0.0
        %2265 = vmatpush1.msra.mxu0 0.0
        %2266 = vmatprep.subr.mxu0 0.0
        %2267 = vmatpush1.msra.mxu0 0.0
        %2268 = vmatprep.subr.mxu0 0.0
        %2269 = vmatpush1.msra.mxu0 0.0
        %2270 = vmatprep.subr.mxu0 0.0
        %2271 = vmatpush1.msra.mxu0 0.0
        %2272 = vmatprep.subr.mxu0 0.0
        %2273 = vmatpush1.msra.mxu0 0.0
        %2274 = vmatprep.subr.mxu0 0.0
        %2275 = vmatpush1.msra.mxu0 0.0
        %2276 = vmatprep.subr.mxu0 0.0
        %2277 = vmatpush1.msra.mxu0 0.0
        %2278 = vmatprep.subr.mxu0 0.0
        %2279 = vmatpush1.msra.mxu0 0.0
        %2280 = vmatprep.subr.mxu0 0.0
        %2281 = vmatpush1.msra.mxu0 0.0
        %2282 = vmatprep.subr.mxu0 0.0
        %2283 = vmatpush1.msra.mxu0 0.0
        %2284 = vmatprep.subr.mxu0 0.0
        %2285 = vmatpush1.msra.mxu0 0.0
        %2286 = vmatprep.subr.mxu0 0.0
        %2287 = vmatpush1.msra.mxu0 0.0
        %2288 = vmatprep.subr.mxu0 0.0
        %2289 = vmatpush1.msra.mxu0 0.0
        %2290 = vmatprep.subr.mxu0 0.0
        %2291 = vmatpush1.msra.mxu0 0.0
        %2292 = vmatprep.subr.mxu0 0.0
        %2293 = vmatpush1.msra.mxu0 0.0
        %2294 = vmatprep.subr.mxu0 0.0
        %2295 = vmatpush1.msra.mxu0 0.0
        %2296 = vmatprep.subr.mxu0 0.0
        %2297 = vmatpush1.msra.mxu0 0.0
        %2298 = vmatprep.subr.mxu0 0.0
        %2299 = vmatpush1.msra.mxu0 0.0
        %2300 = vmatprep.subr.mxu0 0.0
        %2301 = vmatpush1.msra.mxu0 0.0
        %2302 = vmatprep.subr.mxu0 0.0
        %2303 = vmatpush1.msra.mxu0 0.0
        %2304 = vmatprep.subr.mxu0 0.0
        %2305 = vmatpush1.msra.mxu0 0.0
        %2306 = vmatprep.subr.mxu0 0.0
        %2307 = vmatpush1.msra.mxu0 0.0
        %2308 = vmatprep.subr.mxu0 0.0
        %2309 = vmatpush1.msra.mxu0 0.0
        %2310 = vmatprep.subr.mxu0 0.0
        %2311 = vmatpush1.msra.mxu0 0.0
        %2312 = vmatprep.subr.mxu0 0.0
        %2313 = vmatpush1.msra.mxu0 0.0
        %2314 = vmatprep.mubr.f32.mxu0 0.0
        %2315 = vmatmul.mubr.f32.gmra.mrb[0].mxu0 %v737
        %v2316 = vpop.f32.mrb[0].mxu0
        %v2317 = vadd.f32 0.0, %v2316
        %v2318 = vpop.f32.mrb[0].mxu0
        %2319 = vmatprep.mubr.f32.mxu0 0.0
        %2320 = vmatmul.mubr.f32.gmra.mrb[0].mxu0 %v739
        %v2321 = vpop.f32.mrb[0].mxu0
        %v2322 = vadd.f32 0.0, %v2321
        %v2323 = vpop.f32.mrb[0].mxu0
        %2324 = vmatprep.mubr.f32.mxu0 0.0
        %2325 = vmatmul.mubr.f32.gmra.mrb[0].mxu0 %v741
        %v2326 = vpop.f32.mrb[0].mxu0
        %v2327 = vadd.f32 0.0, %v2326
        %v2328 = vpop.f32.mrb[0].mxu0
        %2329 = vmatprep.mubr.f32.mxu0 0.0
        %2330 = vmatmul.mubr.f32.gmra.mrb[0].mxu0 %v743
        %v2331 = vpop.f32.mrb[0].mxu0
        %v2332 = vadd.f32 0.0, %v2331
        %v2333 = vpop.f32.mrb[0].mxu0
        %2334 = vmatprep.mubr.f32.mxu0 0.0
        %2335 = vmatmul.mubr.f32.gmra.mrb[0].mxu0 %v745
        %v2336 = vpop.f32.mrb[0].mxu0
        %v2337 = vadd.f32 0.0, %v2336
        %v2338 = vpop.f32.mrb[0].mxu0
        %2339 = vmatprep.mubr.f32.mxu0 0.0
        %2340 = vmatmul.mubr.f32.gmra.mrb[0].mxu0 %v747
        %v2341 = vpop.f32.mrb[0].mxu0
        %v2342 = vadd.f32 0.0, %v2341
        %v2343 = vpop.f32.mrb[0].mxu0
        %2344 = vmatprep.mubr.f32.mxu0 0.0
        %2345 = vmatmul.mubr.f32.gmra.mrb[0].mxu0 %v749
        %v2346 = vpop.f32.mrb[0].mxu0
        %v2347 = vadd.f32 0.0, %v2346
        %v2348 = vpop.f32.mrb[0].mxu0
        %2349 = vmatprep.mubr.f32.mxu0 0.0
        %2350 = vmatmul.mubr.f32.gmra.mrb[0].mxu0 %v751
        %v2351 = vpop.f32.mrb[0].mxu0
        %v2352 = vadd.f32 0.0, %v2351
        %v2353 = vpop.f32.mrb[0].mxu0
        %2354 = vmatprep.mubr.f32.mxu0 0.0
        %2355 = vmatmul.mubr.f32.gmra.mrb[0].mxu0 %v753
        %v2356 = vpop.f32.mrb[0].mxu0
        %v2357 = vadd.f32 0.0, %v2356
        %v2358 = vpop.f32.mrb[0].mxu0
        %2359 = vmatprep.mubr.f32.mxu0 0.0
        %2360 = vmatmul.mubr.f32.gmra.mrb[0].mxu0 %v755
        %v2361 = vpop.f32.mrb[0].mxu0
        %v2362 = vadd.f32 0.0, %v2361
        %v2363 = vpop.f32.mrb[0].mxu0
        %2364 = vmatprep.mubr.f32.mxu0 0.0
        %2365 = vmatmul.mubr.f32.gmra.mrb[0].mxu0 %v757
        %v2366 = vpop.f32.mrb[0].mxu0
        %v2367 = vadd.f32 0.0, %v2366
        %v2368 = vpop.f32.mrb[0].mxu0
        %2369 = vmatprep.mubr.f32.mxu0 0.0
        %2370 = vmatmul.mubr.f32.gmra.mrb[0].mxu0 %v759
        %v2371 = vpop.f32.mrb[0].mxu0
        %v2372 = vadd.f32 0.0, %v2371
        %v2373 = vpop.f32.mrb[0].mxu0
        %2374 = vmatprep.mubr.f32.mxu0 0.0
        %2375 = vmatmul.mubr.f32.gmra.mrb[0].mxu0 %v761
        %v2376 = vpop.f32.mrb[0].mxu0
        %v2377 = vadd.f32 0.0, %v2376
        %v2378 = vpop.f32.mrb[0].mxu0
        %2379 = vmatprep.mubr.f32.mxu0 0.0
        %2380 = vmatmul.mubr.f32.gmra.mrb[0].mxu0 %v763
        %v2381 = vpop.f32.mrb[0].mxu0
        %v2382 = vadd.f32 0.0, %v2381
        %v2383 = vpop.f32.mrb[0].mxu0
        %2384 = vmatprep.mubr.f32.mxu0 0.0
        %2385 = vmatmul.mubr.f32.gmra.mrb[0].mxu0 %v765
        %v2386 = vpop.f32.mrb[0].mxu0
        %v2387 = vadd.f32 0.0, %v2386
        %v2388 = vpop.f32.mrb[0].mxu0
        %2389 = vmatprep.mubr.f32.mxu0 0.0
        %2390 = vmatmul.mubr.f32.gmra.mrb[0].mxu0 %v767
        %v2391 = vpop.f32.mrb[0].mxu0
        %v2392 = vadd.f32 0.0, %v2391
        %v2393 = vpop.f32.mrb[0].mxu0
        %2394 = vmatprep.mubr.f32.mxu0 0.0
        %2395 = vmatmul.mubr.f32.gmra.mrb[0].mxu0 %v769
        %v2396 = vpop.f32.mrb[0].mxu0
        %v2397 = vadd.f32 0.0, %v2396
        %v2398 = vpop.f32.mrb[0].mxu0
        %2399 = vmatprep.mubr.f32.mxu0 0.0
        %2400 = vmatmul.mubr.f32.gmra.mrb[0].mxu0 %v771
        %v2401 = vpop.f32.mrb[0].mxu0
        %v2402 = vadd.f32 0.0, %v2401
        %v2403 = vpop.f32.mrb[0].mxu0
        %2404 = vmatprep.mubr.f32.mxu0 0.0
        %2405 = vmatmul.mubr.f32.gmra.mrb[0].mxu0 %v773
        %v2406 = vpop.f32.mrb[0].mxu0
        %v2407 = vadd.f32 0.0, %v2406
        %v2408 = vpop.f32.mrb[0].mxu0
        %2409 = vmatprep.mubr.f32.mxu0 0.0
        %2410 = vmatmul.mubr.f32.gmra.mrb[0].mxu0 %v775
        %v2411 = vpop.f32.mrb[0].mxu0
        %v2412 = vadd.f32 0.0, %v2411
        %v2413 = vpop.f32.mrb[0].mxu0
        %2414 = vmatprep.mubr.f32.mxu0 0.0
        %2415 = vmatmul.mubr.f32.gmra.mrb[0].mxu0 %v777
        %v2416 = vpop.f32.mrb[0].mxu0
        %v2417 = vadd.f32 0.0, %v2416
        %v2418 = vpop.f32.mrb[0].mxu0
        %2419 = vmatprep.mubr.f32.mxu0 0.0
        %2420 = vmatmul.mubr.f32.gmra.mrb[0].mxu0 %v779
        %v2421 = vpop.f32.mrb[0].mxu0
        %v2422 = vadd.f32 0.0, %v2421
        %v2423 = vpop.f32.mrb[0].mxu0
        %2424 = vmatprep.mubr.f32.mxu0 0.0
        %2425 = vmatmul.mubr.f32.gmra.mrb[0].mxu0 %v781
        %v2426 = vpop.f32.mrb[0].mxu0
        %v2427 = vadd.f32 0.0, %v2426
        %v2428 = vpop.f32.mrb[0].mxu0
        %2429 = vmatprep.mubr.f32.mxu0 0.0
        %2430 = vmatmul.mubr.f32.gmra.mrb[0].mxu0 %v783
        %v2431 = vpop.f32.mrb[0].mxu0
        %v2432 = vadd.f32 0.0, %v2431
        %v2433 = vpop.f32.mrb[0].mxu0
        %2434 = vmatprep.mubr.f32.mxu0 0.0
        %2435 = vmatmul.mubr.f32.gmra.mrb[0].mxu0 %v785
        %v2436 = vpop.f32.mrb[0].mxu0
        %v2437 = vadd.f32 0.0, %v2436
        %v2438 = vpop.f32.mrb[0].mxu0
        %2439 = vmatprep.mubr.f32.mxu0 0.0
        %2440 = vmatmul.mubr.f32.gmra.mrb[0].mxu0 %v787
        %v2441 = vpop.f32.mrb[0].mxu0
        %v2442 = vadd.f32 0.0, %v2441
        %v2443 = vpop.f32.mrb[0].mxu0
        %2444 = vmatprep.mubr.f32.mxu0 0.0
        %2445 = vmatmul.mubr.f32.gmra.mrb[0].mxu0 %v789
        %v2446 = vpop.f32.mrb[0].mxu0
        %v2447 = vadd.f32 0.0, %v2446
        %v2448 = vpop.f32.mrb[0].mxu0
        %2449 = vmatprep.mubr.f32.mxu0 0.0
        %2450 = vmatmul.mubr.f32.gmra.mrb[0].mxu0 %v791
        %v2451 = vpop.f32.mrb[0].mxu0
        %v2452 = vadd.f32 0.0, %v2451
        %v2453 = vpop.f32.mrb[0].mxu0
        %2454 = vmatprep.mubr.f32.mxu0 0.0
        %2455 = vmatmul.mubr.f32.gmra.mrb[0].mxu0 %v1431
        %v2456 = vpop.f32.mrb[0].mxu0
        %v2457 = vadd.f32 0.0, %v2456
        %v2458 = vpop.f32.mrb[0].mxu0
        %2459 = vmatprep.mubr.f32.mxu0 0.0
        %2460 = vmatmul.mubr.f32.gmra.mrb[0].mxu0 %v1434
        %v2461 = vpop.f32.mrb[0].mxu0
        %v2462 = vadd.f32 0.0, %v2461
        %v2463 = vpop.f32.mrb[0].mxu0
        %2464 = vmatprep.mubr.f32.mxu0 0.0
        %2465 = vmatmul.mubr.f32.gmra.mrb[0].mxu0 %v2242
        %v2466 = vpop.f32.mrb[0].mxu0
        %v2467 = vadd.f32 0.0, %v2466
        %v2468 = vpop.f32.mrb[0].mxu0
        %2469 = vmatprep.mubr.f32.mxu0 0.0
        %2470 = vmatmul.mubr.f32.gmra.mrb[0].mxu0 %v2245
        %v2471 = vpop.f32.mrb[0].mxu0
        %v2472 = vadd.f32 0.0, %v2471
        %v2473 = vpop.f32.mrb[0].mxu0
        %2474 = vdwg.mxu0
        %v2475 = vadd.f32 %v2207, %v2317
        %v2476 = vadd.f32 %v2208, %v2322
        %v2477 = vadd.f32 %v2209, %v2327
        %v2478 = vadd.f32 %v2210, %v2332
        %v2479 = vadd.f32 %v2211, %v2337
        %v2480 = vadd.f32 %v2212, %v2342
        %v2481 = vadd.f32 %v2213, %v2347
        %v2482 = vadd.f32 %v2214, %v2352
        %v2483 = vadd.f32 %v2215, %v2357
        %v2484 = vadd.f32 %v2216, %v2362
        %v2485 = vadd.f32 %v2217, %v2367
        %v2486 = vadd.f32 %v2218, %v2372
        %v2487 = vadd.f32 %v2219, %v2377
        %v2488 = vadd.f32 %v2220, %v2382
        %v2489 = vadd.f32 %v2221, %v2387
        %v2490 = vadd.f32 %v2222, %v2392
        %v2491 = vadd.f32 %v2223, %v2397
        %v2492 = vadd.f32 %v2224, %v2402
        %v2493 = vadd.f32 %v2225, %v2407
        %v2494 = vadd.f32 %v2226, %v2412
        %v2495 = vadd.f32 %v2227, %v2417
        %v2496 = vadd.f32 %v2228, %v2422
        %v2497 = vadd.f32 %v2229, %v2427
        %v2498 = vadd.f32 %v2230, %v2432
        %v2499 = vadd.f32 %v2231, %v2437
        %v2500 = vadd.f32 %v2232, %v2442
        %v2501 = vadd.f32 %v2233, %v2447
        %v2502 = vadd.f32 %v2234, %v2452
        %v2503 = vadd.f32 %v2235, %v2457
        %v2504 = vadd.f32 %v2236, %v2462
        %v2505 = vadd.f32 %v2237, %v2467
        %v2506 = vadd.f32 %v2238, %v2472
        %v2508 = vrot.slane %v300, 1
        %v2509 = vrot.slane %v301, 1
        %v2510 = vsel %vm352, %v2508, %v2509
        %v2511 = vrot.slane %v302, 1
        %v2512 = vsel %vm352, %v2509, %v2511
        %s2513 = scalar_lea.vmem %s1, 28
        %v2514 = vld [vmem:[%s2513] sm:$0xf]
        %v2515 = vsel %vm435, %v2510, 0
        %v2517 = vsel %vm435, %v2512, 0
        %v2520 = vsel %vm500, %v2514, 0
        %2522 = vmatprep.subr.mxu0 0.0
        %2523 = vmatpush1.msra.mxu0 %v2520
        %2524 = vmatprep.subr.mxu0 0.0
        %2525 = vmatpush1.msra.mxu0 0.0
        %2526 = vmatprep.subr.mxu0 0.0
        %2527 = vmatpush1.msra.mxu0 0.0
        %2528 = vmatprep.subr.mxu0 0.0
        %2529 = vmatpush1.msra.mxu0 0.0
        %2530 = vmatprep.subr.mxu0 0.0
        %2531 = vmatpush1.msra.mxu0 0.0
        %2532 = vmatprep.subr.mxu0 0.0
        %2533 = vmatpush1.msra.mxu0 0.0
        %2534 = vmatprep.subr.mxu0 0.0
        %2535 = vmatpush1.msra.mxu0 0.0
        %2536 = vmatprep.subr.mxu0 0.0
        %2537 = vmatpush1.msra.mxu0 0.0
        %2538 = vmatprep.subr.mxu0 0.0
        %2539 = vmatpush1.msra.mxu0 0.0
        %2540 = vmatprep.subr.mxu0 0.0
        %2541 = vmatpush1.msra.mxu0 0.0
        %2542 = vmatprep.subr.mxu0 0.0
        %2543 = vmatpush1.msra.mxu0 0.0
        %2544 = vmatprep.subr.mxu0 0.0
        %2545 = vmatpush1.msra.mxu0 0.0
        %2546 = vmatprep.subr.mxu0 0.0
        %2547 = vmatpush1.msra.mxu0 0.0
        %2548 = vmatprep.subr.mxu0 0.0
        %2549 = vmatpush1.msra.mxu0 0.0
        %2550 = vmatprep.subr.mxu0 0.0
        %2551 = vmatpush1.msra.mxu0 0.0
        %2552 = vmatprep.subr.mxu0 0.0
        %2553 = vmatpush1.msra.mxu0 0.0
        %2554 = vmatprep.subr.mxu0 0.0
        %2555 = vmatpush1.msra.mxu0 0.0
        %2556 = vmatprep.subr.mxu0 0.0
        %2557 = vmatpush1.msra.mxu0 0.0
        %2558 = vmatprep.subr.mxu0 0.0
        %2559 = vmatpush1.msra.mxu0 0.0
        %2560 = vmatprep.subr.mxu0 0.0
        %2561 = vmatpush1.msra.mxu0 0.0
        %2562 = vmatprep.subr.mxu0 0.0
        %2563 = vmatpush1.msra.mxu0 0.0
        %2564 = vmatprep.subr.mxu0 0.0
        %2565 = vmatpush1.msra.mxu0 0.0
        %2566 = vmatprep.subr.mxu0 0.0
        %2567 = vmatpush1.msra.mxu0 0.0
        %2568 = vmatprep.subr.mxu0 0.0
        %2569 = vmatpush1.msra.mxu0 0.0
        %2570 = vmatprep.subr.mxu0 0.0
        %2571 = vmatpush1.msra.mxu0 0.0
        %2572 = vmatprep.subr.mxu0 0.0
        %2573 = vmatpush1.msra.mxu0 0.0
        %2574 = vmatprep.subr.mxu0 0.0
        %2575 = vmatpush1.msra.mxu0 0.0
        %2576 = vmatprep.subr.mxu0 0.0
        %2577 = vmatpush1.msra.mxu0 0.0
        %2578 = vmatprep.subr.mxu0 0.0
        %2579 = vmatpush1.msra.mxu0 0.0
        %2580 = vmatprep.subr.mxu0 0.0
        %2581 = vmatpush1.msra.mxu0 0.0
        %2582 = vmatprep.subr.mxu0 0.0
        %2583 = vmatpush1.msra.mxu0 0.0
        %2584 = vmatprep.subr.mxu0 0.0
        %2585 = vmatpush1.msra.mxu0 0.0
        %2586 = vmatprep.mubr.f32.mxu0 0.0
        %2587 = vmatmul.mubr.f32.gmra.mrb[0].mxu0 %v444
        %v2588 = vpop.f32.mrb[0].mxu0
        %v2589 = vadd.f32 0.0, %v2588
        %v2590 = vpop.f32.mrb[0].mxu0
        %2591 = vmatprep.mubr.f32.mxu0 0.0
        %2592 = vmatmul.mubr.f32.gmra.mrb[0].mxu0 %v446
        %v2593 = vpop.f32.mrb[0].mxu0
        %v2594 = vadd.f32 0.0, %v2593
        %v2595 = vpop.f32.mrb[0].mxu0
        %2596 = vmatprep.mubr.f32.mxu0 0.0
        %2597 = vmatmul.mubr.f32.gmra.mrb[0].mxu0 %v448
        %v2598 = vpop.f32.mrb[0].mxu0
        %v2599 = vadd.f32 0.0, %v2598
        %v2600 = vpop.f32.mrb[0].mxu0
        %2601 = vmatprep.mubr.f32.mxu0 0.0
        %2602 = vmatmul.mubr.f32.gmra.mrb[0].mxu0 %v450
        %v2603 = vpop.f32.mrb[0].mxu0
        %v2604 = vadd.f32 0.0, %v2603
        %v2605 = vpop.f32.mrb[0].mxu0
        %2606 = vmatprep.mubr.f32.mxu0 0.0
        %2607 = vmatmul.mubr.f32.gmra.mrb[0].mxu0 %v452
        %v2608 = vpop.f32.mrb[0].mxu0
        %v2609 = vadd.f32 0.0, %v2608
        %v2610 = vpop.f32.mrb[0].mxu0
        %2611 = vmatprep.mubr.f32.mxu0 0.0
        %2612 = vmatmul.mubr.f32.gmra.mrb[0].mxu0 %v454
        %v2613 = vpop.f32.mrb[0].mxu0
        %v2614 = vadd.f32 0.0, %v2613
        %v2615 = vpop.f32.mrb[0].mxu0
        %2616 = vmatprep.mubr.f32.mxu0 0.0
        %2617 = vmatmul.mubr.f32.gmra.mrb[0].mxu0 %v456
        %v2618 = vpop.f32.mrb[0].mxu0
        %v2619 = vadd.f32 0.0, %v2618
        %v2620 = vpop.f32.mrb[0].mxu0
        %2621 = vmatprep.mubr.f32.mxu0 0.0
        %2622 = vmatmul.mubr.f32.gmra.mrb[0].mxu0 %v458
        %v2623 = vpop.f32.mrb[0].mxu0
        %v2624 = vadd.f32 0.0, %v2623
        %v2625 = vpop.f32.mrb[0].mxu0
        %2626 = vmatprep.mubr.f32.mxu0 0.0
        %2627 = vmatmul.mubr.f32.gmra.mrb[0].mxu0 %v460
        %v2628 = vpop.f32.mrb[0].mxu0
        %v2629 = vadd.f32 0.0, %v2628
        %v2630 = vpop.f32.mrb[0].mxu0
        %2631 = vmatprep.mubr.f32.mxu0 0.0
        %2632 = vmatmul.mubr.f32.gmra.mrb[0].mxu0 %v462
        %v2633 = vpop.f32.mrb[0].mxu0
        %v2634 = vadd.f32 0.0, %v2633
        %v2635 = vpop.f32.mrb[0].mxu0
        %2636 = vmatprep.mubr.f32.mxu0 0.0
        %2637 = vmatmul.mubr.f32.gmra.mrb[0].mxu0 %v464
        %v2638 = vpop.f32.mrb[0].mxu0
        %v2639 = vadd.f32 0.0, %v2638
        %v2640 = vpop.f32.mrb[0].mxu0
        %2641 = vmatprep.mubr.f32.mxu0 0.0
        %2642 = vmatmul.mubr.f32.gmra.mrb[0].mxu0 %v466
        %v2643 = vpop.f32.mrb[0].mxu0
        %v2644 = vadd.f32 0.0, %v2643
        %v2645 = vpop.f32.mrb[0].mxu0
        %2646 = vmatprep.mubr.f32.mxu0 0.0
        %2647 = vmatmul.mubr.f32.gmra.mrb[0].mxu0 %v468
        %v2648 = vpop.f32.mrb[0].mxu0
        %v2649 = vadd.f32 0.0, %v2648
        %v2650 = vpop.f32.mrb[0].mxu0
        %2651 = vmatprep.mubr.f32.mxu0 0.0
        %2652 = vmatmul.mubr.f32.gmra.mrb[0].mxu0 %v470
        %v2653 = vpop.f32.mrb[0].mxu0
        %v2654 = vadd.f32 0.0, %v2653
        %v2655 = vpop.f32.mrb[0].mxu0
        %2656 = vmatprep.mubr.f32.mxu0 0.0
        %2657 = vmatmul.mubr.f32.gmra.mrb[0].mxu0 %v472
        %v2658 = vpop.f32.mrb[0].mxu0
        %v2659 = vadd.f32 0.0, %v2658
        %v2660 = vpop.f32.mrb[0].mxu0
        %2661 = vmatprep.mubr.f32.mxu0 0.0
        %2662 = vmatmul.mubr.f32.gmra.mrb[0].mxu0 %v474
        %v2663 = vpop.f32.mrb[0].mxu0
        %v2664 = vadd.f32 0.0, %v2663
        %v2665 = vpop.f32.mrb[0].mxu0
        %2666 = vmatprep.mubr.f32.mxu0 0.0
        %2667 = vmatmul.mubr.f32.gmra.mrb[0].mxu0 %v476
        %v2668 = vpop.f32.mrb[0].mxu0
        %v2669 = vadd.f32 0.0, %v2668
        %v2670 = vpop.f32.mrb[0].mxu0
        %2671 = vmatprep.mubr.f32.mxu0 0.0
        %2672 = vmatmul.mubr.f32.gmra.mrb[0].mxu0 %v478
        %v2673 = vpop.f32.mrb[0].mxu0
        %v2674 = vadd.f32 0.0, %v2673
        %v2675 = vpop.f32.mrb[0].mxu0
        %2676 = vmatprep.mubr.f32.mxu0 0.0
        %2677 = vmatmul.mubr.f32.gmra.mrb[0].mxu0 %v480
        %v2678 = vpop.f32.mrb[0].mxu0
        %v2679 = vadd.f32 0.0, %v2678
        %v2680 = vpop.f32.mrb[0].mxu0
        %2681 = vmatprep.mubr.f32.mxu0 0.0
        %2682 = vmatmul.mubr.f32.gmra.mrb[0].mxu0 %v482
        %v2683 = vpop.f32.mrb[0].mxu0
        %v2684 = vadd.f32 0.0, %v2683
        %v2685 = vpop.f32.mrb[0].mxu0
        %2686 = vmatprep.mubr.f32.mxu0 0.0
        %2687 = vmatmul.mubr.f32.gmra.mrb[0].mxu0 %v484
        %v2688 = vpop.f32.mrb[0].mxu0
        %v2689 = vadd.f32 0.0, %v2688
        %v2690 = vpop.f32.mrb[0].mxu0
        %2691 = vmatprep.mubr.f32.mxu0 0.0
        %2692 = vmatmul.mubr.f32.gmra.mrb[0].mxu0 %v486
        %v2693 = vpop.f32.mrb[0].mxu0
        %v2694 = vadd.f32 0.0, %v2693
        %v2695 = vpop.f32.mrb[0].mxu0
        %2696 = vmatprep.mubr.f32.mxu0 0.0
        %2697 = vmatmul.mubr.f32.gmra.mrb[0].mxu0 %v488
        %v2698 = vpop.f32.mrb[0].mxu0
        %v2699 = vadd.f32 0.0, %v2698
        %v2700 = vpop.f32.mrb[0].mxu0
        %2701 = vmatprep.mubr.f32.mxu0 0.0
        %2702 = vmatmul.mubr.f32.gmra.mrb[0].mxu0 %v490
        %v2703 = vpop.f32.mrb[0].mxu0
        %v2704 = vadd.f32 0.0, %v2703
        %v2705 = vpop.f32.mrb[0].mxu0
        %2706 = vmatprep.mubr.f32.mxu0 0.0
        %2707 = vmatmul.mubr.f32.gmra.mrb[0].mxu0 %v492
        %v2708 = vpop.f32.mrb[0].mxu0
        %v2709 = vadd.f32 0.0, %v2708
        %v2710 = vpop.f32.mrb[0].mxu0
        %2711 = vmatprep.mubr.f32.mxu0 0.0
        %2712 = vmatmul.mubr.f32.gmra.mrb[0].mxu0 %v494
        %v2713 = vpop.f32.mrb[0].mxu0
        %v2714 = vadd.f32 0.0, %v2713
        %v2715 = vpop.f32.mrb[0].mxu0
        %2716 = vmatprep.mubr.f32.mxu0 0.0
        %2717 = vmatmul.mubr.f32.gmra.mrb[0].mxu0 %v496
        %v2718 = vpop.f32.mrb[0].mxu0
        %v2719 = vadd.f32 0.0, %v2718
        %v2720 = vpop.f32.mrb[0].mxu0
        %2721 = vmatprep.mubr.f32.mxu0 0.0
        %2722 = vmatmul.mubr.f32.gmra.mrb[0].mxu0 %v498
        %v2723 = vpop.f32.mrb[0].mxu0
        %v2724 = vadd.f32 0.0, %v2723
        %v2725 = vpop.f32.mrb[0].mxu0
        %2726 = vmatprep.mubr.f32.mxu0 0.0
        %2727 = vmatmul.mubr.f32.gmra.mrb[0].mxu0 %v1704
        %v2728 = vpop.f32.mrb[0].mxu0
        %v2729 = vadd.f32 0.0, %v2728
        %v2730 = vpop.f32.mrb[0].mxu0
        %2731 = vmatprep.mubr.f32.mxu0 0.0
        %2732 = vmatmul.mubr.f32.gmra.mrb[0].mxu0 %v1706
        %v2733 = vpop.f32.mrb[0].mxu0
        %v2734 = vadd.f32 0.0, %v2733
        %v2735 = vpop.f32.mrb[0].mxu0
        %2736 = vmatprep.mubr.f32.mxu0 0.0
        %2737 = vmatmul.mubr.f32.gmra.mrb[0].mxu0 %v2515
        %v2738 = vpop.f32.mrb[0].mxu0
        %v2739 = vadd.f32 0.0, %v2738
        %v2740 = vpop.f32.mrb[0].mxu0
        %2741 = vmatprep.mubr.f32.mxu0 0.0
        %2742 = vmatmul.mubr.f32.gmra.mrb[0].mxu0 %v2517
        %v2743 = vpop.f32.mrb[0].mxu0
        %v2744 = vadd.f32 0.0, %v2743
        %v2745 = vpop.f32.mrb[0].mxu0
        %2746 = vdwg.mxu0
        %v2747 = vadd.f32 %v2475, %v2589
        %v2748 = vadd.f32 %v2476, %v2594
        %v2749 = vadd.f32 %v2477, %v2599
        %v2750 = vadd.f32 %v2478, %v2604
        %v2751 = vadd.f32 %v2479, %v2609
        %v2752 = vadd.f32 %v2480, %v2614
        %v2753 = vadd.f32 %v2481, %v2619
        %v2754 = vadd.f32 %v2482, %v2624
        %v2755 = vadd.f32 %v2483, %v2629
        %v2756 = vadd.f32 %v2484, %v2634
        %v2757 = vadd.f32 %v2485, %v2639
        %v2758 = vadd.f32 %v2486, %v2644
        %v2759 = vadd.f32 %v2487, %v2649
        %v2760 = vadd.f32 %v2488, %v2654
        %v2761 = vadd.f32 %v2489, %v2659
        %v2762 = vadd.f32 %v2490, %v2664
        %v2763 = vadd.f32 %v2491, %v2669
        %v2764 = vadd.f32 %v2492, %v2674
        %v2765 = vadd.f32 %v2493, %v2679
        %v2766 = vadd.f32 %v2494, %v2684
        %v2767 = vadd.f32 %v2495, %v2689
        %v2768 = vadd.f32 %v2496, %v2694
        %v2769 = vadd.f32 %v2497, %v2699
        %v2770 = vadd.f32 %v2498, %v2704
        %v2771 = vadd.f32 %v2499, %v2709
        %v2772 = vadd.f32 %v2500, %v2714
        %v2773 = vadd.f32 %v2501, %v2719
        %v2774 = vadd.f32 %v2502, %v2724
        %v2775 = vadd.f32 %v2503, %v2729
        %v2776 = vadd.f32 %v2504, %v2734
        %v2777 = vadd.f32 %v2505, %v2739
        %v2778 = vadd.f32 %v2506, %v2744
        %v2779 = vrot.slane %v300, 2
        %v2780 = vrot.slane %v301, 2
        %v2781 = vsel %vm1021, %v2779, %v2780
        %v2782 = vrot.slane %v302, 2
        %v2783 = vsel %vm1021, %v2780, %v2782
        %s2784 = scalar_lea.vmem %s1, 32
        %v2785 = vld [vmem:[%s2784] sm:$0xf]
        %v2786 = vsel %vm435, %v2781, 0
        %v2788 = vsel %vm435, %v2783, 0
        %v2791 = vsel %vm500, %v2785, 0
        %2793 = vmatprep.subr.mxu0 0.0
        %2794 = vmatpush1.msra.mxu0 %v2791
        %2795 = vmatprep.subr.mxu0 0.0
        %2796 = vmatpush1.msra.mxu0 0.0
        %2797 = vmatprep.subr.mxu0 0.0
        %2798 = vmatpush1.msra.mxu0 0.0
        %2799 = vmatprep.subr.mxu0 0.0
        %2800 = vmatpush1.msra.mxu0 0.0
        %2801 = vmatprep.subr.mxu0 0.0
        %2802 = vmatpush1.msra.mxu0 0.0
        %2803 = vmatprep.subr.mxu0 0.0
        %2804 = vmatpush1.msra.mxu0 0.0
        %2805 = vmatprep.subr.mxu0 0.0
        %2806 = vmatpush1.msra.mxu0 0.0
        %2807 = vmatprep.subr.mxu0 0.0
        %2808 = vmatpush1.msra.mxu0 0.0
        %2809 = vmatprep.subr.mxu0 0.0
        %2810 = vmatpush1.msra.mxu0 0.0
        %2811 = vmatprep.subr.mxu0 0.0
        %2812 = vmatpush1.msra.mxu0 0.0
        %2813 = vmatprep.subr.mxu0 0.0
        %2814 = vmatpush1.msra.mxu0 0.0
        %2815 = vmatprep.subr.mxu0 0.0
        %2816 = vmatpush1.msra.mxu0 0.0
        %2817 = vmatprep.subr.mxu0 0.0
        %2818 = vmatpush1.msra.mxu0 0.0
        %2819 = vmatprep.subr.mxu0 0.0
        %2820 = vmatpush1.msra.mxu0 0.0
        %2821 = vmatprep.subr.mxu0 0.0
        %2822 = vmatpush1.msra.mxu0 0.0
        %2823 = vmatprep.subr.mxu0 0.0
        %2824 = vmatpush1.msra.mxu0 0.0
        %2825 = vmatprep.subr.mxu0 0.0
        %2826 = vmatpush1.msra.mxu0 0.0
        %2827 = vmatprep.subr.mxu0 0.0
        %2828 = vmatpush1.msra.mxu0 0.0
        %2829 = vmatprep.subr.mxu0 0.0
        %2830 = vmatpush1.msra.mxu0 0.0
        %2831 = vmatprep.subr.mxu0 0.0
        %2832 = vmatpush1.msra.mxu0 0.0
        %2833 = vmatprep.subr.mxu0 0.0
        %2834 = vmatpush1.msra.mxu0 0.0
        %2835 = vmatprep.subr.mxu0 0.0
        %2836 = vmatpush1.msra.mxu0 0.0
        %2837 = vmatprep.subr.mxu0 0.0
        %2838 = vmatpush1.msra.mxu0 0.0
        %2839 = vmatprep.subr.mxu0 0.0
        %2840 = vmatpush1.msra.mxu0 0.0
        %2841 = vmatprep.subr.mxu0 0.0
        %2842 = vmatpush1.msra.mxu0 0.0
        %2843 = vmatprep.subr.mxu0 0.0
        %2844 = vmatpush1.msra.mxu0 0.0
        %2845 = vmatprep.subr.mxu0 0.0
        %2846 = vmatpush1.msra.mxu0 0.0
        %2847 = vmatprep.subr.mxu0 0.0
        %2848 = vmatpush1.msra.mxu0 0.0
        %2849 = vmatprep.subr.mxu0 0.0
        %2850 = vmatpush1.msra.mxu0 0.0
        %2851 = vmatprep.subr.mxu0 0.0
        %2852 = vmatpush1.msra.mxu0 0.0
        %2853 = vmatprep.subr.mxu0 0.0
        %2854 = vmatpush1.msra.mxu0 0.0
        %2855 = vmatprep.subr.mxu0 0.0
        %2856 = vmatpush1.msra.mxu0 0.0
        %2857 = vmatprep.mubr.f32.mxu0 0.0
        %2858 = vmatmul.mubr.f32.gmra.mrb[0].mxu0 %v1112
        %v2859 = vpop.f32.mrb[0].mxu0
        %v2860 = vadd.f32 0.0, %v2859
        %v2861 = vpop.f32.mrb[0].mxu0
        %2862 = vmatprep.mubr.f32.mxu0 0.0
        %2863 = vmatmul.mubr.f32.gmra.mrb[0].mxu0 %v1114
        %v2864 = vpop.f32.mrb[0].mxu0
        %v2865 = vadd.f32 0.0, %v2864
        %v2866 = vpop.f32.mrb[0].mxu0
        %2867 = vmatprep.mubr.f32.mxu0 0.0
        %2868 = vmatmul.mubr.f32.gmra.mrb[0].mxu0 %v1116
        %v2869 = vpop.f32.mrb[0].mxu0
        %v2870 = vadd.f32 0.0, %v2869
        %v2871 = vpop.f32.mrb[0].mxu0
        %2872 = vmatprep.mubr.f32.mxu0 0.0
        %2873 = vmatmul.mubr.f32.gmra.mrb[0].mxu0 %v1118
        %v2874 = vpop.f32.mrb[0].mxu0
        %v2875 = vadd.f32 0.0, %v2874
        %v2876 = vpop.f32.mrb[0].mxu0
        %2877 = vmatprep.mubr.f32.mxu0 0.0
        %2878 = vmatmul.mubr.f32.gmra.mrb[0].mxu0 %v1120
        %v2879 = vpop.f32.mrb[0].mxu0
        %v2880 = vadd.f32 0.0, %v2879
        %v2881 = vpop.f32.mrb[0].mxu0
        %2882 = vmatprep.mubr.f32.mxu0 0.0
        %2883 = vmatmul.mubr.f32.gmra.mrb[0].mxu0 %v1122
        %v2884 = vpop.f32.mrb[0].mxu0
        %v2885 = vadd.f32 0.0, %v2884
        %v2886 = vpop.f32.mrb[0].mxu0
        %2887 = vmatprep.mubr.f32.mxu0 0.0
        %2888 = vmatmul.mubr.f32.gmra.mrb[0].mxu0 %v1124
        %v2889 = vpop.f32.mrb[0].mxu0
        %v2890 = vadd.f32 0.0, %v2889
        %v2891 = vpop.f32.mrb[0].mxu0
        %2892 = vmatprep.mubr.f32.mxu0 0.0
        %2893 = vmatmul.mubr.f32.gmra.mrb[0].mxu0 %v1126
        %v2894 = vpop.f32.mrb[0].mxu0
        %v2895 = vadd.f32 0.0, %v2894
        %v2896 = vpop.f32.mrb[0].mxu0
        %2897 = vmatprep.mubr.f32.mxu0 0.0
        %2898 = vmatmul.mubr.f32.gmra.mrb[0].mxu0 %v1128
        %v2899 = vpop.f32.mrb[0].mxu0
        %v2900 = vadd.f32 0.0, %v2899
        %v2901 = vpop.f32.mrb[0].mxu0
        %2902 = vmatprep.mubr.f32.mxu0 0.0
        %2903 = vmatmul.mubr.f32.gmra.mrb[0].mxu0 %v1130
        %v2904 = vpop.f32.mrb[0].mxu0
        %v2905 = vadd.f32 0.0, %v2904
        %v2906 = vpop.f32.mrb[0].mxu0
        %2907 = vmatprep.mubr.f32.mxu0 0.0
        %2908 = vmatmul.mubr.f32.gmra.mrb[0].mxu0 %v1132
        %v2909 = vpop.f32.mrb[0].mxu0
        %v2910 = vadd.f32 0.0, %v2909
        %v2911 = vpop.f32.mrb[0].mxu0
        %2912 = vmatprep.mubr.f32.mxu0 0.0
        %2913 = vmatmul.mubr.f32.gmra.mrb[0].mxu0 %v1134
        %v2914 = vpop.f32.mrb[0].mxu0
        %v2915 = vadd.f32 0.0, %v2914
        %v2916 = vpop.f32.mrb[0].mxu0
        %2917 = vmatprep.mubr.f32.mxu0 0.0
        %2918 = vmatmul.mubr.f32.gmra.mrb[0].mxu0 %v1136
        %v2919 = vpop.f32.mrb[0].mxu0
        %v2920 = vadd.f32 0.0, %v2919
        %v2921 = vpop.f32.mrb[0].mxu0
        %2922 = vmatprep.mubr.f32.mxu0 0.0
        %2923 = vmatmul.mubr.f32.gmra.mrb[0].mxu0 %v1138
        %v2924 = vpop.f32.mrb[0].mxu0
        %v2925 = vadd.f32 0.0, %v2924
        %v2926 = vpop.f32.mrb[0].mxu0
        %2927 = vmatprep.mubr.f32.mxu0 0.0
        %2928 = vmatmul.mubr.f32.gmra.mrb[0].mxu0 %v1140
        %v2929 = vpop.f32.mrb[0].mxu0
        %v2930 = vadd.f32 0.0, %v2929
        %v2931 = vpop.f32.mrb[0].mxu0
        %2932 = vmatprep.mubr.f32.mxu0 0.0
        %2933 = vmatmul.mubr.f32.gmra.mrb[0].mxu0 %v1142
        %v2934 = vpop.f32.mrb[0].mxu0
        %v2935 = vadd.f32 0.0, %v2934
        %v2936 = vpop.f32.mrb[0].mxu0
        %2937 = vmatprep.mubr.f32.mxu0 0.0
        %2938 = vmatmul.mubr.f32.gmra.mrb[0].mxu0 %v1144
        %v2939 = vpop.f32.mrb[0].mxu0
        %v2940 = vadd.f32 0.0, %v2939
        %v2941 = vpop.f32.mrb[0].mxu0
        %2942 = vmatprep.mubr.f32.mxu0 0.0
        %2943 = vmatmul.mubr.f32.gmra.mrb[0].mxu0 %v1146
        %v2944 = vpop.f32.mrb[0].mxu0
        %v2945 = vadd.f32 0.0, %v2944
        %v2946 = vpop.f32.mrb[0].mxu0
        %2947 = vmatprep.mubr.f32.mxu0 0.0
        %2948 = vmatmul.mubr.f32.gmra.mrb[0].mxu0 %v1148
        %v2949 = vpop.f32.mrb[0].mxu0
        %v2950 = vadd.f32 0.0, %v2949
        %v2951 = vpop.f32.mrb[0].mxu0
        %2952 = vmatprep.mubr.f32.mxu0 0.0
        %2953 = vmatmul.mubr.f32.gmra.mrb[0].mxu0 %v1150
        %v2954 = vpop.f32.mrb[0].mxu0
        %v2955 = vadd.f32 0.0, %v2954
        %v2956 = vpop.f32.mrb[0].mxu0
        %2957 = vmatprep.mubr.f32.mxu0 0.0
        %2958 = vmatmul.mubr.f32.gmra.mrb[0].mxu0 %v1152
        %v2959 = vpop.f32.mrb[0].mxu0
        %v2960 = vadd.f32 0.0, %v2959
        %v2961 = vpop.f32.mrb[0].mxu0
        %2962 = vmatprep.mubr.f32.mxu0 0.0
        %2963 = vmatmul.mubr.f32.gmra.mrb[0].mxu0 %v1154
        %v2964 = vpop.f32.mrb[0].mxu0
        %v2965 = vadd.f32 0.0, %v2964
        %v2966 = vpop.f32.mrb[0].mxu0
        %2967 = vmatprep.mubr.f32.mxu0 0.0
        %2968 = vmatmul.mubr.f32.gmra.mrb[0].mxu0 %v1156
        %v2969 = vpop.f32.mrb[0].mxu0
        %v2970 = vadd.f32 0.0, %v2969
        %v2971 = vpop.f32.mrb[0].mxu0
        %2972 = vmatprep.mubr.f32.mxu0 0.0
        %2973 = vmatmul.mubr.f32.gmra.mrb[0].mxu0 %v1158
        %v2974 = vpop.f32.mrb[0].mxu0
        %v2975 = vadd.f32 0.0, %v2974
        %v2976 = vpop.f32.mrb[0].mxu0
        %2977 = vmatprep.mubr.f32.mxu0 0.0
        %2978 = vmatmul.mubr.f32.gmra.mrb[0].mxu0 %v1160
        %v2979 = vpop.f32.mrb[0].mxu0
        %v2980 = vadd.f32 0.0, %v2979
        %v2981 = vpop.f32.mrb[0].mxu0
        %2982 = vmatprep.mubr.f32.mxu0 0.0
        %2983 = vmatmul.mubr.f32.gmra.mrb[0].mxu0 %v1162
        %v2984 = vpop.f32.mrb[0].mxu0
        %v2985 = vadd.f32 0.0, %v2984
        %v2986 = vpop.f32.mrb[0].mxu0
        %2987 = vmatprep.mubr.f32.mxu0 0.0
        %2988 = vmatmul.mubr.f32.gmra.mrb[0].mxu0 %v1164
        %v2989 = vpop.f32.mrb[0].mxu0
        %v2990 = vadd.f32 0.0, %v2989
        %v2991 = vpop.f32.mrb[0].mxu0
        %2992 = vmatprep.mubr.f32.mxu0 0.0
        %2993 = vmatmul.mubr.f32.gmra.mrb[0].mxu0 %v1166
        %v2994 = vpop.f32.mrb[0].mxu0
        %v2995 = vadd.f32 0.0, %v2994
        %v2996 = vpop.f32.mrb[0].mxu0
        %2997 = vmatprep.mubr.f32.mxu0 0.0
        %2998 = vmatmul.mubr.f32.gmra.mrb[0].mxu0 %v1975
        %v2999 = vpop.f32.mrb[0].mxu0
        %v3000 = vadd.f32 0.0, %v2999
        %v3001 = vpop.f32.mrb[0].mxu0
        %3002 = vmatprep.mubr.f32.mxu0 0.0
        %3003 = vmatmul.mubr.f32.gmra.mrb[0].mxu0 %v1977
        %v3004 = vpop.f32.mrb[0].mxu0
        %v3005 = vadd.f32 0.0, %v3004
        %v3006 = vpop.f32.mrb[0].mxu0
        %3007 = vmatprep.mubr.f32.mxu0 0.0
        %3008 = vmatmul.mubr.f32.gmra.mrb[0].mxu0 %v2786
        %v3009 = vpop.f32.mrb[0].mxu0
        %v3010 = vadd.f32 0.0, %v3009
        %v3011 = vpop.f32.mrb[0].mxu0
        %3012 = vmatprep.mubr.f32.mxu0 0.0
        %3013 = vmatmul.mubr.f32.gmra.mrb[0].mxu0 %v2788
        %v3014 = vpop.f32.mrb[0].mxu0
        %v3015 = vadd.f32 0.0, %v3014
        %v3016 = vpop.f32.mrb[0].mxu0
        %3017 = vdwg.mxu0
        %v3018 = vadd.f32 %v2747, %v2860
        %v3019 = vadd.f32 %v2748, %v2865
        %v3020 = vadd.f32 %v2749, %v2870
        %v3021 = vadd.f32 %v2750, %v2875
        %v3022 = vadd.f32 %v2751, %v2880
        %v3023 = vadd.f32 %v2752, %v2885
        %v3024 = vadd.f32 %v2753, %v2890
        %v3025 = vadd.f32 %v2754, %v2895
        %v3026 = vadd.f32 %v2755, %v2900
        %v3027 = vadd.f32 %v2756, %v2905
        %v3028 = vadd.f32 %v2757, %v2910
        %v3029 = vadd.f32 %v2758, %v2915
        %v3030 = vadd.f32 %v2759, %v2920
        %v3031 = vadd.f32 %v2760, %v2925
        %v3032 = vadd.f32 %v2761, %v2930
        %v3033 = vadd.f32 %v2762, %v2935
        %v3034 = vadd.f32 %v2763, %v2940
        %v3035 = vadd.f32 %v2764, %v2945
        %v3036 = vadd.f32 %v2765, %v2950
        %v3037 = vadd.f32 %v2766, %v2955
        %v3038 = vadd.f32 %v2767, %v2960
        %v3039 = vadd.f32 %v2768, %v2965
        %v3040 = vadd.f32 %v2769, %v2970
        %v3041 = vadd.f32 %v2770, %v2975
        %v3042 = vadd.f32 %v2771, %v2980
        %v3043 = vadd.f32 %v2772, %v2985
        %v3044 = vadd.f32 %v2773, %v2990
        %v3045 = vadd.f32 %v2774, %v2995
        %v3046 = vadd.f32 %v2775, %v3000
        %v3047 = vadd.f32 %v2776, %v3005
        %v3048 = vadd.f32 %v2777, %v3010
        %v3049 = vadd.f32 %v2778, %v3015
        %vm3050 = vcmp.gt.f32.partialorder %v3018, 0.0
        %vm3051 = vcmp.gt.f32.partialorder %v3019, 0.0
        %vm3052 = vcmp.gt.f32.partialorder %v3020, 0.0
        %vm3053 = vcmp.gt.f32.partialorder %v3021, 0.0
        %vm3054 = vcmp.gt.f32.partialorder %v3022, 0.0
        %vm3055 = vcmp.gt.f32.partialorder %v3023, 0.0
        %vm3056 = vcmp.gt.f32.partialorder %v3024, 0.0
        %vm3057 = vcmp.gt.f32.partialorder %v3025, 0.0
        %vm3058 = vcmp.gt.f32.partialorder %v3026, 0.0
        %vm3059 = vcmp.gt.f32.partialorder %v3027, 0.0
        %vm3060 = vcmp.gt.f32.partialorder %v3028, 0.0
        %vm3061 = vcmp.gt.f32.partialorder %v3029, 0.0
        %vm3062 = vcmp.gt.f32.partialorder %v3030, 0.0
        %vm3063 = vcmp.gt.f32.partialorder %v3031, 0.0
        %vm3064 = vcmp.gt.f32.partialorder %v3032, 0.0
        %vm3065 = vcmp.gt.f32.partialorder %v3033, 0.0
        %vm3066 = vcmp.gt.f32.partialorder %v3034, 0.0
        %vm3067 = vcmp.gt.f32.partialorder %v3035, 0.0
        %vm3068 = vcmp.gt.f32.partialorder %v3036, 0.0
        %vm3069 = vcmp.gt.f32.partialorder %v3037, 0.0
        %vm3070 = vcmp.gt.f32.partialorder %v3038, 0.0
        %vm3071 = vcmp.gt.f32.partialorder %v3039, 0.0
        %vm3072 = vcmp.gt.f32.partialorder %v3040, 0.0
        %vm3073 = vcmp.gt.f32.partialorder %v3041, 0.0
        %vm3074 = vcmp.gt.f32.partialorder %v3042, 0.0
        %vm3075 = vcmp.gt.f32.partialorder %v3043, 0.0
        %vm3076 = vcmp.gt.f32.partialorder %v3044, 0.0
        %vm3077 = vcmp.gt.f32.partialorder %v3045, 0.0
        %vm3078 = vcmp.gt.f32.partialorder %v3046, 0.0
        %vm3079 = vcmp.gt.f32.partialorder %v3047, 0.0
        %vm3080 = vcmp.gt.f32.partialorder %v3048, 0.0
        %vm3081 = vcmp.gt.f32.partialorder %v3049, 0.0
        %v3082 = vmul.f32 %v3018, 0.01
        %v3083 = vmul.f32 %v3019, 0.01
        %v3084 = vmul.f32 %v3020, 0.01
        %v3085 = vmul.f32 %v3021, 0.01
        %v3086 = vmul.f32 %v3022, 0.01
        %v3087 = vmul.f32 %v3023, 0.01
        %v3088 = vmul.f32 %v3024, 0.01
        %v3089 = vmul.f32 %v3025, 0.01
        %v3090 = vmul.f32 %v3026, 0.01
        %v3091 = vmul.f32 %v3027, 0.01
        %v3092 = vmul.f32 %v3028, 0.01
        %v3093 = vmul.f32 %v3029, 0.01
        %v3094 = vmul.f32 %v3030, 0.01
        %v3095 = vmul.f32 %v3031, 0.01
        %v3096 = vmul.f32 %v3032, 0.01
        %v3097 = vmul.f32 %v3033, 0.01
        %v3098 = vmul.f32 %v3034, 0.01
        %v3099 = vmul.f32 %v3035, 0.01
        %v3100 = vmul.f32 %v3036, 0.01
        %v3101 = vmul.f32 %v3037, 0.01
        %v3102 = vmul.f32 %v3038, 0.01
        %v3103 = vmul.f32 %v3039, 0.01
        %v3104 = vmul.f32 %v3040, 0.01
        %v3105 = vmul.f32 %v3041, 0.01
        %v3106 = vmul.f32 %v3042, 0.01
        %v3107 = vmul.f32 %v3043, 0.01
        %v3108 = vmul.f32 %v3044, 0.01
        %v3109 = vmul.f32 %v3045, 0.01
        %v3110 = vmul.f32 %v3046, 0.01
        %v3111 = vmul.f32 %v3047, 0.01
        %v3112 = vmul.f32 %v3048, 0.01
        %v3113 = vmul.f32 %v3049, 0.01
        %v3114 = vsel %vm3050, %v3018, %v3082
        %v3115 = vsel %vm3051, %v3019, %v3083
        %v3116 = vsel %vm3052, %v3020, %v3084
        %v3117 = vsel %vm3053, %v3021, %v3085
        %v3118 = vsel %vm3054, %v3022, %v3086
        %v3119 = vsel %vm3055, %v3023, %v3087
        %v3120 = vsel %vm3056, %v3024, %v3088
        %v3121 = vsel %vm3057, %v3025, %v3089
        %v3122 = vsel %vm3058, %v3026, %v3090
        %v3123 = vsel %vm3059, %v3027, %v3091
        %v3124 = vsel %vm3060, %v3028, %v3092
        %v3125 = vsel %vm3061, %v3029, %v3093
        %v3126 = vsel %vm3062, %v3030, %v3094
        %v3127 = vsel %vm3063, %v3031, %v3095
        %v3128 = vsel %vm3064, %v3032, %v3096
        %v3129 = vsel %vm3065, %v3033, %v3097
        %v3130 = vsel %vm3066, %v3034, %v3098
        %v3131 = vsel %vm3067, %v3035, %v3099
        %v3132 = vsel %vm3068, %v3036, %v3100
        %v3133 = vsel %vm3069, %v3037, %v3101
        %v3134 = vsel %vm3070, %v3038, %v3102
        %v3135 = vsel %vm3071, %v3039, %v3103
        %v3136 = vsel %vm3072, %v3040, %v3104
        %v3137 = vsel %vm3073, %v3041, %v3105
        %v3138 = vsel %vm3074, %v3042, %v3106
        %v3139 = vsel %vm3075, %v3043, %v3107
        %v3140 = vsel %vm3076, %v3044, %v3108
        %v3141 = vsel %vm3077, %v3045, %v3109
        %v3142 = vsel %vm3078, %v3046, %v3110
        %v3143 = vsel %vm3079, %v3047, %v3111
        %v3144 = vsel %vm3080, %v3048, %v3112
        %v3145 = vsel %vm3081, %v3049, %v3113
        %vm3146 = vcmask 523264
        %3147 = vst.msk [vmem:[#allocation2] sm:$0xff] %vm3146, 0.0
        %3148 = vst.msk [vmem:[#allocation2 + $0x8] sm:$0xff] %vm3146, 0.0
        %vm3149 = vcmask 517120
        %3150 = vst.msk [vmem:[#allocation2 + $0x10] sm:$0x3] %vm3149, 0.0
        %3151 = vst.msk [vmem:[#allocation2 + $0x18] sm:$0xff] %vm3146, 0.0
        %3152 = vst.msk [vmem:[#allocation2 + $0x20] sm:$0xff] %vm3146, 0.0
        %3153 = vst.msk [vmem:[#allocation2 + $0x28] sm:$0x3] %vm3149, 0.0
        %3154 = vst.msk [vmem:[#allocation2 + $0x30] sm:$0xff] %vm3146, 0.0
        %3155 = vst.msk [vmem:[#allocation2 + $0x38] sm:$0xff] %vm3146, 0.0
        %3156 = vst.msk [vmem:[#allocation2 + $0x40] sm:$0x3] %vm3149, 0.0
        %3157 = vst.msk [vmem:[#allocation2 + $0x48] sm:$0xff] %vm3146, 0.0
        %3158 = vst.msk [vmem:[#allocation2 + $0x50] sm:$0xff] %vm3146, 0.0
        %3159 = vst.msk [vmem:[#allocation2 + $0x58] sm:$0x3] %vm3149, 0.0
        %3160 = vst.msk [vmem:[#allocation2 + $0x60] sm:$0xff] %vm3146, 0.0
        %3161 = vst.msk [vmem:[#allocation2 + $0x68] sm:$0xff] %vm3146, 0.0
        %3162 = vst.msk [vmem:[#allocation2 + $0x70] sm:$0x3] %vm3149, 0.0
        %3163 = vst.msk [vmem:[#allocation2 + $0x78] sm:$0xff] %vm3146, 0.0
        %3164 = vst.msk [vmem:[#allocation2 + $0x80] sm:$0xff] %vm3146, 0.0
        %3165 = vst.msk [vmem:[#allocation2 + $0x88] sm:$0x3] %vm3149, 0.0
        %3166 = vst.msk [vmem:[#allocation2 + $0x90] sm:$0xff] %vm3146, 0.0
        %3167 = vst.msk [vmem:[#allocation2 + $0x98] sm:$0xff] %vm3146, 0.0
        %3168 = vst.msk [vmem:[#allocation2 + $0xa0] sm:$0x3] %vm3149, 0.0
        %3169 = vst.msk [vmem:[#allocation2 + $0xa8] sm:$0xff] %vm3146, 0.0
        %3170 = vst.msk [vmem:[#allocation2 + $0xb0] sm:$0xff] %vm3146, 0.0
        %3171 = vst.msk [vmem:[#allocation2 + $0xb8] sm:$0x3] %vm3149, 0.0
        %3172 = vst.msk [vmem:[#allocation2 + $0xc0] sm:$0xff] %vm3146, 0.0
        %3173 = vst.msk [vmem:[#allocation2 + $0xc8] sm:$0xff] %vm3146, 0.0
        %3174 = vst.msk [vmem:[#allocation2 + $0xd0] sm:$0x3] %vm3149, 0.0
        %3175 = vst.msk [vmem:[#allocation2 + $0xd8] sm:$0xff] %vm3146, 0.0
        %3176 = vst.msk [vmem:[#allocation2 + $0xe0] sm:$0xff] %vm3146, 0.0
        %3177 = vst.msk [vmem:[#allocation2 + $0xe8] sm:$0x3] %vm3149, 0.0
        %3178 = vst.msk [vmem:[#allocation2 + $0xf0] sm:$0xff] %vm3146, 0.0
        %3179 = vst.msk [vmem:[#allocation2 + $0xf8] sm:$0xff] %vm3146, 0.0
        %3180 = vst.msk [vmem:[#allocation2 + $0x100] sm:$0x3] %vm3149, 0.0
        %3181 = vst.msk [vmem:[#allocation2 + $0x108] sm:$0xff] %vm3146, 0.0
        %3182 = vst.msk [vmem:[#allocation2 + $0x110] sm:$0xff] %vm3146, 0.0
        %3183 = vst.msk [vmem:[#allocation2 + $0x118] sm:$0x3] %vm3149, 0.0
        %3184 = vst.msk [vmem:[#allocation2 + $0x120] sm:$0xff] %vm3146, 0.0
        %3185 = vst.msk [vmem:[#allocation2 + $0x128] sm:$0xff] %vm3146, 0.0
        %3186 = vst.msk [vmem:[#allocation2 + $0x130] sm:$0x3] %vm3149, 0.0
        %3187 = vst.msk [vmem:[#allocation2 + $0x138] sm:$0xff] %vm3146, 0.0
        %3188 = vst.msk [vmem:[#allocation2 + $0x140] sm:$0xff] %vm3146, 0.0
        %3189 = vst.msk [vmem:[#allocation2 + $0x148] sm:$0x3] %vm3149, 0.0
        %3190 = vst.msk [vmem:[#allocation2 + $0x150] sm:$0xff] %vm3146, 0.0
        %3191 = vst.msk [vmem:[#allocation2 + $0x158] sm:$0xff] %vm3146, 0.0
        %3192 = vst.msk [vmem:[#allocation2 + $0x160] sm:$0x3] %vm3149, 0.0
        %3193 = vst.msk [vmem:[#allocation2 + $0x168] sm:$0xff] %vm3146, 0.0
        %3194 = vst.msk [vmem:[#allocation2 + $0x170] sm:$0xff] %vm3146, 0.0
        %3195 = vst.msk [vmem:[#allocation2 + $0x178] sm:$0x3] %vm3149, 0.0
        %3196 = vst.msk [vmem:[#allocation2 + $0x180] sm:$0xff] %vm3146, 0.0
        %3197 = vst.msk [vmem:[#allocation2 + $0x188] sm:$0xff] %vm3146, 0.0
        %3198 = vst.msk [vmem:[#allocation2 + $0x190] sm:$0x3] %vm3149, 0.0
        %3199 = vst.msk [vmem:[#allocation2 + $0x198] sm:$0xff] %vm3146, 0.0
        %3200 = vst.msk [vmem:[#allocation2 + $0x1a0] sm:$0xff] %vm3146, 0.0
        %3201 = vst.msk [vmem:[#allocation2 + $0x1a8] sm:$0x3] %vm3149, 0.0
        %s3202 = scalar_lea.vmem [#allocation2], 24
        %3203 = vst.msk [vmem:[%s3202 + $0x1] sm:$0xff] %vm3146, %v3114
        %3204 = vst.msk [vmem:[%s3202 + $0x9] sm:$0xff] %vm3146, %v3115
        %3205 = vst.msk [vmem:[%s3202 + $0x19] sm:$0xff] %vm3146, %v3116
        %3206 = vst.msk [vmem:[%s3202 + $0x21] sm:$0xff] %vm3146, %v3117
        %3207 = vst.msk [vmem:[%s3202 + $0x31] sm:$0xff] %vm3146, %v3118
        %3208 = vst.msk [vmem:[%s3202 + $0x39] sm:$0xff] %vm3146, %v3119
        %3209 = vst.msk [vmem:[%s3202 + $0x49] sm:$0xff] %vm3146, %v3120
        %3210 = vst.msk [vmem:[%s3202 + $0x51] sm:$0xff] %vm3146, %v3121
        %3211 = vst.msk [vmem:[%s3202 + $0x61] sm:$0xff] %vm3146, %v3122
        %3212 = vst.msk [vmem:[%s3202 + $0x69] sm:$0xff] %vm3146, %v3123
        %3213 = vst.msk [vmem:[%s3202 + $0x79] sm:$0xff] %vm3146, %v3124
        %3214 = vst.msk [vmem:[%s3202 + $0x81] sm:$0xff] %vm3146, %v3125
        %3215 = vst.msk [vmem:[%s3202 + $0x91] sm:$0xff] %vm3146, %v3126
        %3216 = vst.msk [vmem:[%s3202 + $0x99] sm:$0xff] %vm3146, %v3127
        %3217 = vst.msk [vmem:[%s3202 + $0xa9] sm:$0xff] %vm3146, %v3128
        %3218 = vst.msk [vmem:[%s3202 + $0xb1] sm:$0xff] %vm3146, %v3129
        %3219 = vst.msk [vmem:[%s3202 + $0xc1] sm:$0xff] %vm3146, %v3130
        %3220 = vst.msk [vmem:[%s3202 + $0xc9] sm:$0xff] %vm3146, %v3131
        %3221 = vst.msk [vmem:[%s3202 + $0xd9] sm:$0xff] %vm3146, %v3132
        %3222 = vst.msk [vmem:[%s3202 + $0xe1] sm:$0xff] %vm3146, %v3133
        %3223 = vst.msk [vmem:[%s3202 + $0xf1] sm:$0xff] %vm3146, %v3134
        %3224 = vst.msk [vmem:[%s3202 + $0xf9] sm:$0xff] %vm3146, %v3135
        %3225 = vst.msk [vmem:[%s3202 + $0x109] sm:$0xff] %vm3146, %v3136
        %3226 = vst.msk [vmem:[%s3202 + $0x111] sm:$0xff] %vm3146, %v3137
        %3227 = vst.msk [vmem:[%s3202 + $0x121] sm:$0xff] %vm3146, %v3138
        %3228 = vst.msk [vmem:[%s3202 + $0x129] sm:$0xff] %vm3146, %v3139
        %3229 = vst.msk [vmem:[%s3202 + $0x139] sm:$0xff] %vm3146, %v3140
        %3230 = vst.msk [vmem:[%s3202 + $0x141] sm:$0xff] %vm3146, %v3141
        %3231 = vst.msk [vmem:[%s3202 + $0x151] sm:$0xff] %vm3146, %v3142
        %3232 = vst.msk [vmem:[%s3202 + $0x159] sm:$0xff] %vm3146, %v3143
        %3233 = vst.msk [vmem:[%s3202 + $0x169] sm:$0xff] %vm3146, %v3144
        %3234 = vst.msk [vmem:[%s3202 + $0x171] sm:$0xff] %vm3146, %v3145
        %v3235 = vld [vmem:[#allocation2] sm:$0xff]
        %v3236 = vld [vmem:[#allocation2 + $0x8] sm:$0xff]
        %v3237 = vld [vmem:[#allocation2 + $0x18] sm:$0xff]
        %v3238 = vld [vmem:[#allocation2 + $0x20] sm:$0xff]
        %v3239 = vld [vmem:[#allocation2 + $0x30] sm:$0xff]
        %v3240 = vld [vmem:[#allocation2 + $0x38] sm:$0xff]
        %v3241 = vld [vmem:[#allocation2 + $0x48] sm:$0xff]
        %v3242 = vld [vmem:[#allocation2 + $0x50] sm:$0xff]
        %v3243 = vld [vmem:[#allocation2 + $0x60] sm:$0xff]
        %v3244 = vld [vmem:[#allocation2 + $0x68] sm:$0xff]
        %v3245 = vld [vmem:[#allocation2 + $0x78] sm:$0xff]
        %v3246 = vld [vmem:[#allocation2 + $0x80] sm:$0xff]
        %v3247 = vld [vmem:[#allocation2 + $0x90] sm:$0xff]
        %v3248 = vld [vmem:[#allocation2 + $0x98] sm:$0xff]
        %v3249 = vld [vmem:[#allocation2 + $0xa8] sm:$0xff]
        %v3250 = vld [vmem:[#allocation2 + $0xb0] sm:$0xff]
        %v3251 = vld [vmem:[#allocation2 + $0xc0] sm:$0xff]
        %v3252 = vld [vmem:[#allocation2 + $0xc8] sm:$0xff]
        %v3253 = vld [vmem:[#allocation2 + $0xd8] sm:$0xff]
        %v3254 = vld [vmem:[#allocation2 + $0xe0] sm:$0xff]
        %v3255 = vld [vmem:[#allocation2 + $0xf0] sm:$0xff]
        %v3256 = vld [vmem:[#allocation2 + $0xf8] sm:$0xff]
        %v3257 = vld [vmem:[#allocation2 + $0x108] sm:$0xff]
        %v3258 = vld [vmem:[#allocation2 + $0x110] sm:$0xff]
        %v3259 = vld [vmem:[#allocation2 + $0x120] sm:$0xff]
        %v3260 = vld [vmem:[#allocation2 + $0x128] sm:$0xff]
        %v3261 = vld [vmem:[#allocation2 + $0x138] sm:$0xff]
        %v3262 = vld [vmem:[#allocation2 + $0x140] sm:$0xff]
        %v3263 = vld [vmem:[#allocation2 + $0x150] sm:$0xff]
        %v3264 = vld [vmem:[#allocation2 + $0x158] sm:$0xff]
        %v3265 = vld [vmem:[#allocation2 + $0x168] sm:$0xff]
        %v3266 = vld [vmem:[#allocation2 + $0x170] sm:$0xff]
        %v3267 = vld [vmem:[%s2] sm:$0xff]
        %v3268 = vld [vmem:[%s2 + $0x8] sm:$0xff]
        %v3269 = vld [vmem:[%s2 + $0x10] sm:$0xff]
        %v3270 = vld [vmem:[%s2 + $0x18] sm:$0xff]
        %v3271 = vld [vmem:[%s2 + $0x20] sm:$0xff]
        %v3272 = vld [vmem:[%s2 + $0x28] sm:$0xff]
        %v3273 = vld [vmem:[%s2 + $0x30] sm:$0xff]
        %v3274 = vld [vmem:[%s2 + $0x38] sm:$0xff]
        %v3275 = vld [vmem:[#allocation2 + $0x1] sm:$0xff]
        %v3276 = vld [vmem:[#allocation2 + $0x9] sm:$0xff]
        %v3277 = vld [vmem:[#allocation2 + $0x19] sm:$0xff]
        %v3278 = vld [vmem:[#allocation2 + $0x21] sm:$0xff]
        %v3279 = vld [vmem:[#allocation2 + $0x31] sm:$0xff]
        %v3280 = vld [vmem:[#allocation2 + $0x39] sm:$0xff]
        %v3281 = vld [vmem:[#allocation2 + $0x49] sm:$0xff]
        %v3282 = vld [vmem:[#allocation2 + $0x51] sm:$0xff]
        %v3283 = vld [vmem:[#allocation2 + $0x61] sm:$0xff]
        %v3284 = vld [vmem:[#allocation2 + $0x69] sm:$0xff]
        %v3285 = vld [vmem:[#allocation2 + $0x79] sm:$0xff]
        %v3286 = vld [vmem:[#allocation2 + $0x81] sm:$0xff]
        %v3287 = vld [vmem:[#allocation2 + $0x91] sm:$0xff]
        %v3288 = vld [vmem:[#allocation2 + $0x99] sm:$0xff]
        %v3289 = vld [vmem:[#allocation2 + $0xa9] sm:$0xff]
        %v3290 = vld [vmem:[#allocation2 + $0xb1] sm:$0xff]
        %v3291 = vld [vmem:[#allocation2 + $0xc1] sm:$0xff]
        %v3292 = vld [vmem:[#allocation2 + $0xc9] sm:$0xff]
        %v3293 = vld [vmem:[#allocation2 + $0xd9] sm:$0xff]
        %v3294 = vld [vmem:[#allocation2 + $0xe1] sm:$0xff]
        %v3295 = vld [vmem:[#allocation2 + $0xf1] sm:$0xff]
        %v3296 = vld [vmem:[#allocation2 + $0xf9] sm:$0xff]
        %v3297 = vld [vmem:[#allocation2 + $0x109] sm:$0xff]
        %v3298 = vld [vmem:[#allocation2 + $0x111] sm:$0xff]
        %v3299 = vld [vmem:[#allocation2 + $0x121] sm:$0xff]
        %v3300 = vld [vmem:[#allocation2 + $0x129] sm:$0xff]
        %v3301 = vld [vmem:[#allocation2 + $0x139] sm:$0xff]
        %v3302 = vld [vmem:[#allocation2 + $0x141] sm:$0xff]
        %v3303 = vld [vmem:[#allocation2 + $0x151] sm:$0xff]
        %v3304 = vld [vmem:[#allocation2 + $0x159] sm:$0xff]
        %v3305 = vld [vmem:[#allocation2 + $0x169] sm:$0xff]
        %v3306 = vld [vmem:[#allocation2 + $0x171] sm:$0xff]
        %s3307 = scalar_lea.vmem %s2, 64
        %v3308 = vld [vmem:[%s3307] sm:$0xff]
        %v3309 = vld [vmem:[%s3307 + $0x8] sm:$0xff]
        %v3310 = vld [vmem:[%s3307 + $0x10] sm:$0xff]
        %v3311 = vld [vmem:[%s3307 + $0x18] sm:$0xff]
        %v3312 = vld [vmem:[%s3307 + $0x20] sm:$0xff]
        %v3313 = vld [vmem:[%s3307 + $0x28] sm:$0xff]
        %v3314 = vld [vmem:[%s3307 + $0x30] sm:$0xff]
        %v3315 = vld [vmem:[%s3307 + $0x38] sm:$0xff]
        %v3317 = vsel %vm3146, %v3275, 0
        %v3320 = vsel %vm3146, %v3276, 0
        %v3323 = vsel %vm3146, %v3277, 0
        %v3326 = vsel %vm3146, %v3278, 0
        %v3329 = vsel %vm3146, %v3279, 0
        %v3332 = vsel %vm3146, %v3280, 0
        %v3335 = vsel %vm3146, %v3281, 0
        %v3338 = vsel %vm3146, %v3282, 0
        %v3341 = vsel %vm3146, %v3283, 0
        %v3344 = vsel %vm3146, %v3284, 0
        %v3347 = vsel %vm3146, %v3285, 0
        %v3350 = vsel %vm3146, %v3286, 0
        %v3353 = vsel %vm3146, %v3287, 0
        %v3356 = vsel %vm3146, %v3288, 0
        %v3359 = vsel %vm3146, %v3289, 0
        %v3362 = vsel %vm3146, %v3290, 0
        %v3365 = vsel %vm3146, %v3291, 0
        %v3368 = vsel %vm3146, %v3292, 0
        %v3371 = vsel %vm3146, %v3293, 0
        %v3374 = vsel %vm3146, %v3294, 0
        %v3377 = vsel %vm3146, %v3295, 0
        %v3380 = vsel %vm3146, %v3296, 0
        %v3383 = vsel %vm3146, %v3297, 0
        %v3386 = vsel %vm3146, %v3298, 0
        %v3389 = vsel %vm3146, %v3299, 0
        %v3392 = vsel %vm3146, %v3300, 0
        %v3395 = vsel %vm3146, %v3301, 0
        %v3398 = vsel %vm3146, %v3302, 0
        %v3401 = vsel %vm3146, %v3303, 0
        %v3404 = vsel %vm3146, %v3304, 0
        %v3407 = vsel %vm3146, %v3305, 0
        %v3410 = vsel %vm3146, %v3306, 0
        %3412 = vmatprep.subr.mxu0 0.0
        %3413 = vmatpush1.msra.mxu0 %v3308
        %3414 = vmatprep.subr.mxu0 0.0
        %3415 = vmatpush1.msra.mxu0 %v3309
        %3416 = vmatprep.subr.mxu0 0.0
        %3417 = vmatpush1.msra.mxu0 %v3310
        %3418 = vmatprep.subr.mxu0 0.0
        %3419 = vmatpush1.msra.mxu0 %v3311
        %3420 = vmatprep.subr.mxu0 0.0
        %3421 = vmatpush1.msra.mxu0 %v3312
        %3422 = vmatprep.subr.mxu0 0.0
        %3423 = vmatpush1.msra.mxu0 %v3313
        %3424 = vmatprep.subr.mxu0 0.0
        %3425 = vmatpush1.msra.mxu0 %v3314
        %3426 = vmatprep.subr.mxu0 0.0
        %3427 = vmatpush1.msra.mxu0 %v3315
        %3428 = vmatprep.subr.mxu0 0.0
        %3429 = vmatpush1.msra.mxu0 0.0
        %3430 = vmatprep.subr.mxu0 0.0
        %3431 = vmatpush1.msra.mxu0 0.0
        %3432 = vmatprep.subr.mxu0 0.0
        %3433 = vmatpush1.msra.mxu0 0.0
        %3434 = vmatprep.subr.mxu0 0.0
        %3435 = vmatpush1.msra.mxu0 0.0
        %3436 = vmatprep.subr.mxu0 0.0
        %3437 = vmatpush1.msra.mxu0 0.0
        %3438 = vmatprep.subr.mxu0 0.0
        %3439 = vmatpush1.msra.mxu0 0.0
        %3440 = vmatprep.subr.mxu0 0.0
        %3441 = vmatpush1.msra.mxu0 0.0
        %3442 = vmatprep.subr.mxu0 0.0
        %3443 = vmatpush1.msra.mxu0 0.0
        %3444 = vmatprep.subr.mxu0 0.0
        %3445 = vmatpush1.msra.mxu0 0.0
        %3446 = vmatprep.subr.mxu0 0.0
        %3447 = vmatpush1.msra.mxu0 0.0
        %3448 = vmatprep.subr.mxu0 0.0
        %3449 = vmatpush1.msra.mxu0 0.0
        %3450 = vmatprep.subr.mxu0 0.0
        %3451 = vmatpush1.msra.mxu0 0.0
        %3452 = vmatprep.subr.mxu0 0.0
        %3453 = vmatpush1.msra.mxu0 0.0
        %3454 = vmatprep.subr.mxu0 0.0
        %3455 = vmatpush1.msra.mxu0 0.0
        %3456 = vmatprep.subr.mxu0 0.0
        %3457 = vmatpush1.msra.mxu0 0.0
        %3458 = vmatprep.subr.mxu0 0.0
        %3459 = vmatpush1.msra.mxu0 0.0
        %3460 = vmatprep.subr.mxu0 0.0
        %3461 = vmatpush1.msra.mxu0 0.0
        %3462 = vmatprep.subr.mxu0 0.0
        %3463 = vmatpush1.msra.mxu0 0.0
        %3464 = vmatprep.subr.mxu0 0.0
        %3465 = vmatpush1.msra.mxu0 0.0
        %3466 = vmatprep.subr.mxu0 0.0
        %3467 = vmatpush1.msra.mxu0 0.0
        %3468 = vmatprep.subr.mxu0 0.0
        %3469 = vmatpush1.msra.mxu0 0.0
        %3470 = vmatprep.subr.mxu0 0.0
        %3471 = vmatpush1.msra.mxu0 0.0
        %3472 = vmatprep.subr.mxu0 0.0
        %3473 = vmatpush1.msra.mxu0 0.0
        %3474 = vmatprep.subr.mxu0 0.0
        %3475 = vmatpush1.msra.mxu0 0.0
        %3476 = vmatprep.mubr.f32.mxu0 0.0
        %3477 = vmatmul.mubr.f32.gmra.mrb[0].mxu0 %v3317
        %v3478 = vpop.f32.mrb[0].mxu0
        %v3479 = vadd.f32 0.0, %v3478
        %v3480 = vpop.f32.mrb[0].mxu0
        %3481 = vmatprep.mubr.f32.mxu0 0.0
        %3482 = vmatmul.mubr.f32.gmra.mrb[0].mxu0 %v3320
        %v3483 = vpop.f32.mrb[0].mxu0
        %v3484 = vadd.f32 0.0, %v3483
        %v3485 = vpop.f32.mrb[0].mxu0
        %3486 = vmatprep.mubr.f32.mxu0 0.0
        %3487 = vmatmul.mubr.f32.gmra.mrb[0].mxu0 %v3323
        %v3488 = vpop.f32.mrb[0].mxu0
        %v3489 = vadd.f32 0.0, %v3488
        %v3490 = vpop.f32.mrb[0].mxu0
        %3491 = vmatprep.mubr.f32.mxu0 0.0
        %3492 = vmatmul.mubr.f32.gmra.mrb[0].mxu0 %v3326
        %v3493 = vpop.f32.mrb[0].mxu0
        %v3494 = vadd.f32 0.0, %v3493
        %v3495 = vpop.f32.mrb[0].mxu0
        %3496 = vmatprep.mubr.f32.mxu0 0.0
        %3497 = vmatmul.mubr.f32.gmra.mrb[0].mxu0 %v3329
        %v3498 = vpop.f32.mrb[0].mxu0
        %v3499 = vadd.f32 0.0, %v3498
        %v3500 = vpop.f32.mrb[0].mxu0
        %3501 = vmatprep.mubr.f32.mxu0 0.0
        %3502 = vmatmul.mubr.f32.gmra.mrb[0].mxu0 %v3332
        %v3503 = vpop.f32.mrb[0].mxu0
        %v3504 = vadd.f32 0.0, %v3503
        %v3505 = vpop.f32.mrb[0].mxu0
        %3506 = vmatprep.mubr.f32.mxu0 0.0
        %3507 = vmatmul.mubr.f32.gmra.mrb[0].mxu0 %v3335
        %v3508 = vpop.f32.mrb[0].mxu0
        %v3509 = vadd.f32 0.0, %v3508
        %v3510 = vpop.f32.mrb[0].mxu0
        %3511 = vmatprep.mubr.f32.mxu0 0.0
        %3512 = vmatmul.mubr.f32.gmra.mrb[0].mxu0 %v3338
        %v3513 = vpop.f32.mrb[0].mxu0
        %v3514 = vadd.f32 0.0, %v3513
        %v3515 = vpop.f32.mrb[0].mxu0
        %3516 = vmatprep.mubr.f32.mxu0 0.0
        %3517 = vmatmul.mubr.f32.gmra.mrb[0].mxu0 %v3341
        %v3518 = vpop.f32.mrb[0].mxu0
        %v3519 = vadd.f32 0.0, %v3518
        %v3520 = vpop.f32.mrb[0].mxu0
        %3521 = vmatprep.mubr.f32.mxu0 0.0
        %3522 = vmatmul.mubr.f32.gmra.mrb[0].mxu0 %v3344
        %v3523 = vpop.f32.mrb[0].mxu0
        %v3524 = vadd.f32 0.0, %v3523
        %v3525 = vpop.f32.mrb[0].mxu0
        %3526 = vmatprep.mubr.f32.mxu0 0.0
        %3527 = vmatmul.mubr.f32.gmra.mrb[0].mxu0 %v3347
        %v3528 = vpop.f32.mrb[0].mxu0
        %v3529 = vadd.f32 0.0, %v3528
        %v3530 = vpop.f32.mrb[0].mxu0
        %3531 = vmatprep.mubr.f32.mxu0 0.0
        %3532 = vmatmul.mubr.f32.gmra.mrb[0].mxu0 %v3350
        %v3533 = vpop.f32.mrb[0].mxu0
        %v3534 = vadd.f32 0.0, %v3533
        %v3535 = vpop.f32.mrb[0].mxu0
        %3536 = vmatprep.mubr.f32.mxu0 0.0
        %3537 = vmatmul.mubr.f32.gmra.mrb[0].mxu0 %v3353
        %v3538 = vpop.f32.mrb[0].mxu0
        %v3539 = vadd.f32 0.0, %v3538
        %v3540 = vpop.f32.mrb[0].mxu0
        %3541 = vmatprep.mubr.f32.mxu0 0.0
        %3542 = vmatmul.mubr.f32.gmra.mrb[0].mxu0 %v3356
        %v3543 = vpop.f32.mrb[0].mxu0
        %v3544 = vadd.f32 0.0, %v3543
        %v3545 = vpop.f32.mrb[0].mxu0
        %3546 = vmatprep.mubr.f32.mxu0 0.0
        %3547 = vmatmul.mubr.f32.gmra.mrb[0].mxu0 %v3359
        %v3548 = vpop.f32.mrb[0].mxu0
        %v3549 = vadd.f32 0.0, %v3548
        %v3550 = vpop.f32.mrb[0].mxu0
        %3551 = vmatprep.mubr.f32.mxu0 0.0
        %3552 = vmatmul.mubr.f32.gmra.mrb[0].mxu0 %v3362
        %v3553 = vpop.f32.mrb[0].mxu0
        %v3554 = vadd.f32 0.0, %v3553
        %v3555 = vpop.f32.mrb[0].mxu0
        %3556 = vmatprep.mubr.f32.mxu0 0.0
        %3557 = vmatmul.mubr.f32.gmra.mrb[0].mxu0 %v3365
        %v3558 = vpop.f32.mrb[0].mxu0
        %v3559 = vadd.f32 0.0, %v3558
        %v3560 = vpop.f32.mrb[0].mxu0
        %3561 = vmatprep.mubr.f32.mxu0 0.0
        %3562 = vmatmul.mubr.f32.gmra.mrb[0].mxu0 %v3368
        %v3563 = vpop.f32.mrb[0].mxu0
        %v3564 = vadd.f32 0.0, %v3563
        %v3565 = vpop.f32.mrb[0].mxu0
        %3566 = vmatprep.mubr.f32.mxu0 0.0
        %3567 = vmatmul.mubr.f32.gmra.mrb[0].mxu0 %v3371
        %v3568 = vpop.f32.mrb[0].mxu0
        %v3569 = vadd.f32 0.0, %v3568
        %v3570 = vpop.f32.mrb[0].mxu0
        %3571 = vmatprep.mubr.f32.mxu0 0.0
        %3572 = vmatmul.mubr.f32.gmra.mrb[0].mxu0 %v3374
        %v3573 = vpop.f32.mrb[0].mxu0
        %v3574 = vadd.f32 0.0, %v3573
        %v3575 = vpop.f32.mrb[0].mxu0
        %3576 = vmatprep.mubr.f32.mxu0 0.0
        %3577 = vmatmul.mubr.f32.gmra.mrb[0].mxu0 %v3377
        %v3578 = vpop.f32.mrb[0].mxu0
        %v3579 = vadd.f32 0.0, %v3578
        %v3580 = vpop.f32.mrb[0].mxu0
        %3581 = vmatprep.mubr.f32.mxu0 0.0
        %3582 = vmatmul.mubr.f32.gmra.mrb[0].mxu0 %v3380
        %v3583 = vpop.f32.mrb[0].mxu0
        %v3584 = vadd.f32 0.0, %v3583
        %v3585 = vpop.f32.mrb[0].mxu0
        %3586 = vmatprep.mubr.f32.mxu0 0.0
        %3587 = vmatmul.mubr.f32.gmra.mrb[0].mxu0 %v3383
        %v3588 = vpop.f32.mrb[0].mxu0
        %v3589 = vadd.f32 0.0, %v3588
        %v3590 = vpop.f32.mrb[0].mxu0
        %3591 = vmatprep.mubr.f32.mxu0 0.0
        %3592 = vmatmul.mubr.f32.gmra.mrb[0].mxu0 %v3386
        %v3593 = vpop.f32.mrb[0].mxu0
        %v3594 = vadd.f32 0.0, %v3593
        %v3595 = vpop.f32.mrb[0].mxu0
        %3596 = vmatprep.mubr.f32.mxu0 0.0
        %3597 = vmatmul.mubr.f32.gmra.mrb[0].mxu0 %v3389
        %v3598 = vpop.f32.mrb[0].mxu0
        %v3599 = vadd.f32 0.0, %v3598
        %v3600 = vpop.f32.mrb[0].mxu0
        %3601 = vmatprep.mubr.f32.mxu0 0.0
        %3602 = vmatmul.mubr.f32.gmra.mrb[0].mxu0 %v3392
        %v3603 = vpop.f32.mrb[0].mxu0
        %v3604 = vadd.f32 0.0, %v3603
        %v3605 = vpop.f32.mrb[0].mxu0
        %3606 = vmatprep.mubr.f32.mxu0 0.0
        %3607 = vmatmul.mubr.f32.gmra.mrb[0].mxu0 %v3395
        %v3608 = vpop.f32.mrb[0].mxu0
        %v3609 = vadd.f32 0.0, %v3608
        %v3610 = vpop.f32.mrb[0].mxu0
        %3611 = vmatprep.mubr.f32.mxu0 0.0
        %3612 = vmatmul.mubr.f32.gmra.mrb[0].mxu0 %v3398
        %v3613 = vpop.f32.mrb[0].mxu0
        %v3614 = vadd.f32 0.0, %v3613
        %v3615 = vpop.f32.mrb[0].mxu0
        %3616 = vmatprep.mubr.f32.mxu0 0.0
        %3617 = vmatmul.mubr.f32.gmra.mrb[0].mxu0 %v3401
        %v3618 = vpop.f32.mrb[0].mxu0
        %v3619 = vadd.f32 0.0, %v3618
        %v3620 = vpop.f32.mrb[0].mxu0
        %3621 = vmatprep.mubr.f32.mxu0 0.0
        %3622 = vmatmul.mubr.f32.gmra.mrb[0].mxu0 %v3404
        %v3623 = vpop.f32.mrb[0].mxu0
        %v3624 = vadd.f32 0.0, %v3623
        %v3625 = vpop.f32.mrb[0].mxu0
        %3626 = vmatprep.mubr.f32.mxu0 0.0
        %3627 = vmatmul.mubr.f32.gmra.mrb[0].mxu0 %v3407
        %v3628 = vpop.f32.mrb[0].mxu0
        %v3629 = vadd.f32 0.0, %v3628
        %v3630 = vpop.f32.mrb[0].mxu0
        %3631 = vmatprep.mubr.f32.mxu0 0.0
        %3632 = vmatmul.mubr.f32.gmra.mrb[0].mxu0 %v3410
        %v3633 = vpop.f32.mrb[0].mxu0
        %v3634 = vadd.f32 0.0, %v3633
        %v3635 = vpop.f32.mrb[0].mxu0
        %3636 = vdwg.mxu0
        %v3638 = vsel %vm3146, %v3235, 0
        %v3641 = vsel %vm3146, %v3236, 0
        %v3644 = vsel %vm3146, %v3237, 0
        %v3647 = vsel %vm3146, %v3238, 0
        %v3650 = vsel %vm3146, %v3239, 0
        %v3653 = vsel %vm3146, %v3240, 0
        %v3656 = vsel %vm3146, %v3241, 0
        %v3659 = vsel %vm3146, %v3242, 0
        %v3662 = vsel %vm3146, %v3243, 0
        %v3665 = vsel %vm3146, %v3244, 0
        %v3668 = vsel %vm3146, %v3245, 0
        %v3671 = vsel %vm3146, %v3246, 0
        %v3674 = vsel %vm3146, %v3247, 0
        %v3677 = vsel %vm3146, %v3248, 0
        %v3680 = vsel %vm3146, %v3249, 0
        %v3683 = vsel %vm3146, %v3250, 0
        %v3686 = vsel %vm3146, %v3251, 0
        %v3689 = vsel %vm3146, %v3252, 0
        %v3692 = vsel %vm3146, %v3253, 0
        %v3695 = vsel %vm3146, %v3254, 0
        %v3698 = vsel %vm3146, %v3255, 0
        %v3701 = vsel %vm3146, %v3256, 0
        %v3704 = vsel %vm3146, %v3257, 0
        %v3707 = vsel %vm3146, %v3258, 0
        %v3710 = vsel %vm3146, %v3259, 0
        %v3713 = vsel %vm3146, %v3260, 0
        %v3716 = vsel %vm3146, %v3261, 0
        %v3719 = vsel %vm3146, %v3262, 0
        %v3722 = vsel %vm3146, %v3263, 0
        %v3725 = vsel %vm3146, %v3264, 0
        %v3728 = vsel %vm3146, %v3265, 0
        %v3731 = vsel %vm3146, %v3266, 0
        %3733 = vmatprep.subr.mxu0 0.0
        %3734 = vmatpush1.msra.mxu0 %v3267
        %3735 = vmatprep.subr.mxu0 0.0
        %3736 = vmatpush1.msra.mxu0 %v3268
        %3737 = vmatprep.subr.mxu0 0.0
        %3738 = vmatpush1.msra.mxu0 %v3269
        %3739 = vmatprep.subr.mxu0 0.0
        %3740 = vmatpush1.msra.mxu0 %v3270
        %3741 = vmatprep.subr.mxu0 0.0
        %3742 = vmatpush1.msra.mxu0 %v3271
        %3743 = vmatprep.subr.mxu0 0.0
        %3744 = vmatpush1.msra.mxu0 %v3272
        %3745 = vmatprep.subr.mxu0 0.0
        %3746 = vmatpush1.msra.mxu0 %v3273
        %3747 = vmatprep.subr.mxu0 0.0
        %3748 = vmatpush1.msra.mxu0 %v3274
        %3749 = vmatprep.subr.mxu0 0.0
        %3750 = vmatpush1.msra.mxu0 0.0
        %3751 = vmatprep.subr.mxu0 0.0
        %3752 = vmatpush1.msra.mxu0 0.0
        %3753 = vmatprep.subr.mxu0 0.0
        %3754 = vmatpush1.msra.mxu0 0.0
        %3755 = vmatprep.subr.mxu0 0.0
        %3756 = vmatpush1.msra.mxu0 0.0
        %3757 = vmatprep.subr.mxu0 0.0
        %3758 = vmatpush1.msra.mxu0 0.0
        %3759 = vmatprep.subr.mxu0 0.0
        %3760 = vmatpush1.msra.mxu0 0.0
        %3761 = vmatprep.subr.mxu0 0.0
        %3762 = vmatpush1.msra.mxu0 0.0
        %3763 = vmatprep.subr.mxu0 0.0
        %3764 = vmatpush1.msra.mxu0 0.0
        %3765 = vmatprep.subr.mxu0 0.0
        %3766 = vmatpush1.msra.mxu0 0.0
        %3767 = vmatprep.subr.mxu0 0.0
        %3768 = vmatpush1.msra.mxu0 0.0
        %3769 = vmatprep.subr.mxu0 0.0
        %3770 = vmatpush1.msra.mxu0 0.0
        %3771 = vmatprep.subr.mxu0 0.0
        %3772 = vmatpush1.msra.mxu0 0.0
        %3773 = vmatprep.subr.mxu0 0.0
        %3774 = vmatpush1.msra.mxu0 0.0
        %3775 = vmatprep.subr.mxu0 0.0
        %3776 = vmatpush1.msra.mxu0 0.0
        %3777 = vmatprep.subr.mxu0 0.0
        %3778 = vmatpush1.msra.mxu0 0.0
        %3779 = vmatprep.subr.mxu0 0.0
        %3780 = vmatpush1.msra.mxu0 0.0
        %3781 = vmatprep.subr.mxu0 0.0
        %3782 = vmatpush1.msra.mxu0 0.0
        %3783 = vmatprep.subr.mxu0 0.0
        %3784 = vmatpush1.msra.mxu0 0.0
        %3785 = vmatprep.subr.mxu0 0.0
        %3786 = vmatpush1.msra.mxu0 0.0
        %3787 = vmatprep.subr.mxu0 0.0
        %3788 = vmatpush1.msra.mxu0 0.0
        %3789 = vmatprep.subr.mxu0 0.0
        %3790 = vmatpush1.msra.mxu0 0.0
        %3791 = vmatprep.subr.mxu0 0.0
        %3792 = vmatpush1.msra.mxu0 0.0
        %3793 = vmatprep.subr.mxu0 0.0
        %3794 = vmatpush1.msra.mxu0 0.0
        %3795 = vmatprep.subr.mxu0 0.0
        %3796 = vmatpush1.msra.mxu0 0.0
        %3797 = vmatprep.mubr.f32.mxu0 0.0
        %3798 = vmatmul.mubr.f32.gmra.mrb[0].mxu0 %v3638
        %v3799 = vpop.f32.mrb[0].mxu0
        %v3800 = vadd.f32 %v3479, %v3799
        %v3801 = vpop.f32.mrb[0].mxu0
        %3802 = vmatprep.mubr.f32.mxu0 0.0
        %3803 = vmatmul.mubr.f32.gmra.mrb[0].mxu0 %v3641
        %v3804 = vpop.f32.mrb[0].mxu0
        %v3805 = vadd.f32 %v3484, %v3804
        %v3806 = vpop.f32.mrb[0].mxu0
        %3807 = vmatprep.mubr.f32.mxu0 0.0
        %3808 = vmatmul.mubr.f32.gmra.mrb[0].mxu0 %v3644
        %v3809 = vpop.f32.mrb[0].mxu0
        %v3810 = vadd.f32 %v3489, %v3809
        %v3811 = vpop.f32.mrb[0].mxu0
        %3812 = vmatprep.mubr.f32.mxu0 0.0
        %3813 = vmatmul.mubr.f32.gmra.mrb[0].mxu0 %v3647
        %v3814 = vpop.f32.mrb[0].mxu0
        %v3815 = vadd.f32 %v3494, %v3814
        %v3816 = vpop.f32.mrb[0].mxu0
        %3817 = vmatprep.mubr.f32.mxu0 0.0
        %3818 = vmatmul.mubr.f32.gmra.mrb[0].mxu0 %v3650
        %v3819 = vpop.f32.mrb[0].mxu0
        %v3820 = vadd.f32 %v3499, %v3819
        %v3821 = vpop.f32.mrb[0].mxu0
        %3822 = vmatprep.mubr.f32.mxu0 0.0
        %3823 = vmatmul.mubr.f32.gmra.mrb[0].mxu0 %v3653
        %v3824 = vpop.f32.mrb[0].mxu0
        %v3825 = vadd.f32 %v3504, %v3824
        %v3826 = vpop.f32.mrb[0].mxu0
        %3827 = vmatprep.mubr.f32.mxu0 0.0
        %3828 = vmatmul.mubr.f32.gmra.mrb[0].mxu0 %v3656
        %v3829 = vpop.f32.mrb[0].mxu0
        %v3830 = vadd.f32 %v3509, %v3829
        %v3831 = vpop.f32.mrb[0].mxu0
        %3832 = vmatprep.mubr.f32.mxu0 0.0
        %3833 = vmatmul.mubr.f32.gmra.mrb[0].mxu0 %v3659
        %v3834 = vpop.f32.mrb[0].mxu0
        %v3835 = vadd.f32 %v3514, %v3834
        %v3836 = vpop.f32.mrb[0].mxu0
        %3837 = vmatprep.mubr.f32.mxu0 0.0
        %3838 = vmatmul.mubr.f32.gmra.mrb[0].mxu0 %v3662
        %v3839 = vpop.f32.mrb[0].mxu0
        %v3840 = vadd.f32 %v3519, %v3839
        %v3841 = vpop.f32.mrb[0].mxu0
        %3842 = vmatprep.mubr.f32.mxu0 0.0
        %3843 = vmatmul.mubr.f32.gmra.mrb[0].mxu0 %v3665
        %v3844 = vpop.f32.mrb[0].mxu0
        %v3845 = vadd.f32 %v3524, %v3844
        %v3846 = vpop.f32.mrb[0].mxu0
        %3847 = vmatprep.mubr.f32.mxu0 0.0
        %3848 = vmatmul.mubr.f32.gmra.mrb[0].mxu0 %v3668
        %v3849 = vpop.f32.mrb[0].mxu0
        %v3850 = vadd.f32 %v3529, %v3849
        %v3851 = vpop.f32.mrb[0].mxu0
        %3852 = vmatprep.mubr.f32.mxu0 0.0
        %3853 = vmatmul.mubr.f32.gmra.mrb[0].mxu0 %v3671
        %v3854 = vpop.f32.mrb[0].mxu0
        %v3855 = vadd.f32 %v3534, %v3854
        %v3856 = vpop.f32.mrb[0].mxu0
        %3857 = vmatprep.mubr.f32.mxu0 0.0
        %3858 = vmatmul.mubr.f32.gmra.mrb[0].mxu0 %v3674
        %v3859 = vpop.f32.mrb[0].mxu0
        %v3860 = vadd.f32 %v3539, %v3859
        %v3861 = vpop.f32.mrb[0].mxu0
        %3862 = vmatprep.mubr.f32.mxu0 0.0
        %3863 = vmatmul.mubr.f32.gmra.mrb[0].mxu0 %v3677
        %v3864 = vpop.f32.mrb[0].mxu0
        %v3865 = vadd.f32 %v3544, %v3864
        %v3866 = vpop.f32.mrb[0].mxu0
        %3867 = vmatprep.mubr.f32.mxu0 0.0
        %3868 = vmatmul.mubr.f32.gmra.mrb[0].mxu0 %v3680
        %v3869 = vpop.f32.mrb[0].mxu0
        %v3870 = vadd.f32 %v3549, %v3869
        %v3871 = vpop.f32.mrb[0].mxu0
        %3872 = vmatprep.mubr.f32.mxu0 0.0
        %3873 = vmatmul.mubr.f32.gmra.mrb[0].mxu0 %v3683
        %v3874 = vpop.f32.mrb[0].mxu0
        %v3875 = vadd.f32 %v3554, %v3874
        %v3876 = vpop.f32.mrb[0].mxu0
        %3877 = vmatprep.mubr.f32.mxu0 0.0
        %3878 = vmatmul.mubr.f32.gmra.mrb[0].mxu0 %v3686
        %v3879 = vpop.f32.mrb[0].mxu0
        %v3880 = vadd.f32 %v3559, %v3879
        %v3881 = vpop.f32.mrb[0].mxu0
        %3882 = vmatprep.mubr.f32.mxu0 0.0
        %3883 = vmatmul.mubr.f32.gmra.mrb[0].mxu0 %v3689
        %v3884 = vpop.f32.mrb[0].mxu0
        %v3885 = vadd.f32 %v3564, %v3884
        %v3886 = vpop.f32.mrb[0].mxu0
        %3887 = vmatprep.mubr.f32.mxu0 0.0
        %3888 = vmatmul.mubr.f32.gmra.mrb[0].mxu0 %v3692
        %v3889 = vpop.f32.mrb[0].mxu0
        %v3890 = vadd.f32 %v3569, %v3889
        %v3891 = vpop.f32.mrb[0].mxu0
        %3892 = vmatprep.mubr.f32.mxu0 0.0
        %3893 = vmatmul.mubr.f32.gmra.mrb[0].mxu0 %v3695
        %v3894 = vpop.f32.mrb[0].mxu0
        %v3895 = vadd.f32 %v3574, %v3894
        %v3896 = vpop.f32.mrb[0].mxu0
        %3897 = vmatprep.mubr.f32.mxu0 0.0
        %3898 = vmatmul.mubr.f32.gmra.mrb[0].mxu0 %v3698
        %v3899 = vpop.f32.mrb[0].mxu0
        %v3900 = vadd.f32 %v3579, %v3899
        %v3901 = vpop.f32.mrb[0].mxu0
        %3902 = vmatprep.mubr.f32.mxu0 0.0
        %3903 = vmatmul.mubr.f32.gmra.mrb[0].mxu0 %v3701
        %v3904 = vpop.f32.mrb[0].mxu0
        %v3905 = vadd.f32 %v3584, %v3904
        %v3906 = vpop.f32.mrb[0].mxu0
        %3907 = vmatprep.mubr.f32.mxu0 0.0
        %3908 = vmatmul.mubr.f32.gmra.mrb[0].mxu0 %v3704
        %v3909 = vpop.f32.mrb[0].mxu0
        %v3910 = vadd.f32 %v3589, %v3909
        %v3911 = vpop.f32.mrb[0].mxu0
        %3912 = vmatprep.mubr.f32.mxu0 0.0
        %3913 = vmatmul.mubr.f32.gmra.mrb[0].mxu0 %v3707
        %v3914 = vpop.f32.mrb[0].mxu0
        %v3915 = vadd.f32 %v3594, %v3914
        %v3916 = vpop.f32.mrb[0].mxu0
        %3917 = vmatprep.mubr.f32.mxu0 0.0
        %3918 = vmatmul.mubr.f32.gmra.mrb[0].mxu0 %v3710
        %v3919 = vpop.f32.mrb[0].mxu0
        %v3920 = vadd.f32 %v3599, %v3919
        %v3921 = vpop.f32.mrb[0].mxu0
        %3922 = vmatprep.mubr.f32.mxu0 0.0
        %3923 = vmatmul.mubr.f32.gmra.mrb[0].mxu0 %v3713
        %v3924 = vpop.f32.mrb[0].mxu0
        %v3925 = vadd.f32 %v3604, %v3924
        %v3926 = vpop.f32.mrb[0].mxu0
        %3927 = vmatprep.mubr.f32.mxu0 0.0
        %3928 = vmatmul.mubr.f32.gmra.mrb[0].mxu0 %v3716
        %v3929 = vpop.f32.mrb[0].mxu0
        %v3930 = vadd.f32 %v3609, %v3929
        %v3931 = vpop.f32.mrb[0].mxu0
        %3932 = vmatprep.mubr.f32.mxu0 0.0
        %3933 = vmatmul.mubr.f32.gmra.mrb[0].mxu0 %v3719
        %v3934 = vpop.f32.mrb[0].mxu0
        %v3935 = vadd.f32 %v3614, %v3934
        %v3936 = vpop.f32.mrb[0].mxu0
        %3937 = vmatprep.mubr.f32.mxu0 0.0
        %3938 = vmatmul.mubr.f32.gmra.mrb[0].mxu0 %v3722
        %v3939 = vpop.f32.mrb[0].mxu0
        %v3940 = vadd.f32 %v3619, %v3939
        %v3941 = vpop.f32.mrb[0].mxu0
        %3942 = vmatprep.mubr.f32.mxu0 0.0
        %3943 = vmatmul.mubr.f32.gmra.mrb[0].mxu0 %v3725
        %v3944 = vpop.f32.mrb[0].mxu0
        %v3945 = vadd.f32 %v3624, %v3944
        %v3946 = vpop.f32.mrb[0].mxu0
        %3947 = vmatprep.mubr.f32.mxu0 0.0
        %3948 = vmatmul.mubr.f32.gmra.mrb[0].mxu0 %v3728
        %v3949 = vpop.f32.mrb[0].mxu0
        %v3950 = vadd.f32 %v3629, %v3949
        %v3951 = vpop.f32.mrb[0].mxu0
        %3952 = vmatprep.mubr.f32.mxu0 0.0
        %3953 = vmatmul.mubr.f32.gmra.mrb[0].mxu0 %v3731
        %v3954 = vpop.f32.mrb[0].mxu0
        %v3955 = vadd.f32 %v3634, %v3954
        %v3956 = vpop.f32.mrb[0].mxu0
        %3957 = vdwg.mxu0
        %v3958 = vld [vmem:[#allocation2 + $0x2] sm:$0xff]
        %v3959 = vld [vmem:[#allocation2 + $0xa] sm:$0xff]
        %v3960 = vld [vmem:[#allocation2 + $0x1a] sm:$0xff]
        %v3961 = vld [vmem:[#allocation2 + $0x22] sm:$0xff]
        %v3962 = vld [vmem:[#allocation2 + $0x32] sm:$0xff]
        %v3963 = vld [vmem:[#allocation2 + $0x3a] sm:$0xff]
        %v3964 = vld [vmem:[#allocation2 + $0x4a] sm:$0xff]
        %v3965 = vld [vmem:[#allocation2 + $0x52] sm:$0xff]
        %v3966 = vld [vmem:[#allocation2 + $0x62] sm:$0xff]
        %v3967 = vld [vmem:[#allocation2 + $0x6a] sm:$0xff]
        %v3968 = vld [vmem:[#allocation2 + $0x7a] sm:$0xff]
        %v3969 = vld [vmem:[#allocation2 + $0x82] sm:$0xff]
        %v3970 = vld [vmem:[#allocation2 + $0x92] sm:$0xff]
        %v3971 = vld [vmem:[#allocation2 + $0x9a] sm:$0xff]
        %v3972 = vld [vmem:[#allocation2 + $0xaa] sm:$0xff]
        %v3973 = vld [vmem:[#allocation2 + $0xb2] sm:$0xff]
        %v3974 = vld [vmem:[#allocation2 + $0xc2] sm:$0xff]
        %v3975 = vld [vmem:[#allocation2 + $0xca] sm:$0xff]
        %v3976 = vld [vmem:[#allocation2 + $0xda] sm:$0xff]
        %v3977 = vld [vmem:[#allocation2 + $0xe2] sm:$0xff]
        %v3978 = vld [vmem:[#allocation2 + $0xf2] sm:$0xff]
        %v3979 = vld [vmem:[#allocation2 + $0xfa] sm:$0xff]
        %v3980 = vld [vmem:[#allocation2 + $0x10a] sm:$0xff]
        %v3981 = vld [vmem:[#allocation2 + $0x112] sm:$0xff]
        %v3982 = vld [vmem:[#allocation2 + $0x122] sm:$0xff]
        %v3983 = vld [vmem:[#allocation2 + $0x12a] sm:$0xff]
        %v3984 = vld [vmem:[#allocation2 + $0x13a] sm:$0xff]
        %v3985 = vld [vmem:[#allocation2 + $0x142] sm:$0xff]
        %v3986 = vld [vmem:[#allocation2 + $0x152] sm:$0xff]
        %v3987 = vld [vmem:[#allocation2 + $0x15a] sm:$0xff]
        %v3988 = vld [vmem:[#allocation2 + $0x16a] sm:$0xff]
        %v3989 = vld [vmem:[#allocation2 + $0x172] sm:$0xff]
        %s3990 = scalar_lea.vmem %s2, 128
        %v3991 = vld [vmem:[%s3990] sm:$0xff]
        %v3992 = vld [vmem:[%s3990 + $0x8] sm:$0xff]
        %v3993 = vld [vmem:[%s3990 + $0x10] sm:$0xff]
        %v3994 = vld [vmem:[%s3990 + $0x18] sm:$0xff]
        %v3995 = vld [vmem:[%s3990 + $0x20] sm:$0xff]
        %v3996 = vld [vmem:[%s3990 + $0x28] sm:$0xff]
        %v3997 = vld [vmem:[%s3990 + $0x30] sm:$0xff]
        %v3998 = vld [vmem:[%s3990 + $0x38] sm:$0xff]
        %v4000 = vsel %vm3146, %v3958, 0
        %v4003 = vsel %vm3146, %v3959, 0
        %v4006 = vsel %vm3146, %v3960, 0
        %v4009 = vsel %vm3146, %v3961, 0
        %v4012 = vsel %vm3146, %v3962, 0
        %v4015 = vsel %vm3146, %v3963, 0
        %v4018 = vsel %vm3146, %v3964, 0
        %v4021 = vsel %vm3146, %v3965, 0
        %v4024 = vsel %vm3146, %v3966, 0
        %v4027 = vsel %vm3146, %v3967, 0
        %v4030 = vsel %vm3146, %v3968, 0
        %v4033 = vsel %vm3146, %v3969, 0
        %v4036 = vsel %vm3146, %v3970, 0
        %v4039 = vsel %vm3146, %v3971, 0
        %v4042 = vsel %vm3146, %v3972, 0
        %v4045 = vsel %vm3146, %v3973, 0
        %v4048 = vsel %vm3146, %v3974, 0
        %v4051 = vsel %vm3146, %v3975, 0
        %v4054 = vsel %vm3146, %v3976, 0
        %v4057 = vsel %vm3146, %v3977, 0
        %v4060 = vsel %vm3146, %v3978, 0
        %v4063 = vsel %vm3146, %v3979, 0
        %v4066 = vsel %vm3146, %v3980, 0
        %v4069 = vsel %vm3146, %v3981, 0
        %v4072 = vsel %vm3146, %v3982, 0
        %v4075 = vsel %vm3146, %v3983, 0
        %v4078 = vsel %vm3146, %v3984, 0
        %v4081 = vsel %vm3146, %v3985, 0
        %v4084 = vsel %vm3146, %v3986, 0
        %v4087 = vsel %vm3146, %v3987, 0
        %v4090 = vsel %vm3146, %v3988, 0
        %v4093 = vsel %vm3146, %v3989, 0
        %4095 = vmatprep.subr.mxu0 0.0
        %4096 = vmatpush1.msra.mxu0 %v3991
        %4097 = vmatprep.subr.mxu0 0.0
        %4098 = vmatpush1.msra.mxu0 %v3992
        %4099 = vmatprep.subr.mxu0 0.0
        %4100 = vmatpush1.msra.mxu0 %v3993
        %4101 = vmatprep.subr.mxu0 0.0
        %4102 = vmatpush1.msra.mxu0 %v3994
        %4103 = vmatprep.subr.mxu0 0.0
        %4104 = vmatpush1.msra.mxu0 %v3995
        %4105 = vmatprep.subr.mxu0 0.0
        %4106 = vmatpush1.msra.mxu0 %v3996
        %4107 = vmatprep.subr.mxu0 0.0
        %4108 = vmatpush1.msra.mxu0 %v3997
        %4109 = vmatprep.subr.mxu0 0.0
        %4110 = vmatpush1.msra.mxu0 %v3998
        %4111 = vmatprep.subr.mxu0 0.0
        %4112 = vmatpush1.msra.mxu0 0.0
        %4113 = vmatprep.subr.mxu0 0.0
        %4114 = vmatpush1.msra.mxu0 0.0
        %4115 = vmatprep.subr.mxu0 0.0
        %4116 = vmatpush1.msra.mxu0 0.0
        %4117 = vmatprep.subr.mxu0 0.0
        %4118 = vmatpush1.msra.mxu0 0.0
        %4119 = vmatprep.subr.mxu0 0.0
        %4120 = vmatpush1.msra.mxu0 0.0
        %4121 = vmatprep.subr.mxu0 0.0
        %4122 = vmatpush1.msra.mxu0 0.0
        %4123 = vmatprep.subr.mxu0 0.0
        %4124 = vmatpush1.msra.mxu0 0.0
        %4125 = vmatprep.subr.mxu0 0.0
        %4126 = vmatpush1.msra.mxu0 0.0
        %4127 = vmatprep.subr.mxu0 0.0
        %4128 = vmatpush1.msra.mxu0 0.0
        %4129 = vmatprep.subr.mxu0 0.0
        %4130 = vmatpush1.msra.mxu0 0.0
        %4131 = vmatprep.subr.mxu0 0.0
        %4132 = vmatpush1.msra.mxu0 0.0
        %4133 = vmatprep.subr.mxu0 0.0
        %4134 = vmatpush1.msra.mxu0 0.0
        %4135 = vmatprep.subr.mxu0 0.0
        %4136 = vmatpush1.msra.mxu0 0.0
        %4137 = vmatprep.subr.mxu0 0.0
        %4138 = vmatpush1.msra.mxu0 0.0
        %4139 = vmatprep.subr.mxu0 0.0
        %4140 = vmatpush1.msra.mxu0 0.0
        %4141 = vmatprep.subr.mxu0 0.0
        %4142 = vmatpush1.msra.mxu0 0.0
        %4143 = vmatprep.subr.mxu0 0.0
        %4144 = vmatpush1.msra.mxu0 0.0
        %4145 = vmatprep.subr.mxu0 0.0
        %4146 = vmatpush1.msra.mxu0 0.0
        %4147 = vmatprep.subr.mxu0 0.0
        %4148 = vmatpush1.msra.mxu0 0.0
        %4149 = vmatprep.subr.mxu0 0.0
        %4150 = vmatpush1.msra.mxu0 0.0
        %4151 = vmatprep.subr.mxu0 0.0
        %4152 = vmatpush1.msra.mxu0 0.0
        %4153 = vmatprep.subr.mxu0 0.0
        %4154 = vmatpush1.msra.mxu0 0.0
        %4155 = vmatprep.subr.mxu0 0.0
        %4156 = vmatpush1.msra.mxu0 0.0
        %4157 = vmatprep.subr.mxu0 0.0
        %4158 = vmatpush1.msra.mxu0 0.0
        %4159 = vmatprep.mubr.f32.mxu0 0.0
        %4160 = vmatmul.mubr.f32.gmra.mrb[0].mxu0 %v4000
        %v4161 = vpop.f32.mrb[0].mxu0
        %v4162 = vadd.f32 0.0, %v4161
        %v4163 = vpop.f32.mrb[0].mxu0
        %4164 = vmatprep.mubr.f32.mxu0 0.0
        %4165 = vmatmul.mubr.f32.gmra.mrb[0].mxu0 %v4003
        %v4166 = vpop.f32.mrb[0].mxu0
        %v4167 = vadd.f32 0.0, %v4166
        %v4168 = vpop.f32.mrb[0].mxu0
        %4169 = vmatprep.mubr.f32.mxu0 0.0
        %4170 = vmatmul.mubr.f32.gmra.mrb[0].mxu0 %v4006
        %v4171 = vpop.f32.mrb[0].mxu0
        %v4172 = vadd.f32 0.0, %v4171
        %v4173 = vpop.f32.mrb[0].mxu0
        %4174 = vmatprep.mubr.f32.mxu0 0.0
        %4175 = vmatmul.mubr.f32.gmra.mrb[0].mxu0 %v4009
        %v4176 = vpop.f32.mrb[0].mxu0
        %v4177 = vadd.f32 0.0, %v4176
        %v4178 = vpop.f32.mrb[0].mxu0
        %4179 = vmatprep.mubr.f32.mxu0 0.0
        %4180 = vmatmul.mubr.f32.gmra.mrb[0].mxu0 %v4012
        %v4181 = vpop.f32.mrb[0].mxu0
        %v4182 = vadd.f32 0.0, %v4181
        %v4183 = vpop.f32.mrb[0].mxu0
        %4184 = vmatprep.mubr.f32.mxu0 0.0
        %4185 = vmatmul.mubr.f32.gmra.mrb[0].mxu0 %v4015
        %v4186 = vpop.f32.mrb[0].mxu0
        %v4187 = vadd.f32 0.0, %v4186
        %v4188 = vpop.f32.mrb[0].mxu0
        %4189 = vmatprep.mubr.f32.mxu0 0.0
        %4190 = vmatmul.mubr.f32.gmra.mrb[0].mxu0 %v4018
        %v4191 = vpop.f32.mrb[0].mxu0
        %v4192 = vadd.f32 0.0, %v4191
        %v4193 = vpop.f32.mrb[0].mxu0
        %4194 = vmatprep.mubr.f32.mxu0 0.0
        %4195 = vmatmul.mubr.f32.gmra.mrb[0].mxu0 %v4021
        %v4196 = vpop.f32.mrb[0].mxu0
        %v4197 = vadd.f32 0.0, %v4196
        %v4198 = vpop.f32.mrb[0].mxu0
        %4199 = vmatprep.mubr.f32.mxu0 0.0
        %4200 = vmatmul.mubr.f32.gmra.mrb[0].mxu0 %v4024
        %v4201 = vpop.f32.mrb[0].mxu0
        %v4202 = vadd.f32 0.0, %v4201
        %v4203 = vpop.f32.mrb[0].mxu0
        %4204 = vmatprep.mubr.f32.mxu0 0.0
        %4205 = vmatmul.mubr.f32.gmra.mrb[0].mxu0 %v4027
        %v4206 = vpop.f32.mrb[0].mxu0
        %v4207 = vadd.f32 0.0, %v4206
        %v4208 = vpop.f32.mrb[0].mxu0
        %4209 = vmatprep.mubr.f32.mxu0 0.0
        %4210 = vmatmul.mubr.f32.gmra.mrb[0].mxu0 %v4030
        %v4211 = vpop.f32.mrb[0].mxu0
        %v4212 = vadd.f32 0.0, %v4211
        %v4213 = vpop.f32.mrb[0].mxu0
        %4214 = vmatprep.mubr.f32.mxu0 0.0
        %4215 = vmatmul.mubr.f32.gmra.mrb[0].mxu0 %v4033
        %v4216 = vpop.f32.mrb[0].mxu0
        %v4217 = vadd.f32 0.0, %v4216
        %v4218 = vpop.f32.mrb[0].mxu0
        %4219 = vmatprep.mubr.f32.mxu0 0.0
        %4220 = vmatmul.mubr.f32.gmra.mrb[0].mxu0 %v4036
        %v4221 = vpop.f32.mrb[0].mxu0
        %v4222 = vadd.f32 0.0, %v4221
        %v4223 = vpop.f32.mrb[0].mxu0
        %4224 = vmatprep.mubr.f32.mxu0 0.0
        %4225 = vmatmul.mubr.f32.gmra.mrb[0].mxu0 %v4039
        %v4226 = vpop.f32.mrb[0].mxu0
        %v4227 = vadd.f32 0.0, %v4226
        %v4228 = vpop.f32.mrb[0].mxu0
        %4229 = vmatprep.mubr.f32.mxu0 0.0
        %4230 = vmatmul.mubr.f32.gmra.mrb[0].mxu0 %v4042
        %v4231 = vpop.f32.mrb[0].mxu0
        %v4232 = vadd.f32 0.0, %v4231
        %v4233 = vpop.f32.mrb[0].mxu0
        %4234 = vmatprep.mubr.f32.mxu0 0.0
        %4235 = vmatmul.mubr.f32.gmra.mrb[0].mxu0 %v4045
        %v4236 = vpop.f32.mrb[0].mxu0
        %v4237 = vadd.f32 0.0, %v4236
        %v4238 = vpop.f32.mrb[0].mxu0
        %4239 = vmatprep.mubr.f32.mxu0 0.0
        %4240 = vmatmul.mubr.f32.gmra.mrb[0].mxu0 %v4048
        %v4241 = vpop.f32.mrb[0].mxu0
        %v4242 = vadd.f32 0.0, %v4241
        %v4243 = vpop.f32.mrb[0].mxu0
        %4244 = vmatprep.mubr.f32.mxu0 0.0
        %4245 = vmatmul.mubr.f32.gmra.mrb[0].mxu0 %v4051
        %v4246 = vpop.f32.mrb[0].mxu0
        %v4247 = vadd.f32 0.0, %v4246
        %v4248 = vpop.f32.mrb[0].mxu0
        %4249 = vmatprep.mubr.f32.mxu0 0.0
        %4250 = vmatmul.mubr.f32.gmra.mrb[0].mxu0 %v4054
        %v4251 = vpop.f32.mrb[0].mxu0
        %v4252 = vadd.f32 0.0, %v4251
        %v4253 = vpop.f32.mrb[0].mxu0
        %4254 = vmatprep.mubr.f32.mxu0 0.0
        %4255 = vmatmul.mubr.f32.gmra.mrb[0].mxu0 %v4057
        %v4256 = vpop.f32.mrb[0].mxu0
        %v4257 = vadd.f32 0.0, %v4256
        %v4258 = vpop.f32.mrb[0].mxu0
        %4259 = vmatprep.mubr.f32.mxu0 0.0
        %4260 = vmatmul.mubr.f32.gmra.mrb[0].mxu0 %v4060
        %v4261 = vpop.f32.mrb[0].mxu0
        %v4262 = vadd.f32 0.0, %v4261
        %v4263 = vpop.f32.mrb[0].mxu0
        %4264 = vmatprep.mubr.f32.mxu0 0.0
        %4265 = vmatmul.mubr.f32.gmra.mrb[0].mxu0 %v4063
        %v4266 = vpop.f32.mrb[0].mxu0
        %v4267 = vadd.f32 0.0, %v4266
        %v4268 = vpop.f32.mrb[0].mxu0
        %4269 = vmatprep.mubr.f32.mxu0 0.0
        %4270 = vmatmul.mubr.f32.gmra.mrb[0].mxu0 %v4066
        %v4271 = vpop.f32.mrb[0].mxu0
        %v4272 = vadd.f32 0.0, %v4271
        %v4273 = vpop.f32.mrb[0].mxu0
        %4274 = vmatprep.mubr.f32.mxu0 0.0
        %4275 = vmatmul.mubr.f32.gmra.mrb[0].mxu0 %v4069
        %v4276 = vpop.f32.mrb[0].mxu0
        %v4277 = vadd.f32 0.0, %v4276
        %v4278 = vpop.f32.mrb[0].mxu0
        %4279 = vmatprep.mubr.f32.mxu0 0.0
        %4280 = vmatmul.mubr.f32.gmra.mrb[0].mxu0 %v4072
        %v4281 = vpop.f32.mrb[0].mxu0
        %v4282 = vadd.f32 0.0, %v4281
        %v4283 = vpop.f32.mrb[0].mxu0
        %4284 = vmatprep.mubr.f32.mxu0 0.0
        %4285 = vmatmul.mubr.f32.gmra.mrb[0].mxu0 %v4075
        %v4286 = vpop.f32.mrb[0].mxu0
        %v4287 = vadd.f32 0.0, %v4286
        %v4288 = vpop.f32.mrb[0].mxu0
        %4289 = vmatprep.mubr.f32.mxu0 0.0
        %4290 = vmatmul.mubr.f32.gmra.mrb[0].mxu0 %v4078
        %v4291 = vpop.f32.mrb[0].mxu0
        %v4292 = vadd.f32 0.0, %v4291
        %v4293 = vpop.f32.mrb[0].mxu0
        %4294 = vmatprep.mubr.f32.mxu0 0.0
        %4295 = vmatmul.mubr.f32.gmra.mrb[0].mxu0 %v4081
        %v4296 = vpop.f32.mrb[0].mxu0
        %v4297 = vadd.f32 0.0, %v4296
        %v4298 = vpop.f32.mrb[0].mxu0
        %4299 = vmatprep.mubr.f32.mxu0 0.0
        %4300 = vmatmul.mubr.f32.gmra.mrb[0].mxu0 %v4084
        %v4301 = vpop.f32.mrb[0].mxu0
        %v4302 = vadd.f32 0.0, %v4301
        %v4303 = vpop.f32.mrb[0].mxu0
        %4304 = vmatprep.mubr.f32.mxu0 0.0
        %4305 = vmatmul.mubr.f32.gmra.mrb[0].mxu0 %v4087
        %v4306 = vpop.f32.mrb[0].mxu0
        %v4307 = vadd.f32 0.0, %v4306
        %v4308 = vpop.f32.mrb[0].mxu0
        %4309 = vmatprep.mubr.f32.mxu0 0.0
        %4310 = vmatmul.mubr.f32.gmra.mrb[0].mxu0 %v4090
        %v4311 = vpop.f32.mrb[0].mxu0
        %v4312 = vadd.f32 0.0, %v4311
        %v4313 = vpop.f32.mrb[0].mxu0
        %4314 = vmatprep.mubr.f32.mxu0 0.0
        %4315 = vmatmul.mubr.f32.gmra.mrb[0].mxu0 %v4093
        %v4316 = vpop.f32.mrb[0].mxu0
        %v4317 = vadd.f32 0.0, %v4316
        %v4318 = vpop.f32.mrb[0].mxu0
        %4319 = vdwg.mxu0
        %v4320 = vadd.f32 %v3800, %v4162
        %v4321 = vadd.f32 %v3805, %v4167
        %v4322 = vadd.f32 %v3810, %v4172
        %v4323 = vadd.f32 %v3815, %v4177
        %v4324 = vadd.f32 %v3820, %v4182
        %v4325 = vadd.f32 %v3825, %v4187
        %v4326 = vadd.f32 %v3830, %v4192
        %v4327 = vadd.f32 %v3835, %v4197
        %v4328 = vadd.f32 %v3840, %v4202
        %v4329 = vadd.f32 %v3845, %v4207
        %v4330 = vadd.f32 %v3850, %v4212
        %v4331 = vadd.f32 %v3855, %v4217
        %v4332 = vadd.f32 %v3860, %v4222
        %v4333 = vadd.f32 %v3865, %v4227
        %v4334 = vadd.f32 %v3870, %v4232
        %v4335 = vadd.f32 %v3875, %v4237
        %v4336 = vadd.f32 %v3880, %v4242
        %v4337 = vadd.f32 %v3885, %v4247
        %v4338 = vadd.f32 %v3890, %v4252
        %v4339 = vadd.f32 %v3895, %v4257
        %v4340 = vadd.f32 %v3900, %v4262
        %v4341 = vadd.f32 %v3905, %v4267
        %v4342 = vadd.f32 %v3910, %v4272
        %v4343 = vadd.f32 %v3915, %v4277
        %v4344 = vadd.f32 %v3920, %v4282
        %v4345 = vadd.f32 %v3925, %v4287
        %v4346 = vadd.f32 %v3930, %v4292
        %v4347 = vadd.f32 %v3935, %v4297
        %v4348 = vadd.f32 %v3940, %v4302
        %v4349 = vadd.f32 %v3945, %v4307
        %v4350 = vadd.f32 %v3950, %v4312
        %v4351 = vadd.f32 %v3955, %v4317
        %v4352 = vld [vmem:[%s3202] sm:$0xff]
        %v4353 = vld [vmem:[%s3202 + $0x8] sm:$0xff]
        %v4354 = vld [vmem:[%s3202 + $0x18] sm:$0xff]
        %v4355 = vld [vmem:[%s3202 + $0x20] sm:$0xff]
        %v4356 = vld [vmem:[%s3202 + $0x30] sm:$0xff]
        %v4357 = vld [vmem:[%s3202 + $0x38] sm:$0xff]
        %v4358 = vld [vmem:[%s3202 + $0x48] sm:$0xff]
        %v4359 = vld [vmem:[%s3202 + $0x50] sm:$0xff]
        %v4360 = vld [vmem:[%s3202 + $0x60] sm:$0xff]
        %v4361 = vld [vmem:[%s3202 + $0x68] sm:$0xff]
        %v4362 = vld [vmem:[%s3202 + $0x78] sm:$0xff]
        %v4363 = vld [vmem:[%s3202 + $0x80] sm:$0xff]
        %v4364 = vld [vmem:[%s3202 + $0x90] sm:$0xff]
        %v4365 = vld [vmem:[%s3202 + $0x98] sm:$0xff]
        %v4366 = vld [vmem:[%s3202 + $0xa8] sm:$0xff]
        %v4367 = vld [vmem:[%s3202 + $0xb0] sm:$0xff]
        %v4368 = vld [vmem:[%s3202 + $0xc0] sm:$0xff]
        %v4369 = vld [vmem:[%s3202 + $0xc8] sm:$0xff]
        %v4370 = vld [vmem:[%s3202 + $0xd8] sm:$0xff]
        %v4371 = vld [vmem:[%s3202 + $0xe0] sm:$0xff]
        %v4372 = vld [vmem:[%s3202 + $0xf0] sm:$0xff]
        %v4373 = vld [vmem:[%s3202 + $0xf8] sm:$0xff]
        %v4374 = vld [vmem:[%s3202 + $0x108] sm:$0xff]
        %v4375 = vld [vmem:[%s3202 + $0x110] sm:$0xff]
        %v4376 = vld [vmem:[%s3202 + $0x120] sm:$0xff]
        %v4377 = vld [vmem:[%s3202 + $0x128] sm:$0xff]
        %v4378 = vld [vmem:[%s3202 + $0x138] sm:$0xff]
        %v4379 = vld [vmem:[%s3202 + $0x140] sm:$0xff]
        %v4380 = vld [vmem:[%s3202 + $0x150] sm:$0xff]
        %v4381 = vld [vmem:[%s3202 + $0x158] sm:$0xff]
        %v4382 = vld [vmem:[%s3202 + $0x168] sm:$0xff]
        %v4383 = vld [vmem:[%s3202 + $0x170] sm:$0xff]
        %s4384 = scalar_lea.vmem %s2, 192
        %v4385 = vld [vmem:[%s4384] sm:$0xff]
        %v4386 = vld [vmem:[%s4384 + $0x8] sm:$0xff]
        %v4387 = vld [vmem:[%s4384 + $0x10] sm:$0xff]
        %v4388 = vld [vmem:[%s4384 + $0x18] sm:$0xff]
        %v4389 = vld [vmem:[%s4384 + $0x20] sm:$0xff]
        %v4390 = vld [vmem:[%s4384 + $0x28] sm:$0xff]
        %v4391 = vld [vmem:[%s4384 + $0x30] sm:$0xff]
        %v4392 = vld [vmem:[%s4384 + $0x38] sm:$0xff]
        %v4394 = vsel %vm3146, %v4352, 0
        %v4397 = vsel %vm3146, %v4353, 0
        %v4400 = vsel %vm3146, %v4354, 0
        %v4403 = vsel %vm3146, %v4355, 0
        %v4406 = vsel %vm3146, %v4356, 0
        %v4409 = vsel %vm3146, %v4357, 0
        %v4412 = vsel %vm3146, %v4358, 0
        %v4415 = vsel %vm3146, %v4359, 0
        %v4418 = vsel %vm3146, %v4360, 0
        %v4421 = vsel %vm3146, %v4361, 0
        %v4424 = vsel %vm3146, %v4362, 0
        %v4427 = vsel %vm3146, %v4363, 0
        %v4430 = vsel %vm3146, %v4364, 0
        %v4433 = vsel %vm3146, %v4365, 0
        %v4436 = vsel %vm3146, %v4366, 0
        %v4439 = vsel %vm3146, %v4367, 0
        %v4442 = vsel %vm3146, %v4368, 0
        %v4445 = vsel %vm3146, %v4369, 0
        %v4448 = vsel %vm3146, %v4370, 0
        %v4451 = vsel %vm3146, %v4371, 0
        %v4454 = vsel %vm3146, %v4372, 0
        %v4457 = vsel %vm3146, %v4373, 0
        %v4460 = vsel %vm3146, %v4374, 0
        %v4463 = vsel %vm3146, %v4375, 0
        %v4466 = vsel %vm3146, %v4376, 0
        %v4469 = vsel %vm3146, %v4377, 0
        %v4472 = vsel %vm3146, %v4378, 0
        %v4475 = vsel %vm3146, %v4379, 0
        %v4478 = vsel %vm3146, %v4380, 0
        %v4481 = vsel %vm3146, %v4381, 0
        %v4484 = vsel %vm3146, %v4382, 0
        %v4487 = vsel %vm3146, %v4383, 0
        %4489 = vmatprep.subr.mxu0 0.0
        %4490 = vmatpush1.msra.mxu0 %v4385
        %4491 = vmatprep.subr.mxu0 0.0
        %4492 = vmatpush1.msra.mxu0 %v4386
        %4493 = vmatprep.subr.mxu0 0.0
        %4494 = vmatpush1.msra.mxu0 %v4387
        %4495 = vmatprep.subr.mxu0 0.0
        %4496 = vmatpush1.msra.mxu0 %v4388
        %4497 = vmatprep.subr.mxu0 0.0
        %4498 = vmatpush1.msra.mxu0 %v4389
        %4499 = vmatprep.subr.mxu0 0.0
        %4500 = vmatpush1.msra.mxu0 %v4390
        %4501 = vmatprep.subr.mxu0 0.0
        %4502 = vmatpush1.msra.mxu0 %v4391
        %4503 = vmatprep.subr.mxu0 0.0
        %4504 = vmatpush1.msra.mxu0 %v4392
        %4505 = vmatprep.subr.mxu0 0.0
        %4506 = vmatpush1.msra.mxu0 0.0
        %4507 = vmatprep.subr.mxu0 0.0
        %4508 = vmatpush1.msra.mxu0 0.0
        %4509 = vmatprep.subr.mxu0 0.0
        %4510 = vmatpush1.msra.mxu0 0.0
        %4511 = vmatprep.subr.mxu0 0.0
        %4512 = vmatpush1.msra.mxu0 0.0
        %4513 = vmatprep.subr.mxu0 0.0
        %4514 = vmatpush1.msra.mxu0 0.0
        %4515 = vmatprep.subr.mxu0 0.0
        %4516 = vmatpush1.msra.mxu0 0.0
        %4517 = vmatprep.subr.mxu0 0.0
        %4518 = vmatpush1.msra.mxu0 0.0
        %4519 = vmatprep.subr.mxu0 0.0
        %4520 = vmatpush1.msra.mxu0 0.0
        %4521 = vmatprep.subr.mxu0 0.0
        %4522 = vmatpush1.msra.mxu0 0.0
        %4523 = vmatprep.subr.mxu0 0.0
        %4524 = vmatpush1.msra.mxu0 0.0
        %4525 = vmatprep.subr.mxu0 0.0
        %4526 = vmatpush1.msra.mxu0 0.0
        %4527 = vmatprep.subr.mxu0 0.0
        %4528 = vmatpush1.msra.mxu0 0.0
        %4529 = vmatprep.subr.mxu0 0.0
        %4530 = vmatpush1.msra.mxu0 0.0
        %4531 = vmatprep.subr.mxu0 0.0
        %4532 = vmatpush1.msra.mxu0 0.0
        %4533 = vmatprep.subr.mxu0 0.0
        %4534 = vmatpush1.msra.mxu0 0.0
        %4535 = vmatprep.subr.mxu0 0.0
        %4536 = vmatpush1.msra.mxu0 0.0
        %4537 = vmatprep.subr.mxu0 0.0
        %4538 = vmatpush1.msra.mxu0 0.0
        %4539 = vmatprep.subr.mxu0 0.0
        %4540 = vmatpush1.msra.mxu0 0.0
        %4541 = vmatprep.subr.mxu0 0.0
        %4542 = vmatpush1.msra.mxu0 0.0
        %4543 = vmatprep.subr.mxu0 0.0
        %4544 = vmatpush1.msra.mxu0 0.0
        %4545 = vmatprep.subr.mxu0 0.0
        %4546 = vmatpush1.msra.mxu0 0.0
        %4547 = vmatprep.subr.mxu0 0.0
        %4548 = vmatpush1.msra.mxu0 0.0
        %4549 = vmatprep.subr.mxu0 0.0
        %4550 = vmatpush1.msra.mxu0 0.0
        %4551 = vmatprep.subr.mxu0 0.0
        %4552 = vmatpush1.msra.mxu0 0.0
        %4553 = vmatprep.mubr.f32.mxu0 0.0
        %4554 = vmatmul.mubr.f32.gmra.mrb[0].mxu0 %v4394
        %v4555 = vpop.f32.mrb[0].mxu0
        %v4556 = vadd.f32 0.0, %v4555
        %v4557 = vpop.f32.mrb[0].mxu0
        %4558 = vmatprep.mubr.f32.mxu0 0.0
        %4559 = vmatmul.mubr.f32.gmra.mrb[0].mxu0 %v4397
        %v4560 = vpop.f32.mrb[0].mxu0
        %v4561 = vadd.f32 0.0, %v4560
        %v4562 = vpop.f32.mrb[0].mxu0
        %4563 = vmatprep.mubr.f32.mxu0 0.0
        %4564 = vmatmul.mubr.f32.gmra.mrb[0].mxu0 %v4400
        %v4565 = vpop.f32.mrb[0].mxu0
        %v4566 = vadd.f32 0.0, %v4565
        %v4567 = vpop.f32.mrb[0].mxu0
        %4568 = vmatprep.mubr.f32.mxu0 0.0
        %4569 = vmatmul.mubr.f32.gmra.mrb[0].mxu0 %v4403
        %v4570 = vpop.f32.mrb[0].mxu0
        %v4571 = vadd.f32 0.0, %v4570
        %v4572 = vpop.f32.mrb[0].mxu0
        %4573 = vmatprep.mubr.f32.mxu0 0.0
        %4574 = vmatmul.mubr.f32.gmra.mrb[0].mxu0 %v4406
        %v4575 = vpop.f32.mrb[0].mxu0
        %v4576 = vadd.f32 0.0, %v4575
        %v4577 = vpop.f32.mrb[0].mxu0
        %4578 = vmatprep.mubr.f32.mxu0 0.0
        %4579 = vmatmul.mubr.f32.gmra.mrb[0].mxu0 %v4409
        %v4580 = vpop.f32.mrb[0].mxu0
        %v4581 = vadd.f32 0.0, %v4580
        %v4582 = vpop.f32.mrb[0].mxu0
        %4583 = vmatprep.mubr.f32.mxu0 0.0
        %4584 = vmatmul.mubr.f32.gmra.mrb[0].mxu0 %v4412
        %v4585 = vpop.f32.mrb[0].mxu0
        %v4586 = vadd.f32 0.0, %v4585
        %v4587 = vpop.f32.mrb[0].mxu0
        %4588 = vmatprep.mubr.f32.mxu0 0.0
        %4589 = vmatmul.mubr.f32.gmra.mrb[0].mxu0 %v4415
        %v4590 = vpop.f32.mrb[0].mxu0
        %v4591 = vadd.f32 0.0, %v4590
        %v4592 = vpop.f32.mrb[0].mxu0
        %4593 = vmatprep.mubr.f32.mxu0 0.0
        %4594 = vmatmul.mubr.f32.gmra.mrb[0].mxu0 %v4418
        %v4595 = vpop.f32.mrb[0].mxu0
        %v4596 = vadd.f32 0.0, %v4595
        %v4597 = vpop.f32.mrb[0].mxu0
        %4598 = vmatprep.mubr.f32.mxu0 0.0
        %4599 = vmatmul.mubr.f32.gmra.mrb[0].mxu0 %v4421
        %v4600 = vpop.f32.mrb[0].mxu0
        %v4601 = vadd.f32 0.0, %v4600
        %v4602 = vpop.f32.mrb[0].mxu0
        %4603 = vmatprep.mubr.f32.mxu0 0.0
        %4604 = vmatmul.mubr.f32.gmra.mrb[0].mxu0 %v4424
        %v4605 = vpop.f32.mrb[0].mxu0
        %v4606 = vadd.f32 0.0, %v4605
        %v4607 = vpop.f32.mrb[0].mxu0
        %4608 = vmatprep.mubr.f32.mxu0 0.0
        %4609 = vmatmul.mubr.f32.gmra.mrb[0].mxu0 %v4427
        %v4610 = vpop.f32.mrb[0].mxu0
        %v4611 = vadd.f32 0.0, %v4610
        %v4612 = vpop.f32.mrb[0].mxu0
        %4613 = vmatprep.mubr.f32.mxu0 0.0
        %4614 = vmatmul.mubr.f32.gmra.mrb[0].mxu0 %v4430
        %v4615 = vpop.f32.mrb[0].mxu0
        %v4616 = vadd.f32 0.0, %v4615
        %v4617 = vpop.f32.mrb[0].mxu0
        %4618 = vmatprep.mubr.f32.mxu0 0.0
        %4619 = vmatmul.mubr.f32.gmra.mrb[0].mxu0 %v4433
        %v4620 = vpop.f32.mrb[0].mxu0
        %v4621 = vadd.f32 0.0, %v4620
        %v4622 = vpop.f32.mrb[0].mxu0
        %4623 = vmatprep.mubr.f32.mxu0 0.0
        %4624 = vmatmul.mubr.f32.gmra.mrb[0].mxu0 %v4436
        %v4625 = vpop.f32.mrb[0].mxu0
        %v4626 = vadd.f32 0.0, %v4625
        %v4627 = vpop.f32.mrb[0].mxu0
        %4628 = vmatprep.mubr.f32.mxu0 0.0
        %4629 = vmatmul.mubr.f32.gmra.mrb[0].mxu0 %v4439
        %v4630 = vpop.f32.mrb[0].mxu0
        %v4631 = vadd.f32 0.0, %v4630
        %v4632 = vpop.f32.mrb[0].mxu0
        %4633 = vmatprep.mubr.f32.mxu0 0.0
        %4634 = vmatmul.mubr.f32.gmra.mrb[0].mxu0 %v4442
        %v4635 = vpop.f32.mrb[0].mxu0
        %v4636 = vadd.f32 0.0, %v4635
        %v4637 = vpop.f32.mrb[0].mxu0
        %4638 = vmatprep.mubr.f32.mxu0 0.0
        %4639 = vmatmul.mubr.f32.gmra.mrb[0].mxu0 %v4445
        %v4640 = vpop.f32.mrb[0].mxu0
        %v4641 = vadd.f32 0.0, %v4640
        %v4642 = vpop.f32.mrb[0].mxu0
        %4643 = vmatprep.mubr.f32.mxu0 0.0
        %4644 = vmatmul.mubr.f32.gmra.mrb[0].mxu0 %v4448
        %v4645 = vpop.f32.mrb[0].mxu0
        %v4646 = vadd.f32 0.0, %v4645
        %v4647 = vpop.f32.mrb[0].mxu0
        %4648 = vmatprep.mubr.f32.mxu0 0.0
        %4649 = vmatmul.mubr.f32.gmra.mrb[0].mxu0 %v4451
        %v4650 = vpop.f32.mrb[0].mxu0
        %v4651 = vadd.f32 0.0, %v4650
        %v4652 = vpop.f32.mrb[0].mxu0
        %4653 = vmatprep.mubr.f32.mxu0 0.0
        %4654 = vmatmul.mubr.f32.gmra.mrb[0].mxu0 %v4454
        %v4655 = vpop.f32.mrb[0].mxu0
        %v4656 = vadd.f32 0.0, %v4655
        %v4657 = vpop.f32.mrb[0].mxu0
        %4658 = vmatprep.mubr.f32.mxu0 0.0
        %4659 = vmatmul.mubr.f32.gmra.mrb[0].mxu0 %v4457
        %v4660 = vpop.f32.mrb[0].mxu0
        %v4661 = vadd.f32 0.0, %v4660
        %v4662 = vpop.f32.mrb[0].mxu0
        %4663 = vmatprep.mubr.f32.mxu0 0.0
        %4664 = vmatmul.mubr.f32.gmra.mrb[0].mxu0 %v4460
        %v4665 = vpop.f32.mrb[0].mxu0
        %v4666 = vadd.f32 0.0, %v4665
        %v4667 = vpop.f32.mrb[0].mxu0
        %4668 = vmatprep.mubr.f32.mxu0 0.0
        %4669 = vmatmul.mubr.f32.gmra.mrb[0].mxu0 %v4463
        %v4670 = vpop.f32.mrb[0].mxu0
        %v4671 = vadd.f32 0.0, %v4670
        %v4672 = vpop.f32.mrb[0].mxu0
        %4673 = vmatprep.mubr.f32.mxu0 0.0
        %4674 = vmatmul.mubr.f32.gmra.mrb[0].mxu0 %v4466
        %v4675 = vpop.f32.mrb[0].mxu0
        %v4676 = vadd.f32 0.0, %v4675
        %v4677 = vpop.f32.mrb[0].mxu0
        %4678 = vmatprep.mubr.f32.mxu0 0.0
        %4679 = vmatmul.mubr.f32.gmra.mrb[0].mxu0 %v4469
        %v4680 = vpop.f32.mrb[0].mxu0
        %v4681 = vadd.f32 0.0, %v4680
        %v4682 = vpop.f32.mrb[0].mxu0
        %4683 = vmatprep.mubr.f32.mxu0 0.0
        %4684 = vmatmul.mubr.f32.gmra.mrb[0].mxu0 %v4472
        %v4685 = vpop.f32.mrb[0].mxu0
        %v4686 = vadd.f32 0.0, %v4685
        %v4687 = vpop.f32.mrb[0].mxu0
        %4688 = vmatprep.mubr.f32.mxu0 0.0
        %4689 = vmatmul.mubr.f32.gmra.mrb[0].mxu0 %v4475
        %v4690 = vpop.f32.mrb[0].mxu0
        %v4691 = vadd.f32 0.0, %v4690
        %v4692 = vpop.f32.mrb[0].mxu0
        %4693 = vmatprep.mubr.f32.mxu0 0.0
        %4694 = vmatmul.mubr.f32.gmra.mrb[0].mxu0 %v4478
        %v4695 = vpop.f32.mrb[0].mxu0
        %v4696 = vadd.f32 0.0, %v4695
        %v4697 = vpop.f32.mrb[0].mxu0
        %4698 = vmatprep.mubr.f32.mxu0 0.0
        %4699 = vmatmul.mubr.f32.gmra.mrb[0].mxu0 %v4481
        %v4700 = vpop.f32.mrb[0].mxu0
        %v4701 = vadd.f32 0.0, %v4700
        %v4702 = vpop.f32.mrb[0].mxu0
        %4703 = vmatprep.mubr.f32.mxu0 0.0
        %4704 = vmatmul.mubr.f32.gmra.mrb[0].mxu0 %v4484
        %v4705 = vpop.f32.mrb[0].mxu0
        %v4706 = vadd.f32 0.0, %v4705
        %v4707 = vpop.f32.mrb[0].mxu0
        %4708 = vmatprep.mubr.f32.mxu0 0.0
        %4709 = vmatmul.mubr.f32.gmra.mrb[0].mxu0 %v4487
        %v4710 = vpop.f32.mrb[0].mxu0
        %v4711 = vadd.f32 0.0, %v4710
        %v4712 = vpop.f32.mrb[0].mxu0
        %4713 = vdwg.mxu0
        %v4714 = vadd.f32 %v4320, %v4556
        %v4715 = vadd.f32 %v4321, %v4561
        %v4716 = vadd.f32 %v4322, %v4566
        %v4717 = vadd.f32 %v4323, %v4571
        %v4718 = vadd.f32 %v4324, %v4576
        %v4719 = vadd.f32 %v4325, %v4581
        %v4720 = vadd.f32 %v4326, %v4586
        %v4721 = vadd.f32 %v4327, %v4591
        %v4722 = vadd.f32 %v4328, %v4596
        %v4723 = vadd.f32 %v4329, %v4601
        %v4724 = vadd.f32 %v4330, %v4606
        %v4725 = vadd.f32 %v4331, %v4611
        %v4726 = vadd.f32 %v4332, %v4616
        %v4727 = vadd.f32 %v4333, %v4621
        %v4728 = vadd.f32 %v4334, %v4626
        %v4729 = vadd.f32 %v4335, %v4631
        %v4730 = vadd.f32 %v4336, %v4636
        %v4731 = vadd.f32 %v4337, %v4641
        %v4732 = vadd.f32 %v4338, %v4646
        %v4733 = vadd.f32 %v4339, %v4651
        %v4734 = vadd.f32 %v4340, %v4656
        %v4735 = vadd.f32 %v4341, %v4661
        %v4736 = vadd.f32 %v4342, %v4666
        %v4737 = vadd.f32 %v4343, %v4671
        %v4738 = vadd.f32 %v4344, %v4676
        %v4739 = vadd.f32 %v4345, %v4681
        %v4740 = vadd.f32 %v4346, %v4686
        %v4741 = vadd.f32 %v4347, %v4691
        %v4742 = vadd.f32 %v4348, %v4696
        %v4743 = vadd.f32 %v4349, %v4701
        %v4744 = vadd.f32 %v4350, %v4706
        %v4745 = vadd.f32 %v4351, %v4711
        %v4746 = vld [vmem:[%s3202 + $0x1] sm:$0xff]
        %v4747 = vld [vmem:[%s3202 + $0x9] sm:$0xff]
        %v4748 = vld [vmem:[%s3202 + $0x19] sm:$0xff]
        %v4749 = vld [vmem:[%s3202 + $0x21] sm:$0xff]
        %v4750 = vld [vmem:[%s3202 + $0x31] sm:$0xff]
        %v4751 = vld [vmem:[%s3202 + $0x39] sm:$0xff]
        %v4752 = vld [vmem:[%s3202 + $0x49] sm:$0xff]
        %v4753 = vld [vmem:[%s3202 + $0x51] sm:$0xff]
        %v4754 = vld [vmem:[%s3202 + $0x61] sm:$0xff]
        %v4755 = vld [vmem:[%s3202 + $0x69] sm:$0xff]
        %v4756 = vld [vmem:[%s3202 + $0x79] sm:$0xff]
        %v4757 = vld [vmem:[%s3202 + $0x81] sm:$0xff]
        %v4758 = vld [vmem:[%s3202 + $0x91] sm:$0xff]
        %v4759 = vld [vmem:[%s3202 + $0x99] sm:$0xff]
        %v4760 = vld [vmem:[%s3202 + $0xa9] sm:$0xff]
        %v4761 = vld [vmem:[%s3202 + $0xb1] sm:$0xff]
        %v4762 = vld [vmem:[%s3202 + $0xc1] sm:$0xff]
        %v4763 = vld [vmem:[%s3202 + $0xc9] sm:$0xff]
        %v4764 = vld [vmem:[%s3202 + $0xd9] sm:$0xff]
        %v4765 = vld [vmem:[%s3202 + $0xe1] sm:$0xff]
        %v4766 = vld [vmem:[%s3202 + $0xf1] sm:$0xff]
        %v4767 = vld [vmem:[%s3202 + $0xf9] sm:$0xff]
        %v4768 = vld [vmem:[%s3202 + $0x109] sm:$0xff]
        %v4769 = vld [vmem:[%s3202 + $0x111] sm:$0xff]
        %v4770 = vld [vmem:[%s3202 + $0x121] sm:$0xff]
        %v4771 = vld [vmem:[%s3202 + $0x129] sm:$0xff]
        %v4772 = vld [vmem:[%s3202 + $0x139] sm:$0xff]
        %v4773 = vld [vmem:[%s3202 + $0x141] sm:$0xff]
        %v4774 = vld [vmem:[%s3202 + $0x151] sm:$0xff]
        %v4775 = vld [vmem:[%s3202 + $0x159] sm:$0xff]
        %v4776 = vld [vmem:[%s3202 + $0x169] sm:$0xff]
        %v4777 = vld [vmem:[%s3202 + $0x171] sm:$0xff]
        %s4778 = scalar_lea.vmem %s2, 256
        %v4779 = vld [vmem:[%s4778] sm:$0xff]
        %v4780 = vld [vmem:[%s4778 + $0x8] sm:$0xff]
        %v4781 = vld [vmem:[%s4778 + $0x10] sm:$0xff]
        %v4782 = vld [vmem:[%s4778 + $0x18] sm:$0xff]
        %v4783 = vld [vmem:[%s4778 + $0x20] sm:$0xff]
        %v4784 = vld [vmem:[%s4778 + $0x28] sm:$0xff]
        %v4785 = vld [vmem:[%s4778 + $0x30] sm:$0xff]
        %v4786 = vld [vmem:[%s4778 + $0x38] sm:$0xff]
        %v4788 = vsel %vm3146, %v4746, 0
        %v4791 = vsel %vm3146, %v4747, 0
        %v4794 = vsel %vm3146, %v4748, 0
        %v4797 = vsel %vm3146, %v4749, 0
        %v4800 = vsel %vm3146, %v4750, 0
        %v4803 = vsel %vm3146, %v4751, 0
        %v4806 = vsel %vm3146, %v4752, 0
        %v4809 = vsel %vm3146, %v4753, 0
        %v4812 = vsel %vm3146, %v4754, 0
        %v4815 = vsel %vm3146, %v4755, 0
        %v4818 = vsel %vm3146, %v4756, 0
        %v4821 = vsel %vm3146, %v4757, 0
        %v4824 = vsel %vm3146, %v4758, 0
        %v4827 = vsel %vm3146, %v4759, 0
        %v4830 = vsel %vm3146, %v4760, 0
        %v4833 = vsel %vm3146, %v4761, 0
        %v4836 = vsel %vm3146, %v4762, 0
        %v4839 = vsel %vm3146, %v4763, 0
        %v4842 = vsel %vm3146, %v4764, 0
        %v4845 = vsel %vm3146, %v4765, 0
        %v4848 = vsel %vm3146, %v4766, 0
        %v4851 = vsel %vm3146, %v4767, 0
        %v4854 = vsel %vm3146, %v4768, 0
        %v4857 = vsel %vm3146, %v4769, 0
        %v4860 = vsel %vm3146, %v4770, 0
        %v4863 = vsel %vm3146, %v4771, 0
        %v4866 = vsel %vm3146, %v4772, 0
        %v4869 = vsel %vm3146, %v4773, 0
        %v4872 = vsel %vm3146, %v4774, 0
        %v4875 = vsel %vm3146, %v4775, 0
        %v4878 = vsel %vm3146, %v4776, 0
        %v4881 = vsel %vm3146, %v4777, 0
        %4883 = vmatprep.subr.mxu0 0.0
        %4884 = vmatpush1.msra.mxu0 %v4779
        %4885 = vmatprep.subr.mxu0 0.0
        %4886 = vmatpush1.msra.mxu0 %v4780
        %4887 = vmatprep.subr.mxu0 0.0
        %4888 = vmatpush1.msra.mxu0 %v4781
        %4889 = vmatprep.subr.mxu0 0.0
        %4890 = vmatpush1.msra.mxu0 %v4782
        %4891 = vmatprep.subr.mxu0 0.0
        %4892 = vmatpush1.msra.mxu0 %v4783
        %4893 = vmatprep.subr.mxu0 0.0
        %4894 = vmatpush1.msra.mxu0 %v4784
        %4895 = vmatprep.subr.mxu0 0.0
        %4896 = vmatpush1.msra.mxu0 %v4785
        %4897 = vmatprep.subr.mxu0 0.0
        %4898 = vmatpush1.msra.mxu0 %v4786
        %4899 = vmatprep.subr.mxu0 0.0
        %4900 = vmatpush1.msra.mxu0 0.0
        %4901 = vmatprep.subr.mxu0 0.0
        %4902 = vmatpush1.msra.mxu0 0.0
        %4903 = vmatprep.subr.mxu0 0.0
        %4904 = vmatpush1.msra.mxu0 0.0
        %4905 = vmatprep.subr.mxu0 0.0
        %4906 = vmatpush1.msra.mxu0 0.0
        %4907 = vmatprep.subr.mxu0 0.0
        %4908 = vmatpush1.msra.mxu0 0.0
        %4909 = vmatprep.subr.mxu0 0.0
        %4910 = vmatpush1.msra.mxu0 0.0
        %4911 = vmatprep.subr.mxu0 0.0
        %4912 = vmatpush1.msra.mxu0 0.0
        %4913 = vmatprep.subr.mxu0 0.0
        %4914 = vmatpush1.msra.mxu0 0.0
        %4915 = vmatprep.subr.mxu0 0.0
        %4916 = vmatpush1.msra.mxu0 0.0
        %4917 = vmatprep.subr.mxu0 0.0
        %4918 = vmatpush1.msra.mxu0 0.0
        %4919 = vmatprep.subr.mxu0 0.0
        %4920 = vmatpush1.msra.mxu0 0.0
        %4921 = vmatprep.subr.mxu0 0.0
        %4922 = vmatpush1.msra.mxu0 0.0
        %4923 = vmatprep.subr.mxu0 0.0
        %4924 = vmatpush1.msra.mxu0 0.0
        %4925 = vmatprep.subr.mxu0 0.0
        %4926 = vmatpush1.msra.mxu0 0.0
        %4927 = vmatprep.subr.mxu0 0.0
        %4928 = vmatpush1.msra.mxu0 0.0
        %4929 = vmatprep.subr.mxu0 0.0
        %4930 = vmatpush1.msra.mxu0 0.0
        %4931 = vmatprep.subr.mxu0 0.0
        %4932 = vmatpush1.msra.mxu0 0.0
        %4933 = vmatprep.subr.mxu0 0.0
        %4934 = vmatpush1.msra.mxu0 0.0
        %4935 = vmatprep.subr.mxu0 0.0
        %4936 = vmatpush1.msra.mxu0 0.0
        %4937 = vmatprep.subr.mxu0 0.0
        %4938 = vmatpush1.msra.mxu0 0.0
        %4939 = vmatprep.subr.mxu0 0.0
        %4940 = vmatpush1.msra.mxu0 0.0
        %4941 = vmatprep.subr.mxu0 0.0
        %4942 = vmatpush1.msra.mxu0 0.0
        %4943 = vmatprep.subr.mxu0 0.0
        %4944 = vmatpush1.msra.mxu0 0.0
        %4945 = vmatprep.subr.mxu0 0.0
        %4946 = vmatpush1.msra.mxu0 0.0
        %4947 = vmatprep.mubr.f32.mxu0 0.0
        %4948 = vmatmul.mubr.f32.gmra.mrb[0].mxu0 %v4788
        %v4949 = vpop.f32.mrb[0].mxu0
        %v4950 = vadd.f32 0.0, %v4949
        %v4951 = vpop.f32.mrb[0].mxu0
        %4952 = vmatprep.mubr.f32.mxu0 0.0
        %4953 = vmatmul.mubr.f32.gmra.mrb[0].mxu0 %v4791
        %v4954 = vpop.f32.mrb[0].mxu0
        %v4955 = vadd.f32 0.0, %v4954
        %v4956 = vpop.f32.mrb[0].mxu0
        %4957 = vmatprep.mubr.f32.mxu0 0.0
        %4958 = vmatmul.mubr.f32.gmra.mrb[0].mxu0 %v4794
        %v4959 = vpop.f32.mrb[0].mxu0
        %v4960 = vadd.f32 0.0, %v4959
        %v4961 = vpop.f32.mrb[0].mxu0
        %4962 = vmatprep.mubr.f32.mxu0 0.0
        %4963 = vmatmul.mubr.f32.gmra.mrb[0].mxu0 %v4797
        %v4964 = vpop.f32.mrb[0].mxu0
        %v4965 = vadd.f32 0.0, %v4964
        %v4966 = vpop.f32.mrb[0].mxu0
        %4967 = vmatprep.mubr.f32.mxu0 0.0
        %4968 = vmatmul.mubr.f32.gmra.mrb[0].mxu0 %v4800
        %v4969 = vpop.f32.mrb[0].mxu0
        %v4970 = vadd.f32 0.0, %v4969
        %v4971 = vpop.f32.mrb[0].mxu0
        %4972 = vmatprep.mubr.f32.mxu0 0.0
        %4973 = vmatmul.mubr.f32.gmra.mrb[0].mxu0 %v4803
        %v4974 = vpop.f32.mrb[0].mxu0
        %v4975 = vadd.f32 0.0, %v4974
        %v4976 = vpop.f32.mrb[0].mxu0
        %4977 = vmatprep.mubr.f32.mxu0 0.0
        %4978 = vmatmul.mubr.f32.gmra.mrb[0].mxu0 %v4806
        %v4979 = vpop.f32.mrb[0].mxu0
        %v4980 = vadd.f32 0.0, %v4979
        %v4981 = vpop.f32.mrb[0].mxu0
        %4982 = vmatprep.mubr.f32.mxu0 0.0
        %4983 = vmatmul.mubr.f32.gmra.mrb[0].mxu0 %v4809
        %v4984 = vpop.f32.mrb[0].mxu0
        %v4985 = vadd.f32 0.0, %v4984
        %v4986 = vpop.f32.mrb[0].mxu0
        %4987 = vmatprep.mubr.f32.mxu0 0.0
        %4988 = vmatmul.mubr.f32.gmra.mrb[0].mxu0 %v4812
        %v4989 = vpop.f32.mrb[0].mxu0
        %v4990 = vadd.f32 0.0, %v4989
        %v4991 = vpop.f32.mrb[0].mxu0
        %4992 = vmatprep.mubr.f32.mxu0 0.0
        %4993 = vmatmul.mubr.f32.gmra.mrb[0].mxu0 %v4815
        %v4994 = vpop.f32.mrb[0].mxu0
        %v4995 = vadd.f32 0.0, %v4994
        %v4996 = vpop.f32.mrb[0].mxu0
        %4997 = vmatprep.mubr.f32.mxu0 0.0
        %4998 = vmatmul.mubr.f32.gmra.mrb[0].mxu0 %v4818
        %v4999 = vpop.f32.mrb[0].mxu0
        %v5000 = vadd.f32 0.0, %v4999
        %v5001 = vpop.f32.mrb[0].mxu0
        %5002 = vmatprep.mubr.f32.mxu0 0.0
        %5003 = vmatmul.mubr.f32.gmra.mrb[0].mxu0 %v4821
        %v5004 = vpop.f32.mrb[0].mxu0
        %v5005 = vadd.f32 0.0, %v5004
        %v5006 = vpop.f32.mrb[0].mxu0
        %5007 = vmatprep.mubr.f32.mxu0 0.0
        %5008 = vmatmul.mubr.f32.gmra.mrb[0].mxu0 %v4824
        %v5009 = vpop.f32.mrb[0].mxu0
        %v5010 = vadd.f32 0.0, %v5009
        %v5011 = vpop.f32.mrb[0].mxu0
        %5012 = vmatprep.mubr.f32.mxu0 0.0
        %5013 = vmatmul.mubr.f32.gmra.mrb[0].mxu0 %v4827
        %v5014 = vpop.f32.mrb[0].mxu0
        %v5015 = vadd.f32 0.0, %v5014
        %v5016 = vpop.f32.mrb[0].mxu0
        %5017 = vmatprep.mubr.f32.mxu0 0.0
        %5018 = vmatmul.mubr.f32.gmra.mrb[0].mxu0 %v4830
        %v5019 = vpop.f32.mrb[0].mxu0
        %v5020 = vadd.f32 0.0, %v5019
        %v5021 = vpop.f32.mrb[0].mxu0
        %5022 = vmatprep.mubr.f32.mxu0 0.0
        %5023 = vmatmul.mubr.f32.gmra.mrb[0].mxu0 %v4833
        %v5024 = vpop.f32.mrb[0].mxu0
        %v5025 = vadd.f32 0.0, %v5024
        %v5026 = vpop.f32.mrb[0].mxu0
        %5027 = vmatprep.mubr.f32.mxu0 0.0
        %5028 = vmatmul.mubr.f32.gmra.mrb[0].mxu0 %v4836
        %v5029 = vpop.f32.mrb[0].mxu0
        %v5030 = vadd.f32 0.0, %v5029
        %v5031 = vpop.f32.mrb[0].mxu0
        %5032 = vmatprep.mubr.f32.mxu0 0.0
        %5033 = vmatmul.mubr.f32.gmra.mrb[0].mxu0 %v4839
        %v5034 = vpop.f32.mrb[0].mxu0
        %v5035 = vadd.f32 0.0, %v5034
        %v5036 = vpop.f32.mrb[0].mxu0
        %5037 = vmatprep.mubr.f32.mxu0 0.0
        %5038 = vmatmul.mubr.f32.gmra.mrb[0].mxu0 %v4842
        %v5039 = vpop.f32.mrb[0].mxu0
        %v5040 = vadd.f32 0.0, %v5039
        %v5041 = vpop.f32.mrb[0].mxu0
        %5042 = vmatprep.mubr.f32.mxu0 0.0
        %5043 = vmatmul.mubr.f32.gmra.mrb[0].mxu0 %v4845
        %v5044 = vpop.f32.mrb[0].mxu0
        %v5045 = vadd.f32 0.0, %v5044
        %v5046 = vpop.f32.mrb[0].mxu0
        %5047 = vmatprep.mubr.f32.mxu0 0.0
        %5048 = vmatmul.mubr.f32.gmra.mrb[0].mxu0 %v4848
        %v5049 = vpop.f32.mrb[0].mxu0
        %v5050 = vadd.f32 0.0, %v5049
        %v5051 = vpop.f32.mrb[0].mxu0
        %5052 = vmatprep.mubr.f32.mxu0 0.0
        %5053 = vmatmul.mubr.f32.gmra.mrb[0].mxu0 %v4851
        %v5054 = vpop.f32.mrb[0].mxu0
        %v5055 = vadd.f32 0.0, %v5054
        %v5056 = vpop.f32.mrb[0].mxu0
        %5057 = vmatprep.mubr.f32.mxu0 0.0
        %5058 = vmatmul.mubr.f32.gmra.mrb[0].mxu0 %v4854
        %v5059 = vpop.f32.mrb[0].mxu0
        %v5060 = vadd.f32 0.0, %v5059
        %v5061 = vpop.f32.mrb[0].mxu0
        %5062 = vmatprep.mubr.f32.mxu0 0.0
        %5063 = vmatmul.mubr.f32.gmra.mrb[0].mxu0 %v4857
        %v5064 = vpop.f32.mrb[0].mxu0
        %v5065 = vadd.f32 0.0, %v5064
        %v5066 = vpop.f32.mrb[0].mxu0
        %5067 = vmatprep.mubr.f32.mxu0 0.0
        %5068 = vmatmul.mubr.f32.gmra.mrb[0].mxu0 %v4860
        %v5069 = vpop.f32.mrb[0].mxu0
        %v5070 = vadd.f32 0.0, %v5069
        %v5071 = vpop.f32.mrb[0].mxu0
        %5072 = vmatprep.mubr.f32.mxu0 0.0
        %5073 = vmatmul.mubr.f32.gmra.mrb[0].mxu0 %v4863
        %v5074 = vpop.f32.mrb[0].mxu0
        %v5075 = vadd.f32 0.0, %v5074
        %v5076 = vpop.f32.mrb[0].mxu0
        %5077 = vmatprep.mubr.f32.mxu0 0.0
        %5078 = vmatmul.mubr.f32.gmra.mrb[0].mxu0 %v4866
        %v5079 = vpop.f32.mrb[0].mxu0
        %v5080 = vadd.f32 0.0, %v5079
        %v5081 = vpop.f32.mrb[0].mxu0
        %5082 = vmatprep.mubr.f32.mxu0 0.0
        %5083 = vmatmul.mubr.f32.gmra.mrb[0].mxu0 %v4869
        %v5084 = vpop.f32.mrb[0].mxu0
        %v5085 = vadd.f32 0.0, %v5084
        %v5086 = vpop.f32.mrb[0].mxu0
        %5087 = vmatprep.mubr.f32.mxu0 0.0
        %5088 = vmatmul.mubr.f32.gmra.mrb[0].mxu0 %v4872
        %v5089 = vpop.f32.mrb[0].mxu0
        %v5090 = vadd.f32 0.0, %v5089
        %v5091 = vpop.f32.mrb[0].mxu0
        %5092 = vmatprep.mubr.f32.mxu0 0.0
        %5093 = vmatmul.mubr.f32.gmra.mrb[0].mxu0 %v4875
        %v5094 = vpop.f32.mrb[0].mxu0
        %v5095 = vadd.f32 0.0, %v5094
        %v5096 = vpop.f32.mrb[0].mxu0
        %5097 = vmatprep.mubr.f32.mxu0 0.0
        %5098 = vmatmul.mubr.f32.gmra.mrb[0].mxu0 %v4878
        %v5099 = vpop.f32.mrb[0].mxu0
        %v5100 = vadd.f32 0.0, %v5099
        %v5101 = vpop.f32.mrb[0].mxu0
        %5102 = vmatprep.mubr.f32.mxu0 0.0
        %5103 = vmatmul.mubr.f32.gmra.mrb[0].mxu0 %v4881
        %v5104 = vpop.f32.mrb[0].mxu0
        %v5105 = vadd.f32 0.0, %v5104
        %v5106 = vpop.f32.mrb[0].mxu0
        %5107 = vdwg.mxu0
        %v5108 = vadd.f32 %v4714, %v4950
        %v5109 = vadd.f32 %v4715, %v4955
        %v5110 = vadd.f32 %v4716, %v4960
        %v5111 = vadd.f32 %v4717, %v4965
        %v5112 = vadd.f32 %v4718, %v4970
        %v5113 = vadd.f32 %v4719, %v4975
        %v5114 = vadd.f32 %v4720, %v4980
        %v5115 = vadd.f32 %v4721, %v4985
        %v5116 = vadd.f32 %v4722, %v4990
        %v5117 = vadd.f32 %v4723, %v4995
        %v5118 = vadd.f32 %v4724, %v5000
        %v5119 = vadd.f32 %v4725, %v5005
        %v5120 = vadd.f32 %v4726, %v5010
        %v5121 = vadd.f32 %v4727, %v5015
        %v5122 = vadd.f32 %v4728, %v5020
        %v5123 = vadd.f32 %v4729, %v5025
        %v5124 = vadd.f32 %v4730, %v5030
        %v5125 = vadd.f32 %v4731, %v5035
        %v5126 = vadd.f32 %v4732, %v5040
        %v5127 = vadd.f32 %v4733, %v5045
        %v5128 = vadd.f32 %v4734, %v5050
        %v5129 = vadd.f32 %v4735, %v5055
        %v5130 = vadd.f32 %v4736, %v5060
        %v5131 = vadd.f32 %v4737, %v5065
        %v5132 = vadd.f32 %v4738, %v5070
        %v5133 = vadd.f32 %v4739, %v5075
        %v5134 = vadd.f32 %v4740, %v5080
        %v5135 = vadd.f32 %v4741, %v5085
        %v5136 = vadd.f32 %v4742, %v5090
        %v5137 = vadd.f32 %v4743, %v5095
        %v5138 = vadd.f32 %v4744, %v5100
        %v5139 = vadd.f32 %v4745, %v5105
        %v5140 = vld [vmem:[%s3202 + $0x2] sm:$0xff]
        %v5141 = vld [vmem:[%s3202 + $0xa] sm:$0xff]
        %v5142 = vld [vmem:[%s3202 + $0x1a] sm:$0xff]
        %v5143 = vld [vmem:[%s3202 + $0x22] sm:$0xff]
        %v5144 = vld [vmem:[%s3202 + $0x32] sm:$0xff]
        %v5145 = vld [vmem:[%s3202 + $0x3a] sm:$0xff]
        %v5146 = vld [vmem:[%s3202 + $0x4a] sm:$0xff]
        %v5147 = vld [vmem:[%s3202 + $0x52] sm:$0xff]
        %v5148 = vld [vmem:[%s3202 + $0x62] sm:$0xff]
        %v5149 = vld [vmem:[%s3202 + $0x6a] sm:$0xff]
        %v5150 = vld [vmem:[%s3202 + $0x7a] sm:$0xff]
        %v5151 = vld [vmem:[%s3202 + $0x82] sm:$0xff]
        %v5152 = vld [vmem:[%s3202 + $0x92] sm:$0xff]
        %v5153 = vld [vmem:[%s3202 + $0x9a] sm:$0xff]
        %v5154 = vld [vmem:[%s3202 + $0xaa] sm:$0xff]
        %v5155 = vld [vmem:[%s3202 + $0xb2] sm:$0xff]
        %v5156 = vld [vmem:[%s3202 + $0xc2] sm:$0xff]
        %v5157 = vld [vmem:[%s3202 + $0xca] sm:$0xff]
        %v5158 = vld [vmem:[%s3202 + $0xda] sm:$0xff]
        %v5159 = vld [vmem:[%s3202 + $0xe2] sm:$0xff]
        %v5160 = vld [vmem:[%s3202 + $0xf2] sm:$0xff]
        %v5161 = vld [vmem:[%s3202 + $0xfa] sm:$0xff]
        %v5162 = vld [vmem:[%s3202 + $0x10a] sm:$0xff]
        %v5163 = vld [vmem:[%s3202 + $0x112] sm:$0xff]
        %v5164 = vld [vmem:[%s3202 + $0x122] sm:$0xff]
        %v5165 = vld [vmem:[%s3202 + $0x12a] sm:$0xff]
        %v5166 = vld [vmem:[%s3202 + $0x13a] sm:$0xff]
        %v5167 = vld [vmem:[%s3202 + $0x142] sm:$0xff]
        %v5168 = vld [vmem:[%s3202 + $0x152] sm:$0xff]
        %v5169 = vld [vmem:[%s3202 + $0x15a] sm:$0xff]
        %v5170 = vld [vmem:[%s3202 + $0x16a] sm:$0xff]
        %v5171 = vld [vmem:[%s3202 + $0x172] sm:$0xff]
        %s5172 = scalar_lea.vmem %s2, 320
        %v5173 = vld [vmem:[%s5172] sm:$0xff]
        %v5174 = vld [vmem:[%s5172 + $0x8] sm:$0xff]
        %v5175 = vld [vmem:[%s5172 + $0x10] sm:$0xff]
        %v5176 = vld [vmem:[%s5172 + $0x18] sm:$0xff]
        %v5177 = vld [vmem:[%s5172 + $0x20] sm:$0xff]
        %v5178 = vld [vmem:[%s5172 + $0x28] sm:$0xff]
        %v5179 = vld [vmem:[%s5172 + $0x30] sm:$0xff]
        %v5180 = vld [vmem:[%s5172 + $0x38] sm:$0xff]
        %v5182 = vsel %vm3146, %v5140, 0
        %v5185 = vsel %vm3146, %v5141, 0
        %v5188 = vsel %vm3146, %v5142, 0
        %v5191 = vsel %vm3146, %v5143, 0
        %v5194 = vsel %vm3146, %v5144, 0
        %v5197 = vsel %vm3146, %v5145, 0
        %v5200 = vsel %vm3146, %v5146, 0
        %v5203 = vsel %vm3146, %v5147, 0
        %v5206 = vsel %vm3146, %v5148, 0
        %v5209 = vsel %vm3146, %v5149, 0
        %v5212 = vsel %vm3146, %v5150, 0
        %v5215 = vsel %vm3146, %v5151, 0
        %v5218 = vsel %vm3146, %v5152, 0
        %v5221 = vsel %vm3146, %v5153, 0
        %v5224 = vsel %vm3146, %v5154, 0
        %v5227 = vsel %vm3146, %v5155, 0
        %v5230 = vsel %vm3146, %v5156, 0
        %v5233 = vsel %vm3146, %v5157, 0
        %v5236 = vsel %vm3146, %v5158, 0
        %v5239 = vsel %vm3146, %v5159, 0
        %v5242 = vsel %vm3146, %v5160, 0
        %v5245 = vsel %vm3146, %v5161, 0
        %v5248 = vsel %vm3146, %v5162, 0
        %v5251 = vsel %vm3146, %v5163, 0
        %v5254 = vsel %vm3146, %v5164, 0
        %v5257 = vsel %vm3146, %v5165, 0
        %v5260 = vsel %vm3146, %v5166, 0
        %v5263 = vsel %vm3146, %v5167, 0
        %v5266 = vsel %vm3146, %v5168, 0
        %v5269 = vsel %vm3146, %v5169, 0
        %v5272 = vsel %vm3146, %v5170, 0
        %v5275 = vsel %vm3146, %v5171, 0
        %5277 = vmatprep.subr.mxu0 0.0
        %5278 = vmatpush1.msra.mxu0 %v5173
        %5279 = vmatprep.subr.mxu0 0.0
        %5280 = vmatpush1.msra.mxu0 %v5174
        %5281 = vmatprep.subr.mxu0 0.0
        %5282 = vmatpush1.msra.mxu0 %v5175
        %5283 = vmatprep.subr.mxu0 0.0
        %5284 = vmatpush1.msra.mxu0 %v5176
        %5285 = vmatprep.subr.mxu0 0.0
        %5286 = vmatpush1.msra.mxu0 %v5177
        %5287 = vmatprep.subr.mxu0 0.0
        %5288 = vmatpush1.msra.mxu0 %v5178
        %5289 = vmatprep.subr.mxu0 0.0
        %5290 = vmatpush1.msra.mxu0 %v5179
        %5291 = vmatprep.subr.mxu0 0.0
        %5292 = vmatpush1.msra.mxu0 %v5180
        %5293 = vmatprep.subr.mxu0 0.0
        %5294 = vmatpush1.msra.mxu0 0.0
        %5295 = vmatprep.subr.mxu0 0.0
        %5296 = vmatpush1.msra.mxu0 0.0
        %5297 = vmatprep.subr.mxu0 0.0
        %5298 = vmatpush1.msra.mxu0 0.0
        %5299 = vmatprep.subr.mxu0 0.0
        %5300 = vmatpush1.msra.mxu0 0.0
        %5301 = vmatprep.subr.mxu0 0.0
        %5302 = vmatpush1.msra.mxu0 0.0
        %5303 = vmatprep.subr.mxu0 0.0
        %5304 = vmatpush1.msra.mxu0 0.0
        %5305 = vmatprep.subr.mxu0 0.0
        %5306 = vmatpush1.msra.mxu0 0.0
        %5307 = vmatprep.subr.mxu0 0.0
        %5308 = vmatpush1.msra.mxu0 0.0
        %5309 = vmatprep.subr.mxu0 0.0
        %5310 = vmatpush1.msra.mxu0 0.0
        %5311 = vmatprep.subr.mxu0 0.0
        %5312 = vmatpush1.msra.mxu0 0.0
        %5313 = vmatprep.subr.mxu0 0.0
        %5314 = vmatpush1.msra.mxu0 0.0
        %5315 = vmatprep.subr.mxu0 0.0
        %5316 = vmatpush1.msra.mxu0 0.0
        %5317 = vmatprep.subr.mxu0 0.0
        %5318 = vmatpush1.msra.mxu0 0.0
        %5319 = vmatprep.subr.mxu0 0.0
        %5320 = vmatpush1.msra.mxu0 0.0
        %5321 = vmatprep.subr.mxu0 0.0
        %5322 = vmatpush1.msra.mxu0 0.0
        %5323 = vmatprep.subr.mxu0 0.0
        %5324 = vmatpush1.msra.mxu0 0.0
        %5325 = vmatprep.subr.mxu0 0.0
        %5326 = vmatpush1.msra.mxu0 0.0
        %5327 = vmatprep.subr.mxu0 0.0
        %5328 = vmatpush1.msra.mxu0 0.0
        %5329 = vmatprep.subr.mxu0 0.0
        %5330 = vmatpush1.msra.mxu0 0.0
        %5331 = vmatprep.subr.mxu0 0.0
        %5332 = vmatpush1.msra.mxu0 0.0
        %5333 = vmatprep.subr.mxu0 0.0
        %5334 = vmatpush1.msra.mxu0 0.0
        %5335 = vmatprep.subr.mxu0 0.0
        %5336 = vmatpush1.msra.mxu0 0.0
        %5337 = vmatprep.subr.mxu0 0.0
        %5338 = vmatpush1.msra.mxu0 0.0
        %5339 = vmatprep.subr.mxu0 0.0
        %5340 = vmatpush1.msra.mxu0 0.0
        %5341 = vmatprep.mubr.f32.mxu0 0.0
        %5342 = vmatmul.mubr.f32.gmra.mrb[0].mxu0 %v5182
        %v5343 = vpop.f32.mrb[0].mxu0
        %v5344 = vadd.f32 0.0, %v5343
        %v5345 = vpop.f32.mrb[0].mxu0
        %5346 = vmatprep.mubr.f32.mxu0 0.0
        %5347 = vmatmul.mubr.f32.gmra.mrb[0].mxu0 %v5185
        %v5348 = vpop.f32.mrb[0].mxu0
        %v5349 = vadd.f32 0.0, %v5348
        %v5350 = vpop.f32.mrb[0].mxu0
        %5351 = vmatprep.mubr.f32.mxu0 0.0
        %5352 = vmatmul.mubr.f32.gmra.mrb[0].mxu0 %v5188
        %v5353 = vpop.f32.mrb[0].mxu0
        %v5354 = vadd.f32 0.0, %v5353
        %v5355 = vpop.f32.mrb[0].mxu0
        %5356 = vmatprep.mubr.f32.mxu0 0.0
        %5357 = vmatmul.mubr.f32.gmra.mrb[0].mxu0 %v5191
        %v5358 = vpop.f32.mrb[0].mxu0
        %v5359 = vadd.f32 0.0, %v5358
        %v5360 = vpop.f32.mrb[0].mxu0
        %5361 = vmatprep.mubr.f32.mxu0 0.0
        %5362 = vmatmul.mubr.f32.gmra.mrb[0].mxu0 %v5194
        %v5363 = vpop.f32.mrb[0].mxu0
        %v5364 = vadd.f32 0.0, %v5363
        %v5365 = vpop.f32.mrb[0].mxu0
        %5366 = vmatprep.mubr.f32.mxu0 0.0
        %5367 = vmatmul.mubr.f32.gmra.mrb[0].mxu0 %v5197
        %v5368 = vpop.f32.mrb[0].mxu0
        %v5369 = vadd.f32 0.0, %v5368
        %v5370 = vpop.f32.mrb[0].mxu0
        %5371 = vmatprep.mubr.f32.mxu0 0.0
        %5372 = vmatmul.mubr.f32.gmra.mrb[0].mxu0 %v5200
        %v5373 = vpop.f32.mrb[0].mxu0
        %v5374 = vadd.f32 0.0, %v5373
        %v5375 = vpop.f32.mrb[0].mxu0
        %5376 = vmatprep.mubr.f32.mxu0 0.0
        %5377 = vmatmul.mubr.f32.gmra.mrb[0].mxu0 %v5203
        %v5378 = vpop.f32.mrb[0].mxu0
        %v5379 = vadd.f32 0.0, %v5378
        %v5380 = vpop.f32.mrb[0].mxu0
        %5381 = vmatprep.mubr.f32.mxu0 0.0
        %5382 = vmatmul.mubr.f32.gmra.mrb[0].mxu0 %v5206
        %v5383 = vpop.f32.mrb[0].mxu0
        %v5384 = vadd.f32 0.0, %v5383
        %v5385 = vpop.f32.mrb[0].mxu0
        %5386 = vmatprep.mubr.f32.mxu0 0.0
        %5387 = vmatmul.mubr.f32.gmra.mrb[0].mxu0 %v5209
        %v5388 = vpop.f32.mrb[0].mxu0
        %v5389 = vadd.f32 0.0, %v5388
        %v5390 = vpop.f32.mrb[0].mxu0
        %5391 = vmatprep.mubr.f32.mxu0 0.0
        %5392 = vmatmul.mubr.f32.gmra.mrb[0].mxu0 %v5212
        %v5393 = vpop.f32.mrb[0].mxu0
        %v5394 = vadd.f32 0.0, %v5393
        %v5395 = vpop.f32.mrb[0].mxu0
        %5396 = vmatprep.mubr.f32.mxu0 0.0
        %5397 = vmatmul.mubr.f32.gmra.mrb[0].mxu0 %v5215
        %v5398 = vpop.f32.mrb[0].mxu0
        %v5399 = vadd.f32 0.0, %v5398
        %v5400 = vpop.f32.mrb[0].mxu0
        %5401 = vmatprep.mubr.f32.mxu0 0.0
        %5402 = vmatmul.mubr.f32.gmra.mrb[0].mxu0 %v5218
        %v5403 = vpop.f32.mrb[0].mxu0
        %v5404 = vadd.f32 0.0, %v5403
        %v5405 = vpop.f32.mrb[0].mxu0
        %5406 = vmatprep.mubr.f32.mxu0 0.0
        %5407 = vmatmul.mubr.f32.gmra.mrb[0].mxu0 %v5221
        %v5408 = vpop.f32.mrb[0].mxu0
        %v5409 = vadd.f32 0.0, %v5408
        %v5410 = vpop.f32.mrb[0].mxu0
        %5411 = vmatprep.mubr.f32.mxu0 0.0
        %5412 = vmatmul.mubr.f32.gmra.mrb[0].mxu0 %v5224
        %v5413 = vpop.f32.mrb[0].mxu0
        %v5414 = vadd.f32 0.0, %v5413
        %v5415 = vpop.f32.mrb[0].mxu0
        %5416 = vmatprep.mubr.f32.mxu0 0.0
        %5417 = vmatmul.mubr.f32.gmra.mrb[0].mxu0 %v5227
        %v5418 = vpop.f32.mrb[0].mxu0
        %v5419 = vadd.f32 0.0, %v5418
        %v5420 = vpop.f32.mrb[0].mxu0
        %5421 = vmatprep.mubr.f32.mxu0 0.0
        %5422 = vmatmul.mubr.f32.gmra.mrb[0].mxu0 %v5230
        %v5423 = vpop.f32.mrb[0].mxu0
        %v5424 = vadd.f32 0.0, %v5423
        %v5425 = vpop.f32.mrb[0].mxu0
        %5426 = vmatprep.mubr.f32.mxu0 0.0
        %5427 = vmatmul.mubr.f32.gmra.mrb[0].mxu0 %v5233
        %v5428 = vpop.f32.mrb[0].mxu0
        %v5429 = vadd.f32 0.0, %v5428
        %v5430 = vpop.f32.mrb[0].mxu0
        %5431 = vmatprep.mubr.f32.mxu0 0.0
        %5432 = vmatmul.mubr.f32.gmra.mrb[0].mxu0 %v5236
        %v5433 = vpop.f32.mrb[0].mxu0
        %v5434 = vadd.f32 0.0, %v5433
        %v5435 = vpop.f32.mrb[0].mxu0
        %5436 = vmatprep.mubr.f32.mxu0 0.0
        %5437 = vmatmul.mubr.f32.gmra.mrb[0].mxu0 %v5239
        %v5438 = vpop.f32.mrb[0].mxu0
        %v5439 = vadd.f32 0.0, %v5438
        %v5440 = vpop.f32.mrb[0].mxu0
        %5441 = vmatprep.mubr.f32.mxu0 0.0
        %5442 = vmatmul.mubr.f32.gmra.mrb[0].mxu0 %v5242
        %v5443 = vpop.f32.mrb[0].mxu0
        %v5444 = vadd.f32 0.0, %v5443
        %v5445 = vpop.f32.mrb[0].mxu0
        %5446 = vmatprep.mubr.f32.mxu0 0.0
        %5447 = vmatmul.mubr.f32.gmra.mrb[0].mxu0 %v5245
        %v5448 = vpop.f32.mrb[0].mxu0
        %v5449 = vadd.f32 0.0, %v5448
        %v5450 = vpop.f32.mrb[0].mxu0
        %5451 = vmatprep.mubr.f32.mxu0 0.0
        %5452 = vmatmul.mubr.f32.gmra.mrb[0].mxu0 %v5248
        %v5453 = vpop.f32.mrb[0].mxu0
        %v5454 = vadd.f32 0.0, %v5453
        %v5455 = vpop.f32.mrb[0].mxu0
        %5456 = vmatprep.mubr.f32.mxu0 0.0
        %5457 = vmatmul.mubr.f32.gmra.mrb[0].mxu0 %v5251
        %v5458 = vpop.f32.mrb[0].mxu0
        %v5459 = vadd.f32 0.0, %v5458
        %v5460 = vpop.f32.mrb[0].mxu0
        %5461 = vmatprep.mubr.f32.mxu0 0.0
        %5462 = vmatmul.mubr.f32.gmra.mrb[0].mxu0 %v5254
        %v5463 = vpop.f32.mrb[0].mxu0
        %v5464 = vadd.f32 0.0, %v5463
        %v5465 = vpop.f32.mrb[0].mxu0
        %5466 = vmatprep.mubr.f32.mxu0 0.0
        %5467 = vmatmul.mubr.f32.gmra.mrb[0].mxu0 %v5257
        %v5468 = vpop.f32.mrb[0].mxu0
        %v5469 = vadd.f32 0.0, %v5468
        %v5470 = vpop.f32.mrb[0].mxu0
        %5471 = vmatprep.mubr.f32.mxu0 0.0
        %5472 = vmatmul.mubr.f32.gmra.mrb[0].mxu0 %v5260
        %v5473 = vpop.f32.mrb[0].mxu0
        %v5474 = vadd.f32 0.0, %v5473
        %v5475 = vpop.f32.mrb[0].mxu0
        %5476 = vmatprep.mubr.f32.mxu0 0.0
        %5477 = vmatmul.mubr.f32.gmra.mrb[0].mxu0 %v5263
        %v5478 = vpop.f32.mrb[0].mxu0
        %v5479 = vadd.f32 0.0, %v5478
        %v5480 = vpop.f32.mrb[0].mxu0
        %5481 = vmatprep.mubr.f32.mxu0 0.0
        %5482 = vmatmul.mubr.f32.gmra.mrb[0].mxu0 %v5266
        %v5483 = vpop.f32.mrb[0].mxu0
        %v5484 = vadd.f32 0.0, %v5483
        %v5485 = vpop.f32.mrb[0].mxu0
        %5486 = vmatprep.mubr.f32.mxu0 0.0
        %5487 = vmatmul.mubr.f32.gmra.mrb[0].mxu0 %v5269
        %v5488 = vpop.f32.mrb[0].mxu0
        %v5489 = vadd.f32 0.0, %v5488
        %v5490 = vpop.f32.mrb[0].mxu0
        %5491 = vmatprep.mubr.f32.mxu0 0.0
        %5492 = vmatmul.mubr.f32.gmra.mrb[0].mxu0 %v5272
        %v5493 = vpop.f32.mrb[0].mxu0
        %v5494 = vadd.f32 0.0, %v5493
        %v5495 = vpop.f32.mrb[0].mxu0
        %5496 = vmatprep.mubr.f32.mxu0 0.0
        %5497 = vmatmul.mubr.f32.gmra.mrb[0].mxu0 %v5275
        %v5498 = vpop.f32.mrb[0].mxu0
        %v5499 = vadd.f32 0.0, %v5498
        %v5500 = vpop.f32.mrb[0].mxu0
        %5501 = vdwg.mxu0
        %v5502 = vadd.f32 %v5108, %v5344
        %v5503 = vadd.f32 %v5109, %v5349
        %v5504 = vadd.f32 %v5110, %v5354
        %v5505 = vadd.f32 %v5111, %v5359
        %v5506 = vadd.f32 %v5112, %v5364
        %v5507 = vadd.f32 %v5113, %v5369
        %v5508 = vadd.f32 %v5114, %v5374
        %v5509 = vadd.f32 %v5115, %v5379
        %v5510 = vadd.f32 %v5116, %v5384
        %v5511 = vadd.f32 %v5117, %v5389
        %v5512 = vadd.f32 %v5118, %v5394
        %v5513 = vadd.f32 %v5119, %v5399
        %v5514 = vadd.f32 %v5120, %v5404
        %v5515 = vadd.f32 %v5121, %v5409
        %v5516 = vadd.f32 %v5122, %v5414
        %v5517 = vadd.f32 %v5123, %v5419
        %v5518 = vadd.f32 %v5124, %v5424
        %v5519 = vadd.f32 %v5125, %v5429
        %v5520 = vadd.f32 %v5126, %v5434
        %v5521 = vadd.f32 %v5127, %v5439
        %v5522 = vadd.f32 %v5128, %v5444
        %v5523 = vadd.f32 %v5129, %v5449
        %v5524 = vadd.f32 %v5130, %v5454
        %v5525 = vadd.f32 %v5131, %v5459
        %v5526 = vadd.f32 %v5132, %v5464
        %v5527 = vadd.f32 %v5133, %v5469
        %v5528 = vadd.f32 %v5134, %v5474
        %v5529 = vadd.f32 %v5135, %v5479
        %v5530 = vadd.f32 %v5136, %v5484
        %v5531 = vadd.f32 %v5137, %v5489
        %v5532 = vadd.f32 %v5138, %v5494
        %v5533 = vadd.f32 %v5139, %v5499
        %s5534 = scalar_lea.vmem [#allocation2], 48
        %v5535 = vld [vmem:[%s5534] sm:$0xff]
        %v5536 = vld [vmem:[%s5534 + $0x8] sm:$0xff]
        %v5537 = vld [vmem:[%s5534 + $0x18] sm:$0xff]
        %v5538 = vld [vmem:[%s5534 + $0x20] sm:$0xff]
        %v5539 = vld [vmem:[%s5534 + $0x30] sm:$0xff]
        %v5540 = vld [vmem:[%s5534 + $0x38] sm:$0xff]
        %v5541 = vld [vmem:[%s5534 + $0x48] sm:$0xff]
        %v5542 = vld [vmem:[%s5534 + $0x50] sm:$0xff]
        %v5543 = vld [vmem:[%s5534 + $0x60] sm:$0xff]
        %v5544 = vld [vmem:[%s5534 + $0x68] sm:$0xff]
        %v5545 = vld [vmem:[%s5534 + $0x78] sm:$0xff]
        %v5546 = vld [vmem:[%s5534 + $0x80] sm:$0xff]
        %v5547 = vld [vmem:[%s5534 + $0x90] sm:$0xff]
        %v5548 = vld [vmem:[%s5534 + $0x98] sm:$0xff]
        %v5549 = vld [vmem:[%s5534 + $0xa8] sm:$0xff]
        %v5550 = vld [vmem:[%s5534 + $0xb0] sm:$0xff]
        %v5551 = vld [vmem:[%s5534 + $0xc0] sm:$0xff]
        %v5552 = vld [vmem:[%s5534 + $0xc8] sm:$0xff]
        %v5553 = vld [vmem:[%s5534 + $0xd8] sm:$0xff]
        %v5554 = vld [vmem:[%s5534 + $0xe0] sm:$0xff]
        %v5555 = vld [vmem:[%s5534 + $0xf0] sm:$0xff]
        %v5556 = vld [vmem:[%s5534 + $0xf8] sm:$0xff]
        %v5557 = vld [vmem:[%s5534 + $0x108] sm:$0xff]
        %v5558 = vld [vmem:[%s5534 + $0x110] sm:$0xff]
        %v5559 = vld [vmem:[%s5534 + $0x120] sm:$0xff]
        %v5560 = vld [vmem:[%s5534 + $0x128] sm:$0xff]
        %v5561 = vld [vmem:[%s5534 + $0x138] sm:$0xff]
        %v5562 = vld [vmem:[%s5534 + $0x140] sm:$0xff]
        %v5563 = vld [vmem:[%s5534 + $0x150] sm:$0xff]
        %v5564 = vld [vmem:[%s5534 + $0x158] sm:$0xff]
        %v5565 = vld [vmem:[%s5534 + $0x168] sm:$0xff]
        %v5566 = vld [vmem:[%s5534 + $0x170] sm:$0xff]
        %s5567 = scalar_lea.vmem %s2, 384
        %v5568 = vld [vmem:[%s5567] sm:$0xff]
        %v5569 = vld [vmem:[%s5567 + $0x8] sm:$0xff]
        %v5570 = vld [vmem:[%s5567 + $0x10] sm:$0xff]
        %v5571 = vld [vmem:[%s5567 + $0x18] sm:$0xff]
        %v5572 = vld [vmem:[%s5567 + $0x20] sm:$0xff]
        %v5573 = vld [vmem:[%s5567 + $0x28] sm:$0xff]
        %v5574 = vld [vmem:[%s5567 + $0x30] sm:$0xff]
        %v5575 = vld [vmem:[%s5567 + $0x38] sm:$0xff]
        %v5577 = vsel %vm3146, %v5535, 0
        %v5580 = vsel %vm3146, %v5536, 0
        %v5583 = vsel %vm3146, %v5537, 0
        %v5586 = vsel %vm3146, %v5538, 0
        %v5589 = vsel %vm3146, %v5539, 0
        %v5592 = vsel %vm3146, %v5540, 0
        %v5595 = vsel %vm3146, %v5541, 0
        %v5598 = vsel %vm3146, %v5542, 0
        %v5601 = vsel %vm3146, %v5543, 0
        %v5604 = vsel %vm3146, %v5544, 0
        %v5607 = vsel %vm3146, %v5545, 0
        %v5610 = vsel %vm3146, %v5546, 0
        %v5613 = vsel %vm3146, %v5547, 0
        %v5616 = vsel %vm3146, %v5548, 0
        %v5619 = vsel %vm3146, %v5549, 0
        %v5622 = vsel %vm3146, %v5550, 0
        %v5625 = vsel %vm3146, %v5551, 0
        %v5628 = vsel %vm3146, %v5552, 0
        %v5631 = vsel %vm3146, %v5553, 0
        %v5634 = vsel %vm3146, %v5554, 0
        %v5637 = vsel %vm3146, %v5555, 0
        %v5640 = vsel %vm3146, %v5556, 0
        %v5643 = vsel %vm3146, %v5557, 0
        %v5646 = vsel %vm3146, %v5558, 0
        %v5649 = vsel %vm3146, %v5559, 0
        %v5652 = vsel %vm3146, %v5560, 0
        %v5655 = vsel %vm3146, %v5561, 0
        %v5658 = vsel %vm3146, %v5562, 0
        %v5661 = vsel %vm3146, %v5563, 0
        %v5664 = vsel %vm3146, %v5564, 0
        %v5667 = vsel %vm3146, %v5565, 0
        %v5670 = vsel %vm3146, %v5566, 0
        %5672 = vmatprep.subr.mxu0 0.0
        %5673 = vmatpush1.msra.mxu0 %v5568
        %5674 = vmatprep.subr.mxu0 0.0
        %5675 = vmatpush1.msra.mxu0 %v5569
        %5676 = vmatprep.subr.mxu0 0.0
        %5677 = vmatpush1.msra.mxu0 %v5570
        %5678 = vmatprep.subr.mxu0 0.0
        %5679 = vmatpush1.msra.mxu0 %v5571
        %5680 = vmatprep.subr.mxu0 0.0
        %5681 = vmatpush1.msra.mxu0 %v5572
        %5682 = vmatprep.subr.mxu0 0.0
        %5683 = vmatpush1.msra.mxu0 %v5573
        %5684 = vmatprep.subr.mxu0 0.0
        %5685 = vmatpush1.msra.mxu0 %v5574
        %5686 = vmatprep.subr.mxu0 0.0
        %5687 = vmatpush1.msra.mxu0 %v5575
        %5688 = vmatprep.subr.mxu0 0.0
        %5689 = vmatpush1.msra.mxu0 0.0
        %5690 = vmatprep.subr.mxu0 0.0
        %5691 = vmatpush1.msra.mxu0 0.0
        %5692 = vmatprep.subr.mxu0 0.0
        %5693 = vmatpush1.msra.mxu0 0.0
        %5694 = vmatprep.subr.mxu0 0.0
        %5695 = vmatpush1.msra.mxu0 0.0
        %5696 = vmatprep.subr.mxu0 0.0
        %5697 = vmatpush1.msra.mxu0 0.0
        %5698 = vmatprep.subr.mxu0 0.0
        %5699 = vmatpush1.msra.mxu0 0.0
        %5700 = vmatprep.subr.mxu0 0.0
        %5701 = vmatpush1.msra.mxu0 0.0
        %5702 = vmatprep.subr.mxu0 0.0
        %5703 = vmatpush1.msra.mxu0 0.0
        %5704 = vmatprep.subr.mxu0 0.0
        %5705 = vmatpush1.msra.mxu0 0.0
        %5706 = vmatprep.subr.mxu0 0.0
        %5707 = vmatpush1.msra.mxu0 0.0
        %5708 = vmatprep.subr.mxu0 0.0
        %5709 = vmatpush1.msra.mxu0 0.0
        %5710 = vmatprep.subr.mxu0 0.0
        %5711 = vmatpush1.msra.mxu0 0.0
        %5712 = vmatprep.subr.mxu0 0.0
        %5713 = vmatpush1.msra.mxu0 0.0
        %5714 = vmatprep.subr.mxu0 0.0
        %5715 = vmatpush1.msra.mxu0 0.0
        %5716 = vmatprep.subr.mxu0 0.0
        %5717 = vmatpush1.msra.mxu0 0.0
        %5718 = vmatprep.subr.mxu0 0.0
        %5719 = vmatpush1.msra.mxu0 0.0
        %5720 = vmatprep.subr.mxu0 0.0
        %5721 = vmatpush1.msra.mxu0 0.0
        %5722 = vmatprep.subr.mxu0 0.0
        %5723 = vmatpush1.msra.mxu0 0.0
        %5724 = vmatprep.subr.mxu0 0.0
        %5725 = vmatpush1.msra.mxu0 0.0
        %5726 = vmatprep.subr.mxu0 0.0
        %5727 = vmatpush1.msra.mxu0 0.0
        %5728 = vmatprep.subr.mxu0 0.0
        %5729 = vmatpush1.msra.mxu0 0.0
        %5730 = vmatprep.subr.mxu0 0.0
        %5731 = vmatpush1.msra.mxu0 0.0
        %5732 = vmatprep.subr.mxu0 0.0
        %5733 = vmatpush1.msra.mxu0 0.0
        %5734 = vmatprep.subr.mxu0 0.0
        %5735 = vmatpush1.msra.mxu0 0.0
        %5736 = vmatprep.mubr.f32.mxu0 0.0
        %5737 = vmatmul.mubr.f32.gmra.mrb[0].mxu0 %v5577
        %v5738 = vpop.f32.mrb[0].mxu0
        %v5739 = vadd.f32 0.0, %v5738
        %v5740 = vpop.f32.mrb[0].mxu0
        %5741 = vmatprep.mubr.f32.mxu0 0.0
        %5742 = vmatmul.mubr.f32.gmra.mrb[0].mxu0 %v5580
        %v5743 = vpop.f32.mrb[0].mxu0
        %v5744 = vadd.f32 0.0, %v5743
        %v5745 = vpop.f32.mrb[0].mxu0
        %5746 = vmatprep.mubr.f32.mxu0 0.0
        %5747 = vmatmul.mubr.f32.gmra.mrb[0].mxu0 %v5583
        %v5748 = vpop.f32.mrb[0].mxu0
        %v5749 = vadd.f32 0.0, %v5748
        %v5750 = vpop.f32.mrb[0].mxu0
        %5751 = vmatprep.mubr.f32.mxu0 0.0
        %5752 = vmatmul.mubr.f32.gmra.mrb[0].mxu0 %v5586
        %v5753 = vpop.f32.mrb[0].mxu0
        %v5754 = vadd.f32 0.0, %v5753
        %v5755 = vpop.f32.mrb[0].mxu0
        %5756 = vmatprep.mubr.f32.mxu0 0.0
        %5757 = vmatmul.mubr.f32.gmra.mrb[0].mxu0 %v5589
        %v5758 = vpop.f32.mrb[0].mxu0
        %v5759 = vadd.f32 0.0, %v5758
        %v5760 = vpop.f32.mrb[0].mxu0
        %5761 = vmatprep.mubr.f32.mxu0 0.0
        %5762 = vmatmul.mubr.f32.gmra.mrb[0].mxu0 %v5592
        %v5763 = vpop.f32.mrb[0].mxu0
        %v5764 = vadd.f32 0.0, %v5763
        %v5765 = vpop.f32.mrb[0].mxu0
        %5766 = vmatprep.mubr.f32.mxu0 0.0
        %5767 = vmatmul.mubr.f32.gmra.mrb[0].mxu0 %v5595
        %v5768 = vpop.f32.mrb[0].mxu0
        %v5769 = vadd.f32 0.0, %v5768
        %v5770 = vpop.f32.mrb[0].mxu0
        %5771 = vmatprep.mubr.f32.mxu0 0.0
        %5772 = vmatmul.mubr.f32.gmra.mrb[0].mxu0 %v5598
        %v5773 = vpop.f32.mrb[0].mxu0
        %v5774 = vadd.f32 0.0, %v5773
        %v5775 = vpop.f32.mrb[0].mxu0
        %5776 = vmatprep.mubr.f32.mxu0 0.0
        %5777 = vmatmul.mubr.f32.gmra.mrb[0].mxu0 %v5601
        %v5778 = vpop.f32.mrb[0].mxu0
        %v5779 = vadd.f32 0.0, %v5778
        %v5780 = vpop.f32.mrb[0].mxu0
        %5781 = vmatprep.mubr.f32.mxu0 0.0
        %5782 = vmatmul.mubr.f32.gmra.mrb[0].mxu0 %v5604
        %v5783 = vpop.f32.mrb[0].mxu0
        %v5784 = vadd.f32 0.0, %v5783
        %v5785 = vpop.f32.mrb[0].mxu0
        %5786 = vmatprep.mubr.f32.mxu0 0.0
        %5787 = vmatmul.mubr.f32.gmra.mrb[0].mxu0 %v5607
        %v5788 = vpop.f32.mrb[0].mxu0
        %v5789 = vadd.f32 0.0, %v5788
        %v5790 = vpop.f32.mrb[0].mxu0
        %5791 = vmatprep.mubr.f32.mxu0 0.0
        %5792 = vmatmul.mubr.f32.gmra.mrb[0].mxu0 %v5610
        %v5793 = vpop.f32.mrb[0].mxu0
        %v5794 = vadd.f32 0.0, %v5793
        %v5795 = vpop.f32.mrb[0].mxu0
        %5796 = vmatprep.mubr.f32.mxu0 0.0
        %5797 = vmatmul.mubr.f32.gmra.mrb[0].mxu0 %v5613
        %v5798 = vpop.f32.mrb[0].mxu0
        %v5799 = vadd.f32 0.0, %v5798
        %v5800 = vpop.f32.mrb[0].mxu0
        %5801 = vmatprep.mubr.f32.mxu0 0.0
        %5802 = vmatmul.mubr.f32.gmra.mrb[0].mxu0 %v5616
        %v5803 = vpop.f32.mrb[0].mxu0
        %v5804 = vadd.f32 0.0, %v5803
        %v5805 = vpop.f32.mrb[0].mxu0
        %5806 = vmatprep.mubr.f32.mxu0 0.0
        %5807 = vmatmul.mubr.f32.gmra.mrb[0].mxu0 %v5619
        %v5808 = vpop.f32.mrb[0].mxu0
        %v5809 = vadd.f32 0.0, %v5808
        %v5810 = vpop.f32.mrb[0].mxu0
        %5811 = vmatprep.mubr.f32.mxu0 0.0
        %5812 = vmatmul.mubr.f32.gmra.mrb[0].mxu0 %v5622
        %v5813 = vpop.f32.mrb[0].mxu0
        %v5814 = vadd.f32 0.0, %v5813
        %v5815 = vpop.f32.mrb[0].mxu0
        %5816 = vmatprep.mubr.f32.mxu0 0.0
        %5817 = vmatmul.mubr.f32.gmra.mrb[0].mxu0 %v5625
        %v5818 = vpop.f32.mrb[0].mxu0
        %v5819 = vadd.f32 0.0, %v5818
        %v5820 = vpop.f32.mrb[0].mxu0
        %5821 = vmatprep.mubr.f32.mxu0 0.0
        %5822 = vmatmul.mubr.f32.gmra.mrb[0].mxu0 %v5628
        %v5823 = vpop.f32.mrb[0].mxu0
        %v5824 = vadd.f32 0.0, %v5823
        %v5825 = vpop.f32.mrb[0].mxu0
        %5826 = vmatprep.mubr.f32.mxu0 0.0
        %5827 = vmatmul.mubr.f32.gmra.mrb[0].mxu0 %v5631
        %v5828 = vpop.f32.mrb[0].mxu0
        %v5829 = vadd.f32 0.0, %v5828
        %v5830 = vpop.f32.mrb[0].mxu0
        %5831 = vmatprep.mubr.f32.mxu0 0.0
        %5832 = vmatmul.mubr.f32.gmra.mrb[0].mxu0 %v5634
        %v5833 = vpop.f32.mrb[0].mxu0
        %v5834 = vadd.f32 0.0, %v5833
        %v5835 = vpop.f32.mrb[0].mxu0
        %5836 = vmatprep.mubr.f32.mxu0 0.0
        %5837 = vmatmul.mubr.f32.gmra.mrb[0].mxu0 %v5637
        %v5838 = vpop.f32.mrb[0].mxu0
        %v5839 = vadd.f32 0.0, %v5838
        %v5840 = vpop.f32.mrb[0].mxu0
        %5841 = vmatprep.mubr.f32.mxu0 0.0
        %5842 = vmatmul.mubr.f32.gmra.mrb[0].mxu0 %v5640
        %v5843 = vpop.f32.mrb[0].mxu0
        %v5844 = vadd.f32 0.0, %v5843
        %v5845 = vpop.f32.mrb[0].mxu0
        %5846 = vmatprep.mubr.f32.mxu0 0.0
        %5847 = vmatmul.mubr.f32.gmra.mrb[0].mxu0 %v5643
        %v5848 = vpop.f32.mrb[0].mxu0
        %v5849 = vadd.f32 0.0, %v5848
        %v5850 = vpop.f32.mrb[0].mxu0
        %5851 = vmatprep.mubr.f32.mxu0 0.0
        %5852 = vmatmul.mubr.f32.gmra.mrb[0].mxu0 %v5646
        %v5853 = vpop.f32.mrb[0].mxu0
        %v5854 = vadd.f32 0.0, %v5853
        %v5855 = vpop.f32.mrb[0].mxu0
        %5856 = vmatprep.mubr.f32.mxu0 0.0
        %5857 = vmatmul.mubr.f32.gmra.mrb[0].mxu0 %v5649
        %v5858 = vpop.f32.mrb[0].mxu0
        %v5859 = vadd.f32 0.0, %v5858
        %v5860 = vpop.f32.mrb[0].mxu0
        %5861 = vmatprep.mubr.f32.mxu0 0.0
        %5862 = vmatmul.mubr.f32.gmra.mrb[0].mxu0 %v5652
        %v5863 = vpop.f32.mrb[0].mxu0
        %v5864 = vadd.f32 0.0, %v5863
        %v5865 = vpop.f32.mrb[0].mxu0
        %5866 = vmatprep.mubr.f32.mxu0 0.0
        %5867 = vmatmul.mubr.f32.gmra.mrb[0].mxu0 %v5655
        %v5868 = vpop.f32.mrb[0].mxu0
        %v5869 = vadd.f32 0.0, %v5868
        %v5870 = vpop.f32.mrb[0].mxu0
        %5871 = vmatprep.mubr.f32.mxu0 0.0
        %5872 = vmatmul.mubr.f32.gmra.mrb[0].mxu0 %v5658
        %v5873 = vpop.f32.mrb[0].mxu0
        %v5874 = vadd.f32 0.0, %v5873
        %v5875 = vpop.f32.mrb[0].mxu0
        %5876 = vmatprep.mubr.f32.mxu0 0.0
        %5877 = vmatmul.mubr.f32.gmra.mrb[0].mxu0 %v5661
        %v5878 = vpop.f32.mrb[0].mxu0
        %v5879 = vadd.f32 0.0, %v5878
        %v5880 = vpop.f32.mrb[0].mxu0
        %5881 = vmatprep.mubr.f32.mxu0 0.0
        %5882 = vmatmul.mubr.f32.gmra.mrb[0].mxu0 %v5664
        %v5883 = vpop.f32.mrb[0].mxu0
        %v5884 = vadd.f32 0.0, %v5883
        %v5885 = vpop.f32.mrb[0].mxu0
        %5886 = vmatprep.mubr.f32.mxu0 0.0
        %5887 = vmatmul.mubr.f32.gmra.mrb[0].mxu0 %v5667
        %v5888 = vpop.f32.mrb[0].mxu0
        %v5889 = vadd.f32 0.0, %v5888
        %v5890 = vpop.f32.mrb[0].mxu0
        %5891 = vmatprep.mubr.f32.mxu0 0.0
        %5892 = vmatmul.mubr.f32.gmra.mrb[0].mxu0 %v5670
        %v5893 = vpop.f32.mrb[0].mxu0
        %v5894 = vadd.f32 0.0, %v5893
        %v5895 = vpop.f32.mrb[0].mxu0
        %5896 = vdwg.mxu0
        %v5897 = vadd.f32 %v5502, %v5739
        %v5898 = vadd.f32 %v5503, %v5744
        %v5899 = vadd.f32 %v5504, %v5749
        %v5900 = vadd.f32 %v5505, %v5754
        %v5901 = vadd.f32 %v5506, %v5759
        %v5902 = vadd.f32 %v5507, %v5764
        %v5903 = vadd.f32 %v5508, %v5769
        %v5904 = vadd.f32 %v5509, %v5774
        %v5905 = vadd.f32 %v5510, %v5779
        %v5906 = vadd.f32 %v5511, %v5784
        %v5907 = vadd.f32 %v5512, %v5789
        %v5908 = vadd.f32 %v5513, %v5794
        %v5909 = vadd.f32 %v5514, %v5799
        %v5910 = vadd.f32 %v5515, %v5804
        %v5911 = vadd.f32 %v5516, %v5809
        %v5912 = vadd.f32 %v5517, %v5814
        %v5913 = vadd.f32 %v5518, %v5819
        %v5914 = vadd.f32 %v5519, %v5824
        %v5915 = vadd.f32 %v5520, %v5829
        %v5916 = vadd.f32 %v5521, %v5834
        %v5917 = vadd.f32 %v5522, %v5839
        %v5918 = vadd.f32 %v5523, %v5844
        %v5919 = vadd.f32 %v5524, %v5849
        %v5920 = vadd.f32 %v5525, %v5854
        %v5921 = vadd.f32 %v5526, %v5859
        %v5922 = vadd.f32 %v5527, %v5864
        %v5923 = vadd.f32 %v5528, %v5869
        %v5924 = vadd.f32 %v5529, %v5874
        %v5925 = vadd.f32 %v5530, %v5879
        %v5926 = vadd.f32 %v5531, %v5884
        %v5927 = vadd.f32 %v5532, %v5889
        %v5928 = vadd.f32 %v5533, %v5894
        %v5929 = vld [vmem:[%s5534 + $0x1] sm:$0xff]
        %v5930 = vld [vmem:[%s5534 + $0x9] sm:$0xff]
        %v5931 = vld [vmem:[%s5534 + $0x19] sm:$0xff]
        %v5932 = vld [vmem:[%s5534 + $0x21] sm:$0xff]
        %v5933 = vld [vmem:[%s5534 + $0x31] sm:$0xff]
        %v5934 = vld [vmem:[%s5534 + $0x39] sm:$0xff]
        %v5935 = vld [vmem:[%s5534 + $0x49] sm:$0xff]
        %v5936 = vld [vmem:[%s5534 + $0x51] sm:$0xff]
        %v5937 = vld [vmem:[%s5534 + $0x61] sm:$0xff]
        %v5938 = vld [vmem:[%s5534 + $0x69] sm:$0xff]
        %v5939 = vld [vmem:[%s5534 + $0x79] sm:$0xff]
        %v5940 = vld [vmem:[%s5534 + $0x81] sm:$0xff]
        %v5941 = vld [vmem:[%s5534 + $0x91] sm:$0xff]
        %v5942 = vld [vmem:[%s5534 + $0x99] sm:$0xff]
        %v5943 = vld [vmem:[%s5534 + $0xa9] sm:$0xff]
        %v5944 = vld [vmem:[%s5534 + $0xb1] sm:$0xff]
        %v5945 = vld [vmem:[%s5534 + $0xc1] sm:$0xff]
        %v5946 = vld [vmem:[%s5534 + $0xc9] sm:$0xff]
        %v5947 = vld [vmem:[%s5534 + $0xd9] sm:$0xff]
        %v5948 = vld [vmem:[%s5534 + $0xe1] sm:$0xff]
        %v5949 = vld [vmem:[%s5534 + $0xf1] sm:$0xff]
        %v5950 = vld [vmem:[%s5534 + $0xf9] sm:$0xff]
        %v5951 = vld [vmem:[%s5534 + $0x109] sm:$0xff]
        %v5952 = vld [vmem:[%s5534 + $0x111] sm:$0xff]
        %v5953 = vld [vmem:[%s5534 + $0x121] sm:$0xff]
        %v5954 = vld [vmem:[%s5534 + $0x129] sm:$0xff]
        %v5955 = vld [vmem:[%s5534 + $0x139] sm:$0xff]
        %v5956 = vld [vmem:[%s5534 + $0x141] sm:$0xff]
        %v5957 = vld [vmem:[%s5534 + $0x151] sm:$0xff]
        %v5958 = vld [vmem:[%s5534 + $0x159] sm:$0xff]
        %v5959 = vld [vmem:[%s5534 + $0x169] sm:$0xff]
        %v5960 = vld [vmem:[%s5534 + $0x171] sm:$0xff]
        %s5961 = scalar_lea.vmem %s2, 448
        %v5962 = vld [vmem:[%s5961] sm:$0xff]
        %v5963 = vld [vmem:[%s5961 + $0x8] sm:$0xff]
        %v5964 = vld [vmem:[%s5961 + $0x10] sm:$0xff]
        %v5965 = vld [vmem:[%s5961 + $0x18] sm:$0xff]
        %v5966 = vld [vmem:[%s5961 + $0x20] sm:$0xff]
        %v5967 = vld [vmem:[%s5961 + $0x28] sm:$0xff]
        %v5968 = vld [vmem:[%s5961 + $0x30] sm:$0xff]
        %v5969 = vld [vmem:[%s5961 + $0x38] sm:$0xff]
        %v5971 = vsel %vm3146, %v5929, 0
        %v5974 = vsel %vm3146, %v5930, 0
        %v5977 = vsel %vm3146, %v5931, 0
        %v5980 = vsel %vm3146, %v5932, 0
        %v5983 = vsel %vm3146, %v5933, 0
        %v5986 = vsel %vm3146, %v5934, 0
        %v5989 = vsel %vm3146, %v5935, 0
        %v5992 = vsel %vm3146, %v5936, 0
        %v5995 = vsel %vm3146, %v5937, 0
        %v5998 = vsel %vm3146, %v5938, 0
        %v6001 = vsel %vm3146, %v5939, 0
        %v6004 = vsel %vm3146, %v5940, 0
        %v6007 = vsel %vm3146, %v5941, 0
        %v6010 = vsel %vm3146, %v5942, 0
        %v6013 = vsel %vm3146, %v5943, 0
        %v6016 = vsel %vm3146, %v5944, 0
        %v6019 = vsel %vm3146, %v5945, 0
        %v6022 = vsel %vm3146, %v5946, 0
        %v6025 = vsel %vm3146, %v5947, 0
        %v6028 = vsel %vm3146, %v5948, 0
        %v6031 = vsel %vm3146, %v5949, 0
        %v6034 = vsel %vm3146, %v5950, 0
        %v6037 = vsel %vm3146, %v5951, 0
        %v6040 = vsel %vm3146, %v5952, 0
        %v6043 = vsel %vm3146, %v5953, 0
        %v6046 = vsel %vm3146, %v5954, 0
        %v6049 = vsel %vm3146, %v5955, 0
        %v6052 = vsel %vm3146, %v5956, 0
        %v6055 = vsel %vm3146, %v5957, 0
        %v6058 = vsel %vm3146, %v5958, 0
        %v6061 = vsel %vm3146, %v5959, 0
        %v6064 = vsel %vm3146, %v5960, 0
        %6066 = vmatprep.subr.mxu0 0.0
        %6067 = vmatpush1.msra.mxu0 %v5962
        %6068 = vmatprep.subr.mxu0 0.0
        %6069 = vmatpush1.msra.mxu0 %v5963
        %6070 = vmatprep.subr.mxu0 0.0
        %6071 = vmatpush1.msra.mxu0 %v5964
        %6072 = vmatprep.subr.mxu0 0.0
        %6073 = vmatpush1.msra.mxu0 %v5965
        %6074 = vmatprep.subr.mxu0 0.0
        %6075 = vmatpush1.msra.mxu0 %v5966
        %6076 = vmatprep.subr.mxu0 0.0
        %6077 = vmatpush1.msra.mxu0 %v5967
        %6078 = vmatprep.subr.mxu0 0.0
        %6079 = vmatpush1.msra.mxu0 %v5968
        %6080 = vmatprep.subr.mxu0 0.0
        %6081 = vmatpush1.msra.mxu0 %v5969
        %6082 = vmatprep.subr.mxu0 0.0
        %6083 = vmatpush1.msra.mxu0 0.0
        %6084 = vmatprep.subr.mxu0 0.0
        %6085 = vmatpush1.msra.mxu0 0.0
        %6086 = vmatprep.subr.mxu0 0.0
        %6087 = vmatpush1.msra.mxu0 0.0
        %6088 = vmatprep.subr.mxu0 0.0
        %6089 = vmatpush1.msra.mxu0 0.0
        %6090 = vmatprep.subr.mxu0 0.0
        %6091 = vmatpush1.msra.mxu0 0.0
        %6092 = vmatprep.subr.mxu0 0.0
        %6093 = vmatpush1.msra.mxu0 0.0
        %6094 = vmatprep.subr.mxu0 0.0
        %6095 = vmatpush1.msra.mxu0 0.0
        %6096 = vmatprep.subr.mxu0 0.0
        %6097 = vmatpush1.msra.mxu0 0.0
        %6098 = vmatprep.subr.mxu0 0.0
        %6099 = vmatpush1.msra.mxu0 0.0
        %6100 = vmatprep.subr.mxu0 0.0
        %6101 = vmatpush1.msra.mxu0 0.0
        %6102 = vmatprep.subr.mxu0 0.0
        %6103 = vmatpush1.msra.mxu0 0.0
        %6104 = vmatprep.subr.mxu0 0.0
        %6105 = vmatpush1.msra.mxu0 0.0
        %6106 = vmatprep.subr.mxu0 0.0
        %6107 = vmatpush1.msra.mxu0 0.0
        %6108 = vmatprep.subr.mxu0 0.0
        %6109 = vmatpush1.msra.mxu0 0.0
        %6110 = vmatprep.subr.mxu0 0.0
        %6111 = vmatpush1.msra.mxu0 0.0
        %6112 = vmatprep.subr.mxu0 0.0
        %6113 = vmatpush1.msra.mxu0 0.0
        %6114 = vmatprep.subr.mxu0 0.0
        %6115 = vmatpush1.msra.mxu0 0.0
        %6116 = vmatprep.subr.mxu0 0.0
        %6117 = vmatpush1.msra.mxu0 0.0
        %6118 = vmatprep.subr.mxu0 0.0
        %6119 = vmatpush1.msra.mxu0 0.0
        %6120 = vmatprep.subr.mxu0 0.0
        %6121 = vmatpush1.msra.mxu0 0.0
        %6122 = vmatprep.subr.mxu0 0.0
        %6123 = vmatpush1.msra.mxu0 0.0
        %6124 = vmatprep.subr.mxu0 0.0
        %6125 = vmatpush1.msra.mxu0 0.0
        %6126 = vmatprep.subr.mxu0 0.0
        %6127 = vmatpush1.msra.mxu0 0.0
        %6128 = vmatprep.subr.mxu0 0.0
        %6129 = vmatpush1.msra.mxu0 0.0
        %6130 = vmatprep.mubr.f32.mxu0 0.0
        %6131 = vmatmul.mubr.f32.gmra.mrb[0].mxu0 %v5971
        %v6132 = vpop.f32.mrb[0].mxu0
        %v6133 = vadd.f32 0.0, %v6132
        %v6134 = vpop.f32.mrb[0].mxu0
        %6135 = vmatprep.mubr.f32.mxu0 0.0
        %6136 = vmatmul.mubr.f32.gmra.mrb[0].mxu0 %v5974
        %v6137 = vpop.f32.mrb[0].mxu0
        %v6138 = vadd.f32 0.0, %v6137
        %v6139 = vpop.f32.mrb[0].mxu0
        %6140 = vmatprep.mubr.f32.mxu0 0.0
        %6141 = vmatmul.mubr.f32.gmra.mrb[0].mxu0 %v5977
        %v6142 = vpop.f32.mrb[0].mxu0
        %v6143 = vadd.f32 0.0, %v6142
        %v6144 = vpop.f32.mrb[0].mxu0
        %6145 = vmatprep.mubr.f32.mxu0 0.0
        %6146 = vmatmul.mubr.f32.gmra.mrb[0].mxu0 %v5980
        %v6147 = vpop.f32.mrb[0].mxu0
        %v6148 = vadd.f32 0.0, %v6147
        %v6149 = vpop.f32.mrb[0].mxu0
        %6150 = vmatprep.mubr.f32.mxu0 0.0
        %6151 = vmatmul.mubr.f32.gmra.mrb[0].mxu0 %v5983
        %v6152 = vpop.f32.mrb[0].mxu0
        %v6153 = vadd.f32 0.0, %v6152
        %v6154 = vpop.f32.mrb[0].mxu0
        %6155 = vmatprep.mubr.f32.mxu0 0.0
        %6156 = vmatmul.mubr.f32.gmra.mrb[0].mxu0 %v5986
        %v6157 = vpop.f32.mrb[0].mxu0
        %v6158 = vadd.f32 0.0, %v6157
        %v6159 = vpop.f32.mrb[0].mxu0
        %6160 = vmatprep.mubr.f32.mxu0 0.0
        %6161 = vmatmul.mubr.f32.gmra.mrb[0].mxu0 %v5989
        %v6162 = vpop.f32.mrb[0].mxu0
        %v6163 = vadd.f32 0.0, %v6162
        %v6164 = vpop.f32.mrb[0].mxu0
        %6165 = vmatprep.mubr.f32.mxu0 0.0
        %6166 = vmatmul.mubr.f32.gmra.mrb[0].mxu0 %v5992
        %v6167 = vpop.f32.mrb[0].mxu0
        %v6168 = vadd.f32 0.0, %v6167
        %v6169 = vpop.f32.mrb[0].mxu0
        %6170 = vmatprep.mubr.f32.mxu0 0.0
        %6171 = vmatmul.mubr.f32.gmra.mrb[0].mxu0 %v5995
        %v6172 = vpop.f32.mrb[0].mxu0
        %v6173 = vadd.f32 0.0, %v6172
        %v6174 = vpop.f32.mrb[0].mxu0
        %6175 = vmatprep.mubr.f32.mxu0 0.0
        %6176 = vmatmul.mubr.f32.gmra.mrb[0].mxu0 %v5998
        %v6177 = vpop.f32.mrb[0].mxu0
        %v6178 = vadd.f32 0.0, %v6177
        %v6179 = vpop.f32.mrb[0].mxu0
        %6180 = vmatprep.mubr.f32.mxu0 0.0
        %6181 = vmatmul.mubr.f32.gmra.mrb[0].mxu0 %v6001
        %v6182 = vpop.f32.mrb[0].mxu0
        %v6183 = vadd.f32 0.0, %v6182
        %v6184 = vpop.f32.mrb[0].mxu0
        %6185 = vmatprep.mubr.f32.mxu0 0.0
        %6186 = vmatmul.mubr.f32.gmra.mrb[0].mxu0 %v6004
        %v6187 = vpop.f32.mrb[0].mxu0
        %v6188 = vadd.f32 0.0, %v6187
        %v6189 = vpop.f32.mrb[0].mxu0
        %6190 = vmatprep.mubr.f32.mxu0 0.0
        %6191 = vmatmul.mubr.f32.gmra.mrb[0].mxu0 %v6007
        %v6192 = vpop.f32.mrb[0].mxu0
        %v6193 = vadd.f32 0.0, %v6192
        %v6194 = vpop.f32.mrb[0].mxu0
        %6195 = vmatprep.mubr.f32.mxu0 0.0
        %6196 = vmatmul.mubr.f32.gmra.mrb[0].mxu0 %v6010
        %v6197 = vpop.f32.mrb[0].mxu0
        %v6198 = vadd.f32 0.0, %v6197
        %v6199 = vpop.f32.mrb[0].mxu0
        %6200 = vmatprep.mubr.f32.mxu0 0.0
        %6201 = vmatmul.mubr.f32.gmra.mrb[0].mxu0 %v6013
        %v6202 = vpop.f32.mrb[0].mxu0
        %v6203 = vadd.f32 0.0, %v6202
        %v6204 = vpop.f32.mrb[0].mxu0
        %6205 = vmatprep.mubr.f32.mxu0 0.0
        %6206 = vmatmul.mubr.f32.gmra.mrb[0].mxu0 %v6016
        %v6207 = vpop.f32.mrb[0].mxu0
        %v6208 = vadd.f32 0.0, %v6207
        %v6209 = vpop.f32.mrb[0].mxu0
        %6210 = vmatprep.mubr.f32.mxu0 0.0
        %6211 = vmatmul.mubr.f32.gmra.mrb[0].mxu0 %v6019
        %v6212 = vpop.f32.mrb[0].mxu0
        %v6213 = vadd.f32 0.0, %v6212
        %v6214 = vpop.f32.mrb[0].mxu0
        %6215 = vmatprep.mubr.f32.mxu0 0.0
        %6216 = vmatmul.mubr.f32.gmra.mrb[0].mxu0 %v6022
        %v6217 = vpop.f32.mrb[0].mxu0
        %v6218 = vadd.f32 0.0, %v6217
        %v6219 = vpop.f32.mrb[0].mxu0
        %6220 = vmatprep.mubr.f32.mxu0 0.0
        %6221 = vmatmul.mubr.f32.gmra.mrb[0].mxu0 %v6025
        %v6222 = vpop.f32.mrb[0].mxu0
        %v6223 = vadd.f32 0.0, %v6222
        %v6224 = vpop.f32.mrb[0].mxu0
        %6225 = vmatprep.mubr.f32.mxu0 0.0
        %6226 = vmatmul.mubr.f32.gmra.mrb[0].mxu0 %v6028
        %v6227 = vpop.f32.mrb[0].mxu0
        %v6228 = vadd.f32 0.0, %v6227
        %v6229 = vpop.f32.mrb[0].mxu0
        %6230 = vmatprep.mubr.f32.mxu0 0.0
        %6231 = vmatmul.mubr.f32.gmra.mrb[0].mxu0 %v6031
        %v6232 = vpop.f32.mrb[0].mxu0
        %v6233 = vadd.f32 0.0, %v6232
        %v6234 = vpop.f32.mrb[0].mxu0
        %6235 = vmatprep.mubr.f32.mxu0 0.0
        %6236 = vmatmul.mubr.f32.gmra.mrb[0].mxu0 %v6034
        %v6237 = vpop.f32.mrb[0].mxu0
        %v6238 = vadd.f32 0.0, %v6237
        %v6239 = vpop.f32.mrb[0].mxu0
        %6240 = vmatprep.mubr.f32.mxu0 0.0
        %6241 = vmatmul.mubr.f32.gmra.mrb[0].mxu0 %v6037
        %v6242 = vpop.f32.mrb[0].mxu0
        %v6243 = vadd.f32 0.0, %v6242
        %v6244 = vpop.f32.mrb[0].mxu0
        %6245 = vmatprep.mubr.f32.mxu0 0.0
        %6246 = vmatmul.mubr.f32.gmra.mrb[0].mxu0 %v6040
        %v6247 = vpop.f32.mrb[0].mxu0
        %v6248 = vadd.f32 0.0, %v6247
        %v6249 = vpop.f32.mrb[0].mxu0
        %6250 = vmatprep.mubr.f32.mxu0 0.0
        %6251 = vmatmul.mubr.f32.gmra.mrb[0].mxu0 %v6043
        %v6252 = vpop.f32.mrb[0].mxu0
        %v6253 = vadd.f32 0.0, %v6252
        %v6254 = vpop.f32.mrb[0].mxu0
        %6255 = vmatprep.mubr.f32.mxu0 0.0
        %6256 = vmatmul.mubr.f32.gmra.mrb[0].mxu0 %v6046
        %v6257 = vpop.f32.mrb[0].mxu0
        %v6258 = vadd.f32 0.0, %v6257
        %v6259 = vpop.f32.mrb[0].mxu0
        %6260 = vmatprep.mubr.f32.mxu0 0.0
        %6261 = vmatmul.mubr.f32.gmra.mrb[0].mxu0 %v6049
        %v6262 = vpop.f32.mrb[0].mxu0
        %v6263 = vadd.f32 0.0, %v6262
        %v6264 = vpop.f32.mrb[0].mxu0
        %6265 = vmatprep.mubr.f32.mxu0 0.0
        %6266 = vmatmul.mubr.f32.gmra.mrb[0].mxu0 %v6052
        %v6267 = vpop.f32.mrb[0].mxu0
        %v6268 = vadd.f32 0.0, %v6267
        %v6269 = vpop.f32.mrb[0].mxu0
        %6270 = vmatprep.mubr.f32.mxu0 0.0
        %6271 = vmatmul.mubr.f32.gmra.mrb[0].mxu0 %v6055
        %v6272 = vpop.f32.mrb[0].mxu0
        %v6273 = vadd.f32 0.0, %v6272
        %v6274 = vpop.f32.mrb[0].mxu0
        %6275 = vmatprep.mubr.f32.mxu0 0.0
        %6276 = vmatmul.mubr.f32.gmra.mrb[0].mxu0 %v6058
        %v6277 = vpop.f32.mrb[0].mxu0
        %v6278 = vadd.f32 0.0, %v6277
        %v6279 = vpop.f32.mrb[0].mxu0
        %6280 = vmatprep.mubr.f32.mxu0 0.0
        %6281 = vmatmul.mubr.f32.gmra.mrb[0].mxu0 %v6061
        %v6282 = vpop.f32.mrb[0].mxu0
        %v6283 = vadd.f32 0.0, %v6282
        %v6284 = vpop.f32.mrb[0].mxu0
        %6285 = vmatprep.mubr.f32.mxu0 0.0
        %6286 = vmatmul.mubr.f32.gmra.mrb[0].mxu0 %v6064
        %v6287 = vpop.f32.mrb[0].mxu0
        %v6288 = vadd.f32 0.0, %v6287
        %v6289 = vpop.f32.mrb[0].mxu0
        %6290 = vdwg.mxu0
        %v6291 = vadd.f32 %v5897, %v6133
        %v6292 = vadd.f32 %v5898, %v6138
        %v6293 = vadd.f32 %v5899, %v6143
        %v6294 = vadd.f32 %v5900, %v6148
        %v6295 = vadd.f32 %v5901, %v6153
        %v6296 = vadd.f32 %v5902, %v6158
        %v6297 = vadd.f32 %v5903, %v6163
        %v6298 = vadd.f32 %v5904, %v6168
        %v6299 = vadd.f32 %v5905, %v6173
        %v6300 = vadd.f32 %v5906, %v6178
        %v6301 = vadd.f32 %v5907, %v6183
        %v6302 = vadd.f32 %v5908, %v6188
        %v6303 = vadd.f32 %v5909, %v6193
        %v6304 = vadd.f32 %v5910, %v6198
        %v6305 = vadd.f32 %v5911, %v6203
        %v6306 = vadd.f32 %v5912, %v6208
        %v6307 = vadd.f32 %v5913, %v6213
        %v6308 = vadd.f32 %v5914, %v6218
        %v6309 = vadd.f32 %v5915, %v6223
        %v6310 = vadd.f32 %v5916, %v6228
        %v6311 = vadd.f32 %v5917, %v6233
        %v6312 = vadd.f32 %v5918, %v6238
        %v6313 = vadd.f32 %v5919, %v6243
        %v6314 = vadd.f32 %v5920, %v6248
        %v6315 = vadd.f32 %v5921, %v6253
        %v6316 = vadd.f32 %v5922, %v6258
        %v6317 = vadd.f32 %v5923, %v6263
        %v6318 = vadd.f32 %v5924, %v6268
        %v6319 = vadd.f32 %v5925, %v6273
        %v6320 = vadd.f32 %v5926, %v6278
        %v6321 = vadd.f32 %v5927, %v6283
        %v6322 = vadd.f32 %v5928, %v6288
        %v6323 = vld [vmem:[%s5534 + $0x2] sm:$0xff]
        %v6324 = vld [vmem:[%s5534 + $0xa] sm:$0xff]
        %v6325 = vld [vmem:[%s5534 + $0x1a] sm:$0xff]
        %v6326 = vld [vmem:[%s5534 + $0x22] sm:$0xff]
        %v6327 = vld [vmem:[%s5534 + $0x32] sm:$0xff]
        %v6328 = vld [vmem:[%s5534 + $0x3a] sm:$0xff]
        %v6329 = vld [vmem:[%s5534 + $0x4a] sm:$0xff]
        %v6330 = vld [vmem:[%s5534 + $0x52] sm:$0xff]
        %v6331 = vld [vmem:[%s5534 + $0x62] sm:$0xff]
        %v6332 = vld [vmem:[%s5534 + $0x6a] sm:$0xff]
        %v6333 = vld [vmem:[%s5534 + $0x7a] sm:$0xff]
        %v6334 = vld [vmem:[%s5534 + $0x82] sm:$0xff]
        %v6335 = vld [vmem:[%s5534 + $0x92] sm:$0xff]
        %v6336 = vld [vmem:[%s5534 + $0x9a] sm:$0xff]
        %v6337 = vld [vmem:[%s5534 + $0xaa] sm:$0xff]
        %v6338 = vld [vmem:[%s5534 + $0xb2] sm:$0xff]
        %v6339 = vld [vmem:[%s5534 + $0xc2] sm:$0xff]
        %v6340 = vld [vmem:[%s5534 + $0xca] sm:$0xff]
        %v6341 = vld [vmem:[%s5534 + $0xda] sm:$0xff]
        %v6342 = vld [vmem:[%s5534 + $0xe2] sm:$0xff]
        %v6343 = vld [vmem:[%s5534 + $0xf2] sm:$0xff]
        %v6344 = vld [vmem:[%s5534 + $0xfa] sm:$0xff]
        %v6345 = vld [vmem:[%s5534 + $0x10a] sm:$0xff]
        %v6346 = vld [vmem:[%s5534 + $0x112] sm:$0xff]
        %v6347 = vld [vmem:[%s5534 + $0x122] sm:$0xff]
        %v6348 = vld [vmem:[%s5534 + $0x12a] sm:$0xff]
        %v6349 = vld [vmem:[%s5534 + $0x13a] sm:$0xff]
        %v6350 = vld [vmem:[%s5534 + $0x142] sm:$0xff]
        %v6351 = vld [vmem:[%s5534 + $0x152] sm:$0xff]
        %v6352 = vld [vmem:[%s5534 + $0x15a] sm:$0xff]
        %v6353 = vld [vmem:[%s5534 + $0x16a] sm:$0xff]
        %v6354 = vld [vmem:[%s5534 + $0x172] sm:$0xff]
        %s6355 = scalar_lea.vmem %s2, 512
        %v6356 = vld [vmem:[%s6355] sm:$0xff]
        %v6357 = vld [vmem:[%s6355 + $0x8] sm:$0xff]
        %v6358 = vld [vmem:[%s6355 + $0x10] sm:$0xff]
        %v6359 = vld [vmem:[%s6355 + $0x18] sm:$0xff]
        %v6360 = vld [vmem:[%s6355 + $0x20] sm:$0xff]
        %v6361 = vld [vmem:[%s6355 + $0x28] sm:$0xff]
        %v6362 = vld [vmem:[%s6355 + $0x30] sm:$0xff]
        %v6363 = vld [vmem:[%s6355 + $0x38] sm:$0xff]
        %v6365 = vsel %vm3146, %v6323, 0
        %v6368 = vsel %vm3146, %v6324, 0
        %v6371 = vsel %vm3146, %v6325, 0
        %v6374 = vsel %vm3146, %v6326, 0
        %v6377 = vsel %vm3146, %v6327, 0
        %v6380 = vsel %vm3146, %v6328, 0
        %v6383 = vsel %vm3146, %v6329, 0
        %v6386 = vsel %vm3146, %v6330, 0
        %v6389 = vsel %vm3146, %v6331, 0
        %v6392 = vsel %vm3146, %v6332, 0
        %v6395 = vsel %vm3146, %v6333, 0
        %v6398 = vsel %vm3146, %v6334, 0
        %v6401 = vsel %vm3146, %v6335, 0
        %v6404 = vsel %vm3146, %v6336, 0
        %v6407 = vsel %vm3146, %v6337, 0
        %v6410 = vsel %vm3146, %v6338, 0
        %v6413 = vsel %vm3146, %v6339, 0
        %v6416 = vsel %vm3146, %v6340, 0
        %v6419 = vsel %vm3146, %v6341, 0
        %v6422 = vsel %vm3146, %v6342, 0
        %v6425 = vsel %vm3146, %v6343, 0
        %v6428 = vsel %vm3146, %v6344, 0
        %v6431 = vsel %vm3146, %v6345, 0
        %v6434 = vsel %vm3146, %v6346, 0
        %v6437 = vsel %vm3146, %v6347, 0
        %v6440 = vsel %vm3146, %v6348, 0
        %v6443 = vsel %vm3146, %v6349, 0
        %v6446 = vsel %vm3146, %v6350, 0
        %v6449 = vsel %vm3146, %v6351, 0
        %v6452 = vsel %vm3146, %v6352, 0
        %v6455 = vsel %vm3146, %v6353, 0
        %v6458 = vsel %vm3146, %v6354, 0
        %6460 = vmatprep.subr.mxu0 0.0
        %6461 = vmatpush1.msra.mxu0 %v6356
        %6462 = vmatprep.subr.mxu0 0.0
        %6463 = vmatpush1.msra.mxu0 %v6357
        %6464 = vmatprep.subr.mxu0 0.0
        %6465 = vmatpush1.msra.mxu0 %v6358
        %6466 = vmatprep.subr.mxu0 0.0
        %6467 = vmatpush1.msra.mxu0 %v6359
        %6468 = vmatprep.subr.mxu0 0.0
        %6469 = vmatpush1.msra.mxu0 %v6360
        %6470 = vmatprep.subr.mxu0 0.0
        %6471 = vmatpush1.msra.mxu0 %v6361
        %6472 = vmatprep.subr.mxu0 0.0
        %6473 = vmatpush1.msra.mxu0 %v6362
        %6474 = vmatprep.subr.mxu0 0.0
        %6475 = vmatpush1.msra.mxu0 %v6363
        %6476 = vmatprep.subr.mxu0 0.0
        %6477 = vmatpush1.msra.mxu0 0.0
        %6478 = vmatprep.subr.mxu0 0.0
        %6479 = vmatpush1.msra.mxu0 0.0
        %6480 = vmatprep.subr.mxu0 0.0
        %6481 = vmatpush1.msra.mxu0 0.0
        %6482 = vmatprep.subr.mxu0 0.0
        %6483 = vmatpush1.msra.mxu0 0.0
        %6484 = vmatprep.subr.mxu0 0.0
        %6485 = vmatpush1.msra.mxu0 0.0
        %6486 = vmatprep.subr.mxu0 0.0
        %6487 = vmatpush1.msra.mxu0 0.0
        %6488 = vmatprep.subr.mxu0 0.0
        %6489 = vmatpush1.msra.mxu0 0.0
        %6490 = vmatprep.subr.mxu0 0.0
        %6491 = vmatpush1.msra.mxu0 0.0
        %6492 = vmatprep.subr.mxu0 0.0
        %6493 = vmatpush1.msra.mxu0 0.0
        %6494 = vmatprep.subr.mxu0 0.0
        %6495 = vmatpush1.msra.mxu0 0.0
        %6496 = vmatprep.subr.mxu0 0.0
        %6497 = vmatpush1.msra.mxu0 0.0
        %6498 = vmatprep.subr.mxu0 0.0
        %6499 = vmatpush1.msra.mxu0 0.0
        %6500 = vmatprep.subr.mxu0 0.0
        %6501 = vmatpush1.msra.mxu0 0.0
        %6502 = vmatprep.subr.mxu0 0.0
        %6503 = vmatpush1.msra.mxu0 0.0
        %6504 = vmatprep.subr.mxu0 0.0
        %6505 = vmatpush1.msra.mxu0 0.0
        %6506 = vmatprep.subr.mxu0 0.0
        %6507 = vmatpush1.msra.mxu0 0.0
        %6508 = vmatprep.subr.mxu0 0.0
        %6509 = vmatpush1.msra.mxu0 0.0
        %6510 = vmatprep.subr.mxu0 0.0
        %6511 = vmatpush1.msra.mxu0 0.0
        %6512 = vmatprep.subr.mxu0 0.0
        %6513 = vmatpush1.msra.mxu0 0.0
        %6514 = vmatprep.subr.mxu0 0.0
        %6515 = vmatpush1.msra.mxu0 0.0
        %6516 = vmatprep.subr.mxu0 0.0
        %6517 = vmatpush1.msra.mxu0 0.0
        %6518 = vmatprep.subr.mxu0 0.0
        %6519 = vmatpush1.msra.mxu0 0.0
        %6520 = vmatprep.subr.mxu0 0.0
        %6521 = vmatpush1.msra.mxu0 0.0
        %6522 = vmatprep.subr.mxu0 0.0
        %6523 = vmatpush1.msra.mxu0 0.0
        %6524 = vmatprep.mubr.f32.mxu0 0.0
        %6525 = vmatmul.mubr.f32.gmra.mrb[0].mxu0 %v6365
        %v6526 = vpop.f32.mrb[0].mxu0
        %v6527 = vadd.f32 0.0, %v6526
        %v6528 = vpop.f32.mrb[0].mxu0
        %6529 = vmatprep.mubr.f32.mxu0 0.0
        %6530 = vmatmul.mubr.f32.gmra.mrb[0].mxu0 %v6368
        %v6531 = vpop.f32.mrb[0].mxu0
        %v6532 = vadd.f32 0.0, %v6531
        %v6533 = vpop.f32.mrb[0].mxu0
        %6534 = vmatprep.mubr.f32.mxu0 0.0
        %6535 = vmatmul.mubr.f32.gmra.mrb[0].mxu0 %v6371
        %v6536 = vpop.f32.mrb[0].mxu0
        %v6537 = vadd.f32 0.0, %v6536
        %v6538 = vpop.f32.mrb[0].mxu0
        %6539 = vmatprep.mubr.f32.mxu0 0.0
        %6540 = vmatmul.mubr.f32.gmra.mrb[0].mxu0 %v6374
        %v6541 = vpop.f32.mrb[0].mxu0
        %v6542 = vadd.f32 0.0, %v6541
        %v6543 = vpop.f32.mrb[0].mxu0
        %6544 = vmatprep.mubr.f32.mxu0 0.0
        %6545 = vmatmul.mubr.f32.gmra.mrb[0].mxu0 %v6377
        %v6546 = vpop.f32.mrb[0].mxu0
        %v6547 = vadd.f32 0.0, %v6546
        %v6548 = vpop.f32.mrb[0].mxu0
        %6549 = vmatprep.mubr.f32.mxu0 0.0
        %6550 = vmatmul.mubr.f32.gmra.mrb[0].mxu0 %v6380
        %v6551 = vpop.f32.mrb[0].mxu0
        %v6552 = vadd.f32 0.0, %v6551
        %v6553 = vpop.f32.mrb[0].mxu0
        %6554 = vmatprep.mubr.f32.mxu0 0.0
        %6555 = vmatmul.mubr.f32.gmra.mrb[0].mxu0 %v6383
        %v6556 = vpop.f32.mrb[0].mxu0
        %v6557 = vadd.f32 0.0, %v6556
        %v6558 = vpop.f32.mrb[0].mxu0
        %6559 = vmatprep.mubr.f32.mxu0 0.0
        %6560 = vmatmul.mubr.f32.gmra.mrb[0].mxu0 %v6386
        %v6561 = vpop.f32.mrb[0].mxu0
        %v6562 = vadd.f32 0.0, %v6561
        %v6563 = vpop.f32.mrb[0].mxu0
        %6564 = vmatprep.mubr.f32.mxu0 0.0
        %6565 = vmatmul.mubr.f32.gmra.mrb[0].mxu0 %v6389
        %v6566 = vpop.f32.mrb[0].mxu0
        %v6567 = vadd.f32 0.0, %v6566
        %v6568 = vpop.f32.mrb[0].mxu0
        %6569 = vmatprep.mubr.f32.mxu0 0.0
        %6570 = vmatmul.mubr.f32.gmra.mrb[0].mxu0 %v6392
        %v6571 = vpop.f32.mrb[0].mxu0
        %v6572 = vadd.f32 0.0, %v6571
        %v6573 = vpop.f32.mrb[0].mxu0
        %6574 = vmatprep.mubr.f32.mxu0 0.0
        %6575 = vmatmul.mubr.f32.gmra.mrb[0].mxu0 %v6395
        %v6576 = vpop.f32.mrb[0].mxu0
        %v6577 = vadd.f32 0.0, %v6576
        %v6578 = vpop.f32.mrb[0].mxu0
        %6579 = vmatprep.mubr.f32.mxu0 0.0
        %6580 = vmatmul.mubr.f32.gmra.mrb[0].mxu0 %v6398
        %v6581 = vpop.f32.mrb[0].mxu0
        %v6582 = vadd.f32 0.0, %v6581
        %v6583 = vpop.f32.mrb[0].mxu0
        %6584 = vmatprep.mubr.f32.mxu0 0.0
        %6585 = vmatmul.mubr.f32.gmra.mrb[0].mxu0 %v6401
        %v6586 = vpop.f32.mrb[0].mxu0
        %v6587 = vadd.f32 0.0, %v6586
        %v6588 = vpop.f32.mrb[0].mxu0
        %6589 = vmatprep.mubr.f32.mxu0 0.0
        %6590 = vmatmul.mubr.f32.gmra.mrb[0].mxu0 %v6404
        %v6591 = vpop.f32.mrb[0].mxu0
        %v6592 = vadd.f32 0.0, %v6591
        %v6593 = vpop.f32.mrb[0].mxu0
        %6594 = vmatprep.mubr.f32.mxu0 0.0
        %6595 = vmatmul.mubr.f32.gmra.mrb[0].mxu0 %v6407
        %v6596 = vpop.f32.mrb[0].mxu0
        %v6597 = vadd.f32 0.0, %v6596
        %v6598 = vpop.f32.mrb[0].mxu0
        %6599 = vmatprep.mubr.f32.mxu0 0.0
        %6600 = vmatmul.mubr.f32.gmra.mrb[0].mxu0 %v6410
        %v6601 = vpop.f32.mrb[0].mxu0
        %v6602 = vadd.f32 0.0, %v6601
        %v6603 = vpop.f32.mrb[0].mxu0
        %6604 = vmatprep.mubr.f32.mxu0 0.0
        %6605 = vmatmul.mubr.f32.gmra.mrb[0].mxu0 %v6413
        %v6606 = vpop.f32.mrb[0].mxu0
        %v6607 = vadd.f32 0.0, %v6606
        %v6608 = vpop.f32.mrb[0].mxu0
        %6609 = vmatprep.mubr.f32.mxu0 0.0
        %6610 = vmatmul.mubr.f32.gmra.mrb[0].mxu0 %v6416
        %v6611 = vpop.f32.mrb[0].mxu0
        %v6612 = vadd.f32 0.0, %v6611
        %v6613 = vpop.f32.mrb[0].mxu0
        %6614 = vmatprep.mubr.f32.mxu0 0.0
        %6615 = vmatmul.mubr.f32.gmra.mrb[0].mxu0 %v6419
        %v6616 = vpop.f32.mrb[0].mxu0
        %v6617 = vadd.f32 0.0, %v6616
        %v6618 = vpop.f32.mrb[0].mxu0
        %6619 = vmatprep.mubr.f32.mxu0 0.0
        %6620 = vmatmul.mubr.f32.gmra.mrb[0].mxu0 %v6422
        %v6621 = vpop.f32.mrb[0].mxu0
        %v6622 = vadd.f32 0.0, %v6621
        %v6623 = vpop.f32.mrb[0].mxu0
        %6624 = vmatprep.mubr.f32.mxu0 0.0
        %6625 = vmatmul.mubr.f32.gmra.mrb[0].mxu0 %v6425
        %v6626 = vpop.f32.mrb[0].mxu0
        %v6627 = vadd.f32 0.0, %v6626
        %v6628 = vpop.f32.mrb[0].mxu0
        %6629 = vmatprep.mubr.f32.mxu0 0.0
        %6630 = vmatmul.mubr.f32.gmra.mrb[0].mxu0 %v6428
        %v6631 = vpop.f32.mrb[0].mxu0
        %v6632 = vadd.f32 0.0, %v6631
        %v6633 = vpop.f32.mrb[0].mxu0
        %6634 = vmatprep.mubr.f32.mxu0 0.0
        %6635 = vmatmul.mubr.f32.gmra.mrb[0].mxu0 %v6431
        %v6636 = vpop.f32.mrb[0].mxu0
        %v6637 = vadd.f32 0.0, %v6636
        %v6638 = vpop.f32.mrb[0].mxu0
        %6639 = vmatprep.mubr.f32.mxu0 0.0
        %6640 = vmatmul.mubr.f32.gmra.mrb[0].mxu0 %v6434
        %v6641 = vpop.f32.mrb[0].mxu0
        %v6642 = vadd.f32 0.0, %v6641
        %v6643 = vpop.f32.mrb[0].mxu0
        %6644 = vmatprep.mubr.f32.mxu0 0.0
        %6645 = vmatmul.mubr.f32.gmra.mrb[0].mxu0 %v6437
        %v6646 = vpop.f32.mrb[0].mxu0
        %v6647 = vadd.f32 0.0, %v6646
        %v6648 = vpop.f32.mrb[0].mxu0
        %6649 = vmatprep.mubr.f32.mxu0 0.0
        %6650 = vmatmul.mubr.f32.gmra.mrb[0].mxu0 %v6440
        %v6651 = vpop.f32.mrb[0].mxu0
        %v6652 = vadd.f32 0.0, %v6651
        %v6653 = vpop.f32.mrb[0].mxu0
        %6654 = vmatprep.mubr.f32.mxu0 0.0
        %6655 = vmatmul.mubr.f32.gmra.mrb[0].mxu0 %v6443
        %v6656 = vpop.f32.mrb[0].mxu0
        %v6657 = vadd.f32 0.0, %v6656
        %v6658 = vpop.f32.mrb[0].mxu0
        %6659 = vmatprep.mubr.f32.mxu0 0.0
        %6660 = vmatmul.mubr.f32.gmra.mrb[0].mxu0 %v6446
        %v6661 = vpop.f32.mrb[0].mxu0
        %v6662 = vadd.f32 0.0, %v6661
        %v6663 = vpop.f32.mrb[0].mxu0
        %6664 = vmatprep.mubr.f32.mxu0 0.0
        %6665 = vmatmul.mubr.f32.gmra.mrb[0].mxu0 %v6449
        %v6666 = vpop.f32.mrb[0].mxu0
        %v6667 = vadd.f32 0.0, %v6666
        %v6668 = vpop.f32.mrb[0].mxu0
        %6669 = vmatprep.mubr.f32.mxu0 0.0
        %6670 = vmatmul.mubr.f32.gmra.mrb[0].mxu0 %v6452
        %v6671 = vpop.f32.mrb[0].mxu0
        %v6672 = vadd.f32 0.0, %v6671
        %v6673 = vpop.f32.mrb[0].mxu0
        %6674 = vmatprep.mubr.f32.mxu0 0.0
        %6675 = vmatmul.mubr.f32.gmra.mrb[0].mxu0 %v6455
        %v6676 = vpop.f32.mrb[0].mxu0
        %v6677 = vadd.f32 0.0, %v6676
        %v6678 = vpop.f32.mrb[0].mxu0
        %6679 = vmatprep.mubr.f32.mxu0 0.0
        %6680 = vmatmul.mubr.f32.gmra.mrb[0].mxu0 %v6458
        %v6681 = vpop.f32.mrb[0].mxu0
        %v6682 = vadd.f32 0.0, %v6681
        %v6683 = vpop.f32.mrb[0].mxu0
        %6684 = vdwg.mxu0
        %v6685 = vadd.f32 %v6291, %v6527
        %v6686 = vadd.f32 %v6292, %v6532
        %v6687 = vadd.f32 %v6293, %v6537
        %v6688 = vadd.f32 %v6294, %v6542
        %v6689 = vadd.f32 %v6295, %v6547
        %v6690 = vadd.f32 %v6296, %v6552
        %v6691 = vadd.f32 %v6297, %v6557
        %v6692 = vadd.f32 %v6298, %v6562
        %v6693 = vadd.f32 %v6299, %v6567
        %v6694 = vadd.f32 %v6300, %v6572
        %v6695 = vadd.f32 %v6301, %v6577
        %v6696 = vadd.f32 %v6302, %v6582
        %v6697 = vadd.f32 %v6303, %v6587
        %v6698 = vadd.f32 %v6304, %v6592
        %v6699 = vadd.f32 %v6305, %v6597
        %v6700 = vadd.f32 %v6306, %v6602
        %v6701 = vadd.f32 %v6307, %v6607
        %v6702 = vadd.f32 %v6308, %v6612
        %v6703 = vadd.f32 %v6309, %v6617
        %v6704 = vadd.f32 %v6310, %v6622
        %v6705 = vadd.f32 %v6311, %v6627
        %v6706 = vadd.f32 %v6312, %v6632
        %v6707 = vadd.f32 %v6313, %v6637
        %v6708 = vadd.f32 %v6314, %v6642
        %v6709 = vadd.f32 %v6315, %v6647
        %v6710 = vadd.f32 %v6316, %v6652
        %v6711 = vadd.f32 %v6317, %v6657
        %v6712 = vadd.f32 %v6318, %v6662
        %v6713 = vadd.f32 %v6319, %v6667
        %v6714 = vadd.f32 %v6320, %v6672
        %v6715 = vadd.f32 %v6321, %v6677
        %v6716 = vadd.f32 %v6322, %v6682
        %vm6717 = vcmp.gt.f32.partialorder %v6685, 0.0
        %vm6718 = vcmp.gt.f32.partialorder %v6686, 0.0
        %vm6719 = vcmp.gt.f32.partialorder %v6687, 0.0
        %vm6720 = vcmp.gt.f32.partialorder %v6688, 0.0
        %vm6721 = vcmp.gt.f32.partialorder %v6689, 0.0
        %vm6722 = vcmp.gt.f32.partialorder %v6690, 0.0
        %vm6723 = vcmp.gt.f32.partialorder %v6691, 0.0
        %vm6724 = vcmp.gt.f32.partialorder %v6692, 0.0
        %vm6725 = vcmp.gt.f32.partialorder %v6693, 0.0
        %vm6726 = vcmp.gt.f32.partialorder %v6694, 0.0
        %vm6727 = vcmp.gt.f32.partialorder %v6695, 0.0
        %vm6728 = vcmp.gt.f32.partialorder %v6696, 0.0
        %vm6729 = vcmp.gt.f32.partialorder %v6697, 0.0
        %vm6730 = vcmp.gt.f32.partialorder %v6698, 0.0
        %vm6731 = vcmp.gt.f32.partialorder %v6699, 0.0
        %vm6732 = vcmp.gt.f32.partialorder %v6700, 0.0
        %vm6733 = vcmp.gt.f32.partialorder %v6701, 0.0
        %vm6734 = vcmp.gt.f32.partialorder %v6702, 0.0
        %vm6735 = vcmp.gt.f32.partialorder %v6703, 0.0
        %vm6736 = vcmp.gt.f32.partialorder %v6704, 0.0
        %vm6737 = vcmp.gt.f32.partialorder %v6705, 0.0
        %vm6738 = vcmp.gt.f32.partialorder %v6706, 0.0
        %vm6739 = vcmp.gt.f32.partialorder %v6707, 0.0
        %vm6740 = vcmp.gt.f32.partialorder %v6708, 0.0
        %vm6741 = vcmp.gt.f32.partialorder %v6709, 0.0
        %vm6742 = vcmp.gt.f32.partialorder %v6710, 0.0
        %vm6743 = vcmp.gt.f32.partialorder %v6711, 0.0
        %vm6744 = vcmp.gt.f32.partialorder %v6712, 0.0
        %vm6745 = vcmp.gt.f32.partialorder %v6713, 0.0
        %vm6746 = vcmp.gt.f32.partialorder %v6714, 0.0
        %vm6747 = vcmp.gt.f32.partialorder %v6715, 0.0
        %vm6748 = vcmp.gt.f32.partialorder %v6716, 0.0
        %v6749 = vmul.f32 %v6685, 0.01
        %v6750 = vmul.f32 %v6686, 0.01
        %v6751 = vmul.f32 %v6687, 0.01
        %v6752 = vmul.f32 %v6688, 0.01
        %v6753 = vmul.f32 %v6689, 0.01
        %v6754 = vmul.f32 %v6690, 0.01
        %v6755 = vmul.f32 %v6691, 0.01
        %v6756 = vmul.f32 %v6692, 0.01
        %v6757 = vmul.f32 %v6693, 0.01
        %v6758 = vmul.f32 %v6694, 0.01
        %v6759 = vmul.f32 %v6695, 0.01
        %v6760 = vmul.f32 %v6696, 0.01
        %v6761 = vmul.f32 %v6697, 0.01
        %v6762 = vmul.f32 %v6698, 0.01
        %v6763 = vmul.f32 %v6699, 0.01
        %v6764 = vmul.f32 %v6700, 0.01
        %v6765 = vmul.f32 %v6701, 0.01
        %v6766 = vmul.f32 %v6702, 0.01
        %v6767 = vmul.f32 %v6703, 0.01
        %v6768 = vmul.f32 %v6704, 0.01
        %v6769 = vmul.f32 %v6705, 0.01
        %v6770 = vmul.f32 %v6706, 0.01
        %v6771 = vmul.f32 %v6707, 0.01
        %v6772 = vmul.f32 %v6708, 0.01
        %v6773 = vmul.f32 %v6709, 0.01
        %v6774 = vmul.f32 %v6710, 0.01
        %v6775 = vmul.f32 %v6711, 0.01
        %v6776 = vmul.f32 %v6712, 0.01
        %v6777 = vmul.f32 %v6713, 0.01
        %v6778 = vmul.f32 %v6714, 0.01
        %v6779 = vmul.f32 %v6715, 0.01
        %v6780 = vmul.f32 %v6716, 0.01
        %v6781 = vsel %vm6717, %v6685, %v6749
        %v6782 = vsel %vm6718, %v6686, %v6750
        %v6783 = vsel %vm6719, %v6687, %v6751
        %v6784 = vsel %vm6720, %v6688, %v6752
        %v6785 = vsel %vm6721, %v6689, %v6753
        %v6786 = vsel %vm6722, %v6690, %v6754
        %v6787 = vsel %vm6723, %v6691, %v6755
        %v6788 = vsel %vm6724, %v6692, %v6756
        %v6789 = vsel %vm6725, %v6693, %v6757
        %v6790 = vsel %vm6726, %v6694, %v6758
        %v6791 = vsel %vm6727, %v6695, %v6759
        %v6792 = vsel %vm6728, %v6696, %v6760
        %v6793 = vsel %vm6729, %v6697, %v6761
        %v6794 = vsel %vm6730, %v6698, %v6762
        %v6795 = vsel %vm6731, %v6699, %v6763
        %v6796 = vsel %vm6732, %v6700, %v6764
        %v6797 = vsel %vm6733, %v6701, %v6765
        %v6798 = vsel %vm6734, %v6702, %v6766
        %v6799 = vsel %vm6735, %v6703, %v6767
        %v6800 = vsel %vm6736, %v6704, %v6768
        %v6801 = vsel %vm6737, %v6705, %v6769
        %v6802 = vsel %vm6738, %v6706, %v6770
        %v6803 = vsel %vm6739, %v6707, %v6771
        %v6804 = vsel %vm6740, %v6708, %v6772
        %v6805 = vsel %vm6741, %v6709, %v6773
        %v6806 = vsel %vm6742, %v6710, %v6774
        %v6807 = vsel %vm6743, %v6711, %v6775
        %v6808 = vsel %vm6744, %v6712, %v6776
        %v6809 = vsel %vm6745, %v6713, %v6777
        %v6810 = vsel %vm6746, %v6714, %v6778
        %v6811 = vsel %vm6747, %v6715, %v6779
        %v6812 = vsel %vm6748, %v6716, %v6780
        %vm6813 = vcmask 29696
        %v6814 = vsel %vm6813, %v6781, -inf
        %v6815 = vsel %vm6813, %v6783, -inf
        %v6816 = vsel %vm6813, %v6785, -inf
        %v6817 = vsel %vm6813, %v6787, -inf
        %v6818 = vsel %vm6813, %v6789, -inf
        %v6819 = vmax.f32 %v6814, %v6818
        %v6820 = vsel %vm6813, %v6791, -inf
        %v6821 = vmax.f32 %v6815, %v6820
        %v6822 = vmax.f32 %v6819, %v6821
        %v6823 = vmax.f32 %v6816, %v6817
        %v6824 = vmax.f32 %v6822, %v6823
        %v6825 = vsel %vm6813, %v6824, -inf
        %v6826 = vrot.slane %v6825, 4
        %v6827 = vmax.f32 %v6825, %v6826
        %v6828 = vrot.slane %v6827, 2
        %v6829 = vmax.f32 %v6827, %v6828
        %v6830 = vrot.slane %v6829, 1
        %v6831 = vmax.f32 %v6829, %v6830
        %v6832 = vld [vmem:[%s3] sm:$0xf]
        %vm6833 = vcmask 31749
        %v6834 = vsel %vm6833, %v6781, -inf
        %v6835 = vsel %vm6833, %v6783, -inf
        %v6836 = vsel %vm6833, %v6785, -inf
        %v6837 = vmax.f32 %v6834, %v6836
        %v6838 = vsel %vm6833, %v6787, -inf
        %v6839 = vmax.f32 %v6835, %v6838
        %v6840 = vsel %vm6833, %v6789, -inf
        %v6841 = vmax.f32 %v6837, %v6840
        %v6842 = vsel %vm6833, %v6791, -inf
        %v6843 = vmax.f32 %v6839, %v6842
        %v6844 = vmax.f32 %v6841, %v6843
        %vm6845 = vcmask 26624
        %v6846 = vsel %vm6845, %v6782, -inf
        %v6847 = vsel %vm6845, %v6784, -inf
        %v6848 = vsel %vm6845, %v6786, -inf
        %v6849 = vmax.f32 %v6846, %v6848
        %v6850 = vsel %vm6845, %v6788, -inf
        %v6851 = vmax.f32 %v6847, %v6850
        %v6852 = vsel %vm6845, %v6790, -inf
        %v6853 = vmax.f32 %v6849, %v6852
        %v6854 = vsel %vm6845, %v6792, -inf
        %v6855 = vmax.f32 %v6851, %v6854
        %v6856 = vmax.f32 %v6853, %v6855
        %v6857 = vsel %vm6833, %v6844, -inf
        %v6858 = vsel %vm6845, %v6856, -inf
        %v6859 = vmax.f32 %v6857, %v6858
        %v6860 = vrot.slane %v6859, 4
        %v6861 = vmax.f32 %v6859, %v6860
        %v6862 = vrot.slane %v6861, 2
        %v6863 = vmax.f32 %v6861, %v6862
        %v6864 = vrot.slane %v6863, 1
        %v6865 = vmax.f32 %v6863, %v6864
        %s6866 = scalar_lea.vmem %s3, 4
        %v6867 = vld [vmem:[%s6866] sm:$0xf]
        %v6869 = vsel %vm435, %v6865, 0
        %v6872 = vsel %vm500, %v6867, 0
        %6874 = vmatprep.subr.mxu0 0.0
        %6875 = vmatpush1.msra.mxu0 %v6872
        %6876 = vmatprep.subr.mxu0 0.0
        %6877 = vmatpush1.msra.mxu0 0.0
        %6878 = vmatprep.subr.mxu0 0.0
        %6879 = vmatpush1.msra.mxu0 0.0
        %6880 = vmatprep.subr.mxu0 0.0
        %6881 = vmatpush1.msra.mxu0 0.0
        %6882 = vmatprep.subr.mxu0 0.0
        %6883 = vmatpush1.msra.mxu0 0.0
        %6884 = vmatprep.subr.mxu0 0.0
        %6885 = vmatpush1.msra.mxu0 0.0
        %6886 = vmatprep.subr.mxu0 0.0
        %6887 = vmatpush1.msra.mxu0 0.0
        %6888 = vmatprep.subr.mxu0 0.0
        %6889 = vmatpush1.msra.mxu0 0.0
        %6890 = vmatprep.subr.mxu0 0.0
        %6891 = vmatpush1.msra.mxu0 0.0
        %6892 = vmatprep.subr.mxu0 0.0
        %6893 = vmatpush1.msra.mxu0 0.0
        %6894 = vmatprep.subr.mxu0 0.0
        %6895 = vmatpush1.msra.mxu0 0.0
        %6896 = vmatprep.subr.mxu0 0.0
        %6897 = vmatpush1.msra.mxu0 0.0
        %6898 = vmatprep.subr.mxu0 0.0
        %6899 = vmatpush1.msra.mxu0 0.0
        %6900 = vmatprep.subr.mxu0 0.0
        %6901 = vmatpush1.msra.mxu0 0.0
        %6902 = vmatprep.subr.mxu0 0.0
        %6903 = vmatpush1.msra.mxu0 0.0
        %6904 = vmatprep.subr.mxu0 0.0
        %6905 = vmatpush1.msra.mxu0 0.0
        %6906 = vmatprep.subr.mxu0 0.0
        %6907 = vmatpush1.msra.mxu0 0.0
        %6908 = vmatprep.subr.mxu0 0.0
        %6909 = vmatpush1.msra.mxu0 0.0
        %6910 = vmatprep.subr.mxu0 0.0
        %6911 = vmatpush1.msra.mxu0 0.0
        %6912 = vmatprep.subr.mxu0 0.0
        %6913 = vmatpush1.msra.mxu0 0.0
        %6914 = vmatprep.subr.mxu0 0.0
        %6915 = vmatpush1.msra.mxu0 0.0
        %6916 = vmatprep.subr.mxu0 0.0
        %6917 = vmatpush1.msra.mxu0 0.0
        %6918 = vmatprep.subr.mxu0 0.0
        %6919 = vmatpush1.msra.mxu0 0.0
        %6920 = vmatprep.subr.mxu0 0.0
        %6921 = vmatpush1.msra.mxu0 0.0
        %6922 = vmatprep.subr.mxu0 0.0
        %6923 = vmatpush1.msra.mxu0 0.0
        %6924 = vmatprep.subr.mxu0 0.0
        %6925 = vmatpush1.msra.mxu0 0.0
        %6926 = vmatprep.subr.mxu0 0.0
        %6927 = vmatpush1.msra.mxu0 0.0
        %6928 = vmatprep.subr.mxu0 0.0
        %6929 = vmatpush1.msra.mxu0 0.0
        %6930 = vmatprep.subr.mxu0 0.0
        %6931 = vmatpush1.msra.mxu0 0.0
        %6932 = vmatprep.subr.mxu0 0.0
        %6933 = vmatpush1.msra.mxu0 0.0
        %6934 = vmatprep.subr.mxu0 0.0
        %6935 = vmatpush1.msra.mxu0 0.0
        %6936 = vmatprep.subr.mxu0 0.0
        %6937 = vmatpush1.msra.mxu0 0.0
        %6938 = vmatprep.mubr.f32.mxu0 0.0
        %6939 = vmatmul.mubr.f32.gmra.mrb[0].mxu0 %v6869
        %v6940 = vpop.f32.mrb[0].mxu0
        %v6941 = vadd.f32 0.0, %v6940
        %v6942 = vpop.f32.mrb[0].mxu0
        %6943 = vdwg.mxu0
        %v6945 = vsel %vm435, %v6831, 0
        %v6948 = vsel %vm500, %v6832, 0
        %6950 = vmatprep.subr.mxu0 0.0
        %6951 = vmatpush1.msra.mxu0 %v6948
        %6952 = vmatprep.subr.mxu0 0.0
        %6953 = vmatpush1.msra.mxu0 0.0
        %6954 = vmatprep.subr.mxu0 0.0
        %6955 = vmatpush1.msra.mxu0 0.0
        %6956 = vmatprep.subr.mxu0 0.0
        %6957 = vmatpush1.msra.mxu0 0.0
        %6958 = vmatprep.subr.mxu0 0.0
        %6959 = vmatpush1.msra.mxu0 0.0
        %6960 = vmatprep.subr.mxu0 0.0
        %6961 = vmatpush1.msra.mxu0 0.0
        %6962 = vmatprep.subr.mxu0 0.0
        %6963 = vmatpush1.msra.mxu0 0.0
        %6964 = vmatprep.subr.mxu0 0.0
        %6965 = vmatpush1.msra.mxu0 0.0
        %6966 = vmatprep.subr.mxu0 0.0
        %6967 = vmatpush1.msra.mxu0 0.0
        %6968 = vmatprep.subr.mxu0 0.0
        %6969 = vmatpush1.msra.mxu0 0.0
        %6970 = vmatprep.subr.mxu0 0.0
        %6971 = vmatpush1.msra.mxu0 0.0
        %6972 = vmatprep.subr.mxu0 0.0
        %6973 = vmatpush1.msra.mxu0 0.0
        %6974 = vmatprep.subr.mxu0 0.0
        %6975 = vmatpush1.msra.mxu0 0.0
        %6976 = vmatprep.subr.mxu0 0.0
        %6977 = vmatpush1.msra.mxu0 0.0
        %6978 = vmatprep.subr.mxu0 0.0
        %6979 = vmatpush1.msra.mxu0 0.0
        %6980 = vmatprep.subr.mxu0 0.0
        %6981 = vmatpush1.msra.mxu0 0.0
        %6982 = vmatprep.subr.mxu0 0.0
        %6983 = vmatpush1.msra.mxu0 0.0
        %6984 = vmatprep.subr.mxu0 0.0
        %6985 = vmatpush1.msra.mxu0 0.0
        %6986 = vmatprep.subr.mxu0 0.0
        %6987 = vmatpush1.msra.mxu0 0.0
        %6988 = vmatprep.subr.mxu0 0.0
        %6989 = vmatpush1.msra.mxu0 0.0
        %6990 = vmatprep.subr.mxu0 0.0
        %6991 = vmatpush1.msra.mxu0 0.0
        %6992 = vmatprep.subr.mxu0 0.0
        %6993 = vmatpush1.msra.mxu0 0.0
        %6994 = vmatprep.subr.mxu0 0.0
        %6995 = vmatpush1.msra.mxu0 0.0
        %6996 = vmatprep.subr.mxu0 0.0
        %6997 = vmatpush1.msra.mxu0 0.0
        %6998 = vmatprep.subr.mxu0 0.0
        %6999 = vmatpush1.msra.mxu0 0.0
        %7000 = vmatprep.subr.mxu0 0.0
        %7001 = vmatpush1.msra.mxu0 0.0
        %7002 = vmatprep.subr.mxu0 0.0
        %7003 = vmatpush1.msra.mxu0 0.0
        %7004 = vmatprep.subr.mxu0 0.0
        %7005 = vmatpush1.msra.mxu0 0.0
        %7006 = vmatprep.subr.mxu0 0.0
        %7007 = vmatpush1.msra.mxu0 0.0
        %7008 = vmatprep.subr.mxu0 0.0
        %7009 = vmatpush1.msra.mxu0 0.0
        %7010 = vmatprep.subr.mxu0 0.0
        %7011 = vmatpush1.msra.mxu0 0.0
        %7012 = vmatprep.subr.mxu0 0.0
        %7013 = vmatpush1.msra.mxu0 0.0
        %7014 = vmatprep.mubr.f32.mxu0 0.0
        %7015 = vmatmul.mubr.f32.gmra.mrb[0].mxu0 %v6945
        %v7016 = vpop.f32.mrb[0].mxu0
        %v7017 = vadd.f32 %v6941, %v7016
        %v7018 = vpop.f32.mrb[0].mxu0
        %7019 = vdwg.mxu0
        %vm7020 = vcmask 31746
        %v7021 = vsel %vm7020, %v6782, -inf
        %v7022 = vsel %vm7020, %v6784, -inf
        %v7023 = vsel %vm7020, %v6786, -inf
        %v7024 = vsel %vm7020, %v6788, -inf
        %v7025 = vsel %vm7020, %v6790, -inf
        %v7026 = vmax.f32 %v7021, %v7025
        %v7027 = vsel %vm7020, %v6792, -inf
        %v7028 = vmax.f32 %v7022, %v7027
        %v7029 = vmax.f32 %v7026, %v7028
        %v7030 = vmax.f32 %v7023, %v7024
        %v7031 = vmax.f32 %v7029, %v7030
        %v7032 = vsel %vm7020, %v7031, -inf
        %v7033 = vrot.slane %v7032, 4
        %v7034 = vmax.f32 %v7032, %v7033
        %v7035 = vrot.slane %v7034, 2
        %v7036 = vmax.f32 %v7034, %v7035
        %v7037 = vrot.slane %v7036, 1
        %v7038 = vmax.f32 %v7036, %v7037
        %s7039 = scalar_lea.vmem %s3, 8
        %v7040 = vld [vmem:[%s7039] sm:$0xf]
        %v7042 = vsel %vm435, %v7038, 0
        %v7045 = vsel %vm500, %v7040, 0
        %7047 = vmatprep.subr.mxu0 0.0
        %7048 = vmatpush1.msra.mxu0 %v7045
        %7049 = vmatprep.subr.mxu0 0.0
        %7050 = vmatpush1.msra.mxu0 0.0
        %7051 = vmatprep.subr.mxu0 0.0
        %7052 = vmatpush1.msra.mxu0 0.0
        %7053 = vmatprep.subr.mxu0 0.0
        %7054 = vmatpush1.msra.mxu0 0.0
        %7055 = vmatprep.subr.mxu0 0.0
        %7056 = vmatpush1.msra.mxu0 0.0
        %7057 = vmatprep.subr.mxu0 0.0
        %7058 = vmatpush1.msra.mxu0 0.0
        %7059 = vmatprep.subr.mxu0 0.0
        %7060 = vmatpush1.msra.mxu0 0.0
        %7061 = vmatprep.subr.mxu0 0.0
        %7062 = vmatpush1.msra.mxu0 0.0
        %7063 = vmatprep.subr.mxu0 0.0
        %7064 = vmatpush1.msra.mxu0 0.0
        %7065 = vmatprep.subr.mxu0 0.0
        %7066 = vmatpush1.msra.mxu0 0.0
        %7067 = vmatprep.subr.mxu0 0.0
        %7068 = vmatpush1.msra.mxu0 0.0
        %7069 = vmatprep.subr.mxu0 0.0
        %7070 = vmatpush1.msra.mxu0 0.0
        %7071 = vmatprep.subr.mxu0 0.0
        %7072 = vmatpush1.msra.mxu0 0.0
        %7073 = vmatprep.subr.mxu0 0.0
        %7074 = vmatpush1.msra.mxu0 0.0
        %7075 = vmatprep.subr.mxu0 0.0
        %7076 = vmatpush1.msra.mxu0 0.0
        %7077 = vmatprep.subr.mxu0 0.0
        %7078 = vmatpush1.msra.mxu0 0.0
        %7079 = vmatprep.subr.mxu0 0.0
        %7080 = vmatpush1.msra.mxu0 0.0
        %7081 = vmatprep.subr.mxu0 0.0
        %7082 = vmatpush1.msra.mxu0 0.0
        %7083 = vmatprep.subr.mxu0 0.0
        %7084 = vmatpush1.msra.mxu0 0.0
        %7085 = vmatprep.subr.mxu0 0.0
        %7086 = vmatpush1.msra.mxu0 0.0
        %7087 = vmatprep.subr.mxu0 0.0
        %7088 = vmatpush1.msra.mxu0 0.0
        %7089 = vmatprep.subr.mxu0 0.0
        %7090 = vmatpush1.msra.mxu0 0.0
        %7091 = vmatprep.subr.mxu0 0.0
        %7092 = vmatpush1.msra.mxu0 0.0
        %7093 = vmatprep.subr.mxu0 0.0
        %7094 = vmatpush1.msra.mxu0 0.0
        %7095 = vmatprep.subr.mxu0 0.0
        %7096 = vmatpush1.msra.mxu0 0.0
        %7097 = vmatprep.subr.mxu0 0.0
        %7098 = vmatpush1.msra.mxu0 0.0
        %7099 = vmatprep.subr.mxu0 0.0
        %7100 = vmatpush1.msra.mxu0 0.0
        %7101 = vmatprep.subr.mxu0 0.0
        %7102 = vmatpush1.msra.mxu0 0.0
        %7103 = vmatprep.subr.mxu0 0.0
        %7104 = vmatpush1.msra.mxu0 0.0
        %7105 = vmatprep.subr.mxu0 0.0
        %7106 = vmatpush1.msra.mxu0 0.0
        %7107 = vmatprep.subr.mxu0 0.0
        %7108 = vmatpush1.msra.mxu0 0.0
        %7109 = vmatprep.subr.mxu0 0.0
        %7110 = vmatpush1.msra.mxu0 0.0
        %7111 = vmatprep.mubr.f32.mxu0 0.0
        %7112 = vmatmul.mubr.f32.gmra.mrb[0].mxu0 %v7042
        %v7113 = vpop.f32.mrb[0].mxu0
        %v7114 = vadd.f32 0.0, %v7113
        %v7115 = vpop.f32.mrb[0].mxu0
        %7116 = vdwg.mxu0
        %v7117 = vadd.f32 %v7017, %v7114
        %v7118 = vsel %vm6813, %v6793, -inf
        %v7119 = vsel %vm6813, %v6795, -inf
        %v7120 = vsel %vm6813, %v6797, -inf
        %v7121 = vsel %vm6813, %v6799, -inf
        %v7122 = vmax.f32 %v6820, %v7121
        %v7123 = vsel %vm6813, %v6801, -inf
        %v7124 = vmax.f32 %v7118, %v7123
        %v7125 = vmax.f32 %v7122, %v7124
        %v7126 = vmax.f32 %v7119, %v7120
        %v7127 = vmax.f32 %v7125, %v7126
        %v7128 = vsel %vm6813, %v7127, -inf
        %v7129 = vrot.slane %v7128, 4
        %v7130 = vmax.f32 %v7128, %v7129
        %v7131 = vrot.slane %v7130, 2
        %v7132 = vmax.f32 %v7130, %v7131
        %v7133 = vrot.slane %v7132, 1
        %v7134 = vmax.f32 %v7132, %v7133
        %s7135 = scalar_lea.vmem %s3, 12
        %v7136 = vld [vmem:[%s7135] sm:$0xf]
        %v7138 = vsel %vm435, %v7134, 0
        %v7141 = vsel %vm500, %v7136, 0
        %7143 = vmatprep.subr.mxu0 0.0
        %7144 = vmatpush1.msra.mxu0 %v7141
        %7145 = vmatprep.subr.mxu0 0.0
        %7146 = vmatpush1.msra.mxu0 0.0
        %7147 = vmatprep.subr.mxu0 0.0
        %7148 = vmatpush1.msra.mxu0 0.0
        %7149 = vmatprep.subr.mxu0 0.0
        %7150 = vmatpush1.msra.mxu0 0.0
        %7151 = vmatprep.subr.mxu0 0.0
        %7152 = vmatpush1.msra.mxu0 0.0
        %7153 = vmatprep.subr.mxu0 0.0
        %7154 = vmatpush1.msra.mxu0 0.0
        %7155 = vmatprep.subr.mxu0 0.0
        %7156 = vmatpush1.msra.mxu0 0.0
        %7157 = vmatprep.subr.mxu0 0.0
        %7158 = vmatpush1.msra.mxu0 0.0
        %7159 = vmatprep.subr.mxu0 0.0
        %7160 = vmatpush1.msra.mxu0 0.0
        %7161 = vmatprep.subr.mxu0 0.0
        %7162 = vmatpush1.msra.mxu0 0.0
        %7163 = vmatprep.subr.mxu0 0.0
        %7164 = vmatpush1.msra.mxu0 0.0
        %7165 = vmatprep.subr.mxu0 0.0
        %7166 = vmatpush1.msra.mxu0 0.0
        %7167 = vmatprep.subr.mxu0 0.0
        %7168 = vmatpush1.msra.mxu0 0.0
        %7169 = vmatprep.subr.mxu0 0.0
        %7170 = vmatpush1.msra.mxu0 0.0
        %7171 = vmatprep.subr.mxu0 0.0
        %7172 = vmatpush1.msra.mxu0 0.0
        %7173 = vmatprep.subr.mxu0 0.0
        %7174 = vmatpush1.msra.mxu0 0.0
        %7175 = vmatprep.subr.mxu0 0.0
        %7176 = vmatpush1.msra.mxu0 0.0
        %7177 = vmatprep.subr.mxu0 0.0
        %7178 = vmatpush1.msra.mxu0 0.0
        %7179 = vmatprep.subr.mxu0 0.0
        %7180 = vmatpush1.msra.mxu0 0.0
        %7181 = vmatprep.subr.mxu0 0.0
        %7182 = vmatpush1.msra.mxu0 0.0
        %7183 = vmatprep.subr.mxu0 0.0
        %7184 = vmatpush1.msra.mxu0 0.0
        %7185 = vmatprep.subr.mxu0 0.0
        %7186 = vmatpush1.msra.mxu0 0.0
        %7187 = vmatprep.subr.mxu0 0.0
        %7188 = vmatpush1.msra.mxu0 0.0
        %7189 = vmatprep.subr.mxu0 0.0
        %7190 = vmatpush1.msra.mxu0 0.0
        %7191 = vmatprep.subr.mxu0 0.0
        %7192 = vmatpush1.msra.mxu0 0.0
        %7193 = vmatprep.subr.mxu0 0.0
        %7194 = vmatpush1.msra.mxu0 0.0
        %7195 = vmatprep.subr.mxu0 0.0
        %7196 = vmatpush1.msra.mxu0 0.0
        %7197 = vmatprep.subr.mxu0 0.0
        %7198 = vmatpush1.msra.mxu0 0.0
        %7199 = vmatprep.subr.mxu0 0.0
        %7200 = vmatpush1.msra.mxu0 0.0
        %7201 = vmatprep.subr.mxu0 0.0
        %7202 = vmatpush1.msra.mxu0 0.0
        %7203 = vmatprep.subr.mxu0 0.0
        %7204 = vmatpush1.msra.mxu0 0.0
        %7205 = vmatprep.subr.mxu0 0.0
        %7206 = vmatpush1.msra.mxu0 0.0
        %7207 = vmatprep.mubr.f32.mxu0 0.0
        %7208 = vmatmul.mubr.f32.gmra.mrb[0].mxu0 %v7138
        %v7209 = vpop.f32.mrb[0].mxu0
        %v7210 = vadd.f32 0.0, %v7209
        %v7211 = vpop.f32.mrb[0].mxu0
        %7212 = vdwg.mxu0
        %v7213 = vadd.f32 %v7117, %v7210
        %v7214 = vsel %vm6833, %v6793, -inf
        %v7215 = vsel %vm6833, %v6795, -inf
        %v7216 = vmax.f32 %v6842, %v7215
        %v7217 = vsel %vm6833, %v6797, -inf
        %v7218 = vmax.f32 %v7214, %v7217
        %v7219 = vsel %vm6833, %v6799, -inf
        %v7220 = vmax.f32 %v7216, %v7219
        %v7221 = vsel %vm6833, %v6801, -inf
        %v7222 = vmax.f32 %v7218, %v7221
        %v7223 = vmax.f32 %v7220, %v7222
        %v7224 = vsel %vm6845, %v6794, -inf
        %v7225 = vsel %vm6845, %v6796, -inf
        %v7226 = vmax.f32 %v6854, %v7225
        %v7227 = vsel %vm6845, %v6798, -inf
        %v7228 = vmax.f32 %v7224, %v7227
        %v7229 = vsel %vm6845, %v6800, -inf
        %v7230 = vmax.f32 %v7226, %v7229
        %v7231 = vsel %vm6845, %v6802, -inf
        %v7232 = vmax.f32 %v7228, %v7231
        %v7233 = vmax.f32 %v7230, %v7232
        %v7234 = vsel %vm6833, %v7223, -inf
        %v7235 = vsel %vm6845, %v7233, -inf
        %v7236 = vmax.f32 %v7234, %v7235
        %v7237 = vrot.slane %v7236, 4
        %v7238 = vmax.f32 %v7236, %v7237
        %v7239 = vrot.slane %v7238, 2
        %v7240 = vmax.f32 %v7238, %v7239
        %v7241 = vrot.slane %v7240, 1
        %v7242 = vmax.f32 %v7240, %v7241
        %s7243 = scalar_lea.vmem %s3, 16
        %v7244 = vld [vmem:[%s7243] sm:$0xf]
        %v7246 = vsel %vm435, %v7242, 0
        %v7249 = vsel %vm500, %v7244, 0
        %7251 = vmatprep.subr.mxu0 0.0
        %7252 = vmatpush1.msra.mxu0 %v7249
        %7253 = vmatprep.subr.mxu0 0.0
        %7254 = vmatpush1.msra.mxu0 0.0
        %7255 = vmatprep.subr.mxu0 0.0
        %7256 = vmatpush1.msra.mxu0 0.0
        %7257 = vmatprep.subr.mxu0 0.0
        %7258 = vmatpush1.msra.mxu0 0.0
        %7259 = vmatprep.subr.mxu0 0.0
        %7260 = vmatpush1.msra.mxu0 0.0
        %7261 = vmatprep.subr.mxu0 0.0
        %7262 = vmatpush1.msra.mxu0 0.0
        %7263 = vmatprep.subr.mxu0 0.0
        %7264 = vmatpush1.msra.mxu0 0.0
        %7265 = vmatprep.subr.mxu0 0.0
        %7266 = vmatpush1.msra.mxu0 0.0
        %7267 = vmatprep.subr.mxu0 0.0
        %7268 = vmatpush1.msra.mxu0 0.0
        %7269 = vmatprep.subr.mxu0 0.0
        %7270 = vmatpush1.msra.mxu0 0.0
        %7271 = vmatprep.subr.mxu0 0.0
        %7272 = vmatpush1.msra.mxu0 0.0
        %7273 = vmatprep.subr.mxu0 0.0
        %7274 = vmatpush1.msra.mxu0 0.0
        %7275 = vmatprep.subr.mxu0 0.0
        %7276 = vmatpush1.msra.mxu0 0.0
        %7277 = vmatprep.subr.mxu0 0.0
        %7278 = vmatpush1.msra.mxu0 0.0
        %7279 = vmatprep.subr.mxu0 0.0
        %7280 = vmatpush1.msra.mxu0 0.0
        %7281 = vmatprep.subr.mxu0 0.0
        %7282 = vmatpush1.msra.mxu0 0.0
        %7283 = vmatprep.subr.mxu0 0.0
        %7284 = vmatpush1.msra.mxu0 0.0
        %7285 = vmatprep.subr.mxu0 0.0
        %7286 = vmatpush1.msra.mxu0 0.0
        %7287 = vmatprep.subr.mxu0 0.0
        %7288 = vmatpush1.msra.mxu0 0.0
        %7289 = vmatprep.subr.mxu0 0.0
        %7290 = vmatpush1.msra.mxu0 0.0
        %7291 = vmatprep.subr.mxu0 0.0
        %7292 = vmatpush1.msra.mxu0 0.0
        %7293 = vmatprep.subr.mxu0 0.0
        %7294 = vmatpush1.msra.mxu0 0.0
        %7295 = vmatprep.subr.mxu0 0.0
        %7296 = vmatpush1.msra.mxu0 0.0
        %7297 = vmatprep.subr.mxu0 0.0
        %7298 = vmatpush1.msra.mxu0 0.0
        %7299 = vmatprep.subr.mxu0 0.0
        %7300 = vmatpush1.msra.mxu0 0.0
        %7301 = vmatprep.subr.mxu0 0.0
        %7302 = vmatpush1.msra.mxu0 0.0
        %7303 = vmatprep.subr.mxu0 0.0
        %7304 = vmatpush1.msra.mxu0 0.0
        %7305 = vmatprep.subr.mxu0 0.0
        %7306 = vmatpush1.msra.mxu0 0.0
        %7307 = vmatprep.subr.mxu0 0.0
        %7308 = vmatpush1.msra.mxu0 0.0
        %7309 = vmatprep.subr.mxu0 0.0
        %7310 = vmatpush1.msra.mxu0 0.0
        %7311 = vmatprep.subr.mxu0 0.0
        %7312 = vmatpush1.msra.mxu0 0.0
        %7313 = vmatprep.subr.mxu0 0.0
        %7314 = vmatpush1.msra.mxu0 0.0
        %7315 = vmatprep.mubr.f32.mxu0 0.0
        %7316 = vmatmul.mubr.f32.gmra.mrb[0].mxu0 %v7246
        %v7317 = vpop.f32.mrb[0].mxu0
        %v7318 = vadd.f32 0.0, %v7317
        %v7319 = vpop.f32.mrb[0].mxu0
        %7320 = vdwg.mxu0
        %v7321 = vadd.f32 %v7213, %v7318
        %v7322 = vsel %vm7020, %v6794, -inf
        %v7323 = vsel %vm7020, %v6796, -inf
        %v7324 = vsel %vm7020, %v6798, -inf
        %v7325 = vsel %vm7020, %v6800, -inf
        %v7326 = vmax.f32 %v7027, %v7325
        %v7327 = vsel %vm7020, %v6802, -inf
        %v7328 = vmax.f32 %v7322, %v7327
        %v7329 = vmax.f32 %v7326, %v7328
        %v7330 = vmax.f32 %v7323, %v7324
        %v7331 = vmax.f32 %v7329, %v7330
        %v7332 = vsel %vm7020, %v7331, -inf
        %v7333 = vrot.slane %v7332, 4
        %v7334 = vmax.f32 %v7332, %v7333
        %v7335 = vrot.slane %v7334, 2
        %v7336 = vmax.f32 %v7334, %v7335
        %v7337 = vrot.slane %v7336, 1
        %v7338 = vmax.f32 %v7336, %v7337
        %s7339 = scalar_lea.vmem %s3, 20
        %v7340 = vld [vmem:[%s7339] sm:$0xf]
        %v7342 = vsel %vm435, %v7338, 0
        %v7345 = vsel %vm500, %v7340, 0
        %7347 = vmatprep.subr.mxu0 0.0
        %7348 = vmatpush1.msra.mxu0 %v7345
        %7349 = vmatprep.subr.mxu0 0.0
        %7350 = vmatpush1.msra.mxu0 0.0
        %7351 = vmatprep.subr.mxu0 0.0
        %7352 = vmatpush1.msra.mxu0 0.0
        %7353 = vmatprep.subr.mxu0 0.0
        %7354 = vmatpush1.msra.mxu0 0.0
        %7355 = vmatprep.subr.mxu0 0.0
        %7356 = vmatpush1.msra.mxu0 0.0
        %7357 = vmatprep.subr.mxu0 0.0
        %7358 = vmatpush1.msra.mxu0 0.0
        %7359 = vmatprep.subr.mxu0 0.0
        %7360 = vmatpush1.msra.mxu0 0.0
        %7361 = vmatprep.subr.mxu0 0.0
        %7362 = vmatpush1.msra.mxu0 0.0
        %7363 = vmatprep.subr.mxu0 0.0
        %7364 = vmatpush1.msra.mxu0 0.0
        %7365 = vmatprep.subr.mxu0 0.0
        %7366 = vmatpush1.msra.mxu0 0.0
        %7367 = vmatprep.subr.mxu0 0.0
        %7368 = vmatpush1.msra.mxu0 0.0
        %7369 = vmatprep.subr.mxu0 0.0
        %7370 = vmatpush1.msra.mxu0 0.0
        %7371 = vmatprep.subr.mxu0 0.0
        %7372 = vmatpush1.msra.mxu0 0.0
        %7373 = vmatprep.subr.mxu0 0.0
        %7374 = vmatpush1.msra.mxu0 0.0
        %7375 = vmatprep.subr.mxu0 0.0
        %7376 = vmatpush1.msra.mxu0 0.0
        %7377 = vmatprep.subr.mxu0 0.0
        %7378 = vmatpush1.msra.mxu0 0.0
        %7379 = vmatprep.subr.mxu0 0.0
        %7380 = vmatpush1.msra.mxu0 0.0
        %7381 = vmatprep.subr.mxu0 0.0
        %7382 = vmatpush1.msra.mxu0 0.0
        %7383 = vmatprep.subr.mxu0 0.0
        %7384 = vmatpush1.msra.mxu0 0.0
        %7385 = vmatprep.subr.mxu0 0.0
        %7386 = vmatpush1.msra.mxu0 0.0
        %7387 = vmatprep.subr.mxu0 0.0
        %7388 = vmatpush1.msra.mxu0 0.0
        %7389 = vmatprep.subr.mxu0 0.0
        %7390 = vmatpush1.msra.mxu0 0.0
        %7391 = vmatprep.subr.mxu0 0.0
        %7392 = vmatpush1.msra.mxu0 0.0
        %7393 = vmatprep.subr.mxu0 0.0
        %7394 = vmatpush1.msra.mxu0 0.0
        %7395 = vmatprep.subr.mxu0 0.0
        %7396 = vmatpush1.msra.mxu0 0.0
        %7397 = vmatprep.subr.mxu0 0.0
        %7398 = vmatpush1.msra.mxu0 0.0
        %7399 = vmatprep.subr.mxu0 0.0
        %7400 = vmatpush1.msra.mxu0 0.0
        %7401 = vmatprep.subr.mxu0 0.0
        %7402 = vmatpush1.msra.mxu0 0.0
        %7403 = vmatprep.subr.mxu0 0.0
        %7404 = vmatpush1.msra.mxu0 0.0
        %7405 = vmatprep.subr.mxu0 0.0
        %7406 = vmatpush1.msra.mxu0 0.0
        %7407 = vmatprep.subr.mxu0 0.0
        %7408 = vmatpush1.msra.mxu0 0.0
        %7409 = vmatprep.subr.mxu0 0.0
        %7410 = vmatpush1.msra.mxu0 0.0
        %7411 = vmatprep.mubr.f32.mxu0 0.0
        %7412 = vmatmul.mubr.f32.gmra.mrb[0].mxu0 %v7342
        %v7413 = vpop.f32.mrb[0].mxu0
        %v7414 = vadd.f32 0.0, %v7413
        %v7415 = vpop.f32.mrb[0].mxu0
        %7416 = vdwg.mxu0
        %v7417 = vadd.f32 %v7321, %v7414
        %v7418 = vsel %vm6813, %v6803, -inf
        %v7419 = vsel %vm6813, %v6805, -inf
        %v7420 = vsel %vm6813, %v6807, -inf
        %v7421 = vsel %vm6813, %v6809, -inf
        %v7422 = vmax.f32 %v7123, %v7421
        %v7423 = vsel %vm6813, %v6811, -inf
        %v7424 = vmax.f32 %v7418, %v7423
        %v7425 = vmax.f32 %v7422, %v7424
        %v7426 = vmax.f32 %v7419, %v7420
        %v7427 = vmax.f32 %v7425, %v7426
        %v7428 = vsel %vm6813, %v7427, -inf
        %v7429 = vrot.slane %v7428, 4
        %v7430 = vmax.f32 %v7428, %v7429
        %v7431 = vrot.slane %v7430, 2
        %v7432 = vmax.f32 %v7430, %v7431
        %v7433 = vrot.slane %v7432, 1
        %v7434 = vmax.f32 %v7432, %v7433
        %s7435 = scalar_lea.vmem %s3, 24
        %v7436 = vld [vmem:[%s7435] sm:$0xf]
        %v7438 = vsel %vm435, %v7434, 0
        %v7441 = vsel %vm500, %v7436, 0
        %7443 = vmatprep.subr.mxu0 0.0
        %7444 = vmatpush1.msra.mxu0 %v7441
        %7445 = vmatprep.subr.mxu0 0.0
        %7446 = vmatpush1.msra.mxu0 0.0
        %7447 = vmatprep.subr.mxu0 0.0
        %7448 = vmatpush1.msra.mxu0 0.0
        %7449 = vmatprep.subr.mxu0 0.0
        %7450 = vmatpush1.msra.mxu0 0.0
        %7451 = vmatprep.subr.mxu0 0.0
        %7452 = vmatpush1.msra.mxu0 0.0
        %7453 = vmatprep.subr.mxu0 0.0
        %7454 = vmatpush1.msra.mxu0 0.0
        %7455 = vmatprep.subr.mxu0 0.0
        %7456 = vmatpush1.msra.mxu0 0.0
        %7457 = vmatprep.subr.mxu0 0.0
        %7458 = vmatpush1.msra.mxu0 0.0
        %7459 = vmatprep.subr.mxu0 0.0
        %7460 = vmatpush1.msra.mxu0 0.0
        %7461 = vmatprep.subr.mxu0 0.0
        %7462 = vmatpush1.msra.mxu0 0.0
        %7463 = vmatprep.subr.mxu0 0.0
        %7464 = vmatpush1.msra.mxu0 0.0
        %7465 = vmatprep.subr.mxu0 0.0
        %7466 = vmatpush1.msra.mxu0 0.0
        %7467 = vmatprep.subr.mxu0 0.0
        %7468 = vmatpush1.msra.mxu0 0.0
        %7469 = vmatprep.subr.mxu0 0.0
        %7470 = vmatpush1.msra.mxu0 0.0
        %7471 = vmatprep.subr.mxu0 0.0
        %7472 = vmatpush1.msra.mxu0 0.0
        %7473 = vmatprep.subr.mxu0 0.0
        %7474 = vmatpush1.msra.mxu0 0.0
        %7475 = vmatprep.subr.mxu0 0.0
        %7476 = vmatpush1.msra.mxu0 0.0
        %7477 = vmatprep.subr.mxu0 0.0
        %7478 = vmatpush1.msra.mxu0 0.0
        %7479 = vmatprep.subr.mxu0 0.0
        %7480 = vmatpush1.msra.mxu0 0.0
        %7481 = vmatprep.subr.mxu0 0.0
        %7482 = vmatpush1.msra.mxu0 0.0
        %7483 = vmatprep.subr.mxu0 0.0
        %7484 = vmatpush1.msra.mxu0 0.0
        %7485 = vmatprep.subr.mxu0 0.0
        %7486 = vmatpush1.msra.mxu0 0.0
        %7487 = vmatprep.subr.mxu0 0.0
        %7488 = vmatpush1.msra.mxu0 0.0
        %7489 = vmatprep.subr.mxu0 0.0
        %7490 = vmatpush1.msra.mxu0 0.0
        %7491 = vmatprep.subr.mxu0 0.0
        %7492 = vmatpush1.msra.mxu0 0.0
        %7493 = vmatprep.subr.mxu0 0.0
        %7494 = vmatpush1.msra.mxu0 0.0
        %7495 = vmatprep.subr.mxu0 0.0
        %7496 = vmatpush1.msra.mxu0 0.0
        %7497 = vmatprep.subr.mxu0 0.0
        %7498 = vmatpush1.msra.mxu0 0.0
        %7499 = vmatprep.subr.mxu0 0.0
        %7500 = vmatpush1.msra.mxu0 0.0
        %7501 = vmatprep.subr.mxu0 0.0
        %7502 = vmatpush1.msra.mxu0 0.0
        %7503 = vmatprep.subr.mxu0 0.0
        %7504 = vmatpush1.msra.mxu0 0.0
        %7505 = vmatprep.subr.mxu0 0.0
        %7506 = vmatpush1.msra.mxu0 0.0
        %7507 = vmatprep.mubr.f32.mxu0 0.0
        %7508 = vmatmul.mubr.f32.gmra.mrb[0].mxu0 %v7438
        %v7509 = vpop.f32.mrb[0].mxu0
        %v7510 = vadd.f32 0.0, %v7509
        %v7511 = vpop.f32.mrb[0].mxu0
        %7512 = vdwg.mxu0
        %v7513 = vadd.f32 %v7417, %v7510
        %v7514 = vsel %vm6833, %v6803, -inf
        %v7515 = vsel %vm6833, %v6805, -inf
        %v7516 = vmax.f32 %v7221, %v7515
        %v7517 = vsel %vm6833, %v6807, -inf
        %v7518 = vmax.f32 %v7514, %v7517
        %v7519 = vsel %vm6833, %v6809, -inf
        %v7520 = vmax.f32 %v7516, %v7519
        %v7521 = vsel %vm6833, %v6811, -inf
        %v7522 = vmax.f32 %v7518, %v7521
        %v7523 = vmax.f32 %v7520, %v7522
        %v7524 = vsel %vm6845, %v6804, -inf
        %v7525 = vsel %vm6845, %v6806, -inf
        %v7526 = vmax.f32 %v7231, %v7525
        %v7527 = vsel %vm6845, %v6808, -inf
        %v7528 = vmax.f32 %v7524, %v7527
        %v7529 = vsel %vm6845, %v6810, -inf
        %v7530 = vmax.f32 %v7526, %v7529
        %v7531 = vsel %vm6845, %v6812, -inf
        %v7532 = vmax.f32 %v7528, %v7531
        %v7533 = vmax.f32 %v7530, %v7532
        %v7534 = vsel %vm6833, %v7523, -inf
        %v7535 = vsel %vm6845, %v7533, -inf
        %v7536 = vmax.f32 %v7534, %v7535
        %v7537 = vrot.slane %v7536, 4
        %v7538 = vmax.f32 %v7536, %v7537
        %v7539 = vrot.slane %v7538, 2
        %v7540 = vmax.f32 %v7538, %v7539
        %v7541 = vrot.slane %v7540, 1
        %v7542 = vmax.f32 %v7540, %v7541
        %s7543 = scalar_lea.vmem %s3, 28
        %v7544 = vld [vmem:[%s7543] sm:$0xf]
        %v7546 = vsel %vm435, %v7542, 0
        %v7549 = vsel %vm500, %v7544, 0
        %7551 = vmatprep.subr.mxu0 0.0
        %7552 = vmatpush1.msra.mxu0 %v7549
        %7553 = vmatprep.subr.mxu0 0.0
        %7554 = vmatpush1.msra.mxu0 0.0
        %7555 = vmatprep.subr.mxu0 0.0
        %7556 = vmatpush1.msra.mxu0 0.0
        %7557 = vmatprep.subr.mxu0 0.0
        %7558 = vmatpush1.msra.mxu0 0.0
        %7559 = vmatprep.subr.mxu0 0.0
        %7560 = vmatpush1.msra.mxu0 0.0
        %7561 = vmatprep.subr.mxu0 0.0
        %7562 = vmatpush1.msra.mxu0 0.0
        %7563 = vmatprep.subr.mxu0 0.0
        %7564 = vmatpush1.msra.mxu0 0.0
        %7565 = vmatprep.subr.mxu0 0.0
        %7566 = vmatpush1.msra.mxu0 0.0
        %7567 = vmatprep.subr.mxu0 0.0
        %7568 = vmatpush1.msra.mxu0 0.0
        %7569 = vmatprep.subr.mxu0 0.0
        %7570 = vmatpush1.msra.mxu0 0.0
        %7571 = vmatprep.subr.mxu0 0.0
        %7572 = vmatpush1.msra.mxu0 0.0
        %7573 = vmatprep.subr.mxu0 0.0
        %7574 = vmatpush1.msra.mxu0 0.0
        %7575 = vmatprep.subr.mxu0 0.0
        %7576 = vmatpush1.msra.mxu0 0.0
        %7577 = vmatprep.subr.mxu0 0.0
        %7578 = vmatpush1.msra.mxu0 0.0
        %7579 = vmatprep.subr.mxu0 0.0
        %7580 = vmatpush1.msra.mxu0 0.0
        %7581 = vmatprep.subr.mxu0 0.0
        %7582 = vmatpush1.msra.mxu0 0.0
        %7583 = vmatprep.subr.mxu0 0.0
        %7584 = vmatpush1.msra.mxu0 0.0
        %7585 = vmatprep.subr.mxu0 0.0
        %7586 = vmatpush1.msra.mxu0 0.0
        %7587 = vmatprep.subr.mxu0 0.0
        %7588 = vmatpush1.msra.mxu0 0.0
        %7589 = vmatprep.subr.mxu0 0.0
        %7590 = vmatpush1.msra.mxu0 0.0
        %7591 = vmatprep.subr.mxu0 0.0
        %7592 = vmatpush1.msra.mxu0 0.0
        %7593 = vmatprep.subr.mxu0 0.0
        %7594 = vmatpush1.msra.mxu0 0.0
        %7595 = vmatprep.subr.mxu0 0.0
        %7596 = vmatpush1.msra.mxu0 0.0
        %7597 = vmatprep.subr.mxu0 0.0
        %7598 = vmatpush1.msra.mxu0 0.0
        %7599 = vmatprep.subr.mxu0 0.0
        %7600 = vmatpush1.msra.mxu0 0.0
        %7601 = vmatprep.subr.mxu0 0.0
        %7602 = vmatpush1.msra.mxu0 0.0
        %7603 = vmatprep.subr.mxu0 0.0
        %7604 = vmatpush1.msra.mxu0 0.0
        %7605 = vmatprep.subr.mxu0 0.0
        %7606 = vmatpush1.msra.mxu0 0.0
        %7607 = vmatprep.subr.mxu0 0.0
        %7608 = vmatpush1.msra.mxu0 0.0
        %7609 = vmatprep.subr.mxu0 0.0
        %7610 = vmatpush1.msra.mxu0 0.0
        %7611 = vmatprep.subr.mxu0 0.0
        %7612 = vmatpush1.msra.mxu0 0.0
        %7613 = vmatprep.subr.mxu0 0.0
        %7614 = vmatpush1.msra.mxu0 0.0
        %7615 = vmatprep.mubr.f32.mxu0 0.0
        %7616 = vmatmul.mubr.f32.gmra.mrb[0].mxu0 %v7546
        %v7617 = vpop.f32.mrb[0].mxu0
        %v7618 = vadd.f32 0.0, %v7617
        %v7619 = vpop.f32.mrb[0].mxu0
        %7620 = vdwg.mxu0
        %v7621 = vadd.f32 %v7513, %v7618
        %v7622 = vsel %vm7020, %v6804, -inf
        %v7623 = vsel %vm7020, %v6806, -inf
        %v7624 = vsel %vm7020, %v6808, -inf
        %v7625 = vsel %vm7020, %v6810, -inf
        %v7626 = vmax.f32 %v7327, %v7625
        %v7627 = vsel %vm7020, %v6812, -inf
        %v7628 = vmax.f32 %v7622, %v7627
        %v7629 = vmax.f32 %v7626, %v7628
        %v7630 = vmax.f32 %v7623, %v7624
        %v7631 = vmax.f32 %v7629, %v7630
        %v7632 = vsel %vm7020, %v7631, -inf
        %v7633 = vrot.slane %v7632, 4
        %v7634 = vmax.f32 %v7632, %v7633
        %v7635 = vrot.slane %v7634, 2
        %v7636 = vmax.f32 %v7634, %v7635
        %v7637 = vrot.slane %v7636, 1
        %v7638 = vmax.f32 %v7636, %v7637
        %s7639 = scalar_lea.vmem %s3, 32
        %v7640 = vld [vmem:[%s7639] sm:$0xf]
        %v7642 = vsel %vm435, %v7638, 0
        %v7645 = vsel %vm500, %v7640, 0
        %7647 = vmatprep.subr.mxu0 0.0
        %7648 = vmatpush1.msra.mxu0 %v7645
        %7649 = vmatprep.subr.mxu0 0.0
        %7650 = vmatpush1.msra.mxu0 0.0
        %7651 = vmatprep.subr.mxu0 0.0
        %7652 = vmatpush1.msra.mxu0 0.0
        %7653 = vmatprep.subr.mxu0 0.0
        %7654 = vmatpush1.msra.mxu0 0.0
        %7655 = vmatprep.subr.mxu0 0.0
        %7656 = vmatpush1.msra.mxu0 0.0
        %7657 = vmatprep.subr.mxu0 0.0
        %7658 = vmatpush1.msra.mxu0 0.0
        %7659 = vmatprep.subr.mxu0 0.0
        %7660 = vmatpush1.msra.mxu0 0.0
        %7661 = vmatprep.subr.mxu0 0.0
        %7662 = vmatpush1.msra.mxu0 0.0
        %7663 = vmatprep.subr.mxu0 0.0
        %7664 = vmatpush1.msra.mxu0 0.0
        %7665 = vmatprep.subr.mxu0 0.0
        %7666 = vmatpush1.msra.mxu0 0.0
        %7667 = vmatprep.subr.mxu0 0.0
        %7668 = vmatpush1.msra.mxu0 0.0
        %7669 = vmatprep.subr.mxu0 0.0
        %7670 = vmatpush1.msra.mxu0 0.0
        %7671 = vmatprep.subr.mxu0 0.0
        %7672 = vmatpush1.msra.mxu0 0.0
        %7673 = vmatprep.subr.mxu0 0.0
        %7674 = vmatpush1.msra.mxu0 0.0
        %7675 = vmatprep.subr.mxu0 0.0
        %7676 = vmatpush1.msra.mxu0 0.0
        %7677 = vmatprep.subr.mxu0 0.0
        %7678 = vmatpush1.msra.mxu0 0.0
        %7679 = vmatprep.subr.mxu0 0.0
        %7680 = vmatpush1.msra.mxu0 0.0
        %7681 = vmatprep.subr.mxu0 0.0
        %7682 = vmatpush1.msra.mxu0 0.0
        %7683 = vmatprep.subr.mxu0 0.0
        %7684 = vmatpush1.msra.mxu0 0.0
        %7685 = vmatprep.subr.mxu0 0.0
        %7686 = vmatpush1.msra.mxu0 0.0
        %7687 = vmatprep.subr.mxu0 0.0
        %7688 = vmatpush1.msra.mxu0 0.0
        %7689 = vmatprep.subr.mxu0 0.0
        %7690 = vmatpush1.msra.mxu0 0.0
        %7691 = vmatprep.subr.mxu0 0.0
        %7692 = vmatpush1.msra.mxu0 0.0
        %7693 = vmatprep.subr.mxu0 0.0
        %7694 = vmatpush1.msra.mxu0 0.0
        %7695 = vmatprep.subr.mxu0 0.0
        %7696 = vmatpush1.msra.mxu0 0.0
        %7697 = vmatprep.subr.mxu0 0.0
        %7698 = vmatpush1.msra.mxu0 0.0
        %7699 = vmatprep.subr.mxu0 0.0
        %7700 = vmatpush1.msra.mxu0 0.0
        %7701 = vmatprep.subr.mxu0 0.0
        %7702 = vmatpush1.msra.mxu0 0.0
        %7703 = vmatprep.subr.mxu0 0.0
        %7704 = vmatpush1.msra.mxu0 0.0
        %7705 = vmatprep.subr.mxu0 0.0
        %7706 = vmatpush1.msra.mxu0 0.0
        %7707 = vmatprep.subr.mxu0 0.0
        %7708 = vmatpush1.msra.mxu0 0.0
        %7709 = vmatprep.subr.mxu0 0.0
        %7710 = vmatpush1.msra.mxu0 0.0
        %7711 = vmatprep.mubr.f32.mxu0 0.0
        %7712 = vmatmul.mubr.f32.gmra.mrb[0].mxu0 %v7642
        %v7713 = vpop.f32.mrb[0].mxu0
        %v7714 = vadd.f32 0.0, %v7713
        %v7715 = vpop.f32.mrb[0].mxu0
        %7716 = vdwg.mxu0
        %v7717 = vadd.f32 %v7621, %v7714
        %vm7718 = vcmp.gt.f32.partialorder %v7717, 0.0
        %v7719 = vmul.f32 %v7717, 0.01
        %v7720 = vsel %vm7718, %v7717, %v7719
        %v7721 = vld [vmem:[%s4] sm:$0xff]
        %v7722 = vld [vmem:[%s4 + $0x8] sm:$0x3]
        %v7723 = vld [vmem:[%s5] sm:$0x1]
        %vm7724 = vcmask 80896
        %v7726 = vsel %vm7724, %v7720, 0
        %vm7728 = vcmask 1041408
        %v7730 = vsel %vm7728, %v7722, 0
        %7732 = vmatprep.subr.mxu0 0.0
        %7733 = vmatpush1.msra.mxu0 %v7721
        %7734 = vmatprep.subr.mxu0 0.0
        %7735 = vmatpush1.msra.mxu0 %v7730
        %7736 = vmatprep.subr.mxu0 0.0
        %7737 = vmatpush1.msra.mxu0 0.0
        %7738 = vmatprep.subr.mxu0 0.0
        %7739 = vmatpush1.msra.mxu0 0.0
        %7740 = vmatprep.subr.mxu0 0.0
        %7741 = vmatpush1.msra.mxu0 0.0
        %7742 = vmatprep.subr.mxu0 0.0
        %7743 = vmatpush1.msra.mxu0 0.0
        %7744 = vmatprep.subr.mxu0 0.0
        %7745 = vmatpush1.msra.mxu0 0.0
        %7746 = vmatprep.subr.mxu0 0.0
        %7747 = vmatpush1.msra.mxu0 0.0
        %7748 = vmatprep.subr.mxu0 0.0
        %7749 = vmatpush1.msra.mxu0 0.0
        %7750 = vmatprep.subr.mxu0 0.0
        %7751 = vmatpush1.msra.mxu0 0.0
        %7752 = vmatprep.subr.mxu0 0.0
        %7753 = vmatpush1.msra.mxu0 0.0
        %7754 = vmatprep.subr.mxu0 0.0
        %7755 = vmatpush1.msra.mxu0 0.0
        %7756 = vmatprep.subr.mxu0 0.0
        %7757 = vmatpush1.msra.mxu0 0.0
        %7758 = vmatprep.subr.mxu0 0.0
        %7759 = vmatpush1.msra.mxu0 0.0
        %7760 = vmatprep.subr.mxu0 0.0
        %7761 = vmatpush1.msra.mxu0 0.0
        %7762 = vmatprep.subr.mxu0 0.0
        %7763 = vmatpush1.msra.mxu0 0.0
        %7764 = vmatprep.subr.mxu0 0.0
        %7765 = vmatpush1.msra.mxu0 0.0
        %7766 = vmatprep.subr.mxu0 0.0
        %7767 = vmatpush1.msra.mxu0 0.0
        %7768 = vmatprep.subr.mxu0 0.0
        %7769 = vmatpush1.msra.mxu0 0.0
        %7770 = vmatprep.subr.mxu0 0.0
        %7771 = vmatpush1.msra.mxu0 0.0
        %7772 = vmatprep.subr.mxu0 0.0
        %7773 = vmatpush1.msra.mxu0 0.0
        %7774 = vmatprep.subr.mxu0 0.0
        %7775 = vmatpush1.msra.mxu0 0.0
        %7776 = vmatprep.subr.mxu0 0.0
        %7777 = vmatpush1.msra.mxu0 0.0
        %7778 = vmatprep.subr.mxu0 0.0
        %7779 = vmatpush1.msra.mxu0 0.0
        %7780 = vmatprep.subr.mxu0 0.0
        %7781 = vmatpush1.msra.mxu0 0.0
        %7782 = vmatprep.subr.mxu0 0.0
        %7783 = vmatpush1.msra.mxu0 0.0
        %7784 = vmatprep.subr.mxu0 0.0
        %7785 = vmatpush1.msra.mxu0 0.0
        %7786 = vmatprep.subr.mxu0 0.0
        %7787 = vmatpush1.msra.mxu0 0.0
        %7788 = vmatprep.subr.mxu0 0.0
        %7789 = vmatpush1.msra.mxu0 0.0
        %7790 = vmatprep.subr.mxu0 0.0
        %7791 = vmatpush1.msra.mxu0 0.0
        %7792 = vmatprep.subr.mxu0 0.0
        %7793 = vmatpush1.msra.mxu0 0.0
        %7794 = vmatprep.subr.mxu0 0.0
        %7795 = vmatpush1.msra.mxu0 0.0
        %7796 = vmatprep.mubr.f32.mxu0 0.0
        %7797 = vmatmul.mubr.f32.gmra.mrb[0].mxu0 %v7726
        %v7798 = vpop.f32.mrb[0].mxu0
        %v7799 = vadd.f32 %v7723, %v7798
        %v7800 = vpop.f32.mrb[0].mxu0
        %7801 = vdwg.mxu0
        %vm7802 = vcmask 24576
        %7803 = vst.msk [vmem:[%s243] sm:$0x1] %vm7802, %v7799
        %s7804 = sand.u32 %s159, 1
        %s7805 = scalar_lea.sflag [#allocation4], %s7804
        %s7806 = sand.u32 %s159, 1
        %s7807 = scalar_lea.vmem [#allocation3], %s7806
        // Predicated region
        $region45: #{custom_head_forward.1} parent=43 // pred_check
          %p7808 = pneg %p169
        $region46: #{custom_head_forward.1} parent=43 // pred_check_branch
          %7810 = sbr.rel (%p7808) target = $region48
        $region47: #{custom_head_forward.1} parent=43 // pred_region
          %s7812 = ssub.s32 16, 16
          %7813 = vsyncadd %s7805, %s7812
          %s7814 = smul.addr %s20, 16
          %s7815 = scalar_lea.hbm %s6, %s7814
          %s7817 = sshll.u32 %s7807, 4
          %s7818 = int_to_ptr.vmem [resolvable:$true] %s7817
          %7820 = dma.vmem_to_hbm [thread:$0]  %s7818, 16, %s7815, %s7805
        $region48: #{custom_head_forward.1} parent=43 // pred_fallthru
          _
      $region44: #{custom_head_forward.1} parent=5 // pred_fallthru
        _
      %p7821 = scmp.le.s32.totalorder 2, %s15
      // Predicated region
      $region49: #{custom_head_forward.1} parent=5 // pred_check
        %p7822 = pneg %p7821
      $region50: #{custom_head_forward.1} parent=5 // pred_check_branch
        %7824 = sbr.rel (%p7822) target = $region52
      $region51: #{custom_head_forward.1} parent=5 // pred_region
        %s7825 = ssub.s32 %s15, 2
        // Predicated region
        $region53: #{custom_head_forward.1} parent=51 // pred_check
          %p7826 = pneg %p175
        $region54: #{custom_head_forward.1} parent=51 // pred_check_branch
          %7828 = sbr.rel (%p7826) target = $region56
        $region55: #{custom_head_forward.1} parent=51 // pred_region
          %s7829 = sand.u32 %s160, 1
          %s7830 = scalar_lea.sflag [#allocation4], %s7829
          %s7831 = sand.u32 %s160, 1
          %s7832 = scalar_lea.vmem [#allocation3], %s7831
          %7833 = dma.done %s7830, 16
        $region56: #{custom_head_forward.1} parent=51 // pred_fallthru
          _
      $region52: #{custom_head_forward.1} parent=5 // pred_fallthru
        _
    $region6: #{custom_head_forward.1} parent=1 // loop_footer
      %s19 = sadd.s32 1, %s15
    $region7: #{custom_head_forward.1} parent=1 // loop_footer_branch
      %14 = sbr.rel target = $region3
    $region8: #{custom_head_forward.1} parent=1 // loop_exit
      _
    %7834 = vsyncpa [#allocation4], 1
    %s7835 = scalar_lea.sflag [#allocation4], 1
    %7836 = vsyncpa %s7835, 1

</llo_original>
